<compile_context>
chip_gen: v7x
topology: tpu7x:2x2x1
jax: 0.10.0
libtpu: 0.0.40
codegen_flags: <defaults>
</compile_context>

<pallas_src>
import numpy as np

import jax
import jax.numpy as jnp
from jax.experimental import pallas as pl
from jax.experimental.pallas import tpu as pltpu

BT = 64         # samples per grid step (keep N/BT >= 2 for two v7x TCs)
EPS = 1e-5


# --------------------------------------------------------------------------
# Wrapper-side constant / weight layout prep (tiny, one-time per call)
# --------------------------------------------------------------------------

def _conv_band(w, win):
    """Torch conv weight (Cout, Cin, K, K) -> banded matrices (K, win*Cin, wout*Cout).

    With an activation row laid out as lanes = Cin*w + cin, the conv is
        out_row(h) = sum_ki  act_row(h + ki) @ band[ki]
    and the output lane layout is w_out*Cout + c_out."""
    cout, cin, k, _ = w.shape
    wout = win - k + 1
    p = np.zeros((k, win, wout), np.float32)
    for kj in range(k):
        p[kj, kj:kj + wout, :] += np.eye(wout, dtype=np.float32)
    r = jnp.einsum("ocik,kab->iacbo", w, jnp.asarray(p))
    return r.reshape(k, win * cin, wout * cout)


def _col_pool(win, c):
    """0/1 selection matrices for the width-direction half of a 2x2 max pool
    on a lane layout of w*c + ci:  pooled = max(y @ te, y @ to)."""
    wout = win // 2
    te = np.zeros((win * c, wout * c), np.float32)
    to = np.zeros((win * c, wout * c), np.float32)
    for w in range(wout):
        for ci in range(c):
            te[(2 * w) * c + ci, w * c + ci] = 1.0
            to[(2 * w + 1) * c + ci, w * c + ci] = 1.0
    return te, to


def _full_spec(shape):
    """Whole-array block with a constant index_map: VMEM-resident across the
    batch grid (no per-step re-DMA of weights/constants)."""
    return pl.BlockSpec(shape, lambda i, _s=shape: (0,) * len(_s))


# --------------------------------------------------------------------------
# Pallas kernels
# --------------------------------------------------------------------------

def _conv1_pool_kernel(xb_ref, w1_ref, b1_ref, tp_ref, p1_ref, s_ref, q_ref):
    """conv1 + relu + 2x2 max pool for one batch tile (BT samples).

    xb rows are (sample, pooled-row h); lanes hold the 6 contributing input
    rows (6*28 = 168).  The RHS produces both conv rows of the pool pair in
    lane blocks [0:144) and [256:400), so the row pool is one aligned max.
    Emits the pooled slab p1 (BT*12, 72) plus BatchNorm1 partial sums."""
    z = jnp.dot(xb_ref[...], w1_ref[...], preferred_element_type=jnp.float32)
    zm = jnp.maximum(z[:, 0:144], z[:, 256:400])          # row pool (pre-bias)
    y = jnp.maximum(zm + b1_ref[...], 0.0)                # bias + relu
    te = tp_ref[0:144, :]
    to = tp_ref[144:288, :]
    p1 = jnp.maximum(jnp.dot(y, te, preferred_element_type=jnp.float32),
                     jnp.dot(y, to, preferred_element_type=jnp.float32))
    p1_ref[...] = p1
    s_ref[0] = jnp.sum(p1, axis=0, keepdims=True)
    q_ref[0] = jnp.sum(p1 * p1, axis=0, keepdims=True)


def _conv2_fc1_kernel(p1_ref, bn1_ref, w2_ref, b2_ref, tp_ref, w1c_ref, bf1_ref,
                      f1_ref, s_ref, q_ref):
    """bn1 + conv2 + relu + pool2 + fc1 + relu for one batch tile.

    p1 arrives flattened per sample (BT, 864).  conv2 is a single lane-space
    matmul whose output halves [0:384)/[384:768) hold the even/odd conv rows
    of each pool pair; column pool + h-compaction is two 0/1 matmuls that land
    directly in fc1's (BT, 192) layout.  Emits fc1 activations + BN2 partials."""
    pb = p1_ref[...] * bn1_ref[0:1, :] + bn1_ref[1:2, :]   # BatchNorm1
    z = jnp.dot(pb, w2_ref[...], preferred_element_type=jnp.float32)
    zm = jnp.maximum(z[:, 0:384], z[:, 384:768])           # row pool (pre-bias)
    y = jnp.maximum(zm + b2_ref[...], 0.0)                 # bias + relu
    te = tp_ref[0:384, :]
    to = tp_ref[384:768, :]
    p2 = jnp.maximum(jnp.dot(y, te, preferred_element_type=jnp.float32),
                     jnp.dot(y, to, preferred_element_type=jnp.float32))
    f1 = jnp.maximum(
        jnp.dot(p2, w1c_ref[...], preferred_element_type=jnp.float32)
        + bf1_ref[...], 0.0)
    f1_ref[...] = f1
    s_ref[0] = jnp.sum(f1, axis=0, keepdims=True)
    q_ref[0] = jnp.sum(f1 * f1, axis=0, keepdims=True)


def _head_kernel(f1_ref, bn2_ref, w2_ref, b2_ref, w3_ref, b3_ref, o_ref):
    """bn2 + fc2 + relu + out for the whole batch in one step."""
    h = f1_ref[...] * bn2_ref[0:1, :] + bn2_ref[1:2, :]
    h = jnp.maximum(
        jnp.dot(h, w2_ref[...], preferred_element_type=jnp.float32) + b2_ref[...],
        0.0)
    o_ref[...] = (jnp.dot(h, w3_ref[...], preferred_element_type=jnp.float32)
                  + b3_ref[...])


# --------------------------------------------------------------------------
# Forward pass
# --------------------------------------------------------------------------

def network_forward(x, params):
    """x: NCHW float32 (N, 1, 28, 28) -> logits (N, 10)."""
    n = x.shape[0]
    assert x.shape[1:] == (1, 28, 28), "spatial size must be 28x28"
    assert n % BT == 0, "batch must be a multiple of the batch tile (64)"
    g = n // BT
    xs = x[:, 0, :, :]                                     # (N, 28, 28)

    # ---- conv1 weights: banded matmul producing both pool-pair rows --------
    band1 = _conv_band(params["conv1_w"], 28).reshape(140, 144)   # lanes w*6+c
    w1p = jnp.zeros((168, 400), jnp.float32)
    w1p = w1p.at[0:140, 0:144].set(band1)          # conv row 2h   -> cols [0,144)
    w1p = w1p.at[28:168, 256:400].set(band1)       # conv row 2h+1 -> cols [256,400)
    b1t = jnp.tile(params["conv1_b"], 24).reshape(1, 144)
    te1, to1 = _col_pool(24, 6)
    tp1 = jnp.asarray(np.concatenate([te1, to1], axis=0))         # (288, 72)

    # ---- conv2 as one dense lane-space matmul ------------------------------
    band2 = _conv_band(params["conv2_w"], 12)                     # (5, 72, 96)
    w2d = jnp.zeros((864, 768), jnp.float32)
    for half in range(2):                     # half 0: even conv rows, 1: odd
        for h2 in range(4):                   # pooled output row
            r = 2 * h2 + half                 # conv2 output row
            co = half * 384 + h2 * 96
            for ki in range(5):
                w2d = w2d.at[(r + ki) * 72:(r + ki + 1) * 72,
                             co:co + 96].set(band2[ki])
    b2t = jnp.tile(params["conv2_b"], 32).reshape(1, 384)
    te8, to8 = _col_pool(8, 12)
    tpe = np.zeros((384, 192), np.float32)
    tpo = np.zeros((384, 192), np.float32)
    for h2 in range(4):
        tpe[h2 * 96:(h2 + 1) * 96, h2 * 48:(h2 + 1) * 48] = te8
        tpo[h2 * 96:(h2 + 1) * 96, h2 * 48:(h2 + 1) * 48] = to8
    tp2 = jnp.asarray(np.concatenate([tpe, tpo], axis=0))         # (768, 192)

    # ---- fc / head weights (NCHW flatten folded into fc1) ------------------
    w1c = jnp.transpose(params["fc1_w"].reshape(120, 12, 4, 4),
                        (2, 3, 1, 0)).reshape(192, 120)           # [h*48+w*12+o, f]
    bf1 = params["fc1_b"].reshape(1, 120)
    w2 = params["fc2_w"].T                                        # (120, 60)
    bf2 = params["fc2_b"].reshape(1, 60)
    w3 = params["out_w"].T                                        # (60, 10)
    bo = params["out_b"].reshape(1, 10)

    # ---- input row-band layout: 6 input rows per pooled output row ---------
    xb = jnp.concatenate([xs[:, d:d + 24:2, :] for d in range(6)], axis=-1)
    xb = xb.reshape(n * 12, 168)                                  # rows (b, h)

    par = pltpu.CompilerParams(dimension_semantics=("parallel",))

    # ---- kernel A: conv1 + relu + pool1, BN1 partial statistics ------------
    p1, s1, q1 = pl.pallas_call(
        _conv1_pool_kernel,
        grid=(g,),
        in_specs=[pl.BlockSpec((BT * 12, 168), lambda i: (i, 0)),
                  _full_spec((168, 400)), _full_spec((1, 144)),
                  _full_spec((288, 72))],
        out_specs=(pl.BlockSpec((BT * 12, 72), lambda i: (i, 0)),
                   pl.BlockSpec((1, 1, 72), lambda i: (i, 0, 0)),
                   pl.BlockSpec((1, 1, 72), lambda i: (i, 0, 0))),
        out_shape=(jax.ShapeDtypeStruct((n * 12, 72), jnp.float32),
                   jax.ShapeDtypeStruct((g, 1, 72), jnp.float32),
                   jax.ShapeDtypeStruct((g, 1, 72), jnp.float32)),
        compiler_params=par,
        cost_estimate=pl.CostEstimate(
            flops=int(n * 12 * 2 * (168 * 400 + 2 * 144 * 72)),
            transcendentals=0,
            bytes_accessed=int(n * 12 * (168 + 72) * 4 + 400_000)),
    )(xb, w1p, b1t, tp1)

    # BN1 finalize (12 numbers of glue): biased batch var, eps=1e-5
    cnt1 = jnp.float32(n * 144)                       # N * 12 * 12 per channel
    s6 = jnp.sum(s1, axis=(0, 1)).reshape(12, 6).sum(axis=0)
    q6 = jnp.sum(q1, axis=(0, 1)).reshape(12, 6).sum(axis=0)
    mean1 = s6 / cnt1
    var1 = q6 / cnt1 - mean1 * mean1
    g1 = params["bn1_g"] * jax.lax.rsqrt(var1 + EPS)
    bn1 = jnp.stack([jnp.tile(g1, 144),
                     jnp.tile(params["bn1_b"] - mean1 * g1, 144)])   # (2, 864)

    p1f = p1.reshape(n, 864)   # lane = h*72 + w*6 + c (pure row-major reshape)

    # ---- kernel B: bn1 + conv2 + relu + pool2 + fc1 + relu, BN2 partials ----
    f1, s2, q2 = pl.pallas_call(
        _conv2_fc1_kernel,
        grid=(g,),
        in_specs=[pl.BlockSpec((BT, 864), lambda i: (i, 0)),
                  _full_spec((2, 864)), _full_spec((864, 768)),
                  _full_spec((1, 384)), _full_spec((768, 192)),
                  _full_spec((192, 120)), _full_spec((1, 120))],
        out_specs=(pl.BlockSpec((BT, 120), lambda i: (i, 0)),
                   pl.BlockSpec((1, 1, 120), lambda i: (i, 0, 0)),
                   pl.BlockSpec((1, 1, 120), lambda i: (i, 0, 0))),
        out_shape=(jax.ShapeDtypeStruct((n, 120), jnp.float32),
                   jax.ShapeDtypeStruct((g, 1, 120), jnp.float32),
                   jax.ShapeDtypeStruct((g, 1, 120), jnp.float32)),
        compiler_params=par,
        cost_estimate=pl.CostEstimate(
            flops=int(n * 2 * (864 * 768 + 2 * 384 * 192 + 192 * 120)),
            transcendentals=0,
            bytes_accessed=int(n * (864 + 120) * 4 + 4_000_000)),
    )(p1f, bn1, w2d, b2t, tp2, w1c, bf1)

    # BN2 finalize (tiny glue)
    s120 = jnp.sum(s2, axis=(0, 1))
    q120 = jnp.sum(q2, axis=(0, 1))
    mean2 = s120 / jnp.float32(n)
    var2 = q120 / jnp.float32(n) - mean2 * mean2
    g2 = params["bn2_g"] * jax.lax.rsqrt(var2 + EPS)
    bn2 = jnp.stack([g2, params["bn2_b"] - mean2 * g2])              # (2, 120)

    # ---- kernel C: bn2 + fc2 + relu + out, one whole-batch step ------------
    logits = pl.pallas_call(
        _head_kernel,
        grid=(1,),
        in_specs=[_full_spec((n, 120)), _full_spec((2, 120)),
                  _full_spec((120, 60)), _full_spec((1, 60)),
                  _full_spec((60, 10)), _full_spec((1, 10))],
        out_specs=pl.BlockSpec((n, 10), lambda i: (0, 0)),
        out_shape=jax.ShapeDtypeStruct((n, 10), jnp.float32),
        compiler_params=pltpu.CompilerParams(dimension_semantics=("arbitrary",)),
        cost_estimate=pl.CostEstimate(flops=int(n * 2 * (120 * 60 + 60 * 10)),
                                      transcendentals=0,
                                      bytes_accessed=int(n * 760 + 35_000)),
    )(f1, bn2, w2, bf2, w3, bo)
    return logits


# --------------------------------------------------------------------------
# Parameters (torch layouts) and a pure-JAX reference for validation
# --------------------------------------------------------------------------

def init_params(key):
    ks = jax.random.split(key, 8)
    s = 0.05
    return {
        "conv1_w": jax.random.normal(ks[0], (6, 1, 5, 5), jnp.float32) * s,
        "conv1_b": jax.random.normal(ks[1], (6,), jnp.float32) * s,
        "bn1_g": jnp.ones((6,), jnp.float32),
        "bn1_b": jnp.zeros((6,), jnp.float32),
        "conv2_w": jax.random.normal(ks[2], (12, 6, 5, 5), jnp.float32) * s,
        "conv2_b": jax.random.normal(ks[3], (12,), jnp.float32) * s,
        "fc1_w": jax.random.normal(ks[4], (120, 12 * 4 * 4), jnp.float32) * s,
        "fc1_b": jnp.zeros((120,), jnp.float32),
        "bn2_g": jnp.ones((120,), jnp.float32),
        "bn2_b": jnp.zeros((120,), jnp.float32),
        "fc2_w": jax.random.normal(ks[5], (60, 120), jnp.float32) * s,
        "fc2_b": jnp.zeros((60,), jnp.float32),
        "out_w": jax.random.normal(ks[6], (10, 60), jnp.float32) * s,
        "out_b": jnp.zeros((10,), jnp.float32),
    }


def _reference_forward(x, params):
    hp = jax.lax.Precision.HIGHEST
    dn = ("NCHW", "OIHW", "NCHW")
    t = jax.lax.conv_general_dilated(x, params["conv1_w"], (1, 1), "VALID",
                                     dimension_numbers=dn, precision=hp)
    t = jnp.maximum(t + params["conv1_b"].reshape(1, 6, 1, 1), 0.0)
    t = t.reshape(t.shape[0], 6, 12, 2, 12, 2).max(axis=(3, 5))
    mean = t.mean(axis=(0, 2, 3), keepdims=True)
    var = ((t - mean) ** 2).mean(axis=(0, 2, 3), keepdims=True)
    t = (t - mean) * jax.lax.rsqrt(var + EPS)
    t = t * params["bn1_g"].reshape(1, 6, 1, 1) + params["bn1_b"].reshape(1, 6, 1, 1)
    t = jax.lax.conv_general_dilated(t, params["conv2_w"], (1, 1), "VALID",
                                     dimension_numbers=dn, precision=hp)
    t = jnp.maximum(t + params["conv2_b"].reshape(1, 12, 1, 1), 0.0)
    t = t.reshape(t.shape[0], 12, 4, 2, 4, 2).max(axis=(3, 5))
    t = t.reshape(t.shape[0], 12 * 4 * 4)
    t = jnp.maximum(jnp.dot(t, params["fc1_w"].T, precision=hp) + params["fc1_b"], 0.0)
    mean = t.mean(axis=0)
    var = ((t - mean) ** 2).mean(axis=0)
    t = (t - mean) * jax.lax.rsqrt(var + EPS) * params["bn2_g"] + params["bn2_b"]
    t = jnp.maximum(jnp.dot(t, params["fc2_w"].T, precision=hp) + params["fc2_b"], 0.0)
    return jnp.dot(t, params["out_w"].T, precision=hp) + params["out_b"]


if __name__ == "__main__":
    key = jax.random.PRNGKey(0)
    k_x, k_p = jax.random.split(key)
    # Spatial size must be 28x28 for the 12*4*4 flatten; batch = 2 tiles of 64
    # so the grid has >= 2 parallel steps (both v7x TensorCores stay busy).
    x = jax.random.normal(k_x, (128, 1, 28, 28), jnp.float32)
    params = init_params(k_p)

    fwd = jax.jit(network_forward)
    logits = fwd(x, params)
    jax.block_until_ready(logits)
    assert logits.shape == (128, 10) and logits.dtype == jnp.float32

    ref = _reference_forward(x, params)
    np.testing.assert_allclose(np.asarray(logits), np.asarray(ref),
                               rtol=2e-3, atol=2e-3)
    print("KERNEL_OK")
</pallas_src>

<mosaic_0001>
module attributes {stable_mosaic.version = 11 : i64} {
  func.func @_conv1_pool_kernel(%arg0: i32, %arg1: memref<768x168xf32, #tpu.memory_space<vmem>>, %arg2: memref<168x400xf32, #tpu.memory_space<vmem>>, %arg3: memref<1x144xf32, #tpu.memory_space<vmem>>, %arg4: memref<288x72xf32, #tpu.memory_space<vmem>>, %arg5: memref<768x72xf32, #tpu.memory_space<vmem>>, %arg6: memref<1x1x72xf32, #tpu.memory_space<vmem>>, %arg7: memref<1x1x72xf32, #tpu.memory_space<vmem>>) attributes {dimension_semantics = [#tpu.dimension_semantics<parallel>], iteration_bounds = array<i64: 2>, scalar_prefetch = 0 : i64, scratch_operands = 0 : i64, tpu.core_type = #tpu.core_type<tc>, window_params = [{transform_indices = @transform_0, window_bounds = array<i64: 768, 168>}, {pipeline_mode = #tpu.pipeline_mode<synchronous>, transform_indices = @transform_1, window_bounds = array<i64: 168, 400>}, {pipeline_mode = #tpu.pipeline_mode<synchronous>, transform_indices = @transform_2, window_bounds = array<i64: 1, 144>}, {pipeline_mode = #tpu.pipeline_mode<synchronous>, transform_indices = @transform_3, window_bounds = array<i64: 288, 72>}, {transform_indices = @transform_4, window_bounds = array<i64: 768, 72>}, {transform_indices = @transform_5, window_bounds = array<i64: 1, 1, 72>}, {transform_indices = @transform_6, window_bounds = array<i64: 1, 1, 72>}]} {
    %c0 = arith.constant 0 : index
    %c0_0 = arith.constant 0 : index
    %0 = vector.load %arg1[%c0, %c0_0] : memref<768x168xf32, #tpu.memory_space<vmem>>, vector<768x168xf32>
    %c0_1 = arith.constant 0 : index
    %c0_2 = arith.constant 0 : index
    %1 = vector.load %arg2[%c0_1, %c0_2] : memref<168x400xf32, #tpu.memory_space<vmem>>, vector<168x400xf32>
    %cst = arith.constant dense<0.000000e+00> : vector<768x400xf32>
    %2 = tpu.matmul %0, %1, %cst {dimension_numbers = #tpu.dot_dimension_numbers<[1], [0], [0], [1], [0, 0, 1, 1], [], []>} : vector<768x168xf32>, vector<168x400xf32>, vector<768x400xf32> -> vector<768x400xf32>
    %3 = vector.extract_strided_slice %2 {offsets = [0, 0], sizes = [768, 144], strides = [1, 1]} : vector<768x400xf32> to vector<768x144xf32>
    %4 = vector.extract_strided_slice %2 {offsets = [0, 256], sizes = [768, 144], strides = [1, 1]} : vector<768x400xf32> to vector<768x144xf32>
    %5 = arith.maximumf %3, %4 : vector<768x144xf32>
    %c0_3 = arith.constant 0 : index
    %c0_4 = arith.constant 0 : index
    %6 = vector.load %arg3[%c0_3, %c0_4] : memref<1x144xf32, #tpu.memory_space<vmem>>, vector<1x144xf32>
    %7 = vector.broadcast %6 : vector<1x144xf32> to vector<768x144xf32>
    %8 = arith.addf %5, %7 : vector<768x144xf32>
    %cst_5 = arith.constant 0.000000e+00 : f32
    %9 = vector.broadcast %cst_5 : f32 to vector<768x144xf32>
    %10 = arith.maximumf %8, %9 : vector<768x144xf32>
    %c0_6 = arith.constant 0 : index
    %c0_7 = arith.constant 0 : index
    %11 = vector.load %arg4[%c0_6, %c0_7] : memref<288x72xf32, #tpu.memory_space<vmem>>, vector<144x72xf32>
    %c144 = arith.constant 144 : index
    %c0_8 = arith.constant 0 : index
    %12 = vector.load %arg4[%c144, %c0_8] : memref<288x72xf32, #tpu.memory_space<vmem>>, vector<144x72xf32>
    %cst_9 = arith.constant dense<0.000000e+00> : vector<768x72xf32>
    %13 = tpu.matmul %10, %11, %cst_9 {dimension_numbers = #tpu.dot_dimension_numbers<[1], [0], [0], [1], [0, 0, 1, 1], [], []>} : vector<768x144xf32>, vector<144x72xf32>, vector<768x72xf32> -> vector<768x72xf32>
    %cst_10 = arith.constant dense<0.000000e+00> : vector<768x72xf32>
    %14 = tpu.matmul %10, %12, %cst_10 {dimension_numbers = #tpu.dot_dimension_numbers<[1], [0], [0], [1], [0, 0, 1, 1], [], []>} : vector<768x144xf32>, vector<144x72xf32>, vector<768x72xf32> -> vector<768x72xf32>
    %15 = arith.maximumf %13, %14 : vector<768x72xf32>
    %c0_11 = arith.constant 0 : index
    %c0_12 = arith.constant 0 : index
    %16 = vector.load %arg5[%c0_11, %c0_12] : memref<768x72xf32, #tpu.memory_space<vmem>>, vector<768x72xf32>
    tpu.vector_store %arg5[%c0_11, %c0_12], %15 {strides = array<i32>} : memref<768x72xf32, #tpu.memory_space<vmem>>, vector<768x72xf32>,
    %cst_13 = arith.constant dense<0.000000e+00> : vector<72xf32>
    %17 = vector.multi_reduction <add>, %15, %cst_13 [0] : vector<768x72xf32> to vector<72xf32>
    %18 = vector.shape_cast %17 : vector<72xf32> to vector<1x72xf32>
    %c0_14 = arith.constant 0 : index
    %c0_15 = arith.constant 0 : index
    %c0_16 = arith.constant 0 : index
    %19 = vector.load %arg6[%c0_14, %c0_15, %c0_16] : memref<1x1x72xf32, #tpu.memory_space<vmem>>, vector<1x1x72xf32>
    %20 = vector.shape_cast %19 : vector<1x1x72xf32> to vector<1x72xf32>
    %21 = vector.shape_cast %18 : vector<1x72xf32> to vector<1x1x72xf32>
    tpu.vector_store %arg6[%c0_14, %c0_15, %c0_16], %21 {strides = array<i32>} : memref<1x1x72xf32, #tpu.memory_space<vmem>>, vector<1x1x72xf32>,
    %22 = arith.mulf %15, %15 : vector<768x72xf32>
    %cst_17 = arith.constant dense<0.000000e+00> : vector<72xf32>
    %23 = vector.multi_reduction <add>, %22, %cst_17 [0] : vector<768x72xf32> to vector<72xf32>
    %24 = vector.shape_cast %23 : vector<72xf32> to vector<1x72xf32>
    %c0_18 = arith.constant 0 : index
    %c0_19 = arith.constant 0 : index
    %c0_20 = arith.constant 0 : index
    %25 = vector.load %arg7[%c0_18, %c0_19, %c0_20] : memref<1x1x72xf32, #tpu.memory_space<vmem>>, vector<1x1x72xf32>
    %26 = vector.shape_cast %25 : vector<1x1x72xf32> to vector<1x72xf32>
    %27 = vector.shape_cast %24 : vector<1x72xf32> to vector<1x1x72xf32>
    tpu.vector_store %arg7[%c0_18, %c0_19, %c0_20], %27 {strides = array<i32>} : memref<1x1x72xf32, #tpu.memory_space<vmem>>, vector<1x1x72xf32>,
    return
  }
  func.func @transform_0(%arg0: i32) -> (i32, i32) {
    %c0_i32 = arith.constant 0 : i32
    %c0_i32_0 = arith.constant 0 : i32
    return %arg0, %c0_i32 : i32, i32
  }
  func.func @transform_1(%arg0: i32) -> (i32, i32) {
    %c0_i32 = arith.constant 0 : i32
    %c0_i32_0 = arith.constant 0 : i32
    %c0_i32_1 = arith.constant 0 : i32
    return %c0_i32, %c0_i32_0 : i32, i32
  }
  func.func @transform_2(%arg0: i32) -> (i32, i32) {
    %c0_i32 = arith.constant 0 : i32
    %c0_i32_0 = arith.constant 0 : i32
    %c0_i32_1 = arith.constant 0 : i32
    return %c0_i32, %c0_i32_0 : i32, i32
  }
  func.func @transform_3(%arg0: i32) -> (i32, i32) {
    %c0_i32 = arith.constant 0 : i32
    %c0_i32_0 = arith.constant 0 : i32
    %c0_i32_1 = arith.constant 0 : i32
    return %c0_i32, %c0_i32_0 : i32, i32
  }
  func.func @transform_4(%arg0: i32) -> (i32, i32) {
    %c0_i32 = arith.constant 0 : i32
    %c0_i32_0 = arith.constant 0 : i32
    return %arg0, %c0_i32 : i32, i32
  }
  func.func @transform_5(%arg0: i32) -> (i32, i32, i32) {
    %c0_i32 = arith.constant 0 : i32
    %c0_i32_0 = arith.constant 0 : i32
    %c0_i32_1 = arith.constant 0 : i32
    return %arg0, %c0_i32, %c0_i32_0 : i32, i32, i32
  }
  func.func @transform_6(%arg0: i32) -> (i32, i32, i32) {
    %c0_i32 = arith.constant 0 : i32
    %c0_i32_0 = arith.constant 0 : i32
    %c0_i32_1 = arith.constant 0 : i32
    return %arg0, %c0_i32, %c0_i32_0 : i32, i32, i32
  }
}

module attributes {stable_mosaic.version = 11 : i64} {
  func.func @_conv2_fc1_kernel(%arg0: i32, %arg1: memref<64x864xf32, #tpu.memory_space<vmem>>, %arg2: memref<2x864xf32, #tpu.memory_space<vmem>>, %arg3: memref<864x768xf32, #tpu.memory_space<vmem>>, %arg4: memref<1x384xf32, #tpu.memory_space<vmem>>, %arg5: memref<768x192xf32, #tpu.memory_space<vmem>>, %arg6: memref<192x120xf32, #tpu.memory_space<vmem>>, %arg7: memref<1x120xf32, #tpu.memory_space<vmem>>, %arg8: memref<64x120xf32, #tpu.memory_space<vmem>>, %arg9: memref<1x1x120xf32, #tpu.memory_space<vmem>>, %arg10: memref<1x1x120xf32, #tpu.memory_space<vmem>>) attributes {dimension_semantics = [#tpu.dimension_semantics<parallel>], iteration_bounds = array<i64: 2>, scalar_prefetch = 0 : i64, scratch_operands = 0 : i64, tpu.core_type = #tpu.core_type<tc>, window_params = [{transform_indices = @transform_0, window_bounds = array<i64: 64, 864>}, {pipeline_mode = #tpu.pipeline_mode<synchronous>, transform_indices = @transform_1, window_bounds = array<i64: 2, 864>}, {pipeline_mode = #tpu.pipeline_mode<synchronous>, transform_indices = @transform_2, window_bounds = array<i64: 864, 768>}, {pipeline_mode = #tpu.pipeline_mode<synchronous>, transform_indices = @transform_3, window_bounds = array<i64: 1, 384>}, {pipeline_mode = #tpu.pipeline_mode<synchronous>, transform_indices = @transform_4, window_bounds = array<i64: 768, 192>}, {pipeline_mode = #tpu.pipeline_mode<synchronous>, transform_indices = @transform_5, window_bounds = array<i64: 192, 120>}, {pipeline_mode = #tpu.pipeline_mode<synchronous>, transform_indices = @transform_6, window_bounds = array<i64: 1, 120>}, {transform_indices = @transform_7, window_bounds = array<i64: 64, 120>}, {transform_indices = @transform_8, window_bounds = array<i64: 1, 1, 120>}, {transform_indices = @transform_9, window_bounds = array<i64: 1, 1, 120>}]} {
    %c0 = arith.constant 0 : index
    %c0_0 = arith.constant 0 : index
    %0 = vector.load %arg1[%c0, %c0_0] : memref<64x864xf32, #tpu.memory_space<vmem>>, vector<64x864xf32>
    %c0_1 = arith.constant 0 : index
    %c0_2 = arith.constant 0 : index
    %1 = vector.load %arg2[%c0_1, %c0_2] : memref<2x864xf32, #tpu.memory_space<vmem>>, vector<1x864xf32>
    %2 = vector.broadcast %1 : vector<1x864xf32> to vector<64x864xf32>
    %3 = arith.mulf %0, %2 : vector<64x864xf32>
    %c1 = arith.constant 1 : index
    %c0_3 = arith.constant 0 : index
    %4 = vector.load %arg2[%c1, %c0_3] : memref<2x864xf32, #tpu.memory_space<vmem>>, vector<1x864xf32>
    %5 = vector.broadcast %4 : vector<1x864xf32> to vector<64x864xf32>
    %6 = arith.addf %3, %5 : vector<64x864xf32>
    %c0_4 = arith.constant 0 : index
    %c0_5 = arith.constant 0 : index
    %7 = vector.load %arg3[%c0_4, %c0_5] : memref<864x768xf32, #tpu.memory_space<vmem>>, vector<864x768xf32>
    %cst = arith.constant dense<0.000000e+00> : vector<64x768xf32>
    %8 = tpu.matmul %6, %7, %cst {dimension_numbers = #tpu.dot_dimension_numbers<[1], [0], [0], [1], [0, 0, 1, 1], [], []>} : vector<64x864xf32>, vector<864x768xf32>, vector<64x768xf32> -> vector<64x768xf32>
    %9 = vector.extract_strided_slice %8 {offsets = [0, 0], sizes = [64, 384], strides = [1, 1]} : vector<64x768xf32> to vector<64x384xf32>
    %10 = vector.extract_strided_slice %8 {offsets = [0, 384], sizes = [64, 384], strides = [1, 1]} : vector<64x768xf32> to vector<64x384xf32>
    %11 = arith.maximumf %9, %10 : vector<64x384xf32>
    %c0_6 = arith.constant 0 : index
    %c0_7 = arith.constant 0 : index
    %12 = vector.load %arg4[%c0_6, %c0_7] : memref<1x384xf32, #tpu.memory_space<vmem>>, vector<1x384xf32>
    %13 = vector.broadcast %12 : vector<1x384xf32> to vector<64x384xf32>
    %14 = arith.addf %11, %13 : vector<64x384xf32>
    %cst_8 = arith.constant 0.000000e+00 : f32
    %15 = vector.broadcast %cst_8 : f32 to vector<64x384xf32>
    %16 = arith.maximumf %14, %15 : vector<64x384xf32>
    %c0_9 = arith.constant 0 : index
    %c0_10 = arith.constant 0 : index
    %17 = vector.load %arg5[%c0_9, %c0_10] : memref<768x192xf32, #tpu.memory_space<vmem>>, vector<384x192xf32>
    %c384 = arith.constant 384 : index
    %c0_11 = arith.constant 0 : index
    %18 = vector.load %arg5[%c384, %c0_11] : memref<768x192xf32, #tpu.memory_space<vmem>>, vector<384x192xf32>
    %cst_12 = arith.constant dense<0.000000e+00> : vector<64x192xf32>
    %19 = tpu.matmul %16, %17, %cst_12 {dimension_numbers = #tpu.dot_dimension_numbers<[1], [0], [0], [1], [0, 0, 1, 1], [], []>} : vector<64x384xf32>, vector<384x192xf32>, vector<64x192xf32> -> vector<64x192xf32>
    %cst_13 = arith.constant dense<0.000000e+00> : vector<64x192xf32>
    %20 = tpu.matmul %16, %18, %cst_13 {dimension_numbers = #tpu.dot_dimension_numbers<[1], [0], [0], [1], [0, 0, 1, 1], [], []>} : vector<64x384xf32>, vector<384x192xf32>, vector<64x192xf32> -> vector<64x192xf32>
    %21 = arith.maximumf %19, %20 : vector<64x192xf32>
    %c0_14 = arith.constant 0 : index
    %c0_15 = arith.constant 0 : index
    %22 = vector.load %arg6[%c0_14, %c0_15] : memref<192x120xf32, #tpu.memory_space<vmem>>, vector<192x120xf32>
    %cst_16 = arith.constant dense<0.000000e+00> : vector<64x120xf32>
    %23 = tpu.matmul %21, %22, %cst_16 {dimension_numbers = #tpu.dot_dimension_numbers<[1], [0], [0], [1], [0, 0, 1, 1], [], []>} : vector<64x192xf32>, vector<192x120xf32>, vector<64x120xf32> -> vector<64x120xf32>
    %c0_17 = arith.constant 0 : index
    %c0_18 = arith.constant 0 : index
    %24 = vector.load %arg7[%c0_17, %c0_18] : memref<1x120xf32, #tpu.memory_space<vmem>>, vector<1x120xf32>
    %25 = vector.broadcast %24 : vector<1x120xf32> to vector<64x120xf32>
    %26 = arith.addf %23, %25 : vector<64x120xf32>
    %cst_19 = arith.constant 0.000000e+00 : f32
    %27 = vector.broadcast %cst_19 : f32 to vector<64x120xf32>
    %28 = arith.maximumf %26, %27 : vector<64x120xf32>
    %c0_20 = arith.constant 0 : index
    %c0_21 = arith.constant 0 : index
    %29 = vector.load %arg8[%c0_20, %c0_21] : memref<64x120xf32, #tpu.memory_space<vmem>>, vector<64x120xf32>
    tpu.vector_store %arg8[%c0_20, %c0_21], %28 {strides = array<i32>} : memref<64x120xf32, #tpu.memory_space<vmem>>, vector<64x120xf32>,
    %cst_22 = arith.constant dense<0.000000e+00> : vector<120xf32>
    %30 = vector.multi_reduction <add>, %28, %cst_22 [0] : vector<64x120xf32> to vector<120xf32>
    %31 = vector.shape_cast %30 : vector<120xf32> to vector<1x120xf32>
    %c0_23 = arith.constant 0 : index
    %c0_24 = arith.constant 0 : index
    %c0_25 = arith.constant 0 : index
    %32 = vector.load %arg9[%c0_23, %c0_24, %c0_25] : memref<1x1x120xf32, #tpu.memory_space<vmem>>, vector<1x1x120xf32>
    %33 = vector.shape_cast %32 : vector<1x1x120xf32> to vector<1x120xf32>
    %34 = vector.shape_cast %31 : vector<1x120xf32> to vector<1x1x120xf32>
    tpu.vector_store %arg9[%c0_23, %c0_24, %c0_25], %34 {strides = array<i32>} : memref<1x1x120xf32, #tpu.memory_space<vmem>>, vector<1x1x120xf32>,
    %35 = arith.mulf %28, %28 : vector<64x120xf32>
    %cst_26 = arith.constant dense<0.000000e+00> : vector<120xf32>
    %36 = vector.multi_reduction <add>, %35, %cst_26 [0] : vector<64x120xf32> to vector<120xf32>
    %37 = vector.shape_cast %36 : vector<120xf32> to vector<1x120xf32>
    %c0_27 = arith.constant 0 : index
    %c0_28 = arith.constant 0 : index
    %c0_29 = arith.constant 0 : index
    %38 = vector.load %arg10[%c0_27, %c0_28, %c0_29] : memref<1x1x120xf32, #tpu.memory_space<vmem>>, vector<1x1x120xf32>
    %39 = vector.shape_cast %38 : vector<1x1x120xf32> to vector<1x120xf32>
    %40 = vector.shape_cast %37 : vector<1x120xf32> to vector<1x1x120xf32>
    tpu.vector_store %arg10[%c0_27, %c0_28, %c0_29], %40 {strides = array<i32>} : memref<1x1x120xf32, #tpu.memory_space<vmem>>, vector<1x1x120xf32>,
    return
  }
  func.func @transform_0(%arg0: i32) -> (i32, i32) {
    %c0_i32 = arith.constant 0 : i32
    %c0_i32_0 = arith.constant 0 : i32
    return %arg0, %c0_i32 : i32, i32
  }
  func.func @transform_1(%arg0: i32) -> (i32, i32) {
    %c0_i32 = arith.constant 0 : i32
    %c0_i32_0 = arith.constant 0 : i32
    %c0_i32_1 = arith.constant 0 : i32
    return %c0_i32, %c0_i32_0 : i32, i32
  }
  func.func @transform_2(%arg0: i32) -> (i32, i32) {
    %c0_i32 = arith.constant 0 : i32
    %c0_i32_0 = arith.constant 0 : i32
    %c0_i32_1 = arith.constant 0 : i32
    return %c0_i32, %c0_i32_0 : i32, i32
  }
  func.func @transform_3(%arg0: i32) -> (i32, i32) {
    %c0_i32 = arith.constant 0 : i32
    %c0_i32_0 = arith.constant 0 : i32
    %c0_i32_1 = arith.constant 0 : i32
    return %c0_i32, %c0_i32_0 : i32, i32
  }
  func.func @transform_4(%arg0: i32) -> (i32, i32) {
    %c0_i32 = arith.constant 0 : i32
    %c0_i32_0 = arith.constant 0 : i32
    %c0_i32_1 = arith.constant 0 : i32
    return %c0_i32, %c0_i32_0 : i32, i32
  }
  func.func @transform_5(%arg0: i32) -> (i32, i32) {
    %c0_i32 = arith.constant 0 : i32
    %c0_i32_0 = arith.constant 0 : i32
    %c0_i32_1 = arith.constant 0 : i32
    return %c0_i32, %c0_i32_0 : i32, i32
  }
  func.func @transform_6(%arg0: i32) -> (i32, i32) {
    %c0_i32 = arith.constant 0 : i32
    %c0_i32_0 = arith.constant 0 : i32
    %c0_i32_1 = arith.constant 0 : i32
    return %c0_i32, %c0_i32_0 : i32, i32
  }
  func.func @transform_7(%arg0: i32) -> (i32, i32) {
    %c0_i32 = arith.constant 0 : i32
    %c0_i32_0 = arith.constant 0 : i32
    return %arg0, %c0_i32 : i32, i32
  }
  func.func @transform_8(%arg0: i32) -> (i32, i32, i32) {
    %c0_i32 = arith.constant 0 : i32
    %c0_i32_0 = arith.constant 0 : i32
    %c0_i32_1 = arith.constant 0 : i32
    return %arg0, %c0_i32, %c0_i32_0 : i32, i32, i32
  }
  func.func @transform_9(%arg0: i32) -> (i32, i32, i32) {
    %c0_i32 = arith.constant 0 : i32
    %c0_i32_0 = arith.constant 0 : i32
    %c0_i32_1 = arith.constant 0 : i32
    return %arg0, %c0_i32, %c0_i32_0 : i32, i32, i32
  }
}

module attributes {stable_mosaic.version = 11 : i64} {
  func.func @_head_kernel(%arg0: i32, %arg1: memref<128x120xf32, #tpu.memory_space<vmem>>, %arg2: memref<2x120xf32, #tpu.memory_space<vmem>>, %arg3: memref<120x60xf32, #tpu.memory_space<vmem>>, %arg4: memref<1x60xf32, #tpu.memory_space<vmem>>, %arg5: memref<60x10xf32, #tpu.memory_space<vmem>>, %arg6: memref<1x10xf32, #tpu.memory_space<vmem>>, %arg7: memref<128x10xf32, #tpu.memory_space<vmem>>) attributes {dimension_semantics = [#tpu.dimension_semantics<arbitrary>], iteration_bounds = array<i64: 1>, scalar_prefetch = 0 : i64, scratch_operands = 0 : i64, tpu.core_type = #tpu.core_type<tc>, window_params = [{pipeline_mode = #tpu.pipeline_mode<synchronous>, transform_indices = @transform_0, window_bounds = array<i64: 128, 120>}, {pipeline_mode = #tpu.pipeline_mode<synchronous>, transform_indices = @transform_1, window_bounds = array<i64: 2, 120>}, {pipeline_mode = #tpu.pipeline_mode<synchronous>, transform_indices = @transform_2, window_bounds = array<i64: 120, 60>}, {pipeline_mode = #tpu.pipeline_mode<synchronous>, transform_indices = @transform_3, window_bounds = array<i64: 1, 60>}, {pipeline_mode = #tpu.pipeline_mode<synchronous>, transform_indices = @transform_4, window_bounds = array<i64: 60, 10>}, {pipeline_mode = #tpu.pipeline_mode<synchronous>, transform_indices = @transform_5, window_bounds = array<i64: 1, 10>}, {pipeline_mode = #tpu.pipeline_mode<synchronous>, transform_indices = @transform_6, window_bounds = array<i64: 128, 10>}]} {
    %c0 = arith.constant 0 : index
    %c0_0 = arith.constant 0 : index
    %0 = vector.load %arg1[%c0, %c0_0] : memref<128x120xf32, #tpu.memory_space<vmem>>, vector<128x120xf32>
    %c0_1 = arith.constant 0 : index
    %c0_2 = arith.constant 0 : index
    %1 = vector.load %arg2[%c0_1, %c0_2] : memref<2x120xf32, #tpu.memory_space<vmem>>, vector<1x120xf32>
    %2 = vector.broadcast %1 : vector<1x120xf32> to vector<128x120xf32>
    %3 = arith.mulf %0, %2 : vector<128x120xf32>
    %c1 = arith.constant 1 : index
    %c0_3 = arith.constant 0 : index
    %4 = vector.load %arg2[%c1, %c0_3] : memref<2x120xf32, #tpu.memory_space<vmem>>, vector<1x120xf32>
    %5 = vector.broadcast %4 : vector<1x120xf32> to vector<128x120xf32>
    %6 = arith.addf %3, %5 : vector<128x120xf32>
    %c0_4 = arith.constant 0 : index
    %c0_5 = arith.constant 0 : index
    %7 = vector.load %arg3[%c0_4, %c0_5] : memref<120x60xf32, #tpu.memory_space<vmem>>, vector<120x60xf32>
    %cst = arith.constant dense<0.000000e+00> : vector<128x60xf32>
    %8 = tpu.matmul %6, %7, %cst {dimension_numbers = #tpu.dot_dimension_numbers<[1], [0], [0], [1], [0, 0, 1, 1], [], []>} : vector<128x120xf32>, vector<120x60xf32>, vector<128x60xf32> -> vector<128x60xf32>
    %c0_6 = arith.constant 0 : index
    %c0_7 = arith.constant 0 : index
    %9 = vector.load %arg4[%c0_6, %c0_7] : memref<1x60xf32, #tpu.memory_space<vmem>>, vector<1x60xf32>
    %10 = vector.broadcast %9 : vector<1x60xf32> to vector<128x60xf32>
    %11 = arith.addf %8, %10 : vector<128x60xf32>
    %cst_8 = arith.constant 0.000000e+00 : f32
    %12 = vector.broadcast %cst_8 : f32 to vector<128x60xf32>
    %13 = arith.maximumf %11, %12 : vector<128x60xf32>
    %c0_9 = arith.constant 0 : index
    %c0_10 = arith.constant 0 : index
    %14 = vector.load %arg5[%c0_9, %c0_10] : memref<60x10xf32, #tpu.memory_space<vmem>>, vector<60x10xf32>
    %cst_11 = arith.constant dense<0.000000e+00> : vector<128x10xf32>
    %15 = tpu.matmul %13, %14, %cst_11 {dimension_numbers = #tpu.dot_dimension_numbers<[1], [0], [0], [1], [0, 0, 1, 1], [], []>} : vector<128x60xf32>, vector<60x10xf32>, vector<128x10xf32> -> vector<128x10xf32>
    %c0_12 = arith.constant 0 : index
    %c0_13 = arith.constant 0 : index
    %16 = vector.load %arg6[%c0_12, %c0_13] : memref<1x10xf32, #tpu.memory_space<vmem>>, vector<1x10xf32>
    %17 = vector.broadcast %16 : vector<1x10xf32> to vector<128x10xf32>
    %18 = arith.addf %15, %17 : vector<128x10xf32>
    %c0_14 = arith.constant 0 : index
    %c0_15 = arith.constant 0 : index
    %19 = vector.load %arg7[%c0_14, %c0_15] : memref<128x10xf32, #tpu.memory_space<vmem>>, vector<128x10xf32>
    tpu.vector_store %arg7[%c0_14, %c0_15], %18 {strides = array<i32>} : memref<128x10xf32, #tpu.memory_space<vmem>>, vector<128x10xf32>,
    return
  }
  func.func @transform_0(%arg0: i32) -> (i32, i32) {
    %c0_i32 = arith.constant 0 : i32
    %c0_i32_0 = arith.constant 0 : i32
    %c0_i32_1 = arith.constant 0 : i32
    return %c0_i32, %c0_i32_0 : i32, i32
  }
  func.func @transform_1(%arg0: i32) -> (i32, i32) {
    %c0_i32 = arith.constant 0 : i32
    %c0_i32_0 = arith.constant 0 : i32
    %c0_i32_1 = arith.constant 0 : i32
    return %c0_i32, %c0_i32_0 : i32, i32
  }
  func.func @transform_2(%arg0: i32) -> (i32, i32) {
    %c0_i32 = arith.constant 0 : i32
    %c0_i32_0 = arith.constant 0 : i32
    %c0_i32_1 = arith.constant 0 : i32
    return %c0_i32, %c0_i32_0 : i32, i32
  }
  func.func @transform_3(%arg0: i32) -> (i32, i32) {
    %c0_i32 = arith.constant 0 : i32
    %c0_i32_0 = arith.constant 0 : i32
    %c0_i32_1 = arith.constant 0 : i32
    return %c0_i32, %c0_i32_0 : i32, i32
  }
  func.func @transform_4(%arg0: i32) -> (i32, i32) {
    %c0_i32 = arith.constant 0 : i32
    %c0_i32_0 = arith.constant 0 : i32
    %c0_i32_1 = arith.constant 0 : i32
    return %c0_i32, %c0_i32_0 : i32, i32
  }
  func.func @transform_5(%arg0: i32) -> (i32, i32) {
    %c0_i32 = arith.constant 0 : i32
    %c0_i32_0 = arith.constant 0 : i32
    %c0_i32_1 = arith.constant 0 : i32
    return %c0_i32, %c0_i32_0 : i32, i32
  }
  func.func @transform_6(%arg0: i32) -> (i32, i32) {
    %c0_i32 = arith.constant 0 : i32
    %c0_i32_0 = arith.constant 0 : i32
    %c0_i32_1 = arith.constant 0 : i32
    return %c0_i32, %c0_i32_0 : i32, i32
  }
}

</mosaic_0001>

<llo_original>
// kernel: tile.23
$region0: #{tile.23}
  #allocation2 [shape = 's32[1]{0}', space=sflag, size = 0x4, scoped, tag = 'scoped memory for tile.23']
  %s0 = inlined_call_operand.hbm [shape: f32[6], index: 0, kind: input, shape index: {}]
  %s1 = inlined_call_operand.vmem [shape: f32[24,6], index: 1, kind: output, shape index: {}]
  $region1: #{tile.23} parent=0
    #allocation0 [shape = 'u8[512]{0}', space=vmem, size = 0x400, scoped, tag = 'operand span for operand 0']
    #allocation1 [shape = 's32[1]{0}', space=sflag, size = 0x4, scoped, tag = 'scoped memory for tile.23']
    %2 = vsyncpa [#allocation1], 0
    // Predicated region
    $region2: #{tile.23} parent=1 // pred_check
      _
    $region3: #{tile.23} parent=1 // pred_check_branch
      %4 = sbr.rel (0) target = $region5
    $region4: #{tile.23} parent=1 // pred_region
      %s6 = ssub.s32 16, 16
      %7 = vsyncadd [#allocation1], %s6
      %s9 = sshll.u32 [#allocation0], 4
      %s10 = int_to_ptr.vmem [resolvable:$true] %s9
      %12 = dma.hbm_to_vmem [thread:$0]  %s0, 16, %s10, [#allocation1]
    $region5: #{tile.23} parent=1 // pred_fallthru
      _
    // Predicated region
    $region6: #{tile.23} parent=1 // pred_check
      _
    $region7: #{tile.23} parent=1 // pred_check_branch
      %14 = sbr.rel (0) target = $region9
    $region8: #{tile.23} parent=1 // pred_region
      %15 = dma.done [#allocation1], 16
    $region9: #{tile.23} parent=1 // pred_fallthru
      _
    %v16 = vld [vmem:[#allocation0] ss:$0 sm:$0xff]
    %17 = vst [vmem:[%s1] sm:$0xff] %v16
    %s18 = scalar_lea.vmem %s1, 8
    %19 = vst [vmem:[%s18] sm:$0xff] %v16
    %s20 = scalar_lea.vmem %s1, 16
    %21 = vst [vmem:[%s20] sm:$0xff] %v16
    %22 = vsyncpa [#allocation1], 1

// kernel: tile.28
$region0: #{tile.28}
  #allocation2 [shape = 's32[1]{0}', space=sflag, size = 0x4, scoped, tag = 'scoped memory for tile.28']
  %s0 = inlined_call_operand.hbm [shape: f32[12], index: 0, kind: input, shape index: {}]
  %s1 = inlined_call_operand.vmem [shape: f32[32,12], index: 1, kind: output, shape index: {}]
  $region1: #{tile.28} parent=0
    #allocation0 [shape = 'u8[512]{0}', space=vmem, size = 0x400, scoped, tag = 'operand span for operand 0']
    #allocation1 [shape = 's32[1]{0}', space=sflag, size = 0x4, scoped, tag = 'scoped memory for tile.28']
    %2 = vsyncpa [#allocation1], 0
    // Predicated region
    $region2: #{tile.28} parent=1 // pred_check
      _
    $region3: #{tile.28} parent=1 // pred_check_branch
      %4 = sbr.rel (0) target = $region5
    $region4: #{tile.28} parent=1 // pred_region
      %s6 = ssub.s32 16, 16
      %7 = vsyncadd [#allocation1], %s6
      %s9 = sshll.u32 [#allocation0], 4
      %s10 = int_to_ptr.vmem [resolvable:$true] %s9
      %12 = dma.hbm_to_vmem [thread:$0]  %s0, 16, %s10, [#allocation1]
    $region5: #{tile.28} parent=1 // pred_fallthru
      _
    // Predicated region
    $region6: #{tile.28} parent=1 // pred_check
      _
    $region7: #{tile.28} parent=1 // pred_check_branch
      %14 = sbr.rel (0) target = $region9
    $region8: #{tile.28} parent=1 // pred_region
      %15 = dma.done [#allocation1], 16
    $region9: #{tile.28} parent=1 // pred_fallthru
      _
    %v16 = vld [vmem:[#allocation0] ss:$0 sm:$0xff]
    %17 = vst [vmem:[%s1] sm:$0xff] %v16
    %s18 = scalar_lea.vmem %s1, 8
    %19 = vst [vmem:[%s18] sm:$0xff] %v16
    %s20 = scalar_lea.vmem %s1, 16
    %21 = vst [vmem:[%s20] sm:$0xff] %v16
    %s22 = scalar_lea.vmem %s1, 24
    %23 = vst [vmem:[%s22] sm:$0xff] %v16
    %24 = vsyncpa [#allocation1], 1

// kernel: tile.24
$region0: #{tile.24}
  %s0 = inlined_call_operand.vmem [shape: f32[24,6], index: 0, kind: input, shape index: {}]
  %s1 = inlined_call_operand.vmem [shape: f32[1,144], index: 1, kind: output, shape index: {}]
  $region1: #{tile.24} parent=0
    #allocation0 [shape = 'u8[8192]{0}', space=vmem, size = 0x2000, scoped, tag = 'scoped mem for output reshape']
    %v2 = vld [vmem:[%s0] sm:$0x1]
    %vm3 = vcmask 48128
    %4 = vst.msk [vmem:[#allocation0] sm:$0x1] %vm3, %v2
    %s5 = scalar_lea.vmem %s0, 21
    %v6 = vld [vmem:[%s5] sm:$0x1]
    %s7 = scalar_lea.vmem %s0, 21
    %v8 = vld [vmem:[%s7] sm:$0x1]
    %vm9 = vcmask 15360
    %v10 = vsel %vm9, %v8, %v6
    %11 = vrot.lane.b32.xlu0 %v10, 126
    %v12 = vpop.permute.xlu0 %11
    %vm13 = vcmask 31744
    %s14 = scalar_lea.vmem [#allocation0], 8
    %15 = vst.msk [vmem:[%s14] sm:$0x1] %vm13, %v12
    %vm16 = vcmask 1048560
    %17 = vst.msk [vmem:[#allocation0] sm:$0x1] %vm16, %v12
    %s18 = scalar_lea.vmem %s0, 20
    %v19 = vld [vmem:[%s18] sm:$0x1]
    %20 = vrot.lane.b32.xlu0 %v19, 120
    %v21 = vpop.permute.xlu0 %20
    %vm22 = vcmask 1032128
    %23 = vst.msk [vmem:[#allocation0] sm:$0x1] %vm22, %v21
    %s24 = scalar_lea.vmem %s0, 19
    %v25 = vld [vmem:[%s24] sm:$0x1]
    %26 = vrot.lane.b32.xlu0 %v25, 114
    %v27 = vpop.permute.xlu0 %26
    %vm28 = vcmask 982928
    %29 = vst.msk [vmem:[#allocation0] sm:$0x1] %vm28, %v27
    %s30 = scalar_lea.vmem %s0, 18
    %v31 = vld [vmem:[%s30] sm:$0x1]
    %32 = vrot.lane.b32.xlu0 %v31, 108
    %v33 = vpop.permute.xlu0 %32
    %vm34 = vcmask 933728
    %35 = vst.msk [vmem:[#allocation0] sm:$0x1] %vm34, %v33
    %s36 = scalar_lea.vmem %s0, 17
    %v37 = vld [vmem:[%s36] sm:$0x1]
    %38 = vrot.lane.b32.xlu0 %v37, 102
    %v39 = vpop.permute.xlu0 %38
    %vm40 = vcmask 884528
    %41 = vst.msk [vmem:[#allocation0] sm:$0x1] %vm40, %v39
    %s42 = scalar_lea.vmem %s0, 16
    %v43 = vld [vmem:[%s42] sm:$0x1]
    %44 = vrot.lane.b32.xlu0 %v43, 96
    %v45 = vpop.permute.xlu0 %44
    %vm46 = vcmask 835328
    %47 = vst.msk [vmem:[#allocation0] sm:$0x1] %vm46, %v45
    %s48 = scalar_lea.vmem %s0, 15
    %v49 = vld [vmem:[%s48] sm:$0x1]
    %50 = vrot.lane.b32.xlu0 %v49, 90
    %v51 = vpop.permute.xlu0 %50
    %vm52 = vcmask 786128
    %53 = vst.msk [vmem:[#allocation0] sm:$0x1] %vm52, %v51
    %s54 = scalar_lea.vmem %s0, 14
    %v55 = vld [vmem:[%s54] sm:$0x1]
    %56 = vrot.lane.b32.xlu0 %v55, 84
    %v57 = vpop.permute.xlu0 %56
    %vm58 = vcmask 736928
    %59 = vst.msk [vmem:[#allocation0] sm:$0x1] %vm58, %v57
    %s60 = scalar_lea.vmem %s0, 13
    %v61 = vld [vmem:[%s60] sm:$0x1]
    %62 = vrot.lane.b32.xlu0 %v61, 78
    %v63 = vpop.permute.xlu0 %62
    %vm64 = vcmask 687728
    %65 = vst.msk [vmem:[#allocation0] sm:$0x1] %vm64, %v63
    %s66 = scalar_lea.vmem %s0, 12
    %v67 = vld [vmem:[%s66] sm:$0x1]
    %68 = vrot.lane.b32.xlu0 %v67, 72
    %v69 = vpop.permute.xlu0 %68
    %vm70 = vcmask 638528
    %71 = vst.msk [vmem:[#allocation0] sm:$0x1] %vm70, %v69
    %s72 = scalar_lea.vmem %s0, 11
    %v73 = vld [vmem:[%s72] sm:$0x1]
    %74 = vrot.lane.b32.xlu0 %v73, 66
    %v75 = vpop.permute.xlu0 %74
    %vm76 = vcmask 589328
    %77 = vst.msk [vmem:[#allocation0] sm:$0x1] %vm76, %v75
    %s78 = scalar_lea.vmem %s0, 10
    %v79 = vld [vmem:[%s78] sm:$0x1]
    %80 = vrot.lane.b32.xlu0 %v79, 60
    %v81 = vpop.permute.xlu0 %80
    %vm82 = vcmask 540128
    %83 = vst.msk [vmem:[#allocation0] sm:$0x1] %vm82, %v81
    %s84 = scalar_lea.vmem %s0, 9
    %v85 = vld [vmem:[%s84] sm:$0x1]
    %86 = vrot.lane.b32.xlu0 %v85, 54
    %v87 = vpop.permute.xlu0 %86
    %vm88 = vcmask 490928
    %89 = vst.msk [vmem:[#allocation0] sm:$0x1] %vm88, %v87
    %s90 = scalar_lea.vmem %s0, 8
    %v91 = vld [vmem:[%s90] sm:$0x1]
    %92 = vrot.lane.b32.xlu0 %v91, 48
    %v93 = vpop.permute.xlu0 %92
    %vm94 = vcmask 441728
    %95 = vst.msk [vmem:[#allocation0] sm:$0x1] %vm94, %v93
    %s96 = scalar_lea.vmem %s0, 7
    %v97 = vld [vmem:[%s96] sm:$0x1]
    %98 = vrot.lane.b32.xlu0 %v97, 42
    %v99 = vpop.permute.xlu0 %98
    %vm100 = vcmask 392528
    %101 = vst.msk [vmem:[#allocation0] sm:$0x1] %vm100, %v99
    %s102 = scalar_lea.vmem %s0, 6
    %v103 = vld [vmem:[%s102] sm:$0x1]
    %104 = vrot.lane.b32.xlu0 %v103, 36
    %v105 = vpop.permute.xlu0 %104
    %vm106 = vcmask 343328
    %107 = vst.msk [vmem:[#allocation0] sm:$0x1] %vm106, %v105
    %s108 = scalar_lea.vmem %s0, 5
    %v109 = vld [vmem:[%s108] sm:$0x1]
    %110 = vrot.lane.b32.xlu0 %v109, 30
    %v111 = vpop.permute.xlu0 %110
    %vm112 = vcmask 294128
    %113 = vst.msk [vmem:[#allocation0] sm:$0x1] %vm112, %v111
    %s114 = scalar_lea.vmem %s0, 4
    %v115 = vld [vmem:[%s114] sm:$0x1]
    %116 = vrot.lane.b32.xlu0 %v115, 24
    %v117 = vpop.permute.xlu0 %116
    %vm118 = vcmask 244928
    %119 = vst.msk [vmem:[#allocation0] sm:$0x1] %vm118, %v117
    %s120 = scalar_lea.vmem %s0, 3
    %v121 = vld [vmem:[%s120] sm:$0x1]
    %122 = vrot.lane.b32.xlu0 %v121, 18
    %v123 = vpop.permute.xlu0 %122
    %vm124 = vcmask 195728
    %125 = vst.msk [vmem:[#allocation0] sm:$0x1] %vm124, %v123
    %s126 = scalar_lea.vmem %s0, 2
    %v127 = vld [vmem:[%s126] sm:$0x1]
    %128 = vrot.lane.b32.xlu0 %v127, 12
    %v129 = vpop.permute.xlu0 %128
    %vm130 = vcmask 146528
    %131 = vst.msk [vmem:[#allocation0] sm:$0x1] %vm130, %v129
    %s132 = scalar_lea.vmem %s0, 23
    %v133 = vld [vmem:[%s132] sm:$0x1]
    %134 = vrot.lane.b32.xlu0 %v133, 10
    %v135 = vpop.permute.xlu0 %134
    %vm136 = vcmask 130128
    %s137 = scalar_lea.vmem [#allocation0], 8
    %138 = vst.msk [vmem:[%s137] sm:$0x1] %vm136, %v135
    %s139 = scalar_lea.vmem %s0, 1
    %v140 = vld [vmem:[%s139] sm:$0x1]
    %141 = vrot.lane.b32.xlu0 %v140, 6
    %v142 = vpop.permute.xlu0 %141
    %vm143 = vcmask 97328
    %144 = vst.msk [vmem:[#allocation0] sm:$0x1] %vm143, %v142
    %s145 = scalar_lea.vmem %s0, 22
    %v146 = vld [vmem:[%s145] sm:$0x1]
    %147 = vrot.lane.b32.xlu0 %v146, 4
    %v148 = vpop.permute.xlu0 %147
    %vm149 = vcmask 80928
    %s150 = scalar_lea.vmem [#allocation0], 8
    %151 = vst.msk [vmem:[%s150] sm:$0x1] %vm149, %v148
    %s153 = sshllo.u32 0, 1
    %v155 = vld [vmem:[#allocation0] sm:%s153]
    %s156 = sshllo.u32 0, 1
    %157 = vst [vmem:[%s1] sm:%s156] %v155
    %s158 = scalar_lea.vmem [#allocation0], 8
    %v159 = vld [vmem:[%s158] sm:%s153]
    %s160 = sshllo.u32 0, 1
    %s161 = scalar_lea.vmem %s1, 1
    %162 = vst [vmem:[%s161] sm:%s160] %v159

// kernel: tile.29
$region0: #{tile.29}
  %s0 = inlined_call_operand.vmem [shape: f32[32,12], index: 0, kind: input, shape index: {}]
  %s1 = inlined_call_operand.vmem [shape: f32[1,384], index: 1, kind: output, shape index: {}]
  $region1: #{tile.29} parent=0
    #allocation0 [shape = 'u8[12288]{0}', space=vmem, size = 0x3000, scoped, tag = 'scoped mem for output reshape']
    %v2 = vld [vmem:[%s0] sm:$0x1]
    %vm3 = vcmask 97280
    %4 = vst.msk [vmem:[#allocation0] sm:$0x1] %vm3, %v2
    %s5 = scalar_lea.vmem %s0, 21
    %v6 = vld [vmem:[%s5] sm:$0x1]
    %s7 = scalar_lea.vmem %s0, 21
    %v8 = vld [vmem:[%s7] sm:$0x1]
    %vm9 = vcmask 31744
    %v10 = vsel %vm9, %v8, %v6
    %11 = vrot.lane.b32.xlu0 %v10, 124
    %v12 = vpop.permute.xlu0 %11
    %vm13 = vcmask 64512
    %s14 = scalar_lea.vmem [#allocation0], 16
    %15 = vst.msk [vmem:[%s14] sm:$0x1] %vm13, %v12
    %vm16 = vcmask 1048544
    %s17 = scalar_lea.vmem [#allocation0], 8
    %18 = vst.msk [vmem:[%s17] sm:$0x1] %vm16, %v12
    %s19 = scalar_lea.vmem %s0, 10
    %v20 = vld [vmem:[%s19] sm:$0x1]
    %s21 = scalar_lea.vmem %s0, 10
    %v22 = vld [vmem:[%s21] sm:$0x1]
    %vm23 = vcmask 64512
    %v24 = vsel %vm23, %v22, %v20
    %25 = vrot.lane.b32.xlu0 %v24, 120
    %v26 = vpop.permute.xlu0 %25
    %vm27 = vcmask 31744
    %s28 = scalar_lea.vmem [#allocation0], 8
    %29 = vst.msk [vmem:[%s28] sm:$0x1] %vm27, %v26
    %vm30 = vcmask 1048512
    %31 = vst.msk [vmem:[#allocation0] sm:$0x1] %vm30, %v26
    %s32 = scalar_lea.vmem %s0, 31
    %v33 = vld [vmem:[%s32] sm:$0x1]
    %34 = vrot.lane.b32.xlu0 %v33, 116
    %v35 = vpop.permute.xlu0 %34
    %vm36 = vcmask 1048480
    %s37 = scalar_lea.vmem [#allocation0], 16
    %38 = vst.msk [vmem:[%s37] sm:$0x1] %vm36, %v35
    %s39 = scalar_lea.vmem %s0, 20
    %v40 = vld [vmem:[%s39] sm:$0x1]
    %41 = vrot.lane.b32.xlu0 %v40, 112
    %v42 = vpop.permute.xlu0 %41
    %vm43 = vcmask 1015680
    %s44 = scalar_lea.vmem [#allocation0], 8
    %45 = vst.msk [vmem:[%s44] sm:$0x1] %vm43, %v42
    %s46 = scalar_lea.vmem %s0, 9
    %v47 = vld [vmem:[%s46] sm:$0x1]
    %48 = vrot.lane.b32.xlu0 %v47, 108
    %v49 = vpop.permute.xlu0 %48
    %vm50 = vcmask 982880
    %51 = vst.msk [vmem:[#allocation0] sm:$0x1] %vm50, %v49
    %s52 = scalar_lea.vmem %s0, 30
    %v53 = vld [vmem:[%s52] sm:$0x1]
    %54 = vrot.lane.b32.xlu0 %v53, 104
    %v55 = vpop.permute.xlu0 %54
    %vm56 = vcmask 950080
    %s57 = scalar_lea.vmem [#allocation0], 16
    %58 = vst.msk [vmem:[%s57] sm:$0x1] %vm56, %v55
    %s59 = scalar_lea.vmem %s0, 19
    %v60 = vld [vmem:[%s59] sm:$0x1]
    %61 = vrot.lane.b32.xlu0 %v60, 100
    %v62 = vpop.permute.xlu0 %61
    %vm63 = vcmask 917280
    %s64 = scalar_lea.vmem [#allocation0], 8
    %65 = vst.msk [vmem:[%s64] sm:$0x1] %vm63, %v62
    %s66 = scalar_lea.vmem %s0, 8
    %v67 = vld [vmem:[%s66] sm:$0x1]
    %68 = vrot.lane.b32.xlu0 %v67, 96
    %v69 = vpop.permute.xlu0 %68
    %vm70 = vcmask 884480
    %71 = vst.msk [vmem:[#allocation0] sm:$0x1] %vm70, %v69
    %s72 = scalar_lea.vmem %s0, 29
    %v73 = vld [vmem:[%s72] sm:$0x1]
    %74 = vrot.lane.b32.xlu0 %v73, 92
    %v75 = vpop.permute.xlu0 %74
    %vm76 = vcmask 851680
    %s77 = scalar_lea.vmem [#allocation0], 16
    %78 = vst.msk [vmem:[%s77] sm:$0x1] %vm76, %v75
    %s79 = scalar_lea.vmem %s0, 18
    %v80 = vld [vmem:[%s79] sm:$0x1]
    %81 = vrot.lane.b32.xlu0 %v80, 88
    %v82 = vpop.permute.xlu0 %81
    %vm83 = vcmask 818880
    %s84 = scalar_lea.vmem [#allocation0], 8
    %85 = vst.msk [vmem:[%s84] sm:$0x1] %vm83, %v82
    %s86 = scalar_lea.vmem %s0, 7
    %v87 = vld [vmem:[%s86] sm:$0x1]
    %88 = vrot.lane.b32.xlu0 %v87, 84
    %v89 = vpop.permute.xlu0 %88
    %vm90 = vcmask 786080
    %91 = vst.msk [vmem:[#allocation0] sm:$0x1] %vm90, %v89
    %s92 = scalar_lea.vmem %s0, 28
    %v93 = vld [vmem:[%s92] sm:$0x1]
    %94 = vrot.lane.b32.xlu0 %v93, 80
    %v95 = vpop.permute.xlu0 %94
    %vm96 = vcmask 753280
    %s97 = scalar_lea.vmem [#allocation0], 16
    %98 = vst.msk [vmem:[%s97] sm:$0x1] %vm96, %v95
    %s99 = scalar_lea.vmem %s0, 17
    %v100 = vld [vmem:[%s99] sm:$0x1]
    %101 = vrot.lane.b32.xlu0 %v100, 76
    %v102 = vpop.permute.xlu0 %101
    %vm103 = vcmask 720480
    %s104 = scalar_lea.vmem [#allocation0], 8
    %105 = vst.msk [vmem:[%s104] sm:$0x1] %vm103, %v102
    %s106 = scalar_lea.vmem %s0, 6
    %v107 = vld [vmem:[%s106] sm:$0x1]
    %108 = vrot.lane.b32.xlu0 %v107, 72
    %v109 = vpop.permute.xlu0 %108
    %vm110 = vcmask 687680
    %111 = vst.msk [vmem:[#allocation0] sm:$0x1] %vm110, %v109
    %s112 = scalar_lea.vmem %s0, 27
    %v113 = vld [vmem:[%s112] sm:$0x1]
    %114 = vrot.lane.b32.xlu0 %v113, 68
    %v115 = vpop.permute.xlu0 %114
    %vm116 = vcmask 654880
    %s117 = scalar_lea.vmem [#allocation0], 16
    %118 = vst.msk [vmem:[%s117] sm:$0x1] %vm116, %v115
    %s119 = scalar_lea.vmem %s0, 16
    %v120 = vld [vmem:[%s119] sm:$0x1]
    %121 = vrot.lane.b32.xlu0 %v120, 64
    %v122 = vpop.permute.xlu0 %121
    %vm123 = vcmask 622080
    %s124 = scalar_lea.vmem [#allocation0], 8
    %125 = vst.msk [vmem:[%s124] sm:$0x1] %vm123, %v122
    %s126 = scalar_lea.vmem %s0, 5
    %v127 = vld [vmem:[%s126] sm:$0x1]
    %128 = vrot.lane.b32.xlu0 %v127, 60
    %v129 = vpop.permute.xlu0 %128
    %vm130 = vcmask 589280
    %131 = vst.msk [vmem:[#allocation0] sm:$0x1] %vm130, %v129
    %s132 = scalar_lea.vmem %s0, 26
    %v133 = vld [vmem:[%s132] sm:$0x1]
    %134 = vrot.lane.b32.xlu0 %v133, 56
    %v135 = vpop.permute.xlu0 %134
    %vm136 = vcmask 556480
    %s137 = scalar_lea.vmem [#allocation0], 16
    %138 = vst.msk [vmem:[%s137] sm:$0x1] %vm136, %v135
    %s139 = scalar_lea.vmem %s0, 15
    %v140 = vld [vmem:[%s139] sm:$0x1]
    %141 = vrot.lane.b32.xlu0 %v140, 52
    %v142 = vpop.permute.xlu0 %141
    %vm143 = vcmask 523680
    %s144 = scalar_lea.vmem [#allocation0], 8
    %145 = vst.msk [vmem:[%s144] sm:$0x1] %vm143, %v142
    %s146 = scalar_lea.vmem %s0, 4
    %v147 = vld [vmem:[%s146] sm:$0x1]
    %148 = vrot.lane.b32.xlu0 %v147, 48
    %v149 = vpop.permute.xlu0 %148
    %vm150 = vcmask 490880
    %151 = vst.msk [vmem:[#allocation0] sm:$0x1] %vm150, %v149
    %s152 = scalar_lea.vmem %s0, 25
    %v153 = vld [vmem:[%s152] sm:$0x1]
    %154 = vrot.lane.b32.xlu0 %v153, 44
    %v155 = vpop.permute.xlu0 %154
    %vm156 = vcmask 458080
    %s157 = scalar_lea.vmem [#allocation0], 16
    %158 = vst.msk [vmem:[%s157] sm:$0x1] %vm156, %v155
    %s159 = scalar_lea.vmem %s0, 14
    %v160 = vld [vmem:[%s159] sm:$0x1]
    %161 = vrot.lane.b32.xlu0 %v160, 40
    %v162 = vpop.permute.xlu0 %161
    %vm163 = vcmask 425280
    %s164 = scalar_lea.vmem [#allocation0], 8
    %165 = vst.msk [vmem:[%s164] sm:$0x1] %vm163, %v162
    %s166 = scalar_lea.vmem %s0, 3
    %v167 = vld [vmem:[%s166] sm:$0x1]
    %168 = vrot.lane.b32.xlu0 %v167, 36
    %v169 = vpop.permute.xlu0 %168
    %vm170 = vcmask 392480
    %171 = vst.msk [vmem:[#allocation0] sm:$0x1] %vm170, %v169
    %s172 = scalar_lea.vmem %s0, 24
    %v173 = vld [vmem:[%s172] sm:$0x1]
    %174 = vrot.lane.b32.xlu0 %v173, 32
    %v175 = vpop.permute.xlu0 %174
    %vm176 = vcmask 359680
    %s177 = scalar_lea.vmem [#allocation0], 16
    %178 = vst.msk [vmem:[%s177] sm:$0x1] %vm176, %v175
    %s179 = scalar_lea.vmem %s0, 13
    %v180 = vld [vmem:[%s179] sm:$0x1]
    %181 = vrot.lane.b32.xlu0 %v180, 28
    %v182 = vpop.permute.xlu0 %181
    %vm183 = vcmask 326880
    %s184 = scalar_lea.vmem [#allocation0], 8
    %185 = vst.msk [vmem:[%s184] sm:$0x1] %vm183, %v182
    %s186 = scalar_lea.vmem %s0, 2
    %v187 = vld [vmem:[%s186] sm:$0x1]
    %188 = vrot.lane.b32.xlu0 %v187, 24
    %v189 = vpop.permute.xlu0 %188
    %vm190 = vcmask 294080
    %191 = vst.msk [vmem:[#allocation0] sm:$0x1] %vm190, %v189
    %s192 = scalar_lea.vmem %s0, 23
    %v193 = vld [vmem:[%s192] sm:$0x1]
    %194 = vrot.lane.b32.xlu0 %v193, 20
    %v195 = vpop.permute.xlu0 %194
    %vm196 = vcmask 261280
    %s197 = scalar_lea.vmem [#allocation0], 16
    %198 = vst.msk [vmem:[%s197] sm:$0x1] %vm196, %v195
    %s199 = scalar_lea.vmem %s0, 12
    %v200 = vld [vmem:[%s199] sm:$0x1]
    %201 = vrot.lane.b32.xlu0 %v200, 16
    %v202 = vpop.permute.xlu0 %201
    %vm203 = vcmask 228480
    %s204 = scalar_lea.vmem [#allocation0], 8
    %205 = vst.msk [vmem:[%s204] sm:$0x1] %vm203, %v202
    %s206 = scalar_lea.vmem %s0, 1
    %v207 = vld [vmem:[%s206] sm:$0x1]
    %208 = vrot.lane.b32.xlu0 %v207, 12
    %v209 = vpop.permute.xlu0 %208
    %vm210 = vcmask 195680
    %211 = vst.msk [vmem:[#allocation0] sm:$0x1] %vm210, %v209
    %s212 = scalar_lea.vmem %s0, 22
    %v213 = vld [vmem:[%s212] sm:$0x1]
    %214 = vrot.lane.b32.xlu0 %v213, 8
    %v215 = vpop.permute.xlu0 %214
    %vm216 = vcmask 162880
    %s217 = scalar_lea.vmem [#allocation0], 16
    %218 = vst.msk [vmem:[%s217] sm:$0x1] %vm216, %v215
    %s219 = scalar_lea.vmem %s0, 11
    %v220 = vld [vmem:[%s219] sm:$0x1]
    %221 = vrot.lane.b32.xlu0 %v220, 4
    %v222 = vpop.permute.xlu0 %221
    %vm223 = vcmask 130080
    %s224 = scalar_lea.vmem [#allocation0], 8
    %225 = vst.msk [vmem:[%s224] sm:$0x1] %vm223, %v222
    %s227 = sshllo.u32 0, 1
    %v229 = vld [vmem:[#allocation0] sm:%s227]
    %s230 = sshllo.u32 0, 1
    %231 = vst [vmem:[%s1] sm:%s230] %v229
    %s232 = scalar_lea.vmem [#allocation0], 8
    %v233 = vld [vmem:[%s232] sm:%s227]
    %s234 = sshllo.u32 0, 1
    %s235 = scalar_lea.vmem %s1, 1
    %236 = vst [vmem:[%s235] sm:%s234] %v233
    %s237 = scalar_lea.vmem [#allocation0], 16
    %v238 = vld [vmem:[%s237] sm:%s227]
    %s239 = sshllo.u32 0, 1
    %s240 = smul.addr 1, 2
    %s241 = scalar_lea.vmem %s1, %s240
    %242 = vst [vmem:[%s241] sm:%s239] %v238

// kernel: tile.37
$region0: #{tile.37}
  #allocation0 [shape = 's32[1]{0}', space=sflag, size = 0x4, scoped, tag = 'scoped memory for tile.37']
  %s0 = inlined_call_operand.vmem [shape: f32[6], index: 0, kind: input, shape index: {}]
  %s1 = inlined_call_operand.vmem [shape: f32[144,6], index: 1, kind: output, shape index: {}]
  // Predicated region
  $region2: #{tile.37} parent=0 // pred_check
    _
  $region3: #{tile.37} parent=0 // pred_check_branch
    %3 = sbr.rel (0) target = $region5
  $region4: #{tile.37} parent=0 // pred_region
    _
  $region5: #{tile.37} parent=0 // pred_fallthru
    _
  %v4 = vld [vmem:[%s0] ss:$0 sm:$0xff]
  %5 = vst [vmem:[%s1] sm:$0xff] %v4
  %s6 = scalar_lea.vmem %s1, 8
  %7 = vst [vmem:[%s6] sm:$0xff] %v4
  %s8 = scalar_lea.vmem %s1, 16
  %9 = vst [vmem:[%s8] sm:$0xff] %v4
  %s10 = scalar_lea.vmem %s1, 24
  %11 = vst [vmem:[%s10] sm:$0xff] %v4
  %s12 = scalar_lea.vmem %s1, 32
  %13 = vst [vmem:[%s12] sm:$0xff] %v4
  %s14 = scalar_lea.vmem %s1, 40
  %15 = vst [vmem:[%s14] sm:$0xff] %v4
  %s16 = scalar_lea.vmem %s1, 48
  %17 = vst [vmem:[%s16] sm:$0xff] %v4
  %s18 = scalar_lea.vmem %s1, 56
  %19 = vst [vmem:[%s18] sm:$0xff] %v4
  %s20 = scalar_lea.vmem %s1, 64
  %21 = vst [vmem:[%s20] sm:$0xff] %v4
  %s22 = scalar_lea.vmem %s1, 72
  %23 = vst [vmem:[%s22] sm:$0xff] %v4
  %s24 = scalar_lea.vmem %s1, 80
  %25 = vst [vmem:[%s24] sm:$0xff] %v4
  %s26 = scalar_lea.vmem %s1, 88
  %27 = vst [vmem:[%s26] sm:$0xff] %v4
  %s28 = scalar_lea.vmem %s1, 96
  %29 = vst [vmem:[%s28] sm:$0xff] %v4
  %s30 = scalar_lea.vmem %s1, 104
  %31 = vst [vmem:[%s30] sm:$0xff] %v4
  %s32 = scalar_lea.vmem %s1, 112
  %33 = vst [vmem:[%s32] sm:$0xff] %v4
  %s34 = scalar_lea.vmem %s1, 120
  %35 = vst [vmem:[%s34] sm:$0xff] %v4
  %s36 = scalar_lea.vmem %s1, 128
  %37 = vst [vmem:[%s36] sm:$0xff] %v4
  %s38 = scalar_lea.vmem %s1, 136
  %39 = vst [vmem:[%s38] sm:$0xff] %v4

// kernel: tile.39
$region0: #{tile.39}
  %s0 = inlined_call_operand.vmem [shape: f32[144,6], index: 0, kind: input, shape index: {}]
  %s1 = inlined_call_operand.vmem [shape: f32[1,864], index: 1, kind: output, shape index: {}]
  $region1: #{tile.39} parent=0
    #allocation0 [shape = 'u8[28672]{0}', space=vmem, size = 0x7000, scoped, tag = 'scoped mem for output reshape']
    %v2 = vld [vmem:[%s0] sm:$0x1]
    %s3 = scalar_lea.vmem %s0, 63
    %v4 = vld [vmem:[%s3] sm:$0x2]
    %vm5 = vcmask 1041409
    %v6 = vsel %vm5, %v4, %v2
    %s7 = scalar_lea.vmem %s0, 126
    %v8 = vld [vmem:[%s7] sm:$0x4]
    %vm9 = vcmask 1042434
    %v10 = vsel %vm9, %v8, %v6
    %vm11 = vcmask 48128
    %12 = vst.msk [vmem:[#allocation0] ss:$24 sm:$0x7] %vm11, %v10
    %s13 = scalar_lea.vmem %s0, 85
    %v14 = vld [vmem:[%s13] sm:$0x1]
    %s15 = scalar_lea.vmem %s0, 20
    %v16 = vld [vmem:[%s15] sm:$0x2]
    %vm17 = vcmask 1041409
    %v18 = vsel %vm17, %v16, %v14
    %s19 = scalar_lea.vmem %s0, 21
    %v20 = vld [vmem:[%s19] sm:$0x1]
    %s21 = scalar_lea.vmem %s0, 84
    %v22 = vld [vmem:[%s21] sm:$0x2]
    %vm23 = vcmask 1041409
    %v24 = vsel %vm23, %v22, %v20
    %vm25 = vcmask 15360
    %v26 = vsel %vm25, %v24, %v18
    %27 = vrot.lane.b32.xlu0 %v26, 126
    %v28 = vpop.permute.xlu0 %27
    %vm29 = vcmask 31744
    %s30 = scalar_lea.vmem [#allocation0], 32
    %31 = vst.msk [vmem:[%s30] ss:$-24 sm:$0x3] %vm29, %v28
    %vm32 = vcmask 1048560
    %33 = vst.msk [vmem:[#allocation0] ss:$24 sm:$0x3] %vm32, %v28
    %s34 = scalar_lea.vmem %s0, 106
    %v35 = vld [vmem:[%s34] sm:$0x1]
    %s36 = scalar_lea.vmem %s0, 41
    %v37 = vld [vmem:[%s36] sm:$0x2]
    %vm38 = vcmask 1041409
    %v39 = vsel %vm38, %v37, %v35
    %s40 = scalar_lea.vmem %s0, 106
    %v41 = vld [vmem:[%s40] sm:$0x1]
    %s42 = scalar_lea.vmem %s0, 41
    %v43 = vld [vmem:[%s42] sm:$0x2]
    %vm44 = vcmask 1041409
    %v45 = vsel %vm44, %v43, %v41
    %vm46 = vcmask 31744
    %v47 = vsel %vm46, %v45, %v39
    %48 = vrot.lane.b32.xlu0 %v47, 124
    %v49 = vpop.permute.xlu0 %48
    %vm50 = vcmask 15360
    %s51 = scalar_lea.vmem [#allocation0], 40
    %52 = vst.msk [vmem:[%s51] ss:$-24 sm:$0x3] %vm50, %v49
    %vm53 = vcmask 1048544
    %s54 = scalar_lea.vmem [#allocation0], 32
    %55 = vst.msk [vmem:[%s54] ss:$-24 sm:$0x3] %vm53, %v49
    %s56 = scalar_lea.vmem %s0, 127
    %v57 = vld [vmem:[%s56] sm:$0x1]
    %s58 = scalar_lea.vmem %s0, 62
    %v59 = vld [vmem:[%s58] sm:$0x2]
    %vm60 = vcmask 1041409
    %v61 = vsel %vm60, %v59, %v57
    %62 = vrot.lane.b32.xlu0 %v61, 122
    %v63 = vpop.permute.xlu0 %62
    %vm64 = vcmask 1048528
    %s65 = scalar_lea.vmem [#allocation0], 40
    %66 = vst.msk [vmem:[%s65] ss:$-24 sm:$0x3] %vm64, %v63
    %s67 = scalar_lea.vmem %s0, 20
    %v68 = vld [vmem:[%s67] sm:$0x1]
    %s69 = scalar_lea.vmem %s0, 83
    %v70 = vld [vmem:[%s69] sm:$0x2]
    %vm71 = vcmask 1041409
    %v72 = vsel %vm71, %v70, %v68
    %73 = vrot.lane.b32.xlu0 %v72, 120
    %v74 = vpop.permute.xlu0 %73
    %vm75 = vcmask 1032128
    %76 = vst.msk [vmem:[#allocation0] ss:$24 sm:$0x3] %vm75, %v74
    %s77 = scalar_lea.vmem %s0, 105
    %v78 = vld [vmem:[%s77] sm:$0x1]
    %s79 = scalar_lea.vmem %s0, 40
    %v80 = vld [vmem:[%s79] sm:$0x2]
    %vm81 = vcmask 1041409
    %v82 = vsel %vm81, %v80, %v78
    %83 = vrot.lane.b32.xlu0 %v82, 118
    %v84 = vpop.permute.xlu0 %83
    %vm85 = vcmask 1015728
    %s86 = scalar_lea.vmem [#allocation0], 32
    %87 = vst.msk [vmem:[%s86] ss:$-24 sm:$0x3] %vm85, %v84
    %s88 = scalar_lea.vmem %s0, 126
    %v89 = vld [vmem:[%s88] sm:$0x1]
    %s90 = scalar_lea.vmem %s0, 61
    %v91 = vld [vmem:[%s90] sm:$0x2]
    %vm92 = vcmask 1041409
    %v93 = vsel %vm92, %v91, %v89
    %94 = vrot.lane.b32.xlu0 %v93, 116
    %v95 = vpop.permute.xlu0 %94
    %vm96 = vcmask 999328
    %s97 = scalar_lea.vmem [#allocation0], 40
    %98 = vst.msk [vmem:[%s97] ss:$-24 sm:$0x3] %vm96, %v95
    %s99 = scalar_lea.vmem %s0, 19
    %v100 = vld [vmem:[%s99] sm:$0x1]
    %s101 = scalar_lea.vmem %s0, 82
    %v102 = vld [vmem:[%s101] sm:$0x2]
    %vm103 = vcmask 1041409
    %v104 = vsel %vm103, %v102, %v100
    %105 = vrot.lane.b32.xlu0 %v104, 114
    %v106 = vpop.permute.xlu0 %105
    %vm107 = vcmask 982928
    %108 = vst.msk [vmem:[#allocation0] ss:$24 sm:$0x3] %vm107, %v106
    %s109 = scalar_lea.vmem %s0, 104
    %v110 = vld [vmem:[%s109] sm:$0x1]
    %s111 = scalar_lea.vmem %s0, 39
    %v112 = vld [vmem:[%s111] sm:$0x2]
    %vm113 = vcmask 1041409
    %v114 = vsel %vm113, %v112, %v110
    %115 = vrot.lane.b32.xlu0 %v114, 112
    %v116 = vpop.permute.xlu0 %115
    %vm117 = vcmask 966528
    %s118 = scalar_lea.vmem [#allocation0], 32
    %119 = vst.msk [vmem:[%s118] ss:$-24 sm:$0x3] %vm117, %v116
    %s120 = scalar_lea.vmem %s0, 125
    %v121 = vld [vmem:[%s120] sm:$0x1]
    %s122 = scalar_lea.vmem %s0, 60
    %v123 = vld [vmem:[%s122] sm:$0x2]
    %vm124 = vcmask 1041409
    %v125 = vsel %vm124, %v123, %v121
    %126 = vrot.lane.b32.xlu0 %v125, 110
    %v127 = vpop.permute.xlu0 %126
    %vm128 = vcmask 950128
    %s129 = scalar_lea.vmem [#allocation0], 40
    %130 = vst.msk [vmem:[%s129] ss:$-24 sm:$0x3] %vm128, %v127
    %s131 = scalar_lea.vmem %s0, 18
    %v132 = vld [vmem:[%s131] sm:$0x1]
    %s133 = scalar_lea.vmem %s0, 81
    %v134 = vld [vmem:[%s133] sm:$0x2]
    %vm135 = vcmask 1041409
    %v136 = vsel %vm135, %v134, %v132
    %137 = vrot.lane.b32.xlu0 %v136, 108
    %v138 = vpop.permute.xlu0 %137
    %vm139 = vcmask 933728
    %140 = vst.msk [vmem:[#allocation0] ss:$24 sm:$0x3] %vm139, %v138
    %s141 = scalar_lea.vmem %s0, 103
    %v142 = vld [vmem:[%s141] sm:$0x1]
    %s143 = scalar_lea.vmem %s0, 38
    %v144 = vld [vmem:[%s143] sm:$0x2]
    %vm145 = vcmask 1041409
    %v146 = vsel %vm145, %v144, %v142
    %147 = vrot.lane.b32.xlu0 %v146, 106
    %v148 = vpop.permute.xlu0 %147
    %vm149 = vcmask 917328
    %s150 = scalar_lea.vmem [#allocation0], 32
    %151 = vst.msk [vmem:[%s150] ss:$-24 sm:$0x3] %vm149, %v148
    %s152 = scalar_lea.vmem %s0, 124
    %v153 = vld [vmem:[%s152] sm:$0x1]
    %s154 = scalar_lea.vmem %s0, 59
    %v155 = vld [vmem:[%s154] sm:$0x2]
    %vm156 = vcmask 1041409
    %v157 = vsel %vm156, %v155, %v153
    %158 = vrot.lane.b32.xlu0 %v157, 104
    %v159 = vpop.permute.xlu0 %158
    %vm160 = vcmask 900928
    %s161 = scalar_lea.vmem [#allocation0], 40
    %162 = vst.msk [vmem:[%s161] ss:$-24 sm:$0x3] %vm160, %v159
    %s163 = scalar_lea.vmem %s0, 17
    %v164 = vld [vmem:[%s163] sm:$0x1]
    %s165 = scalar_lea.vmem %s0, 80
    %v166 = vld [vmem:[%s165] sm:$0x2]
    %vm167 = vcmask 1041409
    %v168 = vsel %vm167, %v166, %v164
    %169 = vrot.lane.b32.xlu0 %v168, 102
    %v170 = vpop.permute.xlu0 %169
    %vm171 = vcmask 884528
    %172 = vst.msk [vmem:[#allocation0] ss:$24 sm:$0x3] %vm171, %v170
    %s173 = scalar_lea.vmem %s0, 102
    %v174 = vld [vmem:[%s173] sm:$0x1]
    %s175 = scalar_lea.vmem %s0, 37
    %v176 = vld [vmem:[%s175] sm:$0x2]
    %vm177 = vcmask 1041409
    %v178 = vsel %vm177, %v176, %v174
    %179 = vrot.lane.b32.xlu0 %v178, 100
    %v180 = vpop.permute.xlu0 %179
    %vm181 = vcmask 868128
    %s182 = scalar_lea.vmem [#allocation0], 32
    %183 = vst.msk [vmem:[%s182] ss:$-24 sm:$0x3] %vm181, %v180
    %s184 = scalar_lea.vmem %s0, 123
    %v185 = vld [vmem:[%s184] sm:$0x1]
    %s186 = scalar_lea.vmem %s0, 58
    %v187 = vld [vmem:[%s186] sm:$0x2]
    %vm188 = vcmask 1041409
    %v189 = vsel %vm188, %v187, %v185
    %190 = vrot.lane.b32.xlu0 %v189, 98
    %v191 = vpop.permute.xlu0 %190
    %vm192 = vcmask 851728
    %s193 = scalar_lea.vmem [#allocation0], 40
    %194 = vst.msk [vmem:[%s193] ss:$-24 sm:$0x3] %vm192, %v191
    %s195 = scalar_lea.vmem %s0, 16
    %v196 = vld [vmem:[%s195] sm:$0x1]
    %s197 = scalar_lea.vmem %s0, 79
    %v198 = vld [vmem:[%s197] sm:$0x2]
    %vm199 = vcmask 1041409
    %v200 = vsel %vm199, %v198, %v196
    %201 = vrot.lane.b32.xlu0 %v200, 96
    %v202 = vpop.permute.xlu0 %201
    %vm203 = vcmask 835328
    %204 = vst.msk [vmem:[#allocation0] ss:$24 sm:$0x3] %vm203, %v202
    %s205 = scalar_lea.vmem %s0, 101
    %v206 = vld [vmem:[%s205] sm:$0x1]
    %s207 = scalar_lea.vmem %s0, 36
    %v208 = vld [vmem:[%s207] sm:$0x2]
    %vm209 = vcmask 1041409
    %v210 = vsel %vm209, %v208, %v206
    %211 = vrot.lane.b32.xlu0 %v210, 94
    %v212 = vpop.permute.xlu0 %211
    %vm213 = vcmask 818928
    %s214 = scalar_lea.vmem [#allocation0], 32
    %215 = vst.msk [vmem:[%s214] ss:$-24 sm:$0x3] %vm213, %v212
    %s216 = scalar_lea.vmem %s0, 122
    %v217 = vld [vmem:[%s216] sm:$0x1]
    %s218 = scalar_lea.vmem %s0, 57
    %v219 = vld [vmem:[%s218] sm:$0x2]
    %vm220 = vcmask 1041409
    %v221 = vsel %vm220, %v219, %v217
    %222 = vrot.lane.b32.xlu0 %v221, 92
    %v223 = vpop.permute.xlu0 %222
    %vm224 = vcmask 802528
    %s225 = scalar_lea.vmem [#allocation0], 40
    %226 = vst.msk [vmem:[%s225] ss:$-24 sm:$0x3] %vm224, %v223
    %s227 = scalar_lea.vmem %s0, 15
    %v228 = vld [vmem:[%s227] sm:$0x1]
    %s229 = scalar_lea.vmem %s0, 142
    %v230 = vld [vmem:[%s229] sm:$0x2]
    %vm231 = vcmask 1041409
    %v232 = vsel %vm231, %v230, %v228
    %s233 = scalar_lea.vmem %s0, 77
    %v234 = vld [vmem:[%s233] sm:$0x4]
    %vm235 = vcmask 1042434
    %v236 = vsel %vm235, %v234, %v232
    %237 = vrot.lane.b32.xlu0 %v236, 90
    %v238 = vpop.permute.xlu0 %237
    %vm239 = vcmask 786128
    %240 = vst.msk [vmem:[#allocation0] ss:$48 sm:$0x3] %vm239, %v238
    %s241 = scalar_lea.vmem [#allocation0], 22
    %242 = vst.msk [vmem:[%s241] sm:$0x4] %vm239, %v238
    %s243 = scalar_lea.vmem %s0, 100
    %v244 = vld [vmem:[%s243] sm:$0x1]
    %s245 = scalar_lea.vmem %s0, 35
    %v246 = vld [vmem:[%s245] sm:$0x2]
    %vm247 = vcmask 1041409
    %v248 = vsel %vm247, %v246, %v244
    %249 = vrot.lane.b32.xlu0 %v248, 88
    %v250 = vpop.permute.xlu0 %249
    %vm251 = vcmask 769728
    %s252 = scalar_lea.vmem [#allocation0], 32
    %253 = vst.msk [vmem:[%s252] ss:$-24 sm:$0x3] %vm251, %v250
    %s254 = scalar_lea.vmem %s0, 121
    %v255 = vld [vmem:[%s254] sm:$0x1]
    %s256 = scalar_lea.vmem %s0, 56
    %v257 = vld [vmem:[%s256] sm:$0x2]
    %vm258 = vcmask 1041409
    %v259 = vsel %vm258, %v257, %v255
    %260 = vrot.lane.b32.xlu0 %v259, 86
    %v261 = vpop.permute.xlu0 %260
    %vm262 = vcmask 753328
    %s263 = scalar_lea.vmem [#allocation0], 40
    %264 = vst.msk [vmem:[%s263] ss:$-24 sm:$0x3] %vm262, %v261
    %s265 = scalar_lea.vmem %s0, 14
    %v266 = vld [vmem:[%s265] sm:$0x1]
    %s267 = scalar_lea.vmem %s0, 141
    %v268 = vld [vmem:[%s267] sm:$0x2]
    %vm269 = vcmask 1041409
    %v270 = vsel %vm269, %v268, %v266
    %s271 = scalar_lea.vmem %s0, 76
    %v272 = vld [vmem:[%s271] sm:$0x4]
    %vm273 = vcmask 1042434
    %v274 = vsel %vm273, %v272, %v270
    %275 = vrot.lane.b32.xlu0 %v274, 84
    %v276 = vpop.permute.xlu0 %275
    %vm277 = vcmask 736928
    %278 = vst.msk [vmem:[#allocation0] ss:$48 sm:$0x3] %vm277, %v276
    %s279 = scalar_lea.vmem [#allocation0], 22
    %280 = vst.msk [vmem:[%s279] sm:$0x4] %vm277, %v276
    %s281 = scalar_lea.vmem %s0, 99
    %v282 = vld [vmem:[%s281] sm:$0x1]
    %s283 = scalar_lea.vmem %s0, 34
    %v284 = vld [vmem:[%s283] sm:$0x2]
    %vm285 = vcmask 1041409
    %v286 = vsel %vm285, %v284, %v282
    %287 = vrot.lane.b32.xlu0 %v286, 82
    %v288 = vpop.permute.xlu0 %287
    %vm289 = vcmask 720528
    %s290 = scalar_lea.vmem [#allocation0], 32
    %291 = vst.msk [vmem:[%s290] ss:$-24 sm:$0x3] %vm289, %v288
    %s292 = scalar_lea.vmem %s0, 120
    %v293 = vld [vmem:[%s292] sm:$0x1]
    %s294 = scalar_lea.vmem %s0, 55
    %v295 = vld [vmem:[%s294] sm:$0x2]
    %vm296 = vcmask 1041409
    %v297 = vsel %vm296, %v295, %v293
    %298 = vrot.lane.b32.xlu0 %v297, 80
    %v299 = vpop.permute.xlu0 %298
    %vm300 = vcmask 704128
    %s301 = scalar_lea.vmem [#allocation0], 40
    %302 = vst.msk [vmem:[%s301] ss:$-24 sm:$0x3] %vm300, %v299
    %s303 = scalar_lea.vmem %s0, 13
    %v304 = vld [vmem:[%s303] sm:$0x1]
    %s305 = scalar_lea.vmem %s0, 140
    %v306 = vld [vmem:[%s305] sm:$0x2]
    %vm307 = vcmask 1041409
    %v308 = vsel %vm307, %v306, %v304
    %s309 = scalar_lea.vmem %s0, 75
    %v310 = vld [vmem:[%s309] sm:$0x4]
    %vm311 = vcmask 1042434
    %v312 = vsel %vm311, %v310, %v308
    %313 = vrot.lane.b32.xlu0 %v312, 78
    %v314 = vpop.permute.xlu0 %313
    %vm315 = vcmask 687728
    %316 = vst.msk [vmem:[#allocation0] ss:$48 sm:$0x3] %vm315, %v314
    %s317 = scalar_lea.vmem [#allocation0], 22
    %318 = vst.msk [vmem:[%s317] sm:$0x4] %vm315, %v314
    %s319 = scalar_lea.vmem %s0, 98
    %v320 = vld [vmem:[%s319] sm:$0x1]
    %s321 = scalar_lea.vmem %s0, 33
    %v322 = vld [vmem:[%s321] sm:$0x2]
    %vm323 = vcmask 1041409
    %v324 = vsel %vm323, %v322, %v320
    %325 = vrot.lane.b32.xlu0 %v324, 76
    %v326 = vpop.permute.xlu0 %325
    %vm327 = vcmask 671328
    %s328 = scalar_lea.vmem [#allocation0], 32
    %329 = vst.msk [vmem:[%s328] ss:$-24 sm:$0x3] %vm327, %v326
    %s330 = scalar_lea.vmem %s0, 119
    %v331 = vld [vmem:[%s330] sm:$0x1]
    %s332 = scalar_lea.vmem %s0, 54
    %v333 = vld [vmem:[%s332] sm:$0x2]
    %vm334 = vcmask 1041409
    %v335 = vsel %vm334, %v333, %v331
    %336 = vrot.lane.b32.xlu0 %v335, 74
    %v337 = vpop.permute.xlu0 %336
    %vm338 = vcmask 654928
    %s339 = scalar_lea.vmem [#allocation0], 40
    %340 = vst.msk [vmem:[%s339] ss:$-24 sm:$0x3] %vm338, %v337
    %s341 = scalar_lea.vmem %s0, 12
    %v342 = vld [vmem:[%s341] sm:$0x1]
    %s343 = scalar_lea.vmem %s0, 139
    %v344 = vld [vmem:[%s343] sm:$0x2]
    %vm345 = vcmask 1041409
    %v346 = vsel %vm345, %v344, %v342
    %s347 = scalar_lea.vmem %s0, 74
    %v348 = vld [vmem:[%s347] sm:$0x4]
    %vm349 = vcmask 1042434
    %v350 = vsel %vm349, %v348, %v346
    %351 = vrot.lane.b32.xlu0 %v350, 72
    %v352 = vpop.permute.xlu0 %351
    %vm353 = vcmask 638528
    %354 = vst.msk [vmem:[#allocation0] ss:$48 sm:$0x3] %vm353, %v352
    %s355 = scalar_lea.vmem [#allocation0], 22
    %356 = vst.msk [vmem:[%s355] sm:$0x4] %vm353, %v352
    %s357 = scalar_lea.vmem %s0, 97
    %v358 = vld [vmem:[%s357] sm:$0x1]
    %s359 = scalar_lea.vmem %s0, 32
    %v360 = vld [vmem:[%s359] sm:$0x2]
    %vm361 = vcmask 1041409
    %v362 = vsel %vm361, %v360, %v358
    %363 = vrot.lane.b32.xlu0 %v362, 70
    %v364 = vpop.permute.xlu0 %363
    %vm365 = vcmask 622128
    %s366 = scalar_lea.vmem [#allocation0], 32
    %367 = vst.msk [vmem:[%s366] ss:$-24 sm:$0x3] %vm365, %v364
    %s368 = scalar_lea.vmem %s0, 118
    %v369 = vld [vmem:[%s368] sm:$0x1]
    %s370 = scalar_lea.vmem %s0, 53
    %v371 = vld [vmem:[%s370] sm:$0x2]
    %vm372 = vcmask 1041409
    %v373 = vsel %vm372, %v371, %v369
    %374 = vrot.lane.b32.xlu0 %v373, 68
    %v375 = vpop.permute.xlu0 %374
    %vm376 = vcmask 605728
    %s377 = scalar_lea.vmem [#allocation0], 40
    %378 = vst.msk [vmem:[%s377] ss:$-24 sm:$0x3] %vm376, %v375
    %s379 = scalar_lea.vmem %s0, 11
    %v380 = vld [vmem:[%s379] sm:$0x1]
    %s381 = scalar_lea.vmem %s0, 138
    %v382 = vld [vmem:[%s381] sm:$0x2]
    %vm383 = vcmask 1041409
    %v384 = vsel %vm383, %v382, %v380
    %s385 = scalar_lea.vmem %s0, 73
    %v386 = vld [vmem:[%s385] sm:$0x4]
    %vm387 = vcmask 1042434
    %v388 = vsel %vm387, %v386, %v384
    %389 = vrot.lane.b32.xlu0 %v388, 66
    %v390 = vpop.permute.xlu0 %389
    %vm391 = vcmask 589328
    %392 = vst.msk [vmem:[#allocation0] ss:$48 sm:$0x3] %vm391, %v390
    %s393 = scalar_lea.vmem [#allocation0], 22
    %394 = vst.msk [vmem:[%s393] sm:$0x4] %vm391, %v390
    %s395 = scalar_lea.vmem %s0, 96
    %v396 = vld [vmem:[%s395] sm:$0x1]
    %s397 = scalar_lea.vmem %s0, 31
    %v398 = vld [vmem:[%s397] sm:$0x2]
    %vm399 = vcmask 1041409
    %v400 = vsel %vm399, %v398, %v396
    %401 = vrot.lane.b32.xlu0 %v400, 64
    %v402 = vpop.permute.xlu0 %401
    %vm403 = vcmask 572928
    %s404 = scalar_lea.vmem [#allocation0], 32
    %405 = vst.msk [vmem:[%s404] ss:$-24 sm:$0x3] %vm403, %v402
    %s406 = scalar_lea.vmem %s0, 117
    %v407 = vld [vmem:[%s406] sm:$0x1]
    %s408 = scalar_lea.vmem %s0, 52
    %v409 = vld [vmem:[%s408] sm:$0x2]
    %vm410 = vcmask 1041409
    %v411 = vsel %vm410, %v409, %v407
    %412 = vrot.lane.b32.xlu0 %v411, 62
    %v413 = vpop.permute.xlu0 %412
    %vm414 = vcmask 556528
    %s415 = scalar_lea.vmem [#allocation0], 40
    %416 = vst.msk [vmem:[%s415] ss:$-24 sm:$0x3] %vm414, %v413
    %s417 = scalar_lea.vmem %s0, 10
    %v418 = vld [vmem:[%s417] sm:$0x1]
    %s419 = scalar_lea.vmem %s0, 137
    %v420 = vld [vmem:[%s419] sm:$0x2]
    %vm421 = vcmask 1041409
    %v422 = vsel %vm421, %v420, %v418
    %s423 = scalar_lea.vmem %s0, 72
    %v424 = vld [vmem:[%s423] sm:$0x4]
    %vm425 = vcmask 1042434
    %v426 = vsel %vm425, %v424, %v422
    %427 = vrot.lane.b32.xlu0 %v426, 60
    %v428 = vpop.permute.xlu0 %427
    %vm429 = vcmask 540128
    %430 = vst.msk [vmem:[#allocation0] ss:$48 sm:$0x3] %vm429, %v428
    %s431 = scalar_lea.vmem [#allocation0], 22
    %432 = vst.msk [vmem:[%s431] sm:$0x4] %vm429, %v428
    %s433 = scalar_lea.vmem %s0, 95
    %v434 = vld [vmem:[%s433] sm:$0x1]
    %s435 = scalar_lea.vmem %s0, 30
    %v436 = vld [vmem:[%s435] sm:$0x2]
    %vm437 = vcmask 1041409
    %v438 = vsel %vm437, %v436, %v434
    %439 = vrot.lane.b32.xlu0 %v438, 58
    %v440 = vpop.permute.xlu0 %439
    %vm441 = vcmask 523728
    %s442 = scalar_lea.vmem [#allocation0], 32
    %443 = vst.msk [vmem:[%s442] ss:$-24 sm:$0x3] %vm441, %v440
    %s444 = scalar_lea.vmem %s0, 116
    %v445 = vld [vmem:[%s444] sm:$0x1]
    %s446 = scalar_lea.vmem %s0, 51
    %v447 = vld [vmem:[%s446] sm:$0x2]
    %vm448 = vcmask 1041409
    %v449 = vsel %vm448, %v447, %v445
    %450 = vrot.lane.b32.xlu0 %v449, 56
    %v451 = vpop.permute.xlu0 %450
    %vm452 = vcmask 507328
    %s453 = scalar_lea.vmem [#allocation0], 40
    %454 = vst.msk [vmem:[%s453] ss:$-24 sm:$0x3] %vm452, %v451
    %s455 = scalar_lea.vmem %s0, 9
    %v456 = vld [vmem:[%s455] sm:$0x1]
    %s457 = scalar_lea.vmem %s0, 136
    %v458 = vld [vmem:[%s457] sm:$0x2]
    %vm459 = vcmask 1041409
    %v460 = vsel %vm459, %v458, %v456
    %s461 = scalar_lea.vmem %s0, 71
    %v462 = vld [vmem:[%s461] sm:$0x4]
    %vm463 = vcmask 1042434
    %v464 = vsel %vm463, %v462, %v460
    %465 = vrot.lane.b32.xlu0 %v464, 54
    %v466 = vpop.permute.xlu0 %465
    %vm467 = vcmask 490928
    %468 = vst.msk [vmem:[#allocation0] ss:$48 sm:$0x3] %vm467, %v466
    %s469 = scalar_lea.vmem [#allocation0], 22
    %470 = vst.msk [vmem:[%s469] sm:$0x4] %vm467, %v466
    %s471 = scalar_lea.vmem %s0, 94
    %v472 = vld [vmem:[%s471] sm:$0x1]
    %s473 = scalar_lea.vmem %s0, 29
    %v474 = vld [vmem:[%s473] sm:$0x2]
    %vm475 = vcmask 1041409
    %v476 = vsel %vm475, %v474, %v472
    %477 = vrot.lane.b32.xlu0 %v476, 52
    %v478 = vpop.permute.xlu0 %477
    %vm479 = vcmask 474528
    %s480 = scalar_lea.vmem [#allocation0], 32
    %481 = vst.msk [vmem:[%s480] ss:$-24 sm:$0x3] %vm479, %v478
    %s482 = scalar_lea.vmem %s0, 115
    %v483 = vld [vmem:[%s482] sm:$0x1]
    %s484 = scalar_lea.vmem %s0, 50
    %v485 = vld [vmem:[%s484] sm:$0x2]
    %vm486 = vcmask 1041409
    %v487 = vsel %vm486, %v485, %v483
    %488 = vrot.lane.b32.xlu0 %v487, 50
    %v489 = vpop.permute.xlu0 %488
    %vm490 = vcmask 458128
    %s491 = scalar_lea.vmem [#allocation0], 40
    %492 = vst.msk [vmem:[%s491] ss:$-24 sm:$0x3] %vm490, %v489
    %s493 = scalar_lea.vmem %s0, 8
    %v494 = vld [vmem:[%s493] sm:$0x1]
    %s495 = scalar_lea.vmem %s0, 135
    %v496 = vld [vmem:[%s495] sm:$0x2]
    %vm497 = vcmask 1041409
    %v498 = vsel %vm497, %v496, %v494
    %s499 = scalar_lea.vmem %s0, 70
    %v500 = vld [vmem:[%s499] sm:$0x4]
    %vm501 = vcmask 1042434
    %v502 = vsel %vm501, %v500, %v498
    %503 = vrot.lane.b32.xlu0 %v502, 48
    %v504 = vpop.permute.xlu0 %503
    %vm505 = vcmask 441728
    %506 = vst.msk [vmem:[#allocation0] ss:$48 sm:$0x3] %vm505, %v504
    %s507 = scalar_lea.vmem [#allocation0], 22
    %508 = vst.msk [vmem:[%s507] sm:$0x4] %vm505, %v504
    %s509 = scalar_lea.vmem %s0, 93
    %v510 = vld [vmem:[%s509] sm:$0x1]
    %s511 = scalar_lea.vmem %s0, 28
    %v512 = vld [vmem:[%s511] sm:$0x2]
    %vm513 = vcmask 1041409
    %v514 = vsel %vm513, %v512, %v510
    %515 = vrot.lane.b32.xlu0 %v514, 46
    %v516 = vpop.permute.xlu0 %515
    %vm517 = vcmask 425328
    %s518 = scalar_lea.vmem [#allocation0], 32
    %519 = vst.msk [vmem:[%s518] ss:$-24 sm:$0x3] %vm517, %v516
    %s520 = scalar_lea.vmem %s0, 114
    %v521 = vld [vmem:[%s520] sm:$0x1]
    %s522 = scalar_lea.vmem %s0, 49
    %v523 = vld [vmem:[%s522] sm:$0x2]
    %vm524 = vcmask 1041409
    %v525 = vsel %vm524, %v523, %v521
    %526 = vrot.lane.b32.xlu0 %v525, 44
    %v527 = vpop.permute.xlu0 %526
    %vm528 = vcmask 408928
    %s529 = scalar_lea.vmem [#allocation0], 40
    %530 = vst.msk [vmem:[%s529] ss:$-24 sm:$0x3] %vm528, %v527
    %s531 = scalar_lea.vmem %s0, 7
    %v532 = vld [vmem:[%s531] sm:$0x1]
    %s533 = scalar_lea.vmem %s0, 134
    %v534 = vld [vmem:[%s533] sm:$0x2]
    %vm535 = vcmask 1041409
    %v536 = vsel %vm535, %v534, %v532
    %s537 = scalar_lea.vmem %s0, 69
    %v538 = vld [vmem:[%s537] sm:$0x4]
    %vm539 = vcmask 1042434
    %v540 = vsel %vm539, %v538, %v536
    %541 = vrot.lane.b32.xlu0 %v540, 42
    %v542 = vpop.permute.xlu0 %541
    %vm543 = vcmask 392528
    %544 = vst.msk [vmem:[#allocation0] ss:$48 sm:$0x3] %vm543, %v542
    %s545 = scalar_lea.vmem [#allocation0], 22
    %546 = vst.msk [vmem:[%s545] sm:$0x4] %vm543, %v542
    %s547 = scalar_lea.vmem %s0, 92
    %v548 = vld [vmem:[%s547] sm:$0x1]
    %s549 = scalar_lea.vmem %s0, 27
    %v550 = vld [vmem:[%s549] sm:$0x2]
    %vm551 = vcmask 1041409
    %v552 = vsel %vm551, %v550, %v548
    %553 = vrot.lane.b32.xlu0 %v552, 40
    %v554 = vpop.permute.xlu0 %553
    %vm555 = vcmask 376128
    %s556 = scalar_lea.vmem [#allocation0], 32
    %557 = vst.msk [vmem:[%s556] ss:$-24 sm:$0x3] %vm555, %v554
    %s558 = scalar_lea.vmem %s0, 113
    %v559 = vld [vmem:[%s558] sm:$0x1]
    %s560 = scalar_lea.vmem %s0, 48
    %v561 = vld [vmem:[%s560] sm:$0x2]
    %vm562 = vcmask 1041409
    %v563 = vsel %vm562, %v561, %v559
    %564 = vrot.lane.b32.xlu0 %v563, 38
    %v565 = vpop.permute.xlu0 %564
    %vm566 = vcmask 359728
    %s567 = scalar_lea.vmem [#allocation0], 40
    %568 = vst.msk [vmem:[%s567] ss:$-24 sm:$0x3] %vm566, %v565
    %s569 = scalar_lea.vmem %s0, 6
    %v570 = vld [vmem:[%s569] sm:$0x1]
    %s571 = scalar_lea.vmem %s0, 133
    %v572 = vld [vmem:[%s571] sm:$0x2]
    %vm573 = vcmask 1041409
    %v574 = vsel %vm573, %v572, %v570
    %s575 = scalar_lea.vmem %s0, 68
    %v576 = vld [vmem:[%s575] sm:$0x4]
    %vm577 = vcmask 1042434
    %v578 = vsel %vm577, %v576, %v574
    %579 = vrot.lane.b32.xlu0 %v578, 36
    %v580 = vpop.permute.xlu0 %579
    %vm581 = vcmask 343328
    %582 = vst.msk [vmem:[#allocation0] ss:$48 sm:$0x3] %vm581, %v580
    %s583 = scalar_lea.vmem [#allocation0], 22
    %584 = vst.msk [vmem:[%s583] sm:$0x4] %vm581, %v580
    %s585 = scalar_lea.vmem %s0, 91
    %v586 = vld [vmem:[%s585] sm:$0x1]
    %s587 = scalar_lea.vmem %s0, 26
    %v588 = vld [vmem:[%s587] sm:$0x2]
    %vm589 = vcmask 1041409
    %v590 = vsel %vm589, %v588, %v586
    %591 = vrot.lane.b32.xlu0 %v590, 34
    %v592 = vpop.permute.xlu0 %591
    %vm593 = vcmask 326928
    %s594 = scalar_lea.vmem [#allocation0], 32
    %595 = vst.msk [vmem:[%s594] ss:$-24 sm:$0x3] %vm593, %v592
    %s596 = scalar_lea.vmem %s0, 112
    %v597 = vld [vmem:[%s596] sm:$0x1]
    %s598 = scalar_lea.vmem %s0, 47
    %v599 = vld [vmem:[%s598] sm:$0x2]
    %vm600 = vcmask 1041409
    %v601 = vsel %vm600, %v599, %v597
    %602 = vrot.lane.b32.xlu0 %v601, 32
    %v603 = vpop.permute.xlu0 %602
    %vm604 = vcmask 310528
    %s605 = scalar_lea.vmem [#allocation0], 40
    %606 = vst.msk [vmem:[%s605] ss:$-24 sm:$0x3] %vm604, %v603
    %s607 = scalar_lea.vmem %s0, 5
    %v608 = vld [vmem:[%s607] sm:$0x1]
    %s609 = scalar_lea.vmem %s0, 132
    %v610 = vld [vmem:[%s609] sm:$0x2]
    %vm611 = vcmask 1041409
    %v612 = vsel %vm611, %v610, %v608
    %s613 = scalar_lea.vmem %s0, 67
    %v614 = vld [vmem:[%s613] sm:$0x4]
    %vm615 = vcmask 1042434
    %v616 = vsel %vm615, %v614, %v612
    %617 = vrot.lane.b32.xlu0 %v616, 30
    %v618 = vpop.permute.xlu0 %617
    %vm619 = vcmask 294128
    %620 = vst.msk [vmem:[#allocation0] ss:$48 sm:$0x3] %vm619, %v618
    %s621 = scalar_lea.vmem [#allocation0], 22
    %622 = vst.msk [vmem:[%s621] sm:$0x4] %vm619, %v618
    %s623 = scalar_lea.vmem %s0, 90
    %v624 = vld [vmem:[%s623] sm:$0x1]
    %s625 = scalar_lea.vmem %s0, 25
    %v626 = vld [vmem:[%s625] sm:$0x2]
    %vm627 = vcmask 1041409
    %v628 = vsel %vm627, %v626, %v624
    %629 = vrot.lane.b32.xlu0 %v628, 28
    %v630 = vpop.permute.xlu0 %629
    %vm631 = vcmask 277728
    %s632 = scalar_lea.vmem [#allocation0], 32
    %633 = vst.msk [vmem:[%s632] ss:$-24 sm:$0x3] %vm631, %v630
    %s634 = scalar_lea.vmem %s0, 111
    %v635 = vld [vmem:[%s634] sm:$0x1]
    %s636 = scalar_lea.vmem %s0, 46
    %v637 = vld [vmem:[%s636] sm:$0x2]
    %vm638 = vcmask 1041409
    %v639 = vsel %vm638, %v637, %v635
    %640 = vrot.lane.b32.xlu0 %v639, 26
    %v641 = vpop.permute.xlu0 %640
    %vm642 = vcmask 261328
    %s643 = scalar_lea.vmem [#allocation0], 40
    %644 = vst.msk [vmem:[%s643] ss:$-24 sm:$0x3] %vm642, %v641
    %s645 = scalar_lea.vmem %s0, 4
    %v646 = vld [vmem:[%s645] sm:$0x1]
    %s647 = scalar_lea.vmem %s0, 131
    %v648 = vld [vmem:[%s647] sm:$0x2]
    %vm649 = vcmask 1041409
    %v650 = vsel %vm649, %v648, %v646
    %s651 = scalar_lea.vmem %s0, 66
    %v652 = vld [vmem:[%s651] sm:$0x4]
    %vm653 = vcmask 1042434
    %v654 = vsel %vm653, %v652, %v650
    %655 = vrot.lane.b32.xlu0 %v654, 24
    %v656 = vpop.permute.xlu0 %655
    %vm657 = vcmask 244928
    %658 = vst.msk [vmem:[#allocation0] ss:$48 sm:$0x3] %vm657, %v656
    %s659 = scalar_lea.vmem [#allocation0], 22
    %660 = vst.msk [vmem:[%s659] sm:$0x4] %vm657, %v656
    %s661 = scalar_lea.vmem %s0, 89
    %v662 = vld [vmem:[%s661] sm:$0x1]
    %s663 = scalar_lea.vmem %s0, 24
    %v664 = vld [vmem:[%s663] sm:$0x2]
    %vm665 = vcmask 1041409
    %v666 = vsel %vm665, %v664, %v662
    %667 = vrot.lane.b32.xlu0 %v666, 22
    %v668 = vpop.permute.xlu0 %667
    %vm669 = vcmask 228528
    %s670 = scalar_lea.vmem [#allocation0], 32
    %671 = vst.msk [vmem:[%s670] ss:$-24 sm:$0x3] %vm669, %v668
    %s672 = scalar_lea.vmem %s0, 110
    %v673 = vld [vmem:[%s672] sm:$0x1]
    %s674 = scalar_lea.vmem %s0, 45
    %v675 = vld [vmem:[%s674] sm:$0x2]
    %vm676 = vcmask 1041409
    %v677 = vsel %vm676, %v675, %v673
    %678 = vrot.lane.b32.xlu0 %v677, 20
    %v679 = vpop.permute.xlu0 %678
    %vm680 = vcmask 212128
    %s681 = scalar_lea.vmem [#allocation0], 40
    %682 = vst.msk [vmem:[%s681] ss:$-24 sm:$0x3] %vm680, %v679
    %s683 = scalar_lea.vmem %s0, 3
    %v684 = vld [vmem:[%s683] sm:$0x1]
    %s685 = scalar_lea.vmem %s0, 130
    %v686 = vld [vmem:[%s685] sm:$0x2]
    %vm687 = vcmask 1041409
    %v688 = vsel %vm687, %v686, %v684
    %s689 = scalar_lea.vmem %s0, 65
    %v690 = vld [vmem:[%s689] sm:$0x4]
    %vm691 = vcmask 1042434
    %v692 = vsel %vm691, %v690, %v688
    %693 = vrot.lane.b32.xlu0 %v692, 18
    %v694 = vpop.permute.xlu0 %693
    %vm695 = vcmask 195728
    %696 = vst.msk [vmem:[#allocation0] ss:$48 sm:$0x3] %vm695, %v694
    %s697 = scalar_lea.vmem [#allocation0], 22
    %698 = vst.msk [vmem:[%s697] sm:$0x4] %vm695, %v694
    %s699 = scalar_lea.vmem %s0, 88
    %v700 = vld [vmem:[%s699] sm:$0x1]
    %s701 = scalar_lea.vmem %s0, 23
    %v702 = vld [vmem:[%s701] sm:$0x2]
    %vm703 = vcmask 1041409
    %v704 = vsel %vm703, %v702, %v700
    %705 = vrot.lane.b32.xlu0 %v704, 16
    %v706 = vpop.permute.xlu0 %705
    %vm707 = vcmask 179328
    %s708 = scalar_lea.vmem [#allocation0], 32
    %709 = vst.msk [vmem:[%s708] ss:$-24 sm:$0x3] %vm707, %v706
    %s710 = scalar_lea.vmem %s0, 109
    %v711 = vld [vmem:[%s710] sm:$0x1]
    %s712 = scalar_lea.vmem %s0, 44
    %v713 = vld [vmem:[%s712] sm:$0x2]
    %vm714 = vcmask 1041409
    %v715 = vsel %vm714, %v713, %v711
    %716 = vrot.lane.b32.xlu0 %v715, 14
    %v717 = vpop.permute.xlu0 %716
    %vm718 = vcmask 162928
    %s719 = scalar_lea.vmem [#allocation0], 40
    %720 = vst.msk [vmem:[%s719] ss:$-24 sm:$0x3] %vm718, %v717
    %s721 = scalar_lea.vmem %s0, 2
    %v722 = vld [vmem:[%s721] sm:$0x1]
    %s723 = scalar_lea.vmem %s0, 129
    %v724 = vld [vmem:[%s723] sm:$0x2]
    %vm725 = vcmask 1041409
    %v726 = vsel %vm725, %v724, %v722
    %s727 = scalar_lea.vmem %s0, 64
    %v728 = vld [vmem:[%s727] sm:$0x4]
    %vm729 = vcmask 1042434
    %v730 = vsel %vm729, %v728, %v726
    %731 = vrot.lane.b32.xlu0 %v730, 12
    %v732 = vpop.permute.xlu0 %731
    %vm733 = vcmask 146528
    %734 = vst.msk [vmem:[#allocation0] ss:$48 sm:$0x3] %vm733, %v732
    %s735 = scalar_lea.vmem [#allocation0], 22
    %736 = vst.msk [vmem:[%s735] sm:$0x4] %vm733, %v732
    %s737 = scalar_lea.vmem %s0, 87
    %v738 = vld [vmem:[%s737] sm:$0x1]
    %s739 = scalar_lea.vmem %s0, 22
    %v740 = vld [vmem:[%s739] sm:$0x2]
    %vm741 = vcmask 1041409
    %v742 = vsel %vm741, %v740, %v738
    %743 = vrot.lane.b32.xlu0 %v742, 10
    %v744 = vpop.permute.xlu0 %743
    %vm745 = vcmask 130128
    %s746 = scalar_lea.vmem [#allocation0], 32
    %747 = vst.msk [vmem:[%s746] ss:$-24 sm:$0x3] %vm745, %v744
    %s748 = scalar_lea.vmem %s0, 108
    %v749 = vld [vmem:[%s748] sm:$0x1]
    %s750 = scalar_lea.vmem %s0, 43
    %v751 = vld [vmem:[%s750] sm:$0x2]
    %vm752 = vcmask 1041409
    %v753 = vsel %vm752, %v751, %v749
    %754 = vrot.lane.b32.xlu0 %v753, 8
    %v755 = vpop.permute.xlu0 %754
    %vm756 = vcmask 113728
    %s757 = scalar_lea.vmem [#allocation0], 40
    %758 = vst.msk [vmem:[%s757] ss:$-24 sm:$0x3] %vm756, %v755
    %s759 = scalar_lea.vmem %s0, 1
    %v760 = vld [vmem:[%s759] sm:$0x1]
    %s761 = scalar_lea.vmem %s0, 128
    %v762 = vld [vmem:[%s761] sm:$0x2]
    %vm763 = vcmask 1041409
    %v764 = vsel %vm763, %v762, %v760
    %s765 = scalar_lea.vmem %s0, 63
    %v766 = vld [vmem:[%s765] sm:$0x4]
    %vm767 = vcmask 1042434
    %v768 = vsel %vm767, %v766, %v764
    %769 = vrot.lane.b32.xlu0 %v768, 6
    %v770 = vpop.permute.xlu0 %769
    %vm771 = vcmask 97328
    %772 = vst.msk [vmem:[#allocation0] ss:$48 sm:$0x3] %vm771, %v770
    %s773 = scalar_lea.vmem [#allocation0], 22
    %774 = vst.msk [vmem:[%s773] sm:$0x4] %vm771, %v770
    %s775 = scalar_lea.vmem %s0, 86
    %v776 = vld [vmem:[%s775] sm:$0x1]
    %s777 = scalar_lea.vmem %s0, 21
    %v778 = vld [vmem:[%s777] sm:$0x2]
    %vm779 = vcmask 1041409
    %v780 = vsel %vm779, %v778, %v776
    %781 = vrot.lane.b32.xlu0 %v780, 4
    %v782 = vpop.permute.xlu0 %781
    %vm783 = vcmask 80928
    %s784 = scalar_lea.vmem [#allocation0], 32
    %785 = vst.msk [vmem:[%s784] ss:$-24 sm:$0x3] %vm783, %v782
    %s786 = scalar_lea.vmem %s0, 107
    %v787 = vld [vmem:[%s786] sm:$0x1]
    %s788 = scalar_lea.vmem %s0, 42
    %v789 = vld [vmem:[%s788] sm:$0x2]
    %vm790 = vcmask 1041409
    %v791 = vsel %vm790, %v789, %v787
    %792 = vrot.lane.b32.xlu0 %v791, 2
    %v793 = vpop.permute.xlu0 %792
    %vm794 = vcmask 64528
    %s795 = scalar_lea.vmem [#allocation0], 40
    %796 = vst.msk [vmem:[%s795] ss:$-24 sm:$0x3] %vm794, %v793
    %s798 = sshllo.u32 0, 1
    %v800 = vld [vmem:[#allocation0] sm:%s798]
    %s801 = sshllo.u32 0, 1
    %802 = vst [vmem:[%s1] sm:%s801] %v800
    %s803 = scalar_lea.vmem [#allocation0], 8
    %v804 = vld [vmem:[%s803] sm:%s798]
    %s805 = sshllo.u32 0, 1
    %s806 = scalar_lea.vmem %s1, 1
    %807 = vst [vmem:[%s806] sm:%s805] %v804
    %s808 = scalar_lea.vmem [#allocation0], 16
    %v809 = vld [vmem:[%s808] sm:%s798]
    %s810 = sshllo.u32 0, 1
    %s811 = smul.addr 1, 2
    %s812 = scalar_lea.vmem %s1, %s811
    %813 = vst [vmem:[%s812] sm:%s810] %v809
    %s814 = scalar_lea.vmem [#allocation0], 24
    %v815 = vld [vmem:[%s814] sm:%s798]
    %s816 = sshllo.u32 0, 1
    %s817 = smul.addr 1, 3
    %s818 = scalar_lea.vmem %s1, %s817
    %819 = vst [vmem:[%s818] sm:%s816] %v815
    %s820 = scalar_lea.vmem [#allocation0], 32
    %v821 = vld [vmem:[%s820] sm:%s798]
    %s822 = sshllo.u32 0, 1
    %s823 = smul.addr 1, 4
    %s824 = scalar_lea.vmem %s1, %s823
    %825 = vst [vmem:[%s824] sm:%s822] %v821
    %s826 = scalar_lea.vmem [#allocation0], 40
    %v827 = vld [vmem:[%s826] sm:%s798]
    %s828 = sshllo.u32 0, 1
    %s829 = smul.addr 1, 5
    %s830 = scalar_lea.vmem %s1, %s829
    %831 = vst [vmem:[%s830] sm:%s828] %v827
    %s832 = scalar_lea.vmem [#allocation0], 48
    %v833 = vld [vmem:[%s832] sm:%s798]
    %s834 = sshllo.u32 0, 1
    %s835 = smul.addr 1, 6
    %s836 = scalar_lea.vmem %s1, %s835
    %837 = vst [vmem:[%s836] sm:%s834] %v833

// kernel: network_forward.3
$region0: #{network_forward.3}
  #allocation0 [shape = 'u32[]', space=smem, size = 0x4, offset = 0x4, fixed_abs, tag = 'smem constant byte address 0x4 - core index']
  #allocation1 [shape = 'u32[144,128]{1,0:T(1,128)}', space=vmem, size = 0x12000, scoped, tag = 'internal scratch']
  %s0 = inlined_call_operand.vmem [shape: f32[1536,168], index: 0, kind: input, shape index: {}]
  %s1 = inlined_call_operand.vmem [shape: f32[168,400], index: 1, kind: input, shape index: {}]
  %s2 = inlined_call_operand.vmem [shape: f32[1,144], index: 2, kind: input, shape index: {}]
  %s3 = inlined_call_operand.vmem [shape: f32[288,72], index: 3, kind: input, shape index: {}]
  %s4 = inlined_call_operand.vmem [shape: f32[1536,72], index: 4, kind: output, shape index: {0}]
  %s5 = inlined_call_operand.vmem [shape: f32[2,1,72], index: 5, kind: output, shape index: {1}]
  %s6 = inlined_call_operand.vmem [shape: f32[2,1,72], index: 6, kind: output, shape index: {2}]
  %7 = xla_tuple %s4, %s5, %s6
  %s8 = sld [smem:[#allocation0]]
  $region65: #{network_forward.3} parent=0
    _
  %s10 = ssub.s32 1, %s8
  %s11 = scalar_select 0, %s10, %s8
  loop: start=0, step=1, limit=4
  $region2: #{network_forward.3} parent=0 // loop_pre_header
    _
  $region3: #{network_forward.3} parent=0 // loop_header
    %s13 = sphi 0, %s17
    %p14 = scmp.ge.s32.totalorder %s13, 4
    %s23 = sphi 0, %s25
    %s26 = sphi 0, %s23
    %s27 = sphi 0, %s26
    %s43 = sphi 0, %s27
    %s47 = sphi 0, %s47
    %s49 = sphi 0, %s47
    %s50 = sphi 0, %s49
    %s64 = sphi 0, %s50
    %s68 = sphi 0, %s68
    %s70 = sphi 0, %s68
    %s71 = sphi 0, %s70
    %s85 = sphi 0, %s71
    %s89 = sphi 0, %s89
    %s91 = sphi 0, %s89
    %s92 = sphi 0, %s91
    %s106 = sphi 0, %s92
    %s112 = sphi 0, %s114
    %s115 = sphi 0, %s112
    %s116 = sphi 0, %s115
    %s132 = sphi 0, %s116
    %s138 = sphi 0, %s140
    %s141 = sphi 0, %s138
    %s142 = sphi 0, %s141
    %s158 = sphi 0, %s142
    %s164 = sphi 0, %s166
    %s167 = sphi 0, %s164
    %s168 = sphi 0, %s167
    %s184 = sphi 0, %s168
  $region4: #{network_forward.3} parent=0 // loop_header_branch
    %16 = sbr.rel (%p14) target = $region8
  $region5: #{network_forward.3} parent=0 // loop_body
    %s18 = ssub.s32 %s13, 1
    %s19 = ssub.s32 %s13, 2
    %s20 = sadd.s32 %s13, 1
    %s21 = ssub.s32 %s13, %s20
    %p22 = scmp.eq.s32.totalorder %s21, 0
    %s24 = sadd.s32 %s23, 1
    %s25 = scalar_select %p22, %s23, %s24
    %p28 = pneg %p22
    %p29 = scmp.eq.s32.totalorder %s13, 1
    %p30 = por %p28, %p29
    %p31 = scmp.ne.s32.totalorder %s23, %s26
    %p32 = scmp.eq.s32.totalorder %s13, 0
    %p33 = por %p31, %p32
    %p34 = scmp.ne.s32.totalorder %s23, %s26
    %p35 = scmp.eq.s32.totalorder %s18, 1
    %p36 = por %p34, %p35
    %p37 = scmp.ne.s32.totalorder %s26, %s27
    %p38 = scmp.eq.s32.totalorder %s18, 0
    %p39 = por %p37, %p38
    %p40 = scmp.ne.s32.totalorder %s26, %s27
    %p41 = scmp.eq.s32.totalorder %s19, 1
    %p42 = por %p40, %p41
    %p44 = scmp.ne.s32.totalorder %s27, %s43
    %p45 = scmp.eq.s32.totalorder %s19, 0
    %p46 = por %p44, %p45
    %s48 = sadd.s32 %s47, 1
    %p51 = scmp.eq.s32.totalorder %s13, 1
    %p52 = scmp.ne.s32.totalorder %s47, %s49
    %p53 = scmp.eq.s32.totalorder %s13, 0
    %p54 = por %p52, %p53
    %p55 = scmp.ne.s32.totalorder %s47, %s49
    %p56 = scmp.eq.s32.totalorder %s18, 1
    %p57 = por %p55, %p56
    %p58 = scmp.ne.s32.totalorder %s49, %s50
    %p59 = scmp.eq.s32.totalorder %s18, 0
    %p60 = por %p58, %p59
    %p61 = scmp.ne.s32.totalorder %s49, %s50
    %p62 = scmp.eq.s32.totalorder %s19, 1
    %p63 = por %p61, %p62
    %p65 = scmp.ne.s32.totalorder %s50, %s64
    %p66 = scmp.eq.s32.totalorder %s19, 0
    %p67 = por %p65, %p66
    %s69 = sadd.s32 %s68, 1
    %p72 = scmp.eq.s32.totalorder %s13, 1
    %p73 = scmp.ne.s32.totalorder %s68, %s70
    %p74 = scmp.eq.s32.totalorder %s13, 0
    %p75 = por %p73, %p74
    %p76 = scmp.ne.s32.totalorder %s68, %s70
    %p77 = scmp.eq.s32.totalorder %s18, 1
    %p78 = por %p76, %p77
    %p79 = scmp.ne.s32.totalorder %s70, %s71
    %p80 = scmp.eq.s32.totalorder %s18, 0
    %p81 = por %p79, %p80
    %p82 = scmp.ne.s32.totalorder %s70, %s71
    %p83 = scmp.eq.s32.totalorder %s19, 1
    %p84 = por %p82, %p83
    %p86 = scmp.ne.s32.totalorder %s71, %s85
    %p87 = scmp.eq.s32.totalorder %s19, 0
    %p88 = por %p86, %p87
    %s90 = sadd.s32 %s89, 1
    %p93 = scmp.eq.s32.totalorder %s13, 1
    %p94 = scmp.ne.s32.totalorder %s89, %s91
    %p95 = scmp.eq.s32.totalorder %s13, 0
    %p96 = por %p94, %p95
    %p97 = scmp.ne.s32.totalorder %s89, %s91
    %p98 = scmp.eq.s32.totalorder %s18, 1
    %p99 = por %p97, %p98
    %p100 = scmp.ne.s32.totalorder %s91, %s92
    %p101 = scmp.eq.s32.totalorder %s18, 0
    %p102 = por %p100, %p101
    %p103 = scmp.ne.s32.totalorder %s91, %s92
    %p104 = scmp.eq.s32.totalorder %s19, 1
    %p105 = por %p103, %p104
    %p107 = scmp.ne.s32.totalorder %s92, %s106
    %p108 = scmp.eq.s32.totalorder %s19, 0
    %p109 = por %p107, %p108
    %s110 = ssub.s32 %s13, %s20
    %p111 = scmp.eq.s32.totalorder %s110, 0
    %s113 = sadd.s32 %s112, 1
    %s114 = scalar_select %p111, %s112, %s113
    %p117 = pneg %p111
    %p118 = scmp.eq.s32.totalorder %s13, 1
    %p119 = por %p117, %p118
    %p120 = scmp.ne.s32.totalorder %s112, %s115
    %p121 = scmp.eq.s32.totalorder %s13, 0
    %p122 = por %p120, %p121
    %p123 = scmp.ne.s32.totalorder %s112, %s115
    %p124 = scmp.eq.s32.totalorder %s18, 1
    %p125 = por %p123, %p124
    %p126 = scmp.ne.s32.totalorder %s115, %s116
    %p127 = scmp.eq.s32.totalorder %s18, 0
    %p128 = por %p126, %p127
    %p129 = scmp.ne.s32.totalorder %s115, %s116
    %p130 = scmp.eq.s32.totalorder %s19, 1
    %p131 = por %p129, %p130
    %p133 = scmp.ne.s32.totalorder %s116, %s132
    %p134 = scmp.eq.s32.totalorder %s19, 0
    %p135 = por %p133, %p134
    %s136 = ssub.s32 %s13, %s20
    %p137 = scmp.eq.s32.totalorder %s136, 0
    %s139 = sadd.s32 %s138, 1
    %s140 = scalar_select %p137, %s138, %s139
    %p143 = pneg %p137
    %p144 = scmp.eq.s32.totalorder %s13, 1
    %p145 = por %p143, %p144
    %p146 = scmp.ne.s32.totalorder %s138, %s141
    %p147 = scmp.eq.s32.totalorder %s13, 0
    %p148 = por %p146, %p147
    %p149 = scmp.ne.s32.totalorder %s138, %s141
    %p150 = scmp.eq.s32.totalorder %s18, 1
    %p151 = por %p149, %p150
    %p152 = scmp.ne.s32.totalorder %s141, %s142
    %p153 = scmp.eq.s32.totalorder %s18, 0
    %p154 = por %p152, %p153
    %p155 = scmp.ne.s32.totalorder %s141, %s142
    %p156 = scmp.eq.s32.totalorder %s19, 1
    %p157 = por %p155, %p156
    %p159 = scmp.ne.s32.totalorder %s142, %s158
    %p160 = scmp.eq.s32.totalorder %s19, 0
    %p161 = por %p159, %p160
    %s162 = ssub.s32 %s13, %s20
    %p163 = scmp.eq.s32.totalorder %s162, 0
    %s165 = sadd.s32 %s164, 1
    %s166 = scalar_select %p163, %s164, %s165
    %p169 = pneg %p163
    %p170 = scmp.eq.s32.totalorder %s13, 1
    %p171 = por %p169, %p170
    %p172 = scmp.ne.s32.totalorder %s164, %s167
    %p173 = scmp.eq.s32.totalorder %s13, 0
    %p174 = por %p172, %p173
    %p175 = scmp.ne.s32.totalorder %s164, %s167
    %p176 = scmp.eq.s32.totalorder %s18, 1
    %p177 = por %p175, %p176
    %p178 = scmp.ne.s32.totalorder %s167, %s168
    %p179 = scmp.eq.s32.totalorder %s18, 0
    %p180 = por %p178, %p179
    %p181 = scmp.ne.s32.totalorder %s167, %s168
    %p182 = scmp.eq.s32.totalorder %s19, 1
    %p183 = por %p181, %p182
    %p185 = scmp.ne.s32.totalorder %s168, %s184
    %p186 = scmp.eq.s32.totalorder %s19, 0
    %p187 = por %p185, %p186
    %p188 = scmp.le.s32.totalorder 1, %s13
    %p189 = scmp.lt.s32.totalorder %s13, 3
    %p190 = pnand %p188, %p189
    %p191 = pneg %p190
    // Predicated region
    $region9: #{network_forward.3} parent=5 // pred_check
      _
    $region10: #{network_forward.3} parent=5 // pred_check_branch
      %193 = sbr.rel (%p190) target = $region12
    $region11: #{network_forward.3} parent=5 // pred_region
      %s194 = ssub.s32 %s13, 1
      // Predicated region
      $region13: #{network_forward.3} parent=11 // pred_check
        %p195 = pneg %p60
      $region14: #{network_forward.3} parent=11 // pred_check_branch
        %197 = sbr.rel (%p195) target = $region16
      $region15: #{network_forward.3} parent=11 // pred_region
        _
      $region16: #{network_forward.3} parent=11 // pred_fallthru
        _
      // Predicated region
      $region17: #{network_forward.3} parent=11 // pred_check
        %p198 = pneg %p81
      $region18: #{network_forward.3} parent=11 // pred_check_branch
        %200 = sbr.rel (%p198) target = $region20
      $region19: #{network_forward.3} parent=11 // pred_region
        _
      $region20: #{network_forward.3} parent=11 // pred_fallthru
        _
      // Predicated region
      $region21: #{network_forward.3} parent=11 // pred_check
        %p201 = pneg %p102
      $region22: #{network_forward.3} parent=11 // pred_check_branch
        %203 = sbr.rel (%p201) target = $region24
      $region23: #{network_forward.3} parent=11 // pred_region
        _
      $region24: #{network_forward.3} parent=11 // pred_fallthru
        _
    $region12: #{network_forward.3} parent=5 // pred_fallthru
      _
    %p204 = scmp.lt.s32.totalorder %s13, 2
    // Predicated region
    $region25: #{network_forward.3} parent=5 // pred_check
      %p205 = pneg %p204
    $region26: #{network_forward.3} parent=5 // pred_check_branch
      %207 = sbr.rel (%p205) target = $region28
    $region27: #{network_forward.3} parent=5 // pred_region
      // Predicated region
      $region29: #{network_forward.3} parent=27 // pred_check
        %p208 = pneg %p33
      $region30: #{network_forward.3} parent=27 // pred_check_branch
        %210 = sbr.rel (%p208) target = $region32
      $region31: #{network_forward.3} parent=27 // pred_region
        %s211 = smul.u32 96, %s13
        %p212 = scmp.lt.s32.totalorder %s211, 191
        %s213 = scalar_select %p212, %s211, 191
        %s214 = smul.addr %s213, 2
        %s215 = smul.addr %s214, 8
        %s216 = scalar_lea.vmem %s0, %s215
        %s217 = smul.u32 96, %s13
      $region32: #{network_forward.3} parent=27 // pred_fallthru
        _
    $region28: #{network_forward.3} parent=5 // pred_fallthru
      _
    %p218 = scmp.le.s32.totalorder 1, %s13
    %p219 = scmp.lt.s32.totalorder %s13, 3
    %p220 = pnand %p218, %p219
    %p221 = pneg %p220
    // Predicated region
    $region33: #{network_forward.3} parent=5 // pred_check
      _
    $region34: #{network_forward.3} parent=5 // pred_check_branch
      %223 = sbr.rel (%p220) target = $region36
    $region35: #{network_forward.3} parent=5 // pred_region
      %s224 = ssub.s32 %s13, 1
      %s225 = smul.u32 96, %s18
      %p226 = scmp.lt.s32.totalorder %s225, 191
      %s227 = scalar_select %p226, %s225, 191
      %s228 = smul.addr %s227, 2
      %s229 = smul.addr %s228, 8
      %s230 = scalar_lea.vmem %s0, %s229
      %p231 = pneg %p39
      %p232 = pneg %p36
      %p233 = pneg %p60
      %p234 = pneg %p57
      %p235 = pneg %p81
      %p236 = pneg %p78
      %p237 = pneg %p102
      %p238 = pneg %p99
      %p239 = pneg %p128
      %p240 = pneg %p125
      %s241 = smul.u32 96, %s18
      %p242 = scmp.lt.s32.totalorder %s241, 191
      %s243 = scalar_select %p242, %s241, 191
      %s244 = smul.addr %s243, 8
      %s245 = scalar_lea.vmem %s4, %s244
      %p246 = pneg %p154
      %p247 = pneg %p151
      %p248 = scmp.lt.s32.totalorder %s18, 1
      %s249 = scalar_select %p248, %s18, 1
      %s250 = scalar_lea.vmem %s5, %s249
      %p251 = pneg %p180
      %p252 = pneg %p177
      %p253 = scmp.lt.s32.totalorder %s18, 1
      %s254 = scalar_select %p253, %s18, 1
      %s255 = scalar_lea.vmem %s6, %s254
      %s256 = smul.u32 96, %s18
      %p257 = scmp.lt.s32.totalorder %s256, 191
      %s258 = scalar_select %p257, %s256, 191
      %s259 = smul.addr %s258, 2
      %s260 = smul.addr %s259, 8
      %s261 = scalar_lea.vmem %s0, %s260
      %s262 = smul.u32 96, %s18
      %s263 = smul.u32 96, %s18
      %p264 = scmp.lt.s32.totalorder %s263, 191
      %s265 = scalar_select %p264, %s263, 191
      %s266 = smul.addr %s265, 8
      %s267 = scalar_lea.vmem %s4, %s266
      %s268 = smul.u32 96, %s18
      %p269 = scmp.lt.s32.totalorder %s18, 1
      %s270 = scalar_select %p269, %s18, 1
      %s271 = scalar_lea.vmem %s5, %s270
      %p272 = scmp.lt.s32.totalorder %s18, 1
      %s273 = scalar_select %p272, %s18, 1
      %s274 = scalar_lea.vmem %s6, %s273
      %v275 = vld [vmem:[%s261] sm:$0xff]
      %v276 = vld [vmem:[%s261 + $0x8] sm:$0xff]
      %v277 = vld [vmem:[%s261 + $0x10] sm:$0xff]
      %v278 = vld [vmem:[%s261 + $0x18] sm:$0xff]
      %v279 = vld [vmem:[%s261 + $0x20] sm:$0xff]
      %v280 = vld [vmem:[%s261 + $0x28] sm:$0xff]
      %v281 = vld [vmem:[%s261 + $0x30] sm:$0xff]
      %v282 = vld [vmem:[%s261 + $0x38] sm:$0xff]
      %v283 = vld [vmem:[%s261 + $0x40] sm:$0xff]
      %v284 = vld [vmem:[%s261 + $0x48] sm:$0xff]
      %v285 = vld [vmem:[%s261 + $0x50] sm:$0xff]
      %v286 = vld [vmem:[%s261 + $0x58] sm:$0xff]
      %v287 = vld [vmem:[%s261 + $0x60] sm:$0xff]
      %v288 = vld [vmem:[%s261 + $0x68] sm:$0xff]
      %v289 = vld [vmem:[%s261 + $0x70] sm:$0xff]
      %v290 = vld [vmem:[%s261 + $0x78] sm:$0xff]
      %v291 = vld [vmem:[%s261 + $0x80] sm:$0xff]
      %v292 = vld [vmem:[%s261 + $0x88] sm:$0xff]
      %v293 = vld [vmem:[%s261 + $0x90] sm:$0xff]
      %v294 = vld [vmem:[%s261 + $0x98] sm:$0xff]
      %v295 = vld [vmem:[%s261 + $0xa0] sm:$0xff]
      %v296 = vld [vmem:[%s261 + $0xa8] sm:$0xff]
      %v297 = vld [vmem:[%s261 + $0xb0] sm:$0xff]
      %v298 = vld [vmem:[%s261 + $0xb8] sm:$0xff]
      %v299 = vld [vmem:[%s261 + $0xc0] sm:$0xff]
      %v300 = vld [vmem:[%s261 + $0xc8] sm:$0xff]
      %v301 = vld [vmem:[%s261 + $0xd0] sm:$0xff]
      %v302 = vld [vmem:[%s261 + $0xd8] sm:$0xff]
      %v303 = vld [vmem:[%s261 + $0xe0] sm:$0xff]
      %v304 = vld [vmem:[%s261 + $0xe8] sm:$0xff]
      %v305 = vld [vmem:[%s261 + $0xf0] sm:$0xff]
      %v306 = vld [vmem:[%s261 + $0xf8] sm:$0xff]
      %v307 = vld [vmem:[%s261 + $0x100] sm:$0xff]
      %v308 = vld [vmem:[%s261 + $0x108] sm:$0xff]
      %v309 = vld [vmem:[%s261 + $0x110] sm:$0xff]
      %v310 = vld [vmem:[%s261 + $0x118] sm:$0xff]
      %v311 = vld [vmem:[%s261 + $0x120] sm:$0xff]
      %v312 = vld [vmem:[%s261 + $0x128] sm:$0xff]
      %v313 = vld [vmem:[%s261 + $0x130] sm:$0xff]
      %v314 = vld [vmem:[%s261 + $0x138] sm:$0xff]
      %v315 = vld [vmem:[%s261 + $0x140] sm:$0xff]
      %v316 = vld [vmem:[%s261 + $0x148] sm:$0xff]
      %v317 = vld [vmem:[%s261 + $0x150] sm:$0xff]
      %v318 = vld [vmem:[%s261 + $0x158] sm:$0xff]
      %v319 = vld [vmem:[%s261 + $0x160] sm:$0xff]
      %v320 = vld [vmem:[%s261 + $0x168] sm:$0xff]
      %v321 = vld [vmem:[%s261 + $0x170] sm:$0xff]
      %v322 = vld [vmem:[%s261 + $0x178] sm:$0xff]
      %v323 = vld [vmem:[%s261 + $0x180] sm:$0xff]
      %v324 = vld [vmem:[%s261 + $0x188] sm:$0xff]
      %v325 = vld [vmem:[%s261 + $0x190] sm:$0xff]
      %v326 = vld [vmem:[%s261 + $0x198] sm:$0xff]
      %v327 = vld [vmem:[%s261 + $0x1a0] sm:$0xff]
      %v328 = vld [vmem:[%s261 + $0x1a8] sm:$0xff]
      %v329 = vld [vmem:[%s261 + $0x1b0] sm:$0xff]
      %v330 = vld [vmem:[%s261 + $0x1b8] sm:$0xff]
      %v331 = vld [vmem:[%s261 + $0x1c0] sm:$0xff]
      %v332 = vld [vmem:[%s261 + $0x1c8] sm:$0xff]
      %v333 = vld [vmem:[%s261 + $0x1d0] sm:$0xff]
      %v334 = vld [vmem:[%s261 + $0x1d8] sm:$0xff]
      %v335 = vld [vmem:[%s261 + $0x1e0] sm:$0xff]
      %v336 = vld [vmem:[%s261 + $0x1e8] sm:$0xff]
      %v337 = vld [vmem:[%s261 + $0x1f0] sm:$0xff]
      %v338 = vld [vmem:[%s261 + $0x1f8] sm:$0xff]
      %v339 = vld [vmem:[%s261 + $0x200] sm:$0xff]
      %v340 = vld [vmem:[%s261 + $0x208] sm:$0xff]
      %v341 = vld [vmem:[%s261 + $0x210] sm:$0xff]
      %v342 = vld [vmem:[%s261 + $0x218] sm:$0xff]
      %v343 = vld [vmem:[%s261 + $0x220] sm:$0xff]
      %v344 = vld [vmem:[%s261 + $0x228] sm:$0xff]
      %v345 = vld [vmem:[%s261 + $0x230] sm:$0xff]
      %v346 = vld [vmem:[%s261 + $0x238] sm:$0xff]
      %v347 = vld [vmem:[%s261 + $0x240] sm:$0xff]
      %v348 = vld [vmem:[%s261 + $0x248] sm:$0xff]
      %v349 = vld [vmem:[%s261 + $0x250] sm:$0xff]
      %v350 = vld [vmem:[%s261 + $0x258] sm:$0xff]
      %v351 = vld [vmem:[%s261 + $0x260] sm:$0xff]
      %v352 = vld [vmem:[%s261 + $0x268] sm:$0xff]
      %v353 = vld [vmem:[%s261 + $0x270] sm:$0xff]
      %v354 = vld [vmem:[%s261 + $0x278] sm:$0xff]
      %v355 = vld [vmem:[%s261 + $0x280] sm:$0xff]
      %v356 = vld [vmem:[%s261 + $0x288] sm:$0xff]
      %v357 = vld [vmem:[%s261 + $0x290] sm:$0xff]
      %v358 = vld [vmem:[%s261 + $0x298] sm:$0xff]
      %v359 = vld [vmem:[%s261 + $0x2a0] sm:$0xff]
      %v360 = vld [vmem:[%s261 + $0x2a8] sm:$0xff]
      %v361 = vld [vmem:[%s261 + $0x2b0] sm:$0xff]
      %v362 = vld [vmem:[%s261 + $0x2b8] sm:$0xff]
      %v363 = vld [vmem:[%s261 + $0x2c0] sm:$0xff]
      %v364 = vld [vmem:[%s261 + $0x2c8] sm:$0xff]
      %v365 = vld [vmem:[%s261 + $0x2d0] sm:$0xff]
      %v366 = vld [vmem:[%s261 + $0x2d8] sm:$0xff]
      %v367 = vld [vmem:[%s261 + $0x2e0] sm:$0xff]
      %v368 = vld [vmem:[%s261 + $0x2e8] sm:$0xff]
      %v369 = vld [vmem:[%s261 + $0x2f0] sm:$0xff]
      %v370 = vld [vmem:[%s261 + $0x2f8] sm:$0xff]
      %v371 = vld [vmem:[%s261 + $0x300] sm:$0xff]
      %v372 = vld [vmem:[%s261 + $0x308] sm:$0xff]
      %v373 = vld [vmem:[%s261 + $0x310] sm:$0xff]
      %v374 = vld [vmem:[%s261 + $0x318] sm:$0xff]
      %v375 = vld [vmem:[%s261 + $0x320] sm:$0xff]
      %v376 = vld [vmem:[%s261 + $0x328] sm:$0xff]
      %v377 = vld [vmem:[%s261 + $0x330] sm:$0xff]
      %v378 = vld [vmem:[%s261 + $0x338] sm:$0xff]
      %v379 = vld [vmem:[%s261 + $0x340] sm:$0xff]
      %v380 = vld [vmem:[%s261 + $0x348] sm:$0xff]
      %v381 = vld [vmem:[%s261 + $0x350] sm:$0xff]
      %v382 = vld [vmem:[%s261 + $0x358] sm:$0xff]
      %v383 = vld [vmem:[%s261 + $0x360] sm:$0xff]
      %v384 = vld [vmem:[%s261 + $0x368] sm:$0xff]
      %v385 = vld [vmem:[%s261 + $0x370] sm:$0xff]
      %v386 = vld [vmem:[%s261 + $0x378] sm:$0xff]
      %v387 = vld [vmem:[%s261 + $0x380] sm:$0xff]
      %v388 = vld [vmem:[%s261 + $0x388] sm:$0xff]
      %v389 = vld [vmem:[%s261 + $0x390] sm:$0xff]
      %v390 = vld [vmem:[%s261 + $0x398] sm:$0xff]
      %v391 = vld [vmem:[%s261 + $0x3a0] sm:$0xff]
      %v392 = vld [vmem:[%s261 + $0x3a8] sm:$0xff]
      %v393 = vld [vmem:[%s261 + $0x3b0] sm:$0xff]
      %v394 = vld [vmem:[%s261 + $0x3b8] sm:$0xff]
      %v395 = vld [vmem:[%s261 + $0x3c0] sm:$0xff]
      %v396 = vld [vmem:[%s261 + $0x3c8] sm:$0xff]
      %v397 = vld [vmem:[%s261 + $0x3d0] sm:$0xff]
      %v398 = vld [vmem:[%s261 + $0x3d8] sm:$0xff]
      %v399 = vld [vmem:[%s261 + $0x3e0] sm:$0xff]
      %v400 = vld [vmem:[%s261 + $0x3e8] sm:$0xff]
      %v401 = vld [vmem:[%s261 + $0x3f0] sm:$0xff]
      %v402 = vld [vmem:[%s261 + $0x3f8] sm:$0xff]
      %v403 = vld [vmem:[%s261 + $0x400] sm:$0xff]
      %v404 = vld [vmem:[%s261 + $0x408] sm:$0xff]
      %v405 = vld [vmem:[%s261 + $0x410] sm:$0xff]
      %v406 = vld [vmem:[%s261 + $0x418] sm:$0xff]
      %v407 = vld [vmem:[%s261 + $0x420] sm:$0xff]
      %v408 = vld [vmem:[%s261 + $0x428] sm:$0xff]
      %v409 = vld [vmem:[%s261 + $0x430] sm:$0xff]
      %v410 = vld [vmem:[%s261 + $0x438] sm:$0xff]
      %v411 = vld [vmem:[%s261 + $0x440] sm:$0xff]
      %v412 = vld [vmem:[%s261 + $0x448] sm:$0xff]
      %v413 = vld [vmem:[%s261 + $0x450] sm:$0xff]
      %v414 = vld [vmem:[%s261 + $0x458] sm:$0xff]
      %v415 = vld [vmem:[%s261 + $0x460] sm:$0xff]
      %v416 = vld [vmem:[%s261 + $0x468] sm:$0xff]
      %v417 = vld [vmem:[%s261 + $0x470] sm:$0xff]
      %v418 = vld [vmem:[%s261 + $0x478] sm:$0xff]
      %v419 = vld [vmem:[%s261 + $0x480] sm:$0xff]
      %v420 = vld [vmem:[%s261 + $0x488] sm:$0xff]
      %v421 = vld [vmem:[%s261 + $0x490] sm:$0xff]
      %v422 = vld [vmem:[%s261 + $0x498] sm:$0xff]
      %v423 = vld [vmem:[%s261 + $0x4a0] sm:$0xff]
      %v424 = vld [vmem:[%s261 + $0x4a8] sm:$0xff]
      %v425 = vld [vmem:[%s261 + $0x4b0] sm:$0xff]
      %v426 = vld [vmem:[%s261 + $0x4b8] sm:$0xff]
      %v427 = vld [vmem:[%s261 + $0x4c0] sm:$0xff]
      %v428 = vld [vmem:[%s261 + $0x4c8] sm:$0xff]
      %v429 = vld [vmem:[%s261 + $0x4d0] sm:$0xff]
      %v430 = vld [vmem:[%s261 + $0x4d8] sm:$0xff]
      %v431 = vld [vmem:[%s261 + $0x4e0] sm:$0xff]
      %v432 = vld [vmem:[%s261 + $0x4e8] sm:$0xff]
      %v433 = vld [vmem:[%s261 + $0x4f0] sm:$0xff]
      %v434 = vld [vmem:[%s261 + $0x4f8] sm:$0xff]
      %v435 = vld [vmem:[%s261 + $0x500] sm:$0xff]
      %v436 = vld [vmem:[%s261 + $0x508] sm:$0xff]
      %v437 = vld [vmem:[%s261 + $0x510] sm:$0xff]
      %v438 = vld [vmem:[%s261 + $0x518] sm:$0xff]
      %v439 = vld [vmem:[%s261 + $0x520] sm:$0xff]
      %v440 = vld [vmem:[%s261 + $0x528] sm:$0xff]
      %v441 = vld [vmem:[%s261 + $0x530] sm:$0xff]
      %v442 = vld [vmem:[%s261 + $0x538] sm:$0xff]
      %v443 = vld [vmem:[%s261 + $0x540] sm:$0xff]
      %v444 = vld [vmem:[%s261 + $0x548] sm:$0xff]
      %v445 = vld [vmem:[%s261 + $0x550] sm:$0xff]
      %v446 = vld [vmem:[%s261 + $0x558] sm:$0xff]
      %v447 = vld [vmem:[%s261 + $0x560] sm:$0xff]
      %v448 = vld [vmem:[%s261 + $0x568] sm:$0xff]
      %v449 = vld [vmem:[%s261 + $0x570] sm:$0xff]
      %v450 = vld [vmem:[%s261 + $0x578] sm:$0xff]
      %v451 = vld [vmem:[%s261 + $0x580] sm:$0xff]
      %v452 = vld [vmem:[%s261 + $0x588] sm:$0xff]
      %v453 = vld [vmem:[%s261 + $0x590] sm:$0xff]
      %v454 = vld [vmem:[%s261 + $0x598] sm:$0xff]
      %v455 = vld [vmem:[%s261 + $0x5a0] sm:$0xff]
      %v456 = vld [vmem:[%s261 + $0x5a8] sm:$0xff]
      %v457 = vld [vmem:[%s261 + $0x5b0] sm:$0xff]
      %v458 = vld [vmem:[%s261 + $0x5b8] sm:$0xff]
      %v459 = vld [vmem:[%s261 + $0x5c0] sm:$0xff]
      %v460 = vld [vmem:[%s261 + $0x5c8] sm:$0xff]
      %v461 = vld [vmem:[%s261 + $0x5d0] sm:$0xff]
      %v462 = vld [vmem:[%s261 + $0x5d8] sm:$0xff]
      %v463 = vld [vmem:[%s261 + $0x5e0] sm:$0xff]
      %v464 = vld [vmem:[%s261 + $0x5e8] sm:$0xff]
      %v465 = vld [vmem:[%s261 + $0x5f0] sm:$0xff]
      %v466 = vld [vmem:[%s261 + $0x5f8] sm:$0xff]
      %v467 = vld [vmem:[%s1] sm:$0xff]
      %v468 = vld [vmem:[%s1 + $0x8] sm:$0xff]
      %v469 = vld [vmem:[%s1 + $0x10] sm:$0xff]
      %v470 = vld [vmem:[%s1 + $0x18] sm:$0xff]
      %v471 = vld [vmem:[%s1 + $0x20] sm:$0xff]
      %v472 = vld [vmem:[%s1 + $0x28] sm:$0xff]
      %v473 = vld [vmem:[%s1 + $0x30] sm:$0xff]
      %v474 = vld [vmem:[%s1 + $0x38] sm:$0xff]
      %v475 = vld [vmem:[%s1 + $0x40] sm:$0xff]
      %v476 = vld [vmem:[%s1 + $0x48] sm:$0xff]
      %v477 = vld [vmem:[%s1 + $0x50] sm:$0xff]
      %v478 = vld [vmem:[%s1 + $0x58] sm:$0xff]
      %v479 = vld [vmem:[%s1 + $0x60] sm:$0xff]
      %v480 = vld [vmem:[%s1 + $0x68] sm:$0xff]
      %v481 = vld [vmem:[%s1 + $0x70] sm:$0xff]
      %v482 = vld [vmem:[%s1 + $0x78] sm:$0xff]
      %v483 = vld [vmem:[%s1 + $0x80] sm:$0xff]
      %v484 = vld [vmem:[%s1 + $0x88] sm:$0xff]
      %v485 = vld [vmem:[%s1 + $0x90] sm:$0xff]
      %v486 = vld [vmem:[%s1 + $0x98] sm:$0xff]
      %v487 = vld [vmem:[%s1 + $0xa0] sm:$0xff]
      %v488 = vld [vmem:[%s1 + $0xa8] sm:$0xff]
      %v489 = vld [vmem:[%s1 + $0xb0] sm:$0xff]
      %v490 = vld [vmem:[%s1 + $0xb8] sm:$0xff]
      %v491 = vld [vmem:[%s1 + $0xc0] sm:$0xff]
      %v492 = vld [vmem:[%s1 + $0xc8] sm:$0xff]
      %v493 = vld [vmem:[%s1 + $0xd0] sm:$0xff]
      %v494 = vld [vmem:[%s1 + $0xd8] sm:$0xff]
      %v495 = vld [vmem:[%s1 + $0xe0] sm:$0xff]
      %v496 = vld [vmem:[%s1 + $0xe8] sm:$0xff]
      %v497 = vld [vmem:[%s1 + $0xf0] sm:$0xff]
      %v498 = vld [vmem:[%s1 + $0xf8] sm:$0xff]
      %v499 = vld [vmem:[%s1 + $0x100] sm:$0xff]
      %v500 = vld [vmem:[%s1 + $0x108] sm:$0xff]
      %v501 = vld [vmem:[%s1 + $0x110] sm:$0xff]
      %v502 = vld [vmem:[%s1 + $0x118] sm:$0xff]
      %v503 = vld [vmem:[%s1 + $0x120] sm:$0xff]
      %v504 = vld [vmem:[%s1 + $0x128] sm:$0xff]
      %v505 = vld [vmem:[%s1 + $0x130] sm:$0xff]
      %v506 = vld [vmem:[%s1 + $0x138] sm:$0xff]
      %v507 = vld [vmem:[%s1 + $0x140] sm:$0xff]
      %v508 = vld [vmem:[%s1 + $0x148] sm:$0xff]
      %v509 = vld [vmem:[%s1 + $0x150] sm:$0xff]
      %v510 = vld [vmem:[%s1 + $0x158] sm:$0xff]
      %v511 = vld [vmem:[%s1 + $0x160] sm:$0xff]
      %v512 = vld [vmem:[%s1 + $0x168] sm:$0xff]
      %v513 = vld [vmem:[%s1 + $0x170] sm:$0xff]
      %v514 = vld [vmem:[%s1 + $0x178] sm:$0xff]
      %v515 = vld [vmem:[%s1 + $0x180] sm:$0xff]
      %v516 = vld [vmem:[%s1 + $0x188] sm:$0xff]
      %v517 = vld [vmem:[%s1 + $0x190] sm:$0xff]
      %v518 = vld [vmem:[%s1 + $0x198] sm:$0xff]
      %v519 = vld [vmem:[%s1 + $0x1a0] sm:$0xff]
      %v520 = vld [vmem:[%s1 + $0x1a8] sm:$0xff]
      %v521 = vld [vmem:[%s1 + $0x1b0] sm:$0xff]
      %v522 = vld [vmem:[%s1 + $0x1b8] sm:$0xff]
      %v523 = vld [vmem:[%s1 + $0x1c0] sm:$0xff]
      %v524 = vld [vmem:[%s1 + $0x1c8] sm:$0xff]
      %v525 = vld [vmem:[%s1 + $0x1d0] sm:$0xff]
      %v526 = vld [vmem:[%s1 + $0x1d8] sm:$0xff]
      %v527 = vld [vmem:[%s1 + $0x1e0] sm:$0xff]
      %v528 = vld [vmem:[%s1 + $0x1e8] sm:$0xff]
      %v529 = vld [vmem:[%s1 + $0x1f0] sm:$0xff]
      %v530 = vld [vmem:[%s1 + $0x1f8] sm:$0xff]
      %v531 = vld [vmem:[%s1 + $0x200] sm:$0xff]
      %v532 = vld [vmem:[%s1 + $0x208] sm:$0xff]
      %v533 = vld [vmem:[%s1 + $0x210] sm:$0xff]
      %v534 = vld [vmem:[%s1 + $0x218] sm:$0xff]
      %v535 = vld [vmem:[%s1 + $0x220] sm:$0xff]
      %v536 = vld [vmem:[%s1 + $0x228] sm:$0xff]
      %v537 = vld [vmem:[%s1 + $0x230] sm:$0xff]
      %v538 = vld [vmem:[%s1 + $0x238] sm:$0xff]
      %v539 = vld [vmem:[%s1 + $0x240] sm:$0xff]
      %v540 = vld [vmem:[%s1 + $0x248] sm:$0xff]
      %v541 = vld [vmem:[%s1 + $0x250] sm:$0xff]
      %v542 = vld [vmem:[%s1 + $0x258] sm:$0xff]
      %v543 = vld [vmem:[%s1 + $0x260] sm:$0xff]
      %v544 = vld [vmem:[%s1 + $0x268] sm:$0xff]
      %v545 = vld [vmem:[%s1 + $0x270] sm:$0xff]
      %v546 = vld [vmem:[%s1 + $0x278] sm:$0xff]
      %v547 = vld [vmem:[%s1 + $0x280] sm:$0xff]
      %v548 = vld [vmem:[%s1 + $0x288] sm:$0xff]
      %v549 = vld [vmem:[%s1 + $0x290] sm:$0xff]
      %v550 = vld [vmem:[%s1 + $0x298] sm:$0xff]
      %vm551 = vcmask 326656
      %v553 = vsel %vm551, %v276, 0
      %v556 = vsel %vm551, %v278, 0
      %v559 = vsel %vm551, %v280, 0
      %v562 = vsel %vm551, %v282, 0
      %v565 = vsel %vm551, %v284, 0
      %v568 = vsel %vm551, %v286, 0
      %v571 = vsel %vm551, %v288, 0
      %v574 = vsel %vm551, %v290, 0
      %v577 = vsel %vm551, %v292, 0
      %v580 = vsel %vm551, %v294, 0
      %v583 = vsel %vm551, %v296, 0
      %v586 = vsel %vm551, %v298, 0
      %v589 = vsel %vm551, %v300, 0
      %v592 = vsel %vm551, %v302, 0
      %v595 = vsel %vm551, %v304, 0
      %v598 = vsel %vm551, %v306, 0
      %v601 = vsel %vm551, %v308, 0
      %v604 = vsel %vm551, %v310, 0
      %v607 = vsel %vm551, %v312, 0
      %v610 = vsel %vm551, %v314, 0
      %v613 = vsel %vm551, %v316, 0
      %v616 = vsel %vm551, %v318, 0
      %v619 = vsel %vm551, %v320, 0
      %v622 = vsel %vm551, %v322, 0
      %v625 = vsel %vm551, %v324, 0
      %v628 = vsel %vm551, %v326, 0
      %v631 = vsel %vm551, %v328, 0
      %v634 = vsel %vm551, %v330, 0
      %v637 = vsel %vm551, %v332, 0
      %v640 = vsel %vm551, %v334, 0
      %v643 = vsel %vm551, %v336, 0
      %v646 = vsel %vm551, %v338, 0
      %v649 = vsel %vm551, %v340, 0
      %v652 = vsel %vm551, %v342, 0
      %v655 = vsel %vm551, %v344, 0
      %v658 = vsel %vm551, %v346, 0
      %v661 = vsel %vm551, %v348, 0
      %v664 = vsel %vm551, %v350, 0
      %v667 = vsel %vm551, %v352, 0
      %v670 = vsel %vm551, %v354, 0
      %v673 = vsel %vm551, %v356, 0
      %v676 = vsel %vm551, %v358, 0
      %v679 = vsel %vm551, %v360, 0
      %v682 = vsel %vm551, %v362, 0
      %v685 = vsel %vm551, %v364, 0
      %v688 = vsel %vm551, %v366, 0
      %v691 = vsel %vm551, %v368, 0
      %v694 = vsel %vm551, %v370, 0
      %v697 = vsel %vm551, %v372, 0
      %v700 = vsel %vm551, %v374, 0
      %v703 = vsel %vm551, %v376, 0
      %v706 = vsel %vm551, %v378, 0
      %v709 = vsel %vm551, %v380, 0
      %v712 = vsel %vm551, %v382, 0
      %v715 = vsel %vm551, %v384, 0
      %v718 = vsel %vm551, %v386, 0
      %v721 = vsel %vm551, %v388, 0
      %v724 = vsel %vm551, %v390, 0
      %v727 = vsel %vm551, %v392, 0
      %v730 = vsel %vm551, %v394, 0
      %v733 = vsel %vm551, %v396, 0
      %v736 = vsel %vm551, %v398, 0
      %v739 = vsel %vm551, %v400, 0
      %v742 = vsel %vm551, %v402, 0
      %v745 = vsel %vm551, %v404, 0
      %v748 = vsel %vm551, %v406, 0
      %v751 = vsel %vm551, %v408, 0
      %v754 = vsel %vm551, %v410, 0
      %v757 = vsel %vm551, %v412, 0
      %v760 = vsel %vm551, %v414, 0
      %v763 = vsel %vm551, %v416, 0
      %v766 = vsel %vm551, %v418, 0
      %v769 = vsel %vm551, %v420, 0
      %v772 = vsel %vm551, %v422, 0
      %v775 = vsel %vm551, %v424, 0
      %v778 = vsel %vm551, %v426, 0
      %v781 = vsel %vm551, %v428, 0
      %v784 = vsel %vm551, %v430, 0
      %v787 = vsel %vm551, %v432, 0
      %v790 = vsel %vm551, %v434, 0
      %v793 = vsel %vm551, %v436, 0
      %v796 = vsel %vm551, %v438, 0
      %v799 = vsel %vm551, %v440, 0
      %v802 = vsel %vm551, %v442, 0
      %v805 = vsel %vm551, %v444, 0
      %v808 = vsel %vm551, %v446, 0
      %v811 = vsel %vm551, %v448, 0
      %v814 = vsel %vm551, %v450, 0
      %v817 = vsel %vm551, %v452, 0
      %v820 = vsel %vm551, %v454, 0
      %v823 = vsel %vm551, %v456, 0
      %v826 = vsel %vm551, %v458, 0
      %v829 = vsel %vm551, %v460, 0
      %v832 = vsel %vm551, %v462, 0
      %v835 = vsel %vm551, %v464, 0
      %v838 = vsel %vm551, %v466, 0
      %840 = vmatprep.subr.mxu0 %v468
      %841 = vmatpush1.msra.mxu0 %v467
      %842 = vmatprep.subr.mxu0 %v472
      %843 = vmatpush1.msra.mxu0 %v471
      %844 = vmatprep.subr.mxu0 %v476
      %845 = vmatpush1.msra.mxu0 %v475
      %846 = vmatprep.subr.mxu0 %v480
      %847 = vmatpush1.msra.mxu0 %v479
      %848 = vmatprep.subr.mxu0 %v484
      %849 = vmatpush1.msra.mxu0 %v483
      %850 = vmatprep.subr.mxu0 %v488
      %851 = vmatpush1.msra.mxu0 %v487
      %852 = vmatprep.subr.mxu0 %v492
      %853 = vmatpush1.msra.mxu0 %v491
      %854 = vmatprep.subr.mxu0 %v496
      %855 = vmatpush1.msra.mxu0 %v495
      %856 = vmatprep.subr.mxu0 %v500
      %857 = vmatpush1.msra.mxu0 %v499
      %858 = vmatprep.subr.mxu0 %v504
      %859 = vmatpush1.msra.mxu0 %v503
      %860 = vmatprep.subr.mxu0 %v508
      %861 = vmatpush1.msra.mxu0 %v507
      %862 = vmatprep.subr.mxu0 %v512
      %863 = vmatpush1.msra.mxu0 %v511
      %864 = vmatprep.subr.mxu0 %v516
      %865 = vmatpush1.msra.mxu0 %v515
      %866 = vmatprep.subr.mxu0 %v520
      %867 = vmatpush1.msra.mxu0 %v519
      %868 = vmatprep.subr.mxu0 %v524
      %869 = vmatpush1.msra.mxu0 %v523
      %870 = vmatprep.subr.mxu0 %v528
      %871 = vmatpush1.msra.mxu0 %v527
      %872 = vmatprep.subr.mxu0 %v532
      %873 = vmatpush1.msra.mxu0 %v531
      %874 = vmatprep.subr.mxu0 %v536
      %875 = vmatpush1.msra.mxu0 %v535
      %876 = vmatprep.subr.mxu0 %v540
      %877 = vmatpush1.msra.mxu0 %v539
      %878 = vmatprep.subr.mxu0 %v544
      %879 = vmatpush1.msra.mxu0 %v543
      %880 = vmatprep.subr.mxu0 %v548
      %881 = vmatpush1.msra.mxu0 %v547
      %882 = vmatprep.subr.mxu0 0.0
      %883 = vmatpush1.msra.mxu0 0.0
      %884 = vmatprep.subr.mxu0 0.0
      %885 = vmatpush1.msra.mxu0 0.0
      %886 = vmatprep.subr.mxu0 0.0
      %887 = vmatpush1.msra.mxu0 0.0
      %888 = vmatprep.subr.mxu0 0.0
      %889 = vmatpush1.msra.mxu0 0.0
      %890 = vmatprep.subr.mxu0 0.0
      %891 = vmatpush1.msra.mxu0 0.0
      %892 = vmatprep.subr.mxu0 0.0
      %893 = vmatpush1.msra.mxu0 0.0
      %894 = vmatprep.subr.mxu0 0.0
      %895 = vmatpush1.msra.mxu0 0.0
      %896 = vmatprep.subr.mxu0 0.0
      %897 = vmatpush1.msra.mxu0 0.0
      %898 = vmatprep.subr.mxu0 0.0
      %899 = vmatpush1.msra.mxu0 0.0
      %900 = vmatprep.subr.mxu0 0.0
      %901 = vmatpush1.msra.mxu0 0.0
      %902 = vmatprep.subr.mxu0 0.0
      %903 = vmatpush1.msra.mxu0 0.0
      %904 = vmatprep.mubr.f32.mxu0 %v553
      %905 = vmatmul.mubr.f32.gmra.mrb[0].mxu0 %v275
      %v906 = vpop.f32.mrb[0].mxu0
      %v907 = vadd.f32 0.0, %v906
      %v908 = vpop.f32.mrb[0].mxu0
      %v909 = vadd.f32 0.0, %v908
      %910 = vmatprep.mubr.f32.mxu0 %v556
      %911 = vmatmul.mubr.f32.gmra.mrb[0].mxu0 %v277
      %v912 = vpop.f32.mrb[0].mxu0
      %v913 = vadd.f32 0.0, %v912
      %v914 = vpop.f32.mrb[0].mxu0
      %v915 = vadd.f32 0.0, %v914
      %916 = vmatprep.mubr.f32.mxu0 %v559
      %917 = vmatmul.mubr.f32.gmra.mrb[0].mxu0 %v279
      %v918 = vpop.f32.mrb[0].mxu0
      %v919 = vadd.f32 0.0, %v918
      %v920 = vpop.f32.mrb[0].mxu0
      %v921 = vadd.f32 0.0, %v920
      %922 = vmatprep.mubr.f32.mxu0 %v562
      %923 = vmatmul.mubr.f32.gmra.mrb[0].mxu0 %v281
      %v924 = vpop.f32.mrb[0].mxu0
      %v925 = vadd.f32 0.0, %v924
      %v926 = vpop.f32.mrb[0].mxu0
      %v927 = vadd.f32 0.0, %v926
      %928 = vmatprep.mubr.f32.mxu0 %v565
      %929 = vmatmul.mubr.f32.gmra.mrb[0].mxu0 %v283
      %v930 = vpop.f32.mrb[0].mxu0
      %v931 = vadd.f32 0.0, %v930
      %v932 = vpop.f32.mrb[0].mxu0
      %v933 = vadd.f32 0.0, %v932
      %934 = vmatprep.mubr.f32.mxu0 %v568
      %935 = vmatmul.mubr.f32.gmra.mrb[0].mxu0 %v285
      %v936 = vpop.f32.mrb[0].mxu0
      %v937 = vadd.f32 0.0, %v936
      %v938 = vpop.f32.mrb[0].mxu0
      %v939 = vadd.f32 0.0, %v938
      %940 = vmatprep.mubr.f32.mxu0 %v571
      %941 = vmatmul.mubr.f32.gmra.mrb[0].mxu0 %v287
      %v942 = vpop.f32.mrb[0].mxu0
      %v943 = vadd.f32 0.0, %v942
      %v944 = vpop.f32.mrb[0].mxu0
      %v945 = vadd.f32 0.0, %v944
      %946 = vmatprep.mubr.f32.mxu0 %v574
      %947 = vmatmul.mubr.f32.gmra.mrb[0].mxu0 %v289
      %v948 = vpop.f32.mrb[0].mxu0
      %v949 = vadd.f32 0.0, %v948
      %v950 = vpop.f32.mrb[0].mxu0
      %v951 = vadd.f32 0.0, %v950
      %952 = vmatprep.mubr.f32.mxu0 %v577
      %953 = vmatmul.mubr.f32.gmra.mrb[0].mxu0 %v291
      %v954 = vpop.f32.mrb[0].mxu0
      %v955 = vadd.f32 0.0, %v954
      %v956 = vpop.f32.mrb[0].mxu0
      %v957 = vadd.f32 0.0, %v956
      %958 = vmatprep.mubr.f32.mxu0 %v580
      %959 = vmatmul.mubr.f32.gmra.mrb[0].mxu0 %v293
      %v960 = vpop.f32.mrb[0].mxu0
      %v961 = vadd.f32 0.0, %v960
      %v962 = vpop.f32.mrb[0].mxu0
      %v963 = vadd.f32 0.0, %v962
      %964 = vmatprep.mubr.f32.mxu0 %v583
      %965 = vmatmul.mubr.f32.gmra.mrb[0].mxu0 %v295
      %v966 = vpop.f32.mrb[0].mxu0
      %v967 = vadd.f32 0.0, %v966
      %v968 = vpop.f32.mrb[0].mxu0
      %v969 = vadd.f32 0.0, %v968
      %970 = vmatprep.mubr.f32.mxu0 %v586
      %971 = vmatmul.mubr.f32.gmra.mrb[0].mxu0 %v297
      %v972 = vpop.f32.mrb[0].mxu0
      %v973 = vadd.f32 0.0, %v972
      %v974 = vpop.f32.mrb[0].mxu0
      %v975 = vadd.f32 0.0, %v974
      %976 = vmatprep.mubr.f32.mxu0 %v589
      %977 = vmatmul.mubr.f32.gmra.mrb[0].mxu0 %v299
      %v978 = vpop.f32.mrb[0].mxu0
      %v979 = vadd.f32 0.0, %v978
      %v980 = vpop.f32.mrb[0].mxu0
      %v981 = vadd.f32 0.0, %v980
      %982 = vmatprep.mubr.f32.mxu0 %v592
      %983 = vmatmul.mubr.f32.gmra.mrb[0].mxu0 %v301
      %v984 = vpop.f32.mrb[0].mxu0
      %v985 = vadd.f32 0.0, %v984
      %v986 = vpop.f32.mrb[0].mxu0
      %v987 = vadd.f32 0.0, %v986
      %988 = vmatprep.mubr.f32.mxu0 %v595
      %989 = vmatmul.mubr.f32.gmra.mrb[0].mxu0 %v303
      %v990 = vpop.f32.mrb[0].mxu0
      %v991 = vadd.f32 0.0, %v990
      %v992 = vpop.f32.mrb[0].mxu0
      %v993 = vadd.f32 0.0, %v992
      %994 = vmatprep.mubr.f32.mxu0 %v598
      %995 = vmatmul.mubr.f32.gmra.mrb[0].mxu0 %v305
      %v996 = vpop.f32.mrb[0].mxu0
      %v997 = vadd.f32 0.0, %v996
      %v998 = vpop.f32.mrb[0].mxu0
      %v999 = vadd.f32 0.0, %v998
      %1000 = vmatprep.mubr.f32.mxu0 %v601
      %1001 = vmatmul.mubr.f32.gmra.mrb[0].mxu0 %v307
      %v1002 = vpop.f32.mrb[0].mxu0
      %v1003 = vadd.f32 0.0, %v1002
      %v1004 = vpop.f32.mrb[0].mxu0
      %v1005 = vadd.f32 0.0, %v1004
      %1006 = vmatprep.mubr.f32.mxu0 %v604
      %1007 = vmatmul.mubr.f32.gmra.mrb[0].mxu0 %v309
      %v1008 = vpop.f32.mrb[0].mxu0
      %v1009 = vadd.f32 0.0, %v1008
      %v1010 = vpop.f32.mrb[0].mxu0
      %v1011 = vadd.f32 0.0, %v1010
      %1012 = vmatprep.mubr.f32.mxu0 %v607
      %1013 = vmatmul.mubr.f32.gmra.mrb[0].mxu0 %v311
      %v1014 = vpop.f32.mrb[0].mxu0
      %v1015 = vadd.f32 0.0, %v1014
      %v1016 = vpop.f32.mrb[0].mxu0
      %v1017 = vadd.f32 0.0, %v1016
      %1018 = vmatprep.mubr.f32.mxu0 %v610
      %1019 = vmatmul.mubr.f32.gmra.mrb[0].mxu0 %v313
      %v1020 = vpop.f32.mrb[0].mxu0
      %v1021 = vadd.f32 0.0, %v1020
      %v1022 = vpop.f32.mrb[0].mxu0
      %v1023 = vadd.f32 0.0, %v1022
      %1024 = vmatprep.mubr.f32.mxu0 %v613
      %1025 = vmatmul.mubr.f32.gmra.mrb[0].mxu0 %v315
      %v1026 = vpop.f32.mrb[0].mxu0
      %v1027 = vadd.f32 0.0, %v1026
      %v1028 = vpop.f32.mrb[0].mxu0
      %v1029 = vadd.f32 0.0, %v1028
      %1030 = vmatprep.mubr.f32.mxu0 %v616
      %1031 = vmatmul.mubr.f32.gmra.mrb[0].mxu0 %v317
      %v1032 = vpop.f32.mrb[0].mxu0
      %v1033 = vadd.f32 0.0, %v1032
      %v1034 = vpop.f32.mrb[0].mxu0
      %v1035 = vadd.f32 0.0, %v1034
      %1036 = vmatprep.mubr.f32.mxu0 %v619
      %1037 = vmatmul.mubr.f32.gmra.mrb[0].mxu0 %v319
      %v1038 = vpop.f32.mrb[0].mxu0
      %v1039 = vadd.f32 0.0, %v1038
      %v1040 = vpop.f32.mrb[0].mxu0
      %v1041 = vadd.f32 0.0, %v1040
      %1042 = vmatprep.mubr.f32.mxu0 %v622
      %1043 = vmatmul.mubr.f32.gmra.mrb[0].mxu0 %v321
      %v1044 = vpop.f32.mrb[0].mxu0
      %v1045 = vadd.f32 0.0, %v1044
      %v1046 = vpop.f32.mrb[0].mxu0
      %v1047 = vadd.f32 0.0, %v1046
      %1048 = vmatprep.mubr.f32.mxu0 %v625
      %1049 = vmatmul.mubr.f32.gmra.mrb[0].mxu0 %v323
      %v1050 = vpop.f32.mrb[0].mxu0
      %v1051 = vadd.f32 0.0, %v1050
      %v1052 = vpop.f32.mrb[0].mxu0
      %v1053 = vadd.f32 0.0, %v1052
      %1054 = vmatprep.mubr.f32.mxu0 %v628
      %1055 = vmatmul.mubr.f32.gmra.mrb[0].mxu0 %v325
      %v1056 = vpop.f32.mrb[0].mxu0
      %v1057 = vadd.f32 0.0, %v1056
      %v1058 = vpop.f32.mrb[0].mxu0
      %v1059 = vadd.f32 0.0, %v1058
      %1060 = vmatprep.mubr.f32.mxu0 %v631
      %1061 = vmatmul.mubr.f32.gmra.mrb[0].mxu0 %v327
      %v1062 = vpop.f32.mrb[0].mxu0
      %v1063 = vadd.f32 0.0, %v1062
      %v1064 = vpop.f32.mrb[0].mxu0
      %v1065 = vadd.f32 0.0, %v1064
      %1066 = vmatprep.mubr.f32.mxu0 %v634
      %1067 = vmatmul.mubr.f32.gmra.mrb[0].mxu0 %v329
      %v1068 = vpop.f32.mrb[0].mxu0
      %v1069 = vadd.f32 0.0, %v1068
      %v1070 = vpop.f32.mrb[0].mxu0
      %v1071 = vadd.f32 0.0, %v1070
      %1072 = vmatprep.mubr.f32.mxu0 %v637
      %1073 = vmatmul.mubr.f32.gmra.mrb[0].mxu0 %v331
      %v1074 = vpop.f32.mrb[0].mxu0
      %v1075 = vadd.f32 0.0, %v1074
      %v1076 = vpop.f32.mrb[0].mxu0
      %v1077 = vadd.f32 0.0, %v1076
      %1078 = vmatprep.mubr.f32.mxu0 %v640
      %1079 = vmatmul.mubr.f32.gmra.mrb[0].mxu0 %v333
      %v1080 = vpop.f32.mrb[0].mxu0
      %v1081 = vadd.f32 0.0, %v1080
      %v1082 = vpop.f32.mrb[0].mxu0
      %v1083 = vadd.f32 0.0, %v1082
      %1084 = vmatprep.mubr.f32.mxu0 %v643
      %1085 = vmatmul.mubr.f32.gmra.mrb[0].mxu0 %v335
      %v1086 = vpop.f32.mrb[0].mxu0
      %v1087 = vadd.f32 0.0, %v1086
      %v1088 = vpop.f32.mrb[0].mxu0
      %v1089 = vadd.f32 0.0, %v1088
      %1090 = vmatprep.mubr.f32.mxu0 %v646
      %1091 = vmatmul.mubr.f32.gmra.mrb[0].mxu0 %v337
      %v1092 = vpop.f32.mrb[0].mxu0
      %v1093 = vadd.f32 0.0, %v1092
      %v1094 = vpop.f32.mrb[0].mxu0
      %v1095 = vadd.f32 0.0, %v1094
      %1096 = vmatprep.mubr.f32.mxu0 %v649
      %1097 = vmatmul.mubr.f32.gmra.mrb[0].mxu0 %v339
      %v1098 = vpop.f32.mrb[0].mxu0
      %v1099 = vadd.f32 0.0, %v1098
      %v1100 = vpop.f32.mrb[0].mxu0
      %v1101 = vadd.f32 0.0, %v1100
      %1102 = vmatprep.mubr.f32.mxu0 %v652
      %1103 = vmatmul.mubr.f32.gmra.mrb[0].mxu0 %v341
      %v1104 = vpop.f32.mrb[0].mxu0
      %v1105 = vadd.f32 0.0, %v1104
      %v1106 = vpop.f32.mrb[0].mxu0
      %v1107 = vadd.f32 0.0, %v1106
      %1108 = vmatprep.mubr.f32.mxu0 %v655
      %1109 = vmatmul.mubr.f32.gmra.mrb[0].mxu0 %v343
      %v1110 = vpop.f32.mrb[0].mxu0
      %v1111 = vadd.f32 0.0, %v1110
      %v1112 = vpop.f32.mrb[0].mxu0
      %v1113 = vadd.f32 0.0, %v1112
      %1114 = vmatprep.mubr.f32.mxu0 %v658
      %1115 = vmatmul.mubr.f32.gmra.mrb[0].mxu0 %v345
      %v1116 = vpop.f32.mrb[0].mxu0
      %v1117 = vadd.f32 0.0, %v1116
      %v1118 = vpop.f32.mrb[0].mxu0
      %v1119 = vadd.f32 0.0, %v1118
      %1120 = vmatprep.mubr.f32.mxu0 %v661
      %1121 = vmatmul.mubr.f32.gmra.mrb[0].mxu0 %v347
      %v1122 = vpop.f32.mrb[0].mxu0
      %v1123 = vadd.f32 0.0, %v1122
      %v1124 = vpop.f32.mrb[0].mxu0
      %v1125 = vadd.f32 0.0, %v1124
      %1126 = vmatprep.mubr.f32.mxu0 %v664
      %1127 = vmatmul.mubr.f32.gmra.mrb[0].mxu0 %v349
      %v1128 = vpop.f32.mrb[0].mxu0
      %v1129 = vadd.f32 0.0, %v1128
      %v1130 = vpop.f32.mrb[0].mxu0
      %v1131 = vadd.f32 0.0, %v1130
      %1132 = vmatprep.mubr.f32.mxu0 %v667
      %1133 = vmatmul.mubr.f32.gmra.mrb[0].mxu0 %v351
      %v1134 = vpop.f32.mrb[0].mxu0
      %v1135 = vadd.f32 0.0, %v1134
      %v1136 = vpop.f32.mrb[0].mxu0
      %v1137 = vadd.f32 0.0, %v1136
      %1138 = vmatprep.mubr.f32.mxu0 %v670
      %1139 = vmatmul.mubr.f32.gmra.mrb[0].mxu0 %v353
      %v1140 = vpop.f32.mrb[0].mxu0
      %v1141 = vadd.f32 0.0, %v1140
      %v1142 = vpop.f32.mrb[0].mxu0
      %v1143 = vadd.f32 0.0, %v1142
      %1144 = vmatprep.mubr.f32.mxu0 %v673
      %1145 = vmatmul.mubr.f32.gmra.mrb[0].mxu0 %v355
      %v1146 = vpop.f32.mrb[0].mxu0
      %v1147 = vadd.f32 0.0, %v1146
      %v1148 = vpop.f32.mrb[0].mxu0
      %v1149 = vadd.f32 0.0, %v1148
      %1150 = vmatprep.mubr.f32.mxu0 %v676
      %1151 = vmatmul.mubr.f32.gmra.mrb[0].mxu0 %v357
      %v1152 = vpop.f32.mrb[0].mxu0
      %v1153 = vadd.f32 0.0, %v1152
      %v1154 = vpop.f32.mrb[0].mxu0
      %v1155 = vadd.f32 0.0, %v1154
      %1156 = vmatprep.mubr.f32.mxu0 %v679
      %1157 = vmatmul.mubr.f32.gmra.mrb[0].mxu0 %v359
      %v1158 = vpop.f32.mrb[0].mxu0
      %v1159 = vadd.f32 0.0, %v1158
      %v1160 = vpop.f32.mrb[0].mxu0
      %v1161 = vadd.f32 0.0, %v1160
      %1162 = vmatprep.mubr.f32.mxu0 %v682
      %1163 = vmatmul.mubr.f32.gmra.mrb[0].mxu0 %v361
      %v1164 = vpop.f32.mrb[0].mxu0
      %v1165 = vadd.f32 0.0, %v1164
      %v1166 = vpop.f32.mrb[0].mxu0
      %v1167 = vadd.f32 0.0, %v1166
      %1168 = vmatprep.mubr.f32.mxu0 %v685
      %1169 = vmatmul.mubr.f32.gmra.mrb[0].mxu0 %v363
      %v1170 = vpop.f32.mrb[0].mxu0
      %v1171 = vadd.f32 0.0, %v1170
      %v1172 = vpop.f32.mrb[0].mxu0
      %v1173 = vadd.f32 0.0, %v1172
      %1174 = vmatprep.mubr.f32.mxu0 %v688
      %1175 = vmatmul.mubr.f32.gmra.mrb[0].mxu0 %v365
      %v1176 = vpop.f32.mrb[0].mxu0
      %v1177 = vadd.f32 0.0, %v1176
      %v1178 = vpop.f32.mrb[0].mxu0
      %v1179 = vadd.f32 0.0, %v1178
      %1180 = vmatprep.mubr.f32.mxu0 %v691
      %1181 = vmatmul.mubr.f32.gmra.mrb[0].mxu0 %v367
      %v1182 = vpop.f32.mrb[0].mxu0
      %v1183 = vadd.f32 0.0, %v1182
      %v1184 = vpop.f32.mrb[0].mxu0
      %v1185 = vadd.f32 0.0, %v1184
      %1186 = vmatprep.mubr.f32.mxu0 %v694
      %1187 = vmatmul.mubr.f32.gmra.mrb[0].mxu0 %v369
      %v1188 = vpop.f32.mrb[0].mxu0
      %v1189 = vadd.f32 0.0, %v1188
      %v1190 = vpop.f32.mrb[0].mxu0
      %v1191 = vadd.f32 0.0, %v1190
      %1192 = vmatprep.mubr.f32.mxu0 %v697
      %1193 = vmatmul.mubr.f32.gmra.mrb[0].mxu0 %v371
      %v1194 = vpop.f32.mrb[0].mxu0
      %v1195 = vadd.f32 0.0, %v1194
      %v1196 = vpop.f32.mrb[0].mxu0
      %v1197 = vadd.f32 0.0, %v1196
      %1198 = vmatprep.mubr.f32.mxu0 %v700
      %1199 = vmatmul.mubr.f32.gmra.mrb[0].mxu0 %v373
      %v1200 = vpop.f32.mrb[0].mxu0
      %v1201 = vadd.f32 0.0, %v1200
      %v1202 = vpop.f32.mrb[0].mxu0
      %v1203 = vadd.f32 0.0, %v1202
      %1204 = vmatprep.mubr.f32.mxu0 %v703
      %1205 = vmatmul.mubr.f32.gmra.mrb[0].mxu0 %v375
      %v1206 = vpop.f32.mrb[0].mxu0
      %v1207 = vadd.f32 0.0, %v1206
      %v1208 = vpop.f32.mrb[0].mxu0
      %v1209 = vadd.f32 0.0, %v1208
      %1210 = vmatprep.mubr.f32.mxu0 %v706
      %1211 = vmatmul.mubr.f32.gmra.mrb[0].mxu0 %v377
      %v1212 = vpop.f32.mrb[0].mxu0
      %v1213 = vadd.f32 0.0, %v1212
      %v1214 = vpop.f32.mrb[0].mxu0
      %v1215 = vadd.f32 0.0, %v1214
      %1216 = vmatprep.mubr.f32.mxu0 %v709
      %1217 = vmatmul.mubr.f32.gmra.mrb[0].mxu0 %v379
      %v1218 = vpop.f32.mrb[0].mxu0
      %v1219 = vadd.f32 0.0, %v1218
      %v1220 = vpop.f32.mrb[0].mxu0
      %v1221 = vadd.f32 0.0, %v1220
      %1222 = vmatprep.mubr.f32.mxu0 %v712
      %1223 = vmatmul.mubr.f32.gmra.mrb[0].mxu0 %v381
      %v1224 = vpop.f32.mrb[0].mxu0
      %v1225 = vadd.f32 0.0, %v1224
      %v1226 = vpop.f32.mrb[0].mxu0
      %v1227 = vadd.f32 0.0, %v1226
      %1228 = vmatprep.mubr.f32.mxu0 %v715
      %1229 = vmatmul.mubr.f32.gmra.mrb[0].mxu0 %v383
      %v1230 = vpop.f32.mrb[0].mxu0
      %v1231 = vadd.f32 0.0, %v1230
      %v1232 = vpop.f32.mrb[0].mxu0
      %v1233 = vadd.f32 0.0, %v1232
      %1234 = vmatprep.mubr.f32.mxu0 %v718
      %1235 = vmatmul.mubr.f32.gmra.mrb[0].mxu0 %v385
      %v1236 = vpop.f32.mrb[0].mxu0
      %v1237 = vadd.f32 0.0, %v1236
      %v1238 = vpop.f32.mrb[0].mxu0
      %v1239 = vadd.f32 0.0, %v1238
      %1240 = vmatprep.mubr.f32.mxu0 %v721
      %1241 = vmatmul.mubr.f32.gmra.mrb[0].mxu0 %v387
      %v1242 = vpop.f32.mrb[0].mxu0
      %v1243 = vadd.f32 0.0, %v1242
      %v1244 = vpop.f32.mrb[0].mxu0
      %v1245 = vadd.f32 0.0, %v1244
      %1246 = vmatprep.mubr.f32.mxu0 %v724
      %1247 = vmatmul.mubr.f32.gmra.mrb[0].mxu0 %v389
      %v1248 = vpop.f32.mrb[0].mxu0
      %v1249 = vadd.f32 0.0, %v1248
      %v1250 = vpop.f32.mrb[0].mxu0
      %v1251 = vadd.f32 0.0, %v1250
      %1252 = vmatprep.mubr.f32.mxu0 %v727
      %1253 = vmatmul.mubr.f32.gmra.mrb[0].mxu0 %v391
      %v1254 = vpop.f32.mrb[0].mxu0
      %v1255 = vadd.f32 0.0, %v1254
      %v1256 = vpop.f32.mrb[0].mxu0
      %v1257 = vadd.f32 0.0, %v1256
      %1258 = vmatprep.mubr.f32.mxu0 %v730
      %1259 = vmatmul.mubr.f32.gmra.mrb[0].mxu0 %v393
      %v1260 = vpop.f32.mrb[0].mxu0
      %v1261 = vadd.f32 0.0, %v1260
      %v1262 = vpop.f32.mrb[0].mxu0
      %v1263 = vadd.f32 0.0, %v1262
      %1264 = vmatprep.mubr.f32.mxu0 %v733
      %1265 = vmatmul.mubr.f32.gmra.mrb[0].mxu0 %v395
      %v1266 = vpop.f32.mrb[0].mxu0
      %v1267 = vadd.f32 0.0, %v1266
      %v1268 = vpop.f32.mrb[0].mxu0
      %v1269 = vadd.f32 0.0, %v1268
      %1270 = vmatprep.mubr.f32.mxu0 %v736
      %1271 = vmatmul.mubr.f32.gmra.mrb[0].mxu0 %v397
      %v1272 = vpop.f32.mrb[0].mxu0
      %v1273 = vadd.f32 0.0, %v1272
      %v1274 = vpop.f32.mrb[0].mxu0
      %v1275 = vadd.f32 0.0, %v1274
      %1276 = vmatprep.mubr.f32.mxu0 %v739
      %1277 = vmatmul.mubr.f32.gmra.mrb[0].mxu0 %v399
      %v1278 = vpop.f32.mrb[0].mxu0
      %v1279 = vadd.f32 0.0, %v1278
      %v1280 = vpop.f32.mrb[0].mxu0
      %v1281 = vadd.f32 0.0, %v1280
      %1282 = vmatprep.mubr.f32.mxu0 %v742
      %1283 = vmatmul.mubr.f32.gmra.mrb[0].mxu0 %v401
      %v1284 = vpop.f32.mrb[0].mxu0
      %v1285 = vadd.f32 0.0, %v1284
      %v1286 = vpop.f32.mrb[0].mxu0
      %v1287 = vadd.f32 0.0, %v1286
      %1288 = vmatprep.mubr.f32.mxu0 %v745
      %1289 = vmatmul.mubr.f32.gmra.mrb[0].mxu0 %v403
      %v1290 = vpop.f32.mrb[0].mxu0
      %v1291 = vadd.f32 0.0, %v1290
      %v1292 = vpop.f32.mrb[0].mxu0
      %v1293 = vadd.f32 0.0, %v1292
      %1294 = vmatprep.mubr.f32.mxu0 %v748
      %1295 = vmatmul.mubr.f32.gmra.mrb[0].mxu0 %v405
      %v1296 = vpop.f32.mrb[0].mxu0
      %v1297 = vadd.f32 0.0, %v1296
      %v1298 = vpop.f32.mrb[0].mxu0
      %v1299 = vadd.f32 0.0, %v1298
      %1300 = vmatprep.mubr.f32.mxu0 %v751
      %1301 = vmatmul.mubr.f32.gmra.mrb[0].mxu0 %v407
      %v1302 = vpop.f32.mrb[0].mxu0
      %v1303 = vadd.f32 0.0, %v1302
      %v1304 = vpop.f32.mrb[0].mxu0
      %v1305 = vadd.f32 0.0, %v1304
      %1306 = vmatprep.mubr.f32.mxu0 %v754
      %1307 = vmatmul.mubr.f32.gmra.mrb[0].mxu0 %v409
      %v1308 = vpop.f32.mrb[0].mxu0
      %v1309 = vadd.f32 0.0, %v1308
      %v1310 = vpop.f32.mrb[0].mxu0
      %v1311 = vadd.f32 0.0, %v1310
      %1312 = vmatprep.mubr.f32.mxu0 %v757
      %1313 = vmatmul.mubr.f32.gmra.mrb[0].mxu0 %v411
      %v1314 = vpop.f32.mrb[0].mxu0
      %v1315 = vadd.f32 0.0, %v1314
      %v1316 = vpop.f32.mrb[0].mxu0
      %v1317 = vadd.f32 0.0, %v1316
      %1318 = vmatprep.mubr.f32.mxu0 %v760
      %1319 = vmatmul.mubr.f32.gmra.mrb[0].mxu0 %v413
      %v1320 = vpop.f32.mrb[0].mxu0
      %v1321 = vadd.f32 0.0, %v1320
      %v1322 = vpop.f32.mrb[0].mxu0
      %v1323 = vadd.f32 0.0, %v1322
      %1324 = vmatprep.mubr.f32.mxu0 %v763
      %1325 = vmatmul.mubr.f32.gmra.mrb[0].mxu0 %v415
      %v1326 = vpop.f32.mrb[0].mxu0
      %v1327 = vadd.f32 0.0, %v1326
      %v1328 = vpop.f32.mrb[0].mxu0
      %v1329 = vadd.f32 0.0, %v1328
      %1330 = vmatprep.mubr.f32.mxu0 %v766
      %1331 = vmatmul.mubr.f32.gmra.mrb[0].mxu0 %v417
      %v1332 = vpop.f32.mrb[0].mxu0
      %v1333 = vadd.f32 0.0, %v1332
      %v1334 = vpop.f32.mrb[0].mxu0
      %v1335 = vadd.f32 0.0, %v1334
      %1336 = vmatprep.mubr.f32.mxu0 %v769
      %1337 = vmatmul.mubr.f32.gmra.mrb[0].mxu0 %v419
      %v1338 = vpop.f32.mrb[0].mxu0
      %v1339 = vadd.f32 0.0, %v1338
      %v1340 = vpop.f32.mrb[0].mxu0
      %v1341 = vadd.f32 0.0, %v1340
      %1342 = vmatprep.mubr.f32.mxu0 %v772
      %1343 = vmatmul.mubr.f32.gmra.mrb[0].mxu0 %v421
      %v1344 = vpop.f32.mrb[0].mxu0
      %v1345 = vadd.f32 0.0, %v1344
      %v1346 = vpop.f32.mrb[0].mxu0
      %v1347 = vadd.f32 0.0, %v1346
      %1348 = vmatprep.mubr.f32.mxu0 %v775
      %1349 = vmatmul.mubr.f32.gmra.mrb[0].mxu0 %v423
      %v1350 = vpop.f32.mrb[0].mxu0
      %v1351 = vadd.f32 0.0, %v1350
      %v1352 = vpop.f32.mrb[0].mxu0
      %v1353 = vadd.f32 0.0, %v1352
      %1354 = vmatprep.mubr.f32.mxu0 %v778
      %1355 = vmatmul.mubr.f32.gmra.mrb[0].mxu0 %v425
      %v1356 = vpop.f32.mrb[0].mxu0
      %v1357 = vadd.f32 0.0, %v1356
      %v1358 = vpop.f32.mrb[0].mxu0
      %v1359 = vadd.f32 0.0, %v1358
      %1360 = vmatprep.mubr.f32.mxu0 %v781
      %1361 = vmatmul.mubr.f32.gmra.mrb[0].mxu0 %v427
      %v1362 = vpop.f32.mrb[0].mxu0
      %v1363 = vadd.f32 0.0, %v1362
      %v1364 = vpop.f32.mrb[0].mxu0
      %v1365 = vadd.f32 0.0, %v1364
      %1366 = vmatprep.mubr.f32.mxu0 %v784
      %1367 = vmatmul.mubr.f32.gmra.mrb[0].mxu0 %v429
      %v1368 = vpop.f32.mrb[0].mxu0
      %v1369 = vadd.f32 0.0, %v1368
      %v1370 = vpop.f32.mrb[0].mxu0
      %v1371 = vadd.f32 0.0, %v1370
      %1372 = vmatprep.mubr.f32.mxu0 %v787
      %1373 = vmatmul.mubr.f32.gmra.mrb[0].mxu0 %v431
      %v1374 = vpop.f32.mrb[0].mxu0
      %v1375 = vadd.f32 0.0, %v1374
      %v1376 = vpop.f32.mrb[0].mxu0
      %v1377 = vadd.f32 0.0, %v1376
      %1378 = vmatprep.mubr.f32.mxu0 %v790
      %1379 = vmatmul.mubr.f32.gmra.mrb[0].mxu0 %v433
      %v1380 = vpop.f32.mrb[0].mxu0
      %v1381 = vadd.f32 0.0, %v1380
      %v1382 = vpop.f32.mrb[0].mxu0
      %v1383 = vadd.f32 0.0, %v1382
      %1384 = vmatprep.mubr.f32.mxu0 %v793
      %1385 = vmatmul.mubr.f32.gmra.mrb[0].mxu0 %v435
      %v1386 = vpop.f32.mrb[0].mxu0
      %v1387 = vadd.f32 0.0, %v1386
      %v1388 = vpop.f32.mrb[0].mxu0
      %v1389 = vadd.f32 0.0, %v1388
      %1390 = vmatprep.mubr.f32.mxu0 %v796
      %1391 = vmatmul.mubr.f32.gmra.mrb[0].mxu0 %v437
      %v1392 = vpop.f32.mrb[0].mxu0
      %v1393 = vadd.f32 0.0, %v1392
      %v1394 = vpop.f32.mrb[0].mxu0
      %v1395 = vadd.f32 0.0, %v1394
      %1396 = vmatprep.mubr.f32.mxu0 %v799
      %1397 = vmatmul.mubr.f32.gmra.mrb[0].mxu0 %v439
      %v1398 = vpop.f32.mrb[0].mxu0
      %v1399 = vadd.f32 0.0, %v1398
      %v1400 = vpop.f32.mrb[0].mxu0
      %v1401 = vadd.f32 0.0, %v1400
      %1402 = vmatprep.mubr.f32.mxu0 %v802
      %1403 = vmatmul.mubr.f32.gmra.mrb[0].mxu0 %v441
      %v1404 = vpop.f32.mrb[0].mxu0
      %v1405 = vadd.f32 0.0, %v1404
      %v1406 = vpop.f32.mrb[0].mxu0
      %v1407 = vadd.f32 0.0, %v1406
      %1408 = vmatprep.mubr.f32.mxu0 %v805
      %1409 = vmatmul.mubr.f32.gmra.mrb[0].mxu0 %v443
      %v1410 = vpop.f32.mrb[0].mxu0
      %v1411 = vadd.f32 0.0, %v1410
      %v1412 = vpop.f32.mrb[0].mxu0
      %v1413 = vadd.f32 0.0, %v1412
      %1414 = vmatprep.mubr.f32.mxu0 %v808
      %1415 = vmatmul.mubr.f32.gmra.mrb[0].mxu0 %v445
      %v1416 = vpop.f32.mrb[0].mxu0
      %v1417 = vadd.f32 0.0, %v1416
      %v1418 = vpop.f32.mrb[0].mxu0
      %v1419 = vadd.f32 0.0, %v1418
      %1420 = vmatprep.mubr.f32.mxu0 %v811
      %1421 = vmatmul.mubr.f32.gmra.mrb[0].mxu0 %v447
      %v1422 = vpop.f32.mrb[0].mxu0
      %v1423 = vadd.f32 0.0, %v1422
      %v1424 = vpop.f32.mrb[0].mxu0
      %v1425 = vadd.f32 0.0, %v1424
      %1426 = vmatprep.mubr.f32.mxu0 %v814
      %1427 = vmatmul.mubr.f32.gmra.mrb[0].mxu0 %v449
      %v1428 = vpop.f32.mrb[0].mxu0
      %v1429 = vadd.f32 0.0, %v1428
      %v1430 = vpop.f32.mrb[0].mxu0
      %v1431 = vadd.f32 0.0, %v1430
      %1432 = vmatprep.mubr.f32.mxu0 %v817
      %1433 = vmatmul.mubr.f32.gmra.mrb[0].mxu0 %v451
      %v1434 = vpop.f32.mrb[0].mxu0
      %v1435 = vadd.f32 0.0, %v1434
      %v1436 = vpop.f32.mrb[0].mxu0
      %v1437 = vadd.f32 0.0, %v1436
      %1438 = vmatprep.mubr.f32.mxu0 %v820
      %1439 = vmatmul.mubr.f32.gmra.mrb[0].mxu0 %v453
      %v1440 = vpop.f32.mrb[0].mxu0
      %v1441 = vadd.f32 0.0, %v1440
      %v1442 = vpop.f32.mrb[0].mxu0
      %v1443 = vadd.f32 0.0, %v1442
      %1444 = vmatprep.mubr.f32.mxu0 %v823
      %1445 = vmatmul.mubr.f32.gmra.mrb[0].mxu0 %v455
      %v1446 = vpop.f32.mrb[0].mxu0
      %v1447 = vadd.f32 0.0, %v1446
      %v1448 = vpop.f32.mrb[0].mxu0
      %v1449 = vadd.f32 0.0, %v1448
      %1450 = vmatprep.mubr.f32.mxu0 %v826
      %1451 = vmatmul.mubr.f32.gmra.mrb[0].mxu0 %v457
      %v1452 = vpop.f32.mrb[0].mxu0
      %v1453 = vadd.f32 0.0, %v1452
      %v1454 = vpop.f32.mrb[0].mxu0
      %v1455 = vadd.f32 0.0, %v1454
      %1456 = vmatprep.mubr.f32.mxu0 %v829
      %1457 = vmatmul.mubr.f32.gmra.mrb[0].mxu0 %v459
      %v1458 = vpop.f32.mrb[0].mxu0
      %v1459 = vadd.f32 0.0, %v1458
      %v1460 = vpop.f32.mrb[0].mxu0
      %v1461 = vadd.f32 0.0, %v1460
      %1462 = vmatprep.mubr.f32.mxu0 %v832
      %1463 = vmatmul.mubr.f32.gmra.mrb[0].mxu0 %v461
      %v1464 = vpop.f32.mrb[0].mxu0
      %v1465 = vadd.f32 0.0, %v1464
      %v1466 = vpop.f32.mrb[0].mxu0
      %v1467 = vadd.f32 0.0, %v1466
      %1468 = vmatprep.mubr.f32.mxu0 %v835
      %1469 = vmatmul.mubr.f32.gmra.mrb[0].mxu0 %v463
      %v1470 = vpop.f32.mrb[0].mxu0
      %v1471 = vadd.f32 0.0, %v1470
      %v1472 = vpop.f32.mrb[0].mxu0
      %v1473 = vadd.f32 0.0, %v1472
      %1474 = vmatprep.mubr.f32.mxu0 %v838
      %1475 = vmatmul.mubr.f32.gmra.mrb[0].mxu0 %v465
      %v1476 = vpop.f32.mrb[0].mxu0
      %v1477 = vadd.f32 0.0, %v1476
      %v1478 = vpop.f32.mrb[0].mxu0
      %v1479 = vadd.f32 0.0, %v1478
      %1480 = vdwg.mxu0
      %1481 = vmatprep.subr.mxu0 %v470
      %1482 = vmatpush1.msra.mxu0 %v469
      %1483 = vmatprep.subr.mxu0 %v474
      %1484 = vmatpush1.msra.mxu0 %v473
      %1485 = vmatprep.subr.mxu0 %v478
      %1486 = vmatpush1.msra.mxu0 %v477
      %1487 = vmatprep.subr.mxu0 %v482
      %1488 = vmatpush1.msra.mxu0 %v481
      %1489 = vmatprep.subr.mxu0 %v486
      %1490 = vmatpush1.msra.mxu0 %v485
      %1491 = vmatprep.subr.mxu0 %v490
      %1492 = vmatpush1.msra.mxu0 %v489
      %1493 = vmatprep.subr.mxu0 %v494
      %1494 = vmatpush1.msra.mxu0 %v493
      %1495 = vmatprep.subr.mxu0 %v498
      %1496 = vmatpush1.msra.mxu0 %v497
      %1497 = vmatprep.subr.mxu0 %v502
      %1498 = vmatpush1.msra.mxu0 %v501
      %1499 = vmatprep.subr.mxu0 %v506
      %1500 = vmatpush1.msra.mxu0 %v505
      %1501 = vmatprep.subr.mxu0 %v510
      %1502 = vmatpush1.msra.mxu0 %v509
      %1503 = vmatprep.subr.mxu0 %v514
      %1504 = vmatpush1.msra.mxu0 %v513
      %1505 = vmatprep.subr.mxu0 %v518
      %1506 = vmatpush1.msra.mxu0 %v517
      %1507 = vmatprep.subr.mxu0 %v522
      %1508 = vmatpush1.msra.mxu0 %v521
      %1509 = vmatprep.subr.mxu0 %v526
      %1510 = vmatpush1.msra.mxu0 %v525
      %1511 = vmatprep.subr.mxu0 %v530
      %1512 = vmatpush1.msra.mxu0 %v529
      %1513 = vmatprep.subr.mxu0 %v534
      %1514 = vmatpush1.msra.mxu0 %v533
      %1515 = vmatprep.subr.mxu0 %v538
      %1516 = vmatpush1.msra.mxu0 %v537
      %1517 = vmatprep.subr.mxu0 %v542
      %1518 = vmatpush1.msra.mxu0 %v541
      %1519 = vmatprep.subr.mxu0 %v546
      %1520 = vmatpush1.msra.mxu0 %v545
      %1521 = vmatprep.subr.mxu0 %v550
      %1522 = vmatpush1.msra.mxu0 %v549
      %1523 = vmatprep.subr.mxu0 0.0
      %1524 = vmatpush1.msra.mxu0 0.0
      %1525 = vmatprep.subr.mxu0 0.0
      %1526 = vmatpush1.msra.mxu0 0.0
      %1527 = vmatprep.subr.mxu0 0.0
      %1528 = vmatpush1.msra.mxu0 0.0
      %1529 = vmatprep.subr.mxu0 0.0
      %1530 = vmatpush1.msra.mxu0 0.0
      %1531 = vmatprep.subr.mxu0 0.0
      %1532 = vmatpush1.msra.mxu0 0.0
      %1533 = vmatprep.subr.mxu0 0.0
      %1534 = vmatpush1.msra.mxu0 0.0
      %1535 = vmatprep.subr.mxu0 0.0
      %1536 = vmatpush1.msra.mxu0 0.0
      %1537 = vmatprep.subr.mxu0 0.0
      %1538 = vmatpush1.msra.mxu0 0.0
      %1539 = vmatprep.subr.mxu0 0.0
      %1540 = vmatpush1.msra.mxu0 0.0
      %1541 = vmatprep.subr.mxu0 0.0
      %1542 = vmatpush1.msra.mxu0 0.0
      %1543 = vmatprep.subr.mxu0 0.0
      %1544 = vmatpush1.msra.mxu0 0.0
      %1545 = vmatprep.mubr.f32.mxu0 %v553
      %1546 = vmatmul.mubr.f32.gmra.mrb[0].mxu0 %v275
      %v1547 = vpop.f32.mrb[0].mxu0
      %v1548 = vadd.f32 0.0, %v1547
      %v1549 = vpop.f32.mrb[0].mxu0
      %v1550 = vadd.f32 0.0, %v1549
      %1551 = vmatprep.mubr.f32.mxu0 %v556
      %1552 = vmatmul.mubr.f32.gmra.mrb[0].mxu0 %v277
      %v1553 = vpop.f32.mrb[0].mxu0
      %v1554 = vadd.f32 0.0, %v1553
      %v1555 = vpop.f32.mrb[0].mxu0
      %v1556 = vadd.f32 0.0, %v1555
      %1557 = vmatprep.mubr.f32.mxu0 %v559
      %1558 = vmatmul.mubr.f32.gmra.mrb[0].mxu0 %v279
      %v1559 = vpop.f32.mrb[0].mxu0
      %v1560 = vadd.f32 0.0, %v1559
      %v1561 = vpop.f32.mrb[0].mxu0
      %v1562 = vadd.f32 0.0, %v1561
      %1563 = vmatprep.mubr.f32.mxu0 %v562
      %1564 = vmatmul.mubr.f32.gmra.mrb[0].mxu0 %v281
      %v1565 = vpop.f32.mrb[0].mxu0
      %v1566 = vadd.f32 0.0, %v1565
      %v1567 = vpop.f32.mrb[0].mxu0
      %v1568 = vadd.f32 0.0, %v1567
      %1569 = vmatprep.mubr.f32.mxu0 %v565
      %1570 = vmatmul.mubr.f32.gmra.mrb[0].mxu0 %v283
      %v1571 = vpop.f32.mrb[0].mxu0
      %v1572 = vadd.f32 0.0, %v1571
      %v1573 = vpop.f32.mrb[0].mxu0
      %v1574 = vadd.f32 0.0, %v1573
      %1575 = vmatprep.mubr.f32.mxu0 %v568
      %1576 = vmatmul.mubr.f32.gmra.mrb[0].mxu0 %v285
      %v1577 = vpop.f32.mrb[0].mxu0
      %v1578 = vadd.f32 0.0, %v1577
      %v1579 = vpop.f32.mrb[0].mxu0
      %v1580 = vadd.f32 0.0, %v1579
      %1581 = vmatprep.mubr.f32.mxu0 %v571
      %1582 = vmatmul.mubr.f32.gmra.mrb[0].mxu0 %v287
      %v1583 = vpop.f32.mrb[0].mxu0
      %v1584 = vadd.f32 0.0, %v1583
      %v1585 = vpop.f32.mrb[0].mxu0
      %v1586 = vadd.f32 0.0, %v1585
      %1587 = vmatprep.mubr.f32.mxu0 %v574
      %1588 = vmatmul.mubr.f32.gmra.mrb[0].mxu0 %v289
      %v1589 = vpop.f32.mrb[0].mxu0
      %v1590 = vadd.f32 0.0, %v1589
      %v1591 = vpop.f32.mrb[0].mxu0
      %v1592 = vadd.f32 0.0, %v1591
      %1593 = vmatprep.mubr.f32.mxu0 %v577
      %1594 = vmatmul.mubr.f32.gmra.mrb[0].mxu0 %v291
      %v1595 = vpop.f32.mrb[0].mxu0
      %v1596 = vadd.f32 0.0, %v1595
      %v1597 = vpop.f32.mrb[0].mxu0
      %v1598 = vadd.f32 0.0, %v1597
      %1599 = vmatprep.mubr.f32.mxu0 %v580
      %1600 = vmatmul.mubr.f32.gmra.mrb[0].mxu0 %v293
      %v1601 = vpop.f32.mrb[0].mxu0
      %v1602 = vadd.f32 0.0, %v1601
      %v1603 = vpop.f32.mrb[0].mxu0
      %v1604 = vadd.f32 0.0, %v1603
      %1605 = vmatprep.mubr.f32.mxu0 %v583
      %1606 = vmatmul.mubr.f32.gmra.mrb[0].mxu0 %v295
      %v1607 = vpop.f32.mrb[0].mxu0
      %v1608 = vadd.f32 0.0, %v1607
      %v1609 = vpop.f32.mrb[0].mxu0
      %v1610 = vadd.f32 0.0, %v1609
      %1611 = vmatprep.mubr.f32.mxu0 %v586
      %1612 = vmatmul.mubr.f32.gmra.mrb[0].mxu0 %v297
      %v1613 = vpop.f32.mrb[0].mxu0
      %v1614 = vadd.f32 0.0, %v1613
      %v1615 = vpop.f32.mrb[0].mxu0
      %v1616 = vadd.f32 0.0, %v1615
      %1617 = vmatprep.mubr.f32.mxu0 %v589
      %1618 = vmatmul.mubr.f32.gmra.mrb[0].mxu0 %v299
      %v1619 = vpop.f32.mrb[0].mxu0
      %v1620 = vadd.f32 0.0, %v1619
      %v1621 = vpop.f32.mrb[0].mxu0
      %v1622 = vadd.f32 0.0, %v1621
      %1623 = vmatprep.mubr.f32.mxu0 %v592
      %1624 = vmatmul.mubr.f32.gmra.mrb[0].mxu0 %v301
      %v1625 = vpop.f32.mrb[0].mxu0
      %v1626 = vadd.f32 0.0, %v1625
      %v1627 = vpop.f32.mrb[0].mxu0
      %v1628 = vadd.f32 0.0, %v1627
      %1629 = vmatprep.mubr.f32.mxu0 %v595
      %1630 = vmatmul.mubr.f32.gmra.mrb[0].mxu0 %v303
      %v1631 = vpop.f32.mrb[0].mxu0
      %v1632 = vadd.f32 0.0, %v1631
      %v1633 = vpop.f32.mrb[0].mxu0
      %v1634 = vadd.f32 0.0, %v1633
      %1635 = vmatprep.mubr.f32.mxu0 %v598
      %1636 = vmatmul.mubr.f32.gmra.mrb[0].mxu0 %v305
      %v1637 = vpop.f32.mrb[0].mxu0
      %v1638 = vadd.f32 0.0, %v1637
      %v1639 = vpop.f32.mrb[0].mxu0
      %v1640 = vadd.f32 0.0, %v1639
      %1641 = vmatprep.mubr.f32.mxu0 %v601
      %1642 = vmatmul.mubr.f32.gmra.mrb[0].mxu0 %v307
      %v1643 = vpop.f32.mrb[0].mxu0
      %v1644 = vadd.f32 0.0, %v1643
      %v1645 = vpop.f32.mrb[0].mxu0
      %v1646 = vadd.f32 0.0, %v1645
      %1647 = vmatprep.mubr.f32.mxu0 %v604
      %1648 = vmatmul.mubr.f32.gmra.mrb[0].mxu0 %v309
      %v1649 = vpop.f32.mrb[0].mxu0
      %v1650 = vadd.f32 0.0, %v1649
      %v1651 = vpop.f32.mrb[0].mxu0
      %v1652 = vadd.f32 0.0, %v1651
      %1653 = vmatprep.mubr.f32.mxu0 %v607
      %1654 = vmatmul.mubr.f32.gmra.mrb[0].mxu0 %v311
      %v1655 = vpop.f32.mrb[0].mxu0
      %v1656 = vadd.f32 0.0, %v1655
      %v1657 = vpop.f32.mrb[0].mxu0
      %v1658 = vadd.f32 0.0, %v1657
      %1659 = vmatprep.mubr.f32.mxu0 %v610
      %1660 = vmatmul.mubr.f32.gmra.mrb[0].mxu0 %v313
      %v1661 = vpop.f32.mrb[0].mxu0
      %v1662 = vadd.f32 0.0, %v1661
      %v1663 = vpop.f32.mrb[0].mxu0
      %v1664 = vadd.f32 0.0, %v1663
      %1665 = vmatprep.mubr.f32.mxu0 %v613
      %1666 = vmatmul.mubr.f32.gmra.mrb[0].mxu0 %v315
      %v1667 = vpop.f32.mrb[0].mxu0
      %v1668 = vadd.f32 0.0, %v1667
      %v1669 = vpop.f32.mrb[0].mxu0
      %v1670 = vadd.f32 0.0, %v1669
      %1671 = vmatprep.mubr.f32.mxu0 %v616
      %1672 = vmatmul.mubr.f32.gmra.mrb[0].mxu0 %v317
      %v1673 = vpop.f32.mrb[0].mxu0
      %v1674 = vadd.f32 0.0, %v1673
      %v1675 = vpop.f32.mrb[0].mxu0
      %v1676 = vadd.f32 0.0, %v1675
      %1677 = vmatprep.mubr.f32.mxu0 %v619
      %1678 = vmatmul.mubr.f32.gmra.mrb[0].mxu0 %v319
      %v1679 = vpop.f32.mrb[0].mxu0
      %v1680 = vadd.f32 0.0, %v1679
      %v1681 = vpop.f32.mrb[0].mxu0
      %v1682 = vadd.f32 0.0, %v1681
      %1683 = vmatprep.mubr.f32.mxu0 %v622
      %1684 = vmatmul.mubr.f32.gmra.mrb[0].mxu0 %v321
      %v1685 = vpop.f32.mrb[0].mxu0
      %v1686 = vadd.f32 0.0, %v1685
      %v1687 = vpop.f32.mrb[0].mxu0
      %v1688 = vadd.f32 0.0, %v1687
      %1689 = vmatprep.mubr.f32.mxu0 %v625
      %1690 = vmatmul.mubr.f32.gmra.mrb[0].mxu0 %v323
      %v1691 = vpop.f32.mrb[0].mxu0
      %v1692 = vadd.f32 0.0, %v1691
      %v1693 = vpop.f32.mrb[0].mxu0
      %v1694 = vadd.f32 0.0, %v1693
      %1695 = vmatprep.mubr.f32.mxu0 %v628
      %1696 = vmatmul.mubr.f32.gmra.mrb[0].mxu0 %v325
      %v1697 = vpop.f32.mrb[0].mxu0
      %v1698 = vadd.f32 0.0, %v1697
      %v1699 = vpop.f32.mrb[0].mxu0
      %v1700 = vadd.f32 0.0, %v1699
      %1701 = vmatprep.mubr.f32.mxu0 %v631
      %1702 = vmatmul.mubr.f32.gmra.mrb[0].mxu0 %v327
      %v1703 = vpop.f32.mrb[0].mxu0
      %v1704 = vadd.f32 0.0, %v1703
      %v1705 = vpop.f32.mrb[0].mxu0
      %v1706 = vadd.f32 0.0, %v1705
      %1707 = vmatprep.mubr.f32.mxu0 %v634
      %1708 = vmatmul.mubr.f32.gmra.mrb[0].mxu0 %v329
      %v1709 = vpop.f32.mrb[0].mxu0
      %v1710 = vadd.f32 0.0, %v1709
      %v1711 = vpop.f32.mrb[0].mxu0
      %v1712 = vadd.f32 0.0, %v1711
      %1713 = vmatprep.mubr.f32.mxu0 %v637
      %1714 = vmatmul.mubr.f32.gmra.mrb[0].mxu0 %v331
      %v1715 = vpop.f32.mrb[0].mxu0
      %v1716 = vadd.f32 0.0, %v1715
      %v1717 = vpop.f32.mrb[0].mxu0
      %v1718 = vadd.f32 0.0, %v1717
      %1719 = vmatprep.mubr.f32.mxu0 %v640
      %1720 = vmatmul.mubr.f32.gmra.mrb[0].mxu0 %v333
      %v1721 = vpop.f32.mrb[0].mxu0
      %v1722 = vadd.f32 0.0, %v1721
      %v1723 = vpop.f32.mrb[0].mxu0
      %v1724 = vadd.f32 0.0, %v1723
      %1725 = vmatprep.mubr.f32.mxu0 %v643
      %1726 = vmatmul.mubr.f32.gmra.mrb[0].mxu0 %v335
      %v1727 = vpop.f32.mrb[0].mxu0
      %v1728 = vadd.f32 0.0, %v1727
      %v1729 = vpop.f32.mrb[0].mxu0
      %v1730 = vadd.f32 0.0, %v1729
      %1731 = vmatprep.mubr.f32.mxu0 %v646
      %1732 = vmatmul.mubr.f32.gmra.mrb[0].mxu0 %v337
      %v1733 = vpop.f32.mrb[0].mxu0
      %v1734 = vadd.f32 0.0, %v1733
      %v1735 = vpop.f32.mrb[0].mxu0
      %v1736 = vadd.f32 0.0, %v1735
      %1737 = vmatprep.mubr.f32.mxu0 %v649
      %1738 = vmatmul.mubr.f32.gmra.mrb[0].mxu0 %v339
      %v1739 = vpop.f32.mrb[0].mxu0
      %v1740 = vadd.f32 0.0, %v1739
      %v1741 = vpop.f32.mrb[0].mxu0
      %v1742 = vadd.f32 0.0, %v1741
      %1743 = vmatprep.mubr.f32.mxu0 %v652
      %1744 = vmatmul.mubr.f32.gmra.mrb[0].mxu0 %v341
      %v1745 = vpop.f32.mrb[0].mxu0
      %v1746 = vadd.f32 0.0, %v1745
      %v1747 = vpop.f32.mrb[0].mxu0
      %v1748 = vadd.f32 0.0, %v1747
      %1749 = vmatprep.mubr.f32.mxu0 %v655
      %1750 = vmatmul.mubr.f32.gmra.mrb[0].mxu0 %v343
      %v1751 = vpop.f32.mrb[0].mxu0
      %v1752 = vadd.f32 0.0, %v1751
      %v1753 = vpop.f32.mrb[0].mxu0
      %v1754 = vadd.f32 0.0, %v1753
      %1755 = vmatprep.mubr.f32.mxu0 %v658
      %1756 = vmatmul.mubr.f32.gmra.mrb[0].mxu0 %v345
      %v1757 = vpop.f32.mrb[0].mxu0
      %v1758 = vadd.f32 0.0, %v1757
      %v1759 = vpop.f32.mrb[0].mxu0
      %v1760 = vadd.f32 0.0, %v1759
      %1761 = vmatprep.mubr.f32.mxu0 %v661
      %1762 = vmatmul.mubr.f32.gmra.mrb[0].mxu0 %v347
      %v1763 = vpop.f32.mrb[0].mxu0
      %v1764 = vadd.f32 0.0, %v1763
      %v1765 = vpop.f32.mrb[0].mxu0
      %v1766 = vadd.f32 0.0, %v1765
      %1767 = vmatprep.mubr.f32.mxu0 %v664
      %1768 = vmatmul.mubr.f32.gmra.mrb[0].mxu0 %v349
      %v1769 = vpop.f32.mrb[0].mxu0
      %v1770 = vadd.f32 0.0, %v1769
      %v1771 = vpop.f32.mrb[0].mxu0
      %v1772 = vadd.f32 0.0, %v1771
      %1773 = vmatprep.mubr.f32.mxu0 %v667
      %1774 = vmatmul.mubr.f32.gmra.mrb[0].mxu0 %v351
      %v1775 = vpop.f32.mrb[0].mxu0
      %v1776 = vadd.f32 0.0, %v1775
      %v1777 = vpop.f32.mrb[0].mxu0
      %v1778 = vadd.f32 0.0, %v1777
      %1779 = vmatprep.mubr.f32.mxu0 %v670
      %1780 = vmatmul.mubr.f32.gmra.mrb[0].mxu0 %v353
      %v1781 = vpop.f32.mrb[0].mxu0
      %v1782 = vadd.f32 0.0, %v1781
      %v1783 = vpop.f32.mrb[0].mxu0
      %v1784 = vadd.f32 0.0, %v1783
      %1785 = vmatprep.mubr.f32.mxu0 %v673
      %1786 = vmatmul.mubr.f32.gmra.mrb[0].mxu0 %v355
      %v1787 = vpop.f32.mrb[0].mxu0
      %v1788 = vadd.f32 0.0, %v1787
      %v1789 = vpop.f32.mrb[0].mxu0
      %v1790 = vadd.f32 0.0, %v1789
      %1791 = vmatprep.mubr.f32.mxu0 %v676
      %1792 = vmatmul.mubr.f32.gmra.mrb[0].mxu0 %v357
      %v1793 = vpop.f32.mrb[0].mxu0
      %v1794 = vadd.f32 0.0, %v1793
      %v1795 = vpop.f32.mrb[0].mxu0
      %v1796 = vadd.f32 0.0, %v1795
      %1797 = vmatprep.mubr.f32.mxu0 %v679
      %1798 = vmatmul.mubr.f32.gmra.mrb[0].mxu0 %v359
      %v1799 = vpop.f32.mrb[0].mxu0
      %v1800 = vadd.f32 0.0, %v1799
      %v1801 = vpop.f32.mrb[0].mxu0
      %v1802 = vadd.f32 0.0, %v1801
      %1803 = vmatprep.mubr.f32.mxu0 %v682
      %1804 = vmatmul.mubr.f32.gmra.mrb[0].mxu0 %v361
      %v1805 = vpop.f32.mrb[0].mxu0
      %v1806 = vadd.f32 0.0, %v1805
      %v1807 = vpop.f32.mrb[0].mxu0
      %v1808 = vadd.f32 0.0, %v1807
      %1809 = vmatprep.mubr.f32.mxu0 %v685
      %1810 = vmatmul.mubr.f32.gmra.mrb[0].mxu0 %v363
      %v1811 = vpop.f32.mrb[0].mxu0
      %v1812 = vadd.f32 0.0, %v1811
      %v1813 = vpop.f32.mrb[0].mxu0
      %v1814 = vadd.f32 0.0, %v1813
      %1815 = vmatprep.mubr.f32.mxu0 %v688
      %1816 = vmatmul.mubr.f32.gmra.mrb[0].mxu0 %v365
      %v1817 = vpop.f32.mrb[0].mxu0
      %v1818 = vadd.f32 0.0, %v1817
      %v1819 = vpop.f32.mrb[0].mxu0
      %v1820 = vadd.f32 0.0, %v1819
      %1821 = vmatprep.mubr.f32.mxu0 %v691
      %1822 = vmatmul.mubr.f32.gmra.mrb[0].mxu0 %v367
      %v1823 = vpop.f32.mrb[0].mxu0
      %v1824 = vadd.f32 0.0, %v1823
      %v1825 = vpop.f32.mrb[0].mxu0
      %v1826 = vadd.f32 0.0, %v1825
      %1827 = vmatprep.mubr.f32.mxu0 %v694
      %1828 = vmatmul.mubr.f32.gmra.mrb[0].mxu0 %v369
      %v1829 = vpop.f32.mrb[0].mxu0
      %v1830 = vadd.f32 0.0, %v1829
      %v1831 = vpop.f32.mrb[0].mxu0
      %v1832 = vadd.f32 0.0, %v1831
      %1833 = vmatprep.mubr.f32.mxu0 %v697
      %1834 = vmatmul.mubr.f32.gmra.mrb[0].mxu0 %v371
      %v1835 = vpop.f32.mrb[0].mxu0
      %v1836 = vadd.f32 0.0, %v1835
      %v1837 = vpop.f32.mrb[0].mxu0
      %v1838 = vadd.f32 0.0, %v1837
      %1839 = vmatprep.mubr.f32.mxu0 %v700
      %1840 = vmatmul.mubr.f32.gmra.mrb[0].mxu0 %v373
      %v1841 = vpop.f32.mrb[0].mxu0
      %v1842 = vadd.f32 0.0, %v1841
      %v1843 = vpop.f32.mrb[0].mxu0
      %v1844 = vadd.f32 0.0, %v1843
      %1845 = vmatprep.mubr.f32.mxu0 %v703
      %1846 = vmatmul.mubr.f32.gmra.mrb[0].mxu0 %v375
      %v1847 = vpop.f32.mrb[0].mxu0
      %v1848 = vadd.f32 0.0, %v1847
      %v1849 = vpop.f32.mrb[0].mxu0
      %v1850 = vadd.f32 0.0, %v1849
      %1851 = vmatprep.mubr.f32.mxu0 %v706
      %1852 = vmatmul.mubr.f32.gmra.mrb[0].mxu0 %v377
      %v1853 = vpop.f32.mrb[0].mxu0
      %v1854 = vadd.f32 0.0, %v1853
      %v1855 = vpop.f32.mrb[0].mxu0
      %v1856 = vadd.f32 0.0, %v1855
      %1857 = vmatprep.mubr.f32.mxu0 %v709
      %1858 = vmatmul.mubr.f32.gmra.mrb[0].mxu0 %v379
      %v1859 = vpop.f32.mrb[0].mxu0
      %v1860 = vadd.f32 0.0, %v1859
      %v1861 = vpop.f32.mrb[0].mxu0
      %v1862 = vadd.f32 0.0, %v1861
      %1863 = vmatprep.mubr.f32.mxu0 %v712
      %1864 = vmatmul.mubr.f32.gmra.mrb[0].mxu0 %v381
      %v1865 = vpop.f32.mrb[0].mxu0
      %v1866 = vadd.f32 0.0, %v1865
      %v1867 = vpop.f32.mrb[0].mxu0
      %v1868 = vadd.f32 0.0, %v1867
      %1869 = vmatprep.mubr.f32.mxu0 %v715
      %1870 = vmatmul.mubr.f32.gmra.mrb[0].mxu0 %v383
      %v1871 = vpop.f32.mrb[0].mxu0
      %v1872 = vadd.f32 0.0, %v1871
      %v1873 = vpop.f32.mrb[0].mxu0
      %v1874 = vadd.f32 0.0, %v1873
      %1875 = vmatprep.mubr.f32.mxu0 %v718
      %1876 = vmatmul.mubr.f32.gmra.mrb[0].mxu0 %v385
      %v1877 = vpop.f32.mrb[0].mxu0
      %v1878 = vadd.f32 0.0, %v1877
      %v1879 = vpop.f32.mrb[0].mxu0
      %v1880 = vadd.f32 0.0, %v1879
      %1881 = vmatprep.mubr.f32.mxu0 %v721
      %1882 = vmatmul.mubr.f32.gmra.mrb[0].mxu0 %v387
      %v1883 = vpop.f32.mrb[0].mxu0
      %v1884 = vadd.f32 0.0, %v1883
      %v1885 = vpop.f32.mrb[0].mxu0
      %v1886 = vadd.f32 0.0, %v1885
      %1887 = vmatprep.mubr.f32.mxu0 %v724
      %1888 = vmatmul.mubr.f32.gmra.mrb[0].mxu0 %v389
      %v1889 = vpop.f32.mrb[0].mxu0
      %v1890 = vadd.f32 0.0, %v1889
      %v1891 = vpop.f32.mrb[0].mxu0
      %v1892 = vadd.f32 0.0, %v1891
      %1893 = vmatprep.mubr.f32.mxu0 %v727
      %1894 = vmatmul.mubr.f32.gmra.mrb[0].mxu0 %v391
      %v1895 = vpop.f32.mrb[0].mxu0
      %v1896 = vadd.f32 0.0, %v1895
      %v1897 = vpop.f32.mrb[0].mxu0
      %v1898 = vadd.f32 0.0, %v1897
      %1899 = vmatprep.mubr.f32.mxu0 %v730
      %1900 = vmatmul.mubr.f32.gmra.mrb[0].mxu0 %v393
      %v1901 = vpop.f32.mrb[0].mxu0
      %v1902 = vadd.f32 0.0, %v1901
      %v1903 = vpop.f32.mrb[0].mxu0
      %v1904 = vadd.f32 0.0, %v1903
      %1905 = vmatprep.mubr.f32.mxu0 %v733
      %1906 = vmatmul.mubr.f32.gmra.mrb[0].mxu0 %v395
      %v1907 = vpop.f32.mrb[0].mxu0
      %v1908 = vadd.f32 0.0, %v1907
      %v1909 = vpop.f32.mrb[0].mxu0
      %v1910 = vadd.f32 0.0, %v1909
      %1911 = vmatprep.mubr.f32.mxu0 %v736
      %1912 = vmatmul.mubr.f32.gmra.mrb[0].mxu0 %v397
      %v1913 = vpop.f32.mrb[0].mxu0
      %v1914 = vadd.f32 0.0, %v1913
      %v1915 = vpop.f32.mrb[0].mxu0
      %v1916 = vadd.f32 0.0, %v1915
      %1917 = vmatprep.mubr.f32.mxu0 %v739
      %1918 = vmatmul.mubr.f32.gmra.mrb[0].mxu0 %v399
      %v1919 = vpop.f32.mrb[0].mxu0
      %v1920 = vadd.f32 0.0, %v1919
      %v1921 = vpop.f32.mrb[0].mxu0
      %v1922 = vadd.f32 0.0, %v1921
      %1923 = vmatprep.mubr.f32.mxu0 %v742
      %1924 = vmatmul.mubr.f32.gmra.mrb[0].mxu0 %v401
      %v1925 = vpop.f32.mrb[0].mxu0
      %v1926 = vadd.f32 0.0, %v1925
      %v1927 = vpop.f32.mrb[0].mxu0
      %v1928 = vadd.f32 0.0, %v1927
      %1929 = vmatprep.mubr.f32.mxu0 %v745
      %1930 = vmatmul.mubr.f32.gmra.mrb[0].mxu0 %v403
      %v1931 = vpop.f32.mrb[0].mxu0
      %v1932 = vadd.f32 0.0, %v1931
      %v1933 = vpop.f32.mrb[0].mxu0
      %v1934 = vadd.f32 0.0, %v1933
      %1935 = vmatprep.mubr.f32.mxu0 %v748
      %1936 = vmatmul.mubr.f32.gmra.mrb[0].mxu0 %v405
      %v1937 = vpop.f32.mrb[0].mxu0
      %v1938 = vadd.f32 0.0, %v1937
      %v1939 = vpop.f32.mrb[0].mxu0
      %v1940 = vadd.f32 0.0, %v1939
      %1941 = vmatprep.mubr.f32.mxu0 %v751
      %1942 = vmatmul.mubr.f32.gmra.mrb[0].mxu0 %v407
      %v1943 = vpop.f32.mrb[0].mxu0
      %v1944 = vadd.f32 0.0, %v1943
      %v1945 = vpop.f32.mrb[0].mxu0
      %v1946 = vadd.f32 0.0, %v1945
      %1947 = vmatprep.mubr.f32.mxu0 %v754
      %1948 = vmatmul.mubr.f32.gmra.mrb[0].mxu0 %v409
      %v1949 = vpop.f32.mrb[0].mxu0
      %v1950 = vadd.f32 0.0, %v1949
      %v1951 = vpop.f32.mrb[0].mxu0
      %v1952 = vadd.f32 0.0, %v1951
      %1953 = vmatprep.mubr.f32.mxu0 %v757
      %1954 = vmatmul.mubr.f32.gmra.mrb[0].mxu0 %v411
      %v1955 = vpop.f32.mrb[0].mxu0
      %v1956 = vadd.f32 0.0, %v1955
      %v1957 = vpop.f32.mrb[0].mxu0
      %v1958 = vadd.f32 0.0, %v1957
      %1959 = vmatprep.mubr.f32.mxu0 %v760
      %1960 = vmatmul.mubr.f32.gmra.mrb[0].mxu0 %v413
      %v1961 = vpop.f32.mrb[0].mxu0
      %v1962 = vadd.f32 0.0, %v1961
      %v1963 = vpop.f32.mrb[0].mxu0
      %v1964 = vadd.f32 0.0, %v1963
      %1965 = vmatprep.mubr.f32.mxu0 %v763
      %1966 = vmatmul.mubr.f32.gmra.mrb[0].mxu0 %v415
      %v1967 = vpop.f32.mrb[0].mxu0
      %v1968 = vadd.f32 0.0, %v1967
      %v1969 = vpop.f32.mrb[0].mxu0
      %v1970 = vadd.f32 0.0, %v1969
      %1971 = vmatprep.mubr.f32.mxu0 %v766
      %1972 = vmatmul.mubr.f32.gmra.mrb[0].mxu0 %v417
      %v1973 = vpop.f32.mrb[0].mxu0
      %v1974 = vadd.f32 0.0, %v1973
      %v1975 = vpop.f32.mrb[0].mxu0
      %v1976 = vadd.f32 0.0, %v1975
      %1977 = vmatprep.mubr.f32.mxu0 %v769
      %1978 = vmatmul.mubr.f32.gmra.mrb[0].mxu0 %v419
      %v1979 = vpop.f32.mrb[0].mxu0
      %v1980 = vadd.f32 0.0, %v1979
      %v1981 = vpop.f32.mrb[0].mxu0
      %v1982 = vadd.f32 0.0, %v1981
      %1983 = vmatprep.mubr.f32.mxu0 %v772
      %1984 = vmatmul.mubr.f32.gmra.mrb[0].mxu0 %v421
      %v1985 = vpop.f32.mrb[0].mxu0
      %v1986 = vadd.f32 0.0, %v1985
      %v1987 = vpop.f32.mrb[0].mxu0
      %v1988 = vadd.f32 0.0, %v1987
      %1989 = vmatprep.mubr.f32.mxu0 %v775
      %1990 = vmatmul.mubr.f32.gmra.mrb[0].mxu0 %v423
      %v1991 = vpop.f32.mrb[0].mxu0
      %v1992 = vadd.f32 0.0, %v1991
      %v1993 = vpop.f32.mrb[0].mxu0
      %v1994 = vadd.f32 0.0, %v1993
      %1995 = vmatprep.mubr.f32.mxu0 %v778
      %1996 = vmatmul.mubr.f32.gmra.mrb[0].mxu0 %v425
      %v1997 = vpop.f32.mrb[0].mxu0
      %v1998 = vadd.f32 0.0, %v1997
      %v1999 = vpop.f32.mrb[0].mxu0
      %v2000 = vadd.f32 0.0, %v1999
      %2001 = vmatprep.mubr.f32.mxu0 %v781
      %2002 = vmatmul.mubr.f32.gmra.mrb[0].mxu0 %v427
      %v2003 = vpop.f32.mrb[0].mxu0
      %v2004 = vadd.f32 0.0, %v2003
      %v2005 = vpop.f32.mrb[0].mxu0
      %v2006 = vadd.f32 0.0, %v2005
      %2007 = vmatprep.mubr.f32.mxu0 %v784
      %2008 = vmatmul.mubr.f32.gmra.mrb[0].mxu0 %v429
      %v2009 = vpop.f32.mrb[0].mxu0
      %v2010 = vadd.f32 0.0, %v2009
      %v2011 = vpop.f32.mrb[0].mxu0
      %v2012 = vadd.f32 0.0, %v2011
      %2013 = vmatprep.mubr.f32.mxu0 %v787
      %2014 = vmatmul.mubr.f32.gmra.mrb[0].mxu0 %v431
      %v2015 = vpop.f32.mrb[0].mxu0
      %v2016 = vadd.f32 0.0, %v2015
      %v2017 = vpop.f32.mrb[0].mxu0
      %v2018 = vadd.f32 0.0, %v2017
      %2019 = vmatprep.mubr.f32.mxu0 %v790
      %2020 = vmatmul.mubr.f32.gmra.mrb[0].mxu0 %v433
      %v2021 = vpop.f32.mrb[0].mxu0
      %v2022 = vadd.f32 0.0, %v2021
      %v2023 = vpop.f32.mrb[0].mxu0
      %v2024 = vadd.f32 0.0, %v2023
      %2025 = vmatprep.mubr.f32.mxu0 %v793
      %2026 = vmatmul.mubr.f32.gmra.mrb[0].mxu0 %v435
      %v2027 = vpop.f32.mrb[0].mxu0
      %v2028 = vadd.f32 0.0, %v2027
      %v2029 = vpop.f32.mrb[0].mxu0
      %v2030 = vadd.f32 0.0, %v2029
      %2031 = vmatprep.mubr.f32.mxu0 %v796
      %2032 = vmatmul.mubr.f32.gmra.mrb[0].mxu0 %v437
      %v2033 = vpop.f32.mrb[0].mxu0
      %v2034 = vadd.f32 0.0, %v2033
      %v2035 = vpop.f32.mrb[0].mxu0
      %v2036 = vadd.f32 0.0, %v2035
      %2037 = vmatprep.mubr.f32.mxu0 %v799
      %2038 = vmatmul.mubr.f32.gmra.mrb[0].mxu0 %v439
      %v2039 = vpop.f32.mrb[0].mxu0
      %v2040 = vadd.f32 0.0, %v2039
      %v2041 = vpop.f32.mrb[0].mxu0
      %v2042 = vadd.f32 0.0, %v2041
      %2043 = vmatprep.mubr.f32.mxu0 %v802
      %2044 = vmatmul.mubr.f32.gmra.mrb[0].mxu0 %v441
      %v2045 = vpop.f32.mrb[0].mxu0
      %v2046 = vadd.f32 0.0, %v2045
      %v2047 = vpop.f32.mrb[0].mxu0
      %v2048 = vadd.f32 0.0, %v2047
      %2049 = vmatprep.mubr.f32.mxu0 %v805
      %2050 = vmatmul.mubr.f32.gmra.mrb[0].mxu0 %v443
      %v2051 = vpop.f32.mrb[0].mxu0
      %v2052 = vadd.f32 0.0, %v2051
      %v2053 = vpop.f32.mrb[0].mxu0
      %v2054 = vadd.f32 0.0, %v2053
      %2055 = vmatprep.mubr.f32.mxu0 %v808
      %2056 = vmatmul.mubr.f32.gmra.mrb[0].mxu0 %v445
      %v2057 = vpop.f32.mrb[0].mxu0
      %v2058 = vadd.f32 0.0, %v2057
      %v2059 = vpop.f32.mrb[0].mxu0
      %v2060 = vadd.f32 0.0, %v2059
      %2061 = vmatprep.mubr.f32.mxu0 %v811
      %2062 = vmatmul.mubr.f32.gmra.mrb[0].mxu0 %v447
      %v2063 = vpop.f32.mrb[0].mxu0
      %v2064 = vadd.f32 0.0, %v2063
      %v2065 = vpop.f32.mrb[0].mxu0
      %v2066 = vadd.f32 0.0, %v2065
      %2067 = vmatprep.mubr.f32.mxu0 %v814
      %2068 = vmatmul.mubr.f32.gmra.mrb[0].mxu0 %v449
      %v2069 = vpop.f32.mrb[0].mxu0
      %v2070 = vadd.f32 0.0, %v2069
      %v2071 = vpop.f32.mrb[0].mxu0
      %v2072 = vadd.f32 0.0, %v2071
      %2073 = vmatprep.mubr.f32.mxu0 %v817
      %2074 = vmatmul.mubr.f32.gmra.mrb[0].mxu0 %v451
      %v2075 = vpop.f32.mrb[0].mxu0
      %v2076 = vadd.f32 0.0, %v2075
      %v2077 = vpop.f32.mrb[0].mxu0
      %v2078 = vadd.f32 0.0, %v2077
      %2079 = vmatprep.mubr.f32.mxu0 %v820
      %2080 = vmatmul.mubr.f32.gmra.mrb[0].mxu0 %v453
      %v2081 = vpop.f32.mrb[0].mxu0
      %v2082 = vadd.f32 0.0, %v2081
      %v2083 = vpop.f32.mrb[0].mxu0
      %v2084 = vadd.f32 0.0, %v2083
      %2085 = vmatprep.mubr.f32.mxu0 %v823
      %2086 = vmatmul.mubr.f32.gmra.mrb[0].mxu0 %v455
      %v2087 = vpop.f32.mrb[0].mxu0
      %v2088 = vadd.f32 0.0, %v2087
      %v2089 = vpop.f32.mrb[0].mxu0
      %v2090 = vadd.f32 0.0, %v2089
      %2091 = vmatprep.mubr.f32.mxu0 %v826
      %2092 = vmatmul.mubr.f32.gmra.mrb[0].mxu0 %v457
      %v2093 = vpop.f32.mrb[0].mxu0
      %v2094 = vadd.f32 0.0, %v2093
      %v2095 = vpop.f32.mrb[0].mxu0
      %v2096 = vadd.f32 0.0, %v2095
      %2097 = vmatprep.mubr.f32.mxu0 %v829
      %2098 = vmatmul.mubr.f32.gmra.mrb[0].mxu0 %v459
      %v2099 = vpop.f32.mrb[0].mxu0
      %v2100 = vadd.f32 0.0, %v2099
      %v2101 = vpop.f32.mrb[0].mxu0
      %v2102 = vadd.f32 0.0, %v2101
      %2103 = vmatprep.mubr.f32.mxu0 %v832
      %2104 = vmatmul.mubr.f32.gmra.mrb[0].mxu0 %v461
      %v2105 = vpop.f32.mrb[0].mxu0
      %v2106 = vadd.f32 0.0, %v2105
      %v2107 = vpop.f32.mrb[0].mxu0
      %v2108 = vadd.f32 0.0, %v2107
      %2109 = vmatprep.mubr.f32.mxu0 %v835
      %2110 = vmatmul.mubr.f32.gmra.mrb[0].mxu0 %v463
      %v2111 = vpop.f32.mrb[0].mxu0
      %v2112 = vadd.f32 0.0, %v2111
      %v2113 = vpop.f32.mrb[0].mxu0
      %v2114 = vadd.f32 0.0, %v2113
      %2115 = vmatprep.mubr.f32.mxu0 %v838
      %2116 = vmatmul.mubr.f32.gmra.mrb[0].mxu0 %v465
      %v2117 = vpop.f32.mrb[0].mxu0
      %v2118 = vadd.f32 0.0, %v2117
      %v2119 = vpop.f32.mrb[0].mxu0
      %v2120 = vadd.f32 0.0, %v2119
      %2121 = vdwg.mxu0
      %v2122 = vmax.f32 %v907, %v1548
      %v2123 = vmax.f32 %v909, %v1550
      %v2124 = vmax.f32 %v913, %v1554
      %v2125 = vmax.f32 %v915, %v1556
      %v2126 = vmax.f32 %v919, %v1560
      %v2127 = vmax.f32 %v921, %v1562
      %v2128 = vmax.f32 %v925, %v1566
      %v2129 = vmax.f32 %v927, %v1568
      %v2130 = vmax.f32 %v931, %v1572
      %v2131 = vmax.f32 %v933, %v1574
      %v2132 = vmax.f32 %v937, %v1578
      %v2133 = vmax.f32 %v939, %v1580
      %v2134 = vmax.f32 %v943, %v1584
      %v2135 = vmax.f32 %v945, %v1586
      %v2136 = vmax.f32 %v949, %v1590
      %v2137 = vmax.f32 %v951, %v1592
      %v2138 = vmax.f32 %v955, %v1596
      %v2139 = vmax.f32 %v957, %v1598
      %v2140 = vmax.f32 %v961, %v1602
      %v2141 = vmax.f32 %v963, %v1604
      %v2142 = vmax.f32 %v967, %v1608
      %v2143 = vmax.f32 %v969, %v1610
      %v2144 = vmax.f32 %v973, %v1614
      %v2145 = vmax.f32 %v975, %v1616
      %v2146 = vmax.f32 %v979, %v1620
      %v2147 = vmax.f32 %v981, %v1622
      %v2148 = vmax.f32 %v985, %v1626
      %v2149 = vmax.f32 %v987, %v1628
      %v2150 = vmax.f32 %v991, %v1632
      %v2151 = vmax.f32 %v993, %v1634
      %v2152 = vmax.f32 %v997, %v1638
      %v2153 = vmax.f32 %v999, %v1640
      %v2154 = vmax.f32 %v1003, %v1644
      %v2155 = vmax.f32 %v1005, %v1646
      %v2156 = vmax.f32 %v1009, %v1650
      %v2157 = vmax.f32 %v1011, %v1652
      %v2158 = vmax.f32 %v1015, %v1656
      %v2159 = vmax.f32 %v1017, %v1658
      %v2160 = vmax.f32 %v1021, %v1662
      %v2161 = vmax.f32 %v1023, %v1664
      %v2162 = vmax.f32 %v1027, %v1668
      %v2163 = vmax.f32 %v1029, %v1670
      %v2164 = vmax.f32 %v1033, %v1674
      %v2165 = vmax.f32 %v1035, %v1676
      %v2166 = vmax.f32 %v1039, %v1680
      %v2167 = vmax.f32 %v1041, %v1682
      %v2168 = vmax.f32 %v1045, %v1686
      %v2169 = vmax.f32 %v1047, %v1688
      %v2170 = vmax.f32 %v1051, %v1692
      %v2171 = vmax.f32 %v1053, %v1694
      %v2172 = vmax.f32 %v1057, %v1698
      %v2173 = vmax.f32 %v1059, %v1700
      %v2174 = vmax.f32 %v1063, %v1704
      %v2175 = vmax.f32 %v1065, %v1706
      %v2176 = vmax.f32 %v1069, %v1710
      %v2177 = vmax.f32 %v1071, %v1712
      %v2178 = vmax.f32 %v1075, %v1716
      %v2179 = vmax.f32 %v1077, %v1718
      %v2180 = vmax.f32 %v1081, %v1722
      %v2181 = vmax.f32 %v1083, %v1724
      %v2182 = vmax.f32 %v1087, %v1728
      %v2183 = vmax.f32 %v1089, %v1730
      %v2184 = vmax.f32 %v1093, %v1734
      %v2185 = vmax.f32 %v1095, %v1736
      %v2186 = vmax.f32 %v1099, %v1740
      %v2187 = vmax.f32 %v1101, %v1742
      %v2188 = vmax.f32 %v1105, %v1746
      %v2189 = vmax.f32 %v1107, %v1748
      %v2190 = vmax.f32 %v1111, %v1752
      %v2191 = vmax.f32 %v1113, %v1754
      %v2192 = vmax.f32 %v1117, %v1758
      %v2193 = vmax.f32 %v1119, %v1760
      %v2194 = vmax.f32 %v1123, %v1764
      %v2195 = vmax.f32 %v1125, %v1766
      %v2196 = vmax.f32 %v1129, %v1770
      %v2197 = vmax.f32 %v1131, %v1772
      %v2198 = vmax.f32 %v1135, %v1776
      %v2199 = vmax.f32 %v1137, %v1778
      %v2200 = vmax.f32 %v1141, %v1782
      %v2201 = vmax.f32 %v1143, %v1784
      %v2202 = vmax.f32 %v1147, %v1788
      %v2203 = vmax.f32 %v1149, %v1790
      %v2204 = vmax.f32 %v1153, %v1794
      %v2205 = vmax.f32 %v1155, %v1796
      %v2206 = vmax.f32 %v1159, %v1800
      %v2207 = vmax.f32 %v1161, %v1802
      %v2208 = vmax.f32 %v1165, %v1806
      %v2209 = vmax.f32 %v1167, %v1808
      %v2210 = vmax.f32 %v1171, %v1812
      %v2211 = vmax.f32 %v1173, %v1814
      %v2212 = vmax.f32 %v1177, %v1818
      %v2213 = vmax.f32 %v1179, %v1820
      %v2214 = vmax.f32 %v1183, %v1824
      %v2215 = vmax.f32 %v1185, %v1826
      %v2216 = vmax.f32 %v1189, %v1830
      %v2217 = vmax.f32 %v1191, %v1832
      %v2218 = vmax.f32 %v1195, %v1836
      %v2219 = vmax.f32 %v1197, %v1838
      %v2220 = vmax.f32 %v1201, %v1842
      %v2221 = vmax.f32 %v1203, %v1844
      %v2222 = vmax.f32 %v1207, %v1848
      %v2223 = vmax.f32 %v1209, %v1850
      %v2224 = vmax.f32 %v1213, %v1854
      %v2225 = vmax.f32 %v1215, %v1856
      %v2226 = vmax.f32 %v1219, %v1860
      %v2227 = vmax.f32 %v1221, %v1862
      %v2228 = vmax.f32 %v1225, %v1866
      %v2229 = vmax.f32 %v1227, %v1868
      %v2230 = vmax.f32 %v1231, %v1872
      %v2231 = vmax.f32 %v1233, %v1874
      %v2232 = vmax.f32 %v1237, %v1878
      %v2233 = vmax.f32 %v1239, %v1880
      %v2234 = vmax.f32 %v1243, %v1884
      %v2235 = vmax.f32 %v1245, %v1886
      %v2236 = vmax.f32 %v1249, %v1890
      %v2237 = vmax.f32 %v1251, %v1892
      %v2238 = vmax.f32 %v1255, %v1896
      %v2239 = vmax.f32 %v1257, %v1898
      %v2240 = vmax.f32 %v1261, %v1902
      %v2241 = vmax.f32 %v1263, %v1904
      %v2242 = vmax.f32 %v1267, %v1908
      %v2243 = vmax.f32 %v1269, %v1910
      %v2244 = vmax.f32 %v1273, %v1914
      %v2245 = vmax.f32 %v1275, %v1916
      %v2246 = vmax.f32 %v1279, %v1920
      %v2247 = vmax.f32 %v1281, %v1922
      %v2248 = vmax.f32 %v1285, %v1926
      %v2249 = vmax.f32 %v1287, %v1928
      %v2250 = vmax.f32 %v1291, %v1932
      %v2251 = vmax.f32 %v1293, %v1934
      %v2252 = vmax.f32 %v1297, %v1938
      %v2253 = vmax.f32 %v1299, %v1940
      %v2254 = vmax.f32 %v1303, %v1944
      %v2255 = vmax.f32 %v1305, %v1946
      %v2256 = vmax.f32 %v1309, %v1950
      %v2257 = vmax.f32 %v1311, %v1952
      %v2258 = vmax.f32 %v1315, %v1956
      %v2259 = vmax.f32 %v1317, %v1958
      %v2260 = vmax.f32 %v1321, %v1962
      %v2261 = vmax.f32 %v1323, %v1964
      %v2262 = vmax.f32 %v1327, %v1968
      %v2263 = vmax.f32 %v1329, %v1970
      %v2264 = vmax.f32 %v1333, %v1974
      %v2265 = vmax.f32 %v1335, %v1976
      %v2266 = vmax.f32 %v1339, %v1980
      %v2267 = vmax.f32 %v1341, %v1982
      %v2268 = vmax.f32 %v1345, %v1986
      %v2269 = vmax.f32 %v1347, %v1988
      %v2270 = vmax.f32 %v1351, %v1992
      %v2271 = vmax.f32 %v1353, %v1994
      %v2272 = vmax.f32 %v1357, %v1998
      %v2273 = vmax.f32 %v1359, %v2000
      %v2274 = vmax.f32 %v1363, %v2004
      %v2275 = vmax.f32 %v1365, %v2006
      %v2276 = vmax.f32 %v1369, %v2010
      %v2277 = vmax.f32 %v1371, %v2012
      %v2278 = vmax.f32 %v1375, %v2016
      %v2279 = vmax.f32 %v1377, %v2018
      %v2280 = vmax.f32 %v1381, %v2022
      %v2281 = vmax.f32 %v1383, %v2024
      %v2282 = vmax.f32 %v1387, %v2028
      %v2283 = vmax.f32 %v1389, %v2030
      %v2284 = vmax.f32 %v1393, %v2034
      %v2285 = vmax.f32 %v1395, %v2036
      %v2286 = vmax.f32 %v1399, %v2040
      %v2287 = vmax.f32 %v1401, %v2042
      %v2288 = vmax.f32 %v1405, %v2046
      %v2289 = vmax.f32 %v1407, %v2048
      %v2290 = vmax.f32 %v1411, %v2052
      %v2291 = vmax.f32 %v1413, %v2054
      %v2292 = vmax.f32 %v1417, %v2058
      %v2293 = vmax.f32 %v1419, %v2060
      %v2294 = vmax.f32 %v1423, %v2064
      %v2295 = vmax.f32 %v1425, %v2066
      %v2296 = vmax.f32 %v1429, %v2070
      %v2297 = vmax.f32 %v1431, %v2072
      %v2298 = vmax.f32 %v1435, %v2076
      %v2299 = vmax.f32 %v1437, %v2078
      %v2300 = vmax.f32 %v1441, %v2082
      %v2301 = vmax.f32 %v1443, %v2084
      %v2302 = vmax.f32 %v1447, %v2088
      %v2303 = vmax.f32 %v1449, %v2090
      %v2304 = vmax.f32 %v1453, %v2094
      %v2305 = vmax.f32 %v1455, %v2096
      %v2306 = vmax.f32 %v1459, %v2100
      %v2307 = vmax.f32 %v1461, %v2102
      %v2308 = vmax.f32 %v1465, %v2106
      %v2309 = vmax.f32 %v1467, %v2108
      %v2310 = vmax.f32 %v1471, %v2112
      %v2311 = vmax.f32 %v1473, %v2114
      %v2312 = vmax.f32 %v1477, %v2118
      %v2313 = vmax.f32 %v1479, %v2120
      %v2314 = vld [vmem:[%s2] sm:$0x3]
      %v2316 = vlaneseq
      %v2317 = vshrl.u32 %v2316, 7
      %v2318 = vsub.s32 0, %v2317
      %v2319 = vrot.slane %v2314, %v2318
      %v2320 = vlaneseq
      %v2321 = vshrl.u32 %v2320, 7
      %v2322 = vsub.s32 1, %v2321
      %v2323 = vrot.slane %v2314, %v2322
      %v2326 = vadd.f32 %v2122, %v2319
      %v2327 = vadd.f32 %v2123, %v2323
      %v2328 = vadd.f32 %v2124, %v2319
      %v2329 = vadd.f32 %v2125, %v2323
      %v2330 = vadd.f32 %v2126, %v2319
      %v2331 = vadd.f32 %v2127, %v2323
      %v2332 = vadd.f32 %v2128, %v2319
      %v2333 = vadd.f32 %v2129, %v2323
      %v2334 = vadd.f32 %v2130, %v2319
      %v2335 = vadd.f32 %v2131, %v2323
      %v2336 = vadd.f32 %v2132, %v2319
      %v2337 = vadd.f32 %v2133, %v2323
      %v2338 = vadd.f32 %v2134, %v2319
      %v2339 = vadd.f32 %v2135, %v2323
      %v2340 = vadd.f32 %v2136, %v2319
      %v2341 = vadd.f32 %v2137, %v2323
      %v2342 = vadd.f32 %v2138, %v2319
      %v2343 = vadd.f32 %v2139, %v2323
      %v2344 = vadd.f32 %v2140, %v2319
      %v2345 = vadd.f32 %v2141, %v2323
      %v2346 = vadd.f32 %v2142, %v2319
      %v2347 = vadd.f32 %v2143, %v2323
      %v2348 = vadd.f32 %v2144, %v2319
      %v2349 = vadd.f32 %v2145, %v2323
      %v2350 = vadd.f32 %v2146, %v2319
      %v2351 = vadd.f32 %v2147, %v2323
      %v2352 = vadd.f32 %v2148, %v2319
      %v2353 = vadd.f32 %v2149, %v2323
      %v2354 = vadd.f32 %v2150, %v2319
      %v2355 = vadd.f32 %v2151, %v2323
      %v2356 = vadd.f32 %v2152, %v2319
      %v2357 = vadd.f32 %v2153, %v2323
      %v2358 = vadd.f32 %v2154, %v2319
      %v2359 = vadd.f32 %v2155, %v2323
      %v2360 = vadd.f32 %v2156, %v2319
      %v2361 = vadd.f32 %v2157, %v2323
      %v2362 = vadd.f32 %v2158, %v2319
      %v2363 = vadd.f32 %v2159, %v2323
      %v2364 = vadd.f32 %v2160, %v2319
      %v2365 = vadd.f32 %v2161, %v2323
      %v2366 = vadd.f32 %v2162, %v2319
      %v2367 = vadd.f32 %v2163, %v2323
      %v2368 = vadd.f32 %v2164, %v2319
      %v2369 = vadd.f32 %v2165, %v2323
      %v2370 = vadd.f32 %v2166, %v2319
      %v2371 = vadd.f32 %v2167, %v2323
      %v2372 = vadd.f32 %v2168, %v2319
      %v2373 = vadd.f32 %v2169, %v2323
      %v2374 = vadd.f32 %v2170, %v2319
      %v2375 = vadd.f32 %v2171, %v2323
      %v2376 = vadd.f32 %v2172, %v2319
      %v2377 = vadd.f32 %v2173, %v2323
      %v2378 = vadd.f32 %v2174, %v2319
      %v2379 = vadd.f32 %v2175, %v2323
      %v2380 = vadd.f32 %v2176, %v2319
      %v2381 = vadd.f32 %v2177, %v2323
      %v2382 = vadd.f32 %v2178, %v2319
      %v2383 = vadd.f32 %v2179, %v2323
      %v2384 = vadd.f32 %v2180, %v2319
      %v2385 = vadd.f32 %v2181, %v2323
      %v2386 = vadd.f32 %v2182, %v2319
      %v2387 = vadd.f32 %v2183, %v2323
      %v2388 = vadd.f32 %v2184, %v2319
      %v2389 = vadd.f32 %v2185, %v2323
      %v2390 = vadd.f32 %v2186, %v2319
      %v2391 = vadd.f32 %v2187, %v2323
      %v2392 = vadd.f32 %v2188, %v2319
      %v2393 = vadd.f32 %v2189, %v2323
      %v2394 = vadd.f32 %v2190, %v2319
      %v2395 = vadd.f32 %v2191, %v2323
      %v2396 = vadd.f32 %v2192, %v2319
      %v2397 = vadd.f32 %v2193, %v2323
      %v2398 = vadd.f32 %v2194, %v2319
      %v2399 = vadd.f32 %v2195, %v2323
      %v2400 = vadd.f32 %v2196, %v2319
      %v2401 = vadd.f32 %v2197, %v2323
      %v2402 = vadd.f32 %v2198, %v2319
      %v2403 = vadd.f32 %v2199, %v2323
      %v2404 = vadd.f32 %v2200, %v2319
      %v2405 = vadd.f32 %v2201, %v2323
      %v2406 = vadd.f32 %v2202, %v2319
      %v2407 = vadd.f32 %v2203, %v2323
      %v2408 = vadd.f32 %v2204, %v2319
      %v2409 = vadd.f32 %v2205, %v2323
      %v2410 = vadd.f32 %v2206, %v2319
      %v2411 = vadd.f32 %v2207, %v2323
      %v2412 = vadd.f32 %v2208, %v2319
      %v2413 = vadd.f32 %v2209, %v2323
      %v2414 = vadd.f32 %v2210, %v2319
      %v2415 = vadd.f32 %v2211, %v2323
      %v2416 = vadd.f32 %v2212, %v2319
      %v2417 = vadd.f32 %v2213, %v2323
      %v2418 = vadd.f32 %v2214, %v2319
      %v2419 = vadd.f32 %v2215, %v2323
      %v2420 = vadd.f32 %v2216, %v2319
      %v2421 = vadd.f32 %v2217, %v2323
      %v2422 = vadd.f32 %v2218, %v2319
      %v2423 = vadd.f32 %v2219, %v2323
      %v2424 = vadd.f32 %v2220, %v2319
      %v2425 = vadd.f32 %v2221, %v2323
      %v2426 = vadd.f32 %v2222, %v2319
      %v2427 = vadd.f32 %v2223, %v2323
      %v2428 = vadd.f32 %v2224, %v2319
      %v2429 = vadd.f32 %v2225, %v2323
      %v2430 = vadd.f32 %v2226, %v2319
      %v2431 = vadd.f32 %v2227, %v2323
      %v2432 = vadd.f32 %v2228, %v2319
      %v2433 = vadd.f32 %v2229, %v2323
      %v2434 = vadd.f32 %v2230, %v2319
      %v2435 = vadd.f32 %v2231, %v2323
      %v2436 = vadd.f32 %v2232, %v2319
      %v2437 = vadd.f32 %v2233, %v2323
      %v2438 = vadd.f32 %v2234, %v2319
      %v2439 = vadd.f32 %v2235, %v2323
      %v2440 = vadd.f32 %v2236, %v2319
      %v2441 = vadd.f32 %v2237, %v2323
      %v2442 = vadd.f32 %v2238, %v2319
      %v2443 = vadd.f32 %v2239, %v2323
      %v2444 = vadd.f32 %v2240, %v2319
      %v2445 = vadd.f32 %v2241, %v2323
      %v2446 = vadd.f32 %v2242, %v2319
      %v2447 = vadd.f32 %v2243, %v2323
      %v2448 = vadd.f32 %v2244, %v2319
      %v2449 = vadd.f32 %v2245, %v2323
      %v2450 = vadd.f32 %v2246, %v2319
      %v2451 = vadd.f32 %v2247, %v2323
      %v2452 = vadd.f32 %v2248, %v2319
      %v2453 = vadd.f32 %v2249, %v2323
      %v2454 = vadd.f32 %v2250, %v2319
      %v2455 = vadd.f32 %v2251, %v2323
      %v2456 = vadd.f32 %v2252, %v2319
      %v2457 = vadd.f32 %v2253, %v2323
      %v2458 = vadd.f32 %v2254, %v2319
      %v2459 = vadd.f32 %v2255, %v2323
      %v2460 = vadd.f32 %v2256, %v2319
      %v2461 = vadd.f32 %v2257, %v2323
      %v2462 = vadd.f32 %v2258, %v2319
      %v2463 = vadd.f32 %v2259, %v2323
      %v2464 = vadd.f32 %v2260, %v2319
      %v2465 = vadd.f32 %v2261, %v2323
      %v2466 = vadd.f32 %v2262, %v2319
      %v2467 = vadd.f32 %v2263, %v2323
      %v2468 = vadd.f32 %v2264, %v2319
      %v2469 = vadd.f32 %v2265, %v2323
      %v2470 = vadd.f32 %v2266, %v2319
      %v2471 = vadd.f32 %v2267, %v2323
      %v2472 = vadd.f32 %v2268, %v2319
      %v2473 = vadd.f32 %v2269, %v2323
      %v2474 = vadd.f32 %v2270, %v2319
      %v2475 = vadd.f32 %v2271, %v2323
      %v2476 = vadd.f32 %v2272, %v2319
      %v2477 = vadd.f32 %v2273, %v2323
      %v2478 = vadd.f32 %v2274, %v2319
      %v2479 = vadd.f32 %v2275, %v2323
      %v2480 = vadd.f32 %v2276, %v2319
      %v2481 = vadd.f32 %v2277, %v2323
      %v2482 = vadd.f32 %v2278, %v2319
      %v2483 = vadd.f32 %v2279, %v2323
      %v2484 = vadd.f32 %v2280, %v2319
      %v2485 = vadd.f32 %v2281, %v2323
      %v2486 = vadd.f32 %v2282, %v2319
      %v2487 = vadd.f32 %v2283, %v2323
      %v2488 = vadd.f32 %v2284, %v2319
      %v2489 = vadd.f32 %v2285, %v2323
      %v2490 = vadd.f32 %v2286, %v2319
      %v2491 = vadd.f32 %v2287, %v2323
      %v2492 = vadd.f32 %v2288, %v2319
      %v2493 = vadd.f32 %v2289, %v2323
      %v2494 = vadd.f32 %v2290, %v2319
      %v2495 = vadd.f32 %v2291, %v2323
      %v2496 = vadd.f32 %v2292, %v2319
      %v2497 = vadd.f32 %v2293, %v2323
      %v2498 = vadd.f32 %v2294, %v2319
      %v2499 = vadd.f32 %v2295, %v2323
      %v2500 = vadd.f32 %v2296, %v2319
      %v2501 = vadd.f32 %v2297, %v2323
      %v2502 = vadd.f32 %v2298, %v2319
      %v2503 = vadd.f32 %v2299, %v2323
      %v2504 = vadd.f32 %v2300, %v2319
      %v2505 = vadd.f32 %v2301, %v2323
      %v2506 = vadd.f32 %v2302, %v2319
      %v2507 = vadd.f32 %v2303, %v2323
      %v2508 = vadd.f32 %v2304, %v2319
      %v2509 = vadd.f32 %v2305, %v2323
      %v2510 = vadd.f32 %v2306, %v2319
      %v2511 = vadd.f32 %v2307, %v2323
      %v2512 = vadd.f32 %v2308, %v2319
      %v2513 = vadd.f32 %v2309, %v2323
      %v2514 = vadd.f32 %v2310, %v2319
      %v2515 = vadd.f32 %v2311, %v2323
      %v2516 = vadd.f32 %v2312, %v2319
      %v2517 = vadd.f32 %v2313, %v2323
      %v2518 = vmax.f32 %v2326, 0.0
      %v2519 = vmax.f32 %v2327, 0.0
      %v2520 = vmax.f32 %v2328, 0.0
      %v2521 = vmax.f32 %v2329, 0.0
      %v2522 = vmax.f32 %v2330, 0.0
      %v2523 = vmax.f32 %v2331, 0.0
      %v2524 = vmax.f32 %v2332, 0.0
      %v2525 = vmax.f32 %v2333, 0.0
      %v2526 = vmax.f32 %v2334, 0.0
      %v2527 = vmax.f32 %v2335, 0.0
      %v2528 = vmax.f32 %v2336, 0.0
      %v2529 = vmax.f32 %v2337, 0.0
      %v2530 = vmax.f32 %v2338, 0.0
      %v2531 = vmax.f32 %v2339, 0.0
      %v2532 = vmax.f32 %v2340, 0.0
      %v2533 = vmax.f32 %v2341, 0.0
      %v2534 = vmax.f32 %v2342, 0.0
      %v2535 = vmax.f32 %v2343, 0.0
      %v2536 = vmax.f32 %v2344, 0.0
      %v2537 = vmax.f32 %v2345, 0.0
      %v2538 = vmax.f32 %v2346, 0.0
      %v2539 = vmax.f32 %v2347, 0.0
      %v2540 = vmax.f32 %v2348, 0.0
      %v2541 = vmax.f32 %v2349, 0.0
      %v2542 = vmax.f32 %v2350, 0.0
      %v2543 = vmax.f32 %v2351, 0.0
      %v2544 = vmax.f32 %v2352, 0.0
      %v2545 = vmax.f32 %v2353, 0.0
      %v2546 = vmax.f32 %v2354, 0.0
      %v2547 = vmax.f32 %v2355, 0.0
      %v2548 = vmax.f32 %v2356, 0.0
      %v2549 = vmax.f32 %v2357, 0.0
      %v2550 = vmax.f32 %v2358, 0.0
      %v2551 = vmax.f32 %v2359, 0.0
      %v2552 = vmax.f32 %v2360, 0.0
      %v2553 = vmax.f32 %v2361, 0.0
      %v2554 = vmax.f32 %v2362, 0.0
      %v2555 = vmax.f32 %v2363, 0.0
      %v2556 = vmax.f32 %v2364, 0.0
      %v2557 = vmax.f32 %v2365, 0.0
      %v2558 = vmax.f32 %v2366, 0.0
      %v2559 = vmax.f32 %v2367, 0.0
      %v2560 = vmax.f32 %v2368, 0.0
      %v2561 = vmax.f32 %v2369, 0.0
      %v2562 = vmax.f32 %v2370, 0.0
      %v2563 = vmax.f32 %v2371, 0.0
      %v2564 = vmax.f32 %v2372, 0.0
      %v2565 = vmax.f32 %v2373, 0.0
      %v2566 = vmax.f32 %v2374, 0.0
      %v2567 = vmax.f32 %v2375, 0.0
      %v2568 = vmax.f32 %v2376, 0.0
      %v2569 = vmax.f32 %v2377, 0.0
      %v2570 = vmax.f32 %v2378, 0.0
      %v2571 = vmax.f32 %v2379, 0.0
      %v2572 = vmax.f32 %v2380, 0.0
      %v2573 = vmax.f32 %v2381, 0.0
      %v2574 = vmax.f32 %v2382, 0.0
      %v2575 = vmax.f32 %v2383, 0.0
      %v2576 = vmax.f32 %v2384, 0.0
      %v2577 = vmax.f32 %v2385, 0.0
      %v2578 = vmax.f32 %v2386, 0.0
      %v2579 = vmax.f32 %v2387, 0.0
      %v2580 = vmax.f32 %v2388, 0.0
      %v2581 = vmax.f32 %v2389, 0.0
      %v2582 = vmax.f32 %v2390, 0.0
      %v2583 = vmax.f32 %v2391, 0.0
      %v2584 = vmax.f32 %v2392, 0.0
      %v2585 = vmax.f32 %v2393, 0.0
      %v2586 = vmax.f32 %v2394, 0.0
      %v2587 = vmax.f32 %v2395, 0.0
      %v2588 = vmax.f32 %v2396, 0.0
      %v2589 = vmax.f32 %v2397, 0.0
      %v2590 = vmax.f32 %v2398, 0.0
      %v2591 = vmax.f32 %v2399, 0.0
      %v2592 = vmax.f32 %v2400, 0.0
      %v2593 = vmax.f32 %v2401, 0.0
      %v2594 = vmax.f32 %v2402, 0.0
      %v2595 = vmax.f32 %v2403, 0.0
      %v2596 = vmax.f32 %v2404, 0.0
      %v2597 = vmax.f32 %v2405, 0.0
      %v2598 = vmax.f32 %v2406, 0.0
      %v2599 = vmax.f32 %v2407, 0.0
      %v2600 = vmax.f32 %v2408, 0.0
      %v2601 = vmax.f32 %v2409, 0.0
      %v2602 = vmax.f32 %v2410, 0.0
      %v2603 = vmax.f32 %v2411, 0.0
      %v2604 = vmax.f32 %v2412, 0.0
      %v2605 = vmax.f32 %v2413, 0.0
      %v2606 = vmax.f32 %v2414, 0.0
      %v2607 = vmax.f32 %v2415, 0.0
      %v2608 = vmax.f32 %v2416, 0.0
      %v2609 = vmax.f32 %v2417, 0.0
      %v2610 = vmax.f32 %v2418, 0.0
      %v2611 = vmax.f32 %v2419, 0.0
      %v2612 = vmax.f32 %v2420, 0.0
      %v2613 = vmax.f32 %v2421, 0.0
      %v2614 = vmax.f32 %v2422, 0.0
      %v2615 = vmax.f32 %v2423, 0.0
      %v2616 = vmax.f32 %v2424, 0.0
      %v2617 = vmax.f32 %v2425, 0.0
      %v2618 = vmax.f32 %v2426, 0.0
      %v2619 = vmax.f32 %v2427, 0.0
      %v2620 = vmax.f32 %v2428, 0.0
      %v2621 = vmax.f32 %v2429, 0.0
      %v2622 = vmax.f32 %v2430, 0.0
      %v2623 = vmax.f32 %v2431, 0.0
      %v2624 = vmax.f32 %v2432, 0.0
      %v2625 = vmax.f32 %v2433, 0.0
      %v2626 = vmax.f32 %v2434, 0.0
      %v2627 = vmax.f32 %v2435, 0.0
      %v2628 = vmax.f32 %v2436, 0.0
      %v2629 = vmax.f32 %v2437, 0.0
      %v2630 = vmax.f32 %v2438, 0.0
      %v2631 = vmax.f32 %v2439, 0.0
      %v2632 = vmax.f32 %v2440, 0.0
      %v2633 = vmax.f32 %v2441, 0.0
      %v2634 = vmax.f32 %v2442, 0.0
      %v2635 = vmax.f32 %v2443, 0.0
      %v2636 = vmax.f32 %v2444, 0.0
      %v2637 = vmax.f32 %v2445, 0.0
      %v2638 = vmax.f32 %v2446, 0.0
      %v2639 = vmax.f32 %v2447, 0.0
      %v2640 = vmax.f32 %v2448, 0.0
      %v2641 = vmax.f32 %v2449, 0.0
      %v2642 = vmax.f32 %v2450, 0.0
      %v2643 = vmax.f32 %v2451, 0.0
      %v2644 = vmax.f32 %v2452, 0.0
      %v2645 = vmax.f32 %v2453, 0.0
      %v2646 = vmax.f32 %v2454, 0.0
      %v2647 = vmax.f32 %v2455, 0.0
      %v2648 = vmax.f32 %v2456, 0.0
      %v2649 = vmax.f32 %v2457, 0.0
      %v2650 = vmax.f32 %v2458, 0.0
      %v2651 = vmax.f32 %v2459, 0.0
      %v2652 = vmax.f32 %v2460, 0.0
      %v2653 = vmax.f32 %v2461, 0.0
      %v2654 = vmax.f32 %v2462, 0.0
      %v2655 = vmax.f32 %v2463, 0.0
      %v2656 = vmax.f32 %v2464, 0.0
      %v2657 = vmax.f32 %v2465, 0.0
      %v2658 = vmax.f32 %v2466, 0.0
      %v2659 = vmax.f32 %v2467, 0.0
      %v2660 = vmax.f32 %v2468, 0.0
      %v2661 = vmax.f32 %v2469, 0.0
      %v2662 = vmax.f32 %v2470, 0.0
      %v2663 = vmax.f32 %v2471, 0.0
      %v2664 = vmax.f32 %v2472, 0.0
      %v2665 = vmax.f32 %v2473, 0.0
      %v2666 = vmax.f32 %v2474, 0.0
      %v2667 = vmax.f32 %v2475, 0.0
      %v2668 = vmax.f32 %v2476, 0.0
      %v2669 = vmax.f32 %v2477, 0.0
      %v2670 = vmax.f32 %v2478, 0.0
      %v2671 = vmax.f32 %v2479, 0.0
      %v2672 = vmax.f32 %v2480, 0.0
      %v2673 = vmax.f32 %v2481, 0.0
      %v2674 = vmax.f32 %v2482, 0.0
      %v2675 = vmax.f32 %v2483, 0.0
      %v2676 = vmax.f32 %v2484, 0.0
      %v2677 = vmax.f32 %v2485, 0.0
      %v2678 = vmax.f32 %v2486, 0.0
      %v2679 = vmax.f32 %v2487, 0.0
      %v2680 = vmax.f32 %v2488, 0.0
      %v2681 = vmax.f32 %v2489, 0.0
      %v2682 = vmax.f32 %v2490, 0.0
      %v2683 = vmax.f32 %v2491, 0.0
      %v2684 = vmax.f32 %v2492, 0.0
      %v2685 = vmax.f32 %v2493, 0.0
      %v2686 = vmax.f32 %v2494, 0.0
      %v2687 = vmax.f32 %v2495, 0.0
      %v2688 = vmax.f32 %v2496, 0.0
      %v2689 = vmax.f32 %v2497, 0.0
      %v2690 = vmax.f32 %v2498, 0.0
      %v2691 = vmax.f32 %v2499, 0.0
      %v2692 = vmax.f32 %v2500, 0.0
      %v2693 = vmax.f32 %v2501, 0.0
      %v2694 = vmax.f32 %v2502, 0.0
      %v2695 = vmax.f32 %v2503, 0.0
      %v2696 = vmax.f32 %v2504, 0.0
      %v2697 = vmax.f32 %v2505, 0.0
      %v2698 = vmax.f32 %v2506, 0.0
      %v2699 = vmax.f32 %v2507, 0.0
      %v2700 = vmax.f32 %v2508, 0.0
      %v2701 = vmax.f32 %v2509, 0.0
      %v2702 = vmax.f32 %v2510, 0.0
      %v2703 = vmax.f32 %v2511, 0.0
      %v2704 = vmax.f32 %v2512, 0.0
      %v2705 = vmax.f32 %v2513, 0.0
      %v2706 = vmax.f32 %v2514, 0.0
      %v2707 = vmax.f32 %v2515, 0.0
      %v2708 = vmax.f32 %v2516, 0.0
      %v2709 = vmax.f32 %v2517, 0.0
      %v2710 = vld [vmem:[%s3] sm:$0xff]
      %v2711 = vld [vmem:[%s3 + $0x8] sm:$0xff]
      %v2712 = vld [vmem:[%s3 + $0x10] sm:$0xff]
      %v2713 = vld [vmem:[%s3 + $0x18] sm:$0xff]
      %v2714 = vld [vmem:[%s3 + $0x20] sm:$0xff]
      %v2715 = vld [vmem:[%s3 + $0x28] sm:$0xff]
      %v2716 = vld [vmem:[%s3 + $0x30] sm:$0xff]
      %v2717 = vld [vmem:[%s3 + $0x38] sm:$0xff]
      %v2718 = vld [vmem:[%s3 + $0x40] sm:$0xff]
      %v2719 = vld [vmem:[%s3 + $0x48] sm:$0xff]
      %v2720 = vld [vmem:[%s3 + $0x50] sm:$0xff]
      %v2721 = vld [vmem:[%s3 + $0x58] sm:$0xff]
      %v2722 = vld [vmem:[%s3 + $0x60] sm:$0xff]
      %v2723 = vld [vmem:[%s3 + $0x68] sm:$0xff]
      %v2724 = vld [vmem:[%s3 + $0x70] sm:$0xff]
      %v2725 = vld [vmem:[%s3 + $0x78] sm:$0xff]
      %v2726 = vld [vmem:[%s3 + $0x80] sm:$0xff]
      %v2727 = vld [vmem:[%s3 + $0x88] sm:$0xff]
      %v2728 = vld [vmem:[%s3 + $0x90] sm:$0xff]
      %v2729 = vld [vmem:[%s3 + $0x98] sm:$0xff]
      %v2730 = vld [vmem:[%s3 + $0xa0] sm:$0xff]
      %v2731 = vld [vmem:[%s3 + $0xa8] sm:$0xff]
      %v2732 = vld [vmem:[%s3 + $0xb0] sm:$0xff]
      %v2733 = vld [vmem:[%s3 + $0xb8] sm:$0xff]
      %v2734 = vld [vmem:[%s3 + $0xc0] sm:$0xff]
      %v2735 = vld [vmem:[%s3 + $0xc8] sm:$0xff]
      %v2736 = vld [vmem:[%s3 + $0xd0] sm:$0xff]
      %v2737 = vld [vmem:[%s3 + $0xd8] sm:$0xff]
      %v2738 = vld [vmem:[%s3 + $0xe0] sm:$0xff]
      %v2739 = vld [vmem:[%s3 + $0xe8] sm:$0xff]
      %v2740 = vld [vmem:[%s3 + $0xf0] sm:$0xff]
      %v2741 = vld [vmem:[%s3 + $0xf8] sm:$0xff]
      %v2742 = vld [vmem:[%s3 + $0x100] sm:$0xff]
      %v2743 = vld [vmem:[%s3 + $0x108] sm:$0xff]
      %v2744 = vld [vmem:[%s3 + $0x110] sm:$0xff]
      %v2745 = vld [vmem:[%s3 + $0x118] sm:$0xff]
      %vm2746 = vcmask 130048
      %v2748 = vsel %vm2746, %v2519, 0
      %v2751 = vsel %vm2746, %v2521, 0
      %v2754 = vsel %vm2746, %v2523, 0
      %v2757 = vsel %vm2746, %v2525, 0
      %v2760 = vsel %vm2746, %v2527, 0
      %v2763 = vsel %vm2746, %v2529, 0
      %v2766 = vsel %vm2746, %v2531, 0
      %v2769 = vsel %vm2746, %v2533, 0
      %v2772 = vsel %vm2746, %v2535, 0
      %v2775 = vsel %vm2746, %v2537, 0
      %v2778 = vsel %vm2746, %v2539, 0
      %v2781 = vsel %vm2746, %v2541, 0
      %v2784 = vsel %vm2746, %v2543, 0
      %v2787 = vsel %vm2746, %v2545, 0
      %v2790 = vsel %vm2746, %v2547, 0
      %v2793 = vsel %vm2746, %v2549, 0
      %v2796 = vsel %vm2746, %v2551, 0
      %v2799 = vsel %vm2746, %v2553, 0
      %v2802 = vsel %vm2746, %v2555, 0
      %v2805 = vsel %vm2746, %v2557, 0
      %v2808 = vsel %vm2746, %v2559, 0
      %v2811 = vsel %vm2746, %v2561, 0
      %v2814 = vsel %vm2746, %v2563, 0
      %v2817 = vsel %vm2746, %v2565, 0
      %v2820 = vsel %vm2746, %v2567, 0
      %v2823 = vsel %vm2746, %v2569, 0
      %v2826 = vsel %vm2746, %v2571, 0
      %v2829 = vsel %vm2746, %v2573, 0
      %v2832 = vsel %vm2746, %v2575, 0
      %v2835 = vsel %vm2746, %v2577, 0
      %v2838 = vsel %vm2746, %v2579, 0
      %v2841 = vsel %vm2746, %v2581, 0
      %v2844 = vsel %vm2746, %v2583, 0
      %v2847 = vsel %vm2746, %v2585, 0
      %v2850 = vsel %vm2746, %v2587, 0
      %v2853 = vsel %vm2746, %v2589, 0
      %v2856 = vsel %vm2746, %v2591, 0
      %v2859 = vsel %vm2746, %v2593, 0
      %v2862 = vsel %vm2746, %v2595, 0
      %v2865 = vsel %vm2746, %v2597, 0
      %v2868 = vsel %vm2746, %v2599, 0
      %v2871 = vsel %vm2746, %v2601, 0
      %v2874 = vsel %vm2746, %v2603, 0
      %v2877 = vsel %vm2746, %v2605, 0
      %v2880 = vsel %vm2746, %v2607, 0
      %v2883 = vsel %vm2746, %v2609, 0
      %v2886 = vsel %vm2746, %v2611, 0
      %v2889 = vsel %vm2746, %v2613, 0
      %v2892 = vsel %vm2746, %v2615, 0
      %v2895 = vsel %vm2746, %v2617, 0
      %v2898 = vsel %vm2746, %v2619, 0
      %v2901 = vsel %vm2746, %v2621, 0
      %v2904 = vsel %vm2746, %v2623, 0
      %v2907 = vsel %vm2746, %v2625, 0
      %v2910 = vsel %vm2746, %v2627, 0
      %v2913 = vsel %vm2746, %v2629, 0
      %v2916 = vsel %vm2746, %v2631, 0
      %v2919 = vsel %vm2746, %v2633, 0
      %v2922 = vsel %vm2746, %v2635, 0
      %v2925 = vsel %vm2746, %v2637, 0
      %v2928 = vsel %vm2746, %v2639, 0
      %v2931 = vsel %vm2746, %v2641, 0
      %v2934 = vsel %vm2746, %v2643, 0
      %v2937 = vsel %vm2746, %v2645, 0
      %v2940 = vsel %vm2746, %v2647, 0
      %v2943 = vsel %vm2746, %v2649, 0
      %v2946 = vsel %vm2746, %v2651, 0
      %v2949 = vsel %vm2746, %v2653, 0
      %v2952 = vsel %vm2746, %v2655, 0
      %v2955 = vsel %vm2746, %v2657, 0
      %v2958 = vsel %vm2746, %v2659, 0
      %v2961 = vsel %vm2746, %v2661, 0
      %v2964 = vsel %vm2746, %v2663, 0
      %v2967 = vsel %vm2746, %v2665, 0
      %v2970 = vsel %vm2746, %v2667, 0
      %v2973 = vsel %vm2746, %v2669, 0
      %v2976 = vsel %vm2746, %v2671, 0
      %v2979 = vsel %vm2746, %v2673, 0
      %v2982 = vsel %vm2746, %v2675, 0
      %v2985 = vsel %vm2746, %v2677, 0
      %v2988 = vsel %vm2746, %v2679, 0
      %v2991 = vsel %vm2746, %v2681, 0
      %v2994 = vsel %vm2746, %v2683, 0
      %v2997 = vsel %vm2746, %v2685, 0
      %v3000 = vsel %vm2746, %v2687, 0
      %v3003 = vsel %vm2746, %v2689, 0
      %v3006 = vsel %vm2746, %v2691, 0
      %v3009 = vsel %vm2746, %v2693, 0
      %v3012 = vsel %vm2746, %v2695, 0
      %v3015 = vsel %vm2746, %v2697, 0
      %v3018 = vsel %vm2746, %v2699, 0
      %v3021 = vsel %vm2746, %v2701, 0
      %v3024 = vsel %vm2746, %v2703, 0
      %v3027 = vsel %vm2746, %v2705, 0
      %v3030 = vsel %vm2746, %v2707, 0
      %v3033 = vsel %vm2746, %v2709, 0
      %3035 = vmatprep.subr.mxu0 0.0
      %3036 = vmatpush1.msra.mxu0 %v2710
      %3037 = vmatprep.subr.mxu0 0.0
      %3038 = vmatpush1.msra.mxu0 %v2711
      %3039 = vmatprep.subr.mxu0 0.0
      %3040 = vmatpush1.msra.mxu0 %v2712
      %3041 = vmatprep.subr.mxu0 0.0
      %3042 = vmatpush1.msra.mxu0 %v2713
      %3043 = vmatprep.subr.mxu0 0.0
      %3044 = vmatpush1.msra.mxu0 %v2714
      %3045 = vmatprep.subr.mxu0 0.0
      %3046 = vmatpush1.msra.mxu0 %v2715
      %3047 = vmatprep.subr.mxu0 0.0
      %3048 = vmatpush1.msra.mxu0 %v2716
      %3049 = vmatprep.subr.mxu0 0.0
      %3050 = vmatpush1.msra.mxu0 %v2717
      %3051 = vmatprep.subr.mxu0 0.0
      %3052 = vmatpush1.msra.mxu0 %v2718
      %3053 = vmatprep.subr.mxu0 0.0
      %3054 = vmatpush1.msra.mxu0 %v2719
      %3055 = vmatprep.subr.mxu0 0.0
      %3056 = vmatpush1.msra.mxu0 %v2720
      %3057 = vmatprep.subr.mxu0 0.0
      %3058 = vmatpush1.msra.mxu0 %v2721
      %3059 = vmatprep.subr.mxu0 0.0
      %3060 = vmatpush1.msra.mxu0 %v2722
      %3061 = vmatprep.subr.mxu0 0.0
      %3062 = vmatpush1.msra.mxu0 %v2723
      %3063 = vmatprep.subr.mxu0 0.0
      %3064 = vmatpush1.msra.mxu0 %v2724
      %3065 = vmatprep.subr.mxu0 0.0
      %3066 = vmatpush1.msra.mxu0 %v2725
      %3067 = vmatprep.subr.mxu0 0.0
      %3068 = vmatpush1.msra.mxu0 %v2726
      %3069 = vmatprep.subr.mxu0 0.0
      %3070 = vmatpush1.msra.mxu0 %v2727
      %3071 = vmatprep.subr.mxu0 0.0
      %3072 = vmatpush1.msra.mxu0 0.0
      %3073 = vmatprep.subr.mxu0 0.0
      %3074 = vmatpush1.msra.mxu0 0.0
      %3075 = vmatprep.subr.mxu0 0.0
      %3076 = vmatpush1.msra.mxu0 0.0
      %3077 = vmatprep.subr.mxu0 0.0
      %3078 = vmatpush1.msra.mxu0 0.0
      %3079 = vmatprep.subr.mxu0 0.0
      %3080 = vmatpush1.msra.mxu0 0.0
      %3081 = vmatprep.subr.mxu0 0.0
      %3082 = vmatpush1.msra.mxu0 0.0
      %3083 = vmatprep.subr.mxu0 0.0
      %3084 = vmatpush1.msra.mxu0 0.0
      %3085 = vmatprep.subr.mxu0 0.0
      %3086 = vmatpush1.msra.mxu0 0.0
      %3087 = vmatprep.subr.mxu0 0.0
      %3088 = vmatpush1.msra.mxu0 0.0
      %3089 = vmatprep.subr.mxu0 0.0
      %3090 = vmatpush1.msra.mxu0 0.0
      %3091 = vmatprep.subr.mxu0 0.0
      %3092 = vmatpush1.msra.mxu0 0.0
      %3093 = vmatprep.subr.mxu0 0.0
      %3094 = vmatpush1.msra.mxu0 0.0
      %3095 = vmatprep.subr.mxu0 0.0
      %3096 = vmatpush1.msra.mxu0 0.0
      %3097 = vmatprep.subr.mxu0 0.0
      %3098 = vmatpush1.msra.mxu0 0.0
      %3099 = vmatprep.mubr.f32.mxu0 %v2748
      %3100 = vmatmul.mubr.f32.gmra.mrb[0].mxu0 %v2518
      %v3101 = vpop.f32.mrb[0].mxu0
      %v3102 = vadd.f32 0.0, %v3101
      %v3103 = vpop.f32.mrb[0].mxu0
      %3104 = vmatprep.mubr.f32.mxu0 %v2751
      %3105 = vmatmul.mubr.f32.gmra.mrb[0].mxu0 %v2520
      %v3106 = vpop.f32.mrb[0].mxu0
      %v3107 = vadd.f32 0.0, %v3106
      %v3108 = vpop.f32.mrb[0].mxu0
      %3109 = vmatprep.mubr.f32.mxu0 %v2754
      %3110 = vmatmul.mubr.f32.gmra.mrb[0].mxu0 %v2522
      %v3111 = vpop.f32.mrb[0].mxu0
      %v3112 = vadd.f32 0.0, %v3111
      %v3113 = vpop.f32.mrb[0].mxu0
      %3114 = vmatprep.mubr.f32.mxu0 %v2757
      %3115 = vmatmul.mubr.f32.gmra.mrb[0].mxu0 %v2524
      %v3116 = vpop.f32.mrb[0].mxu0
      %v3117 = vadd.f32 0.0, %v3116
      %v3118 = vpop.f32.mrb[0].mxu0
      %3119 = vmatprep.mubr.f32.mxu0 %v2760
      %3120 = vmatmul.mubr.f32.gmra.mrb[0].mxu0 %v2526
      %v3121 = vpop.f32.mrb[0].mxu0
      %v3122 = vadd.f32 0.0, %v3121
      %v3123 = vpop.f32.mrb[0].mxu0
      %3124 = vmatprep.mubr.f32.mxu0 %v2763
      %3125 = vmatmul.mubr.f32.gmra.mrb[0].mxu0 %v2528
      %v3126 = vpop.f32.mrb[0].mxu0
      %v3127 = vadd.f32 0.0, %v3126
      %v3128 = vpop.f32.mrb[0].mxu0
      %3129 = vmatprep.mubr.f32.mxu0 %v2766
      %3130 = vmatmul.mubr.f32.gmra.mrb[0].mxu0 %v2530
      %v3131 = vpop.f32.mrb[0].mxu0
      %v3132 = vadd.f32 0.0, %v3131
      %v3133 = vpop.f32.mrb[0].mxu0
      %3134 = vmatprep.mubr.f32.mxu0 %v2769
      %3135 = vmatmul.mubr.f32.gmra.mrb[0].mxu0 %v2532
      %v3136 = vpop.f32.mrb[0].mxu0
      %v3137 = vadd.f32 0.0, %v3136
      %v3138 = vpop.f32.mrb[0].mxu0
      %3139 = vmatprep.mubr.f32.mxu0 %v2772
      %3140 = vmatmul.mubr.f32.gmra.mrb[0].mxu0 %v2534
      %v3141 = vpop.f32.mrb[0].mxu0
      %v3142 = vadd.f32 0.0, %v3141
      %v3143 = vpop.f32.mrb[0].mxu0
      %3144 = vmatprep.mubr.f32.mxu0 %v2775
      %3145 = vmatmul.mubr.f32.gmra.mrb[0].mxu0 %v2536
      %v3146 = vpop.f32.mrb[0].mxu0
      %v3147 = vadd.f32 0.0, %v3146
      %v3148 = vpop.f32.mrb[0].mxu0
      %3149 = vmatprep.mubr.f32.mxu0 %v2778
      %3150 = vmatmul.mubr.f32.gmra.mrb[0].mxu0 %v2538
      %v3151 = vpop.f32.mrb[0].mxu0
      %v3152 = vadd.f32 0.0, %v3151
      %v3153 = vpop.f32.mrb[0].mxu0
      %3154 = vmatprep.mubr.f32.mxu0 %v2781
      %3155 = vmatmul.mubr.f32.gmra.mrb[0].mxu0 %v2540
      %v3156 = vpop.f32.mrb[0].mxu0
      %v3157 = vadd.f32 0.0, %v3156
      %v3158 = vpop.f32.mrb[0].mxu0
      %3159 = vmatprep.mubr.f32.mxu0 %v2784
      %3160 = vmatmul.mubr.f32.gmra.mrb[0].mxu0 %v2542
      %v3161 = vpop.f32.mrb[0].mxu0
      %v3162 = vadd.f32 0.0, %v3161
      %v3163 = vpop.f32.mrb[0].mxu0
      %3164 = vmatprep.mubr.f32.mxu0 %v2787
      %3165 = vmatmul.mubr.f32.gmra.mrb[0].mxu0 %v2544
      %v3166 = vpop.f32.mrb[0].mxu0
      %v3167 = vadd.f32 0.0, %v3166
      %v3168 = vpop.f32.mrb[0].mxu0
      %3169 = vmatprep.mubr.f32.mxu0 %v2790
      %3170 = vmatmul.mubr.f32.gmra.mrb[0].mxu0 %v2546
      %v3171 = vpop.f32.mrb[0].mxu0
      %v3172 = vadd.f32 0.0, %v3171
      %v3173 = vpop.f32.mrb[0].mxu0
      %3174 = vmatprep.mubr.f32.mxu0 %v2793
      %3175 = vmatmul.mubr.f32.gmra.mrb[0].mxu0 %v2548
      %v3176 = vpop.f32.mrb[0].mxu0
      %v3177 = vadd.f32 0.0, %v3176
      %v3178 = vpop.f32.mrb[0].mxu0
      %3179 = vmatprep.mubr.f32.mxu0 %v2796
      %3180 = vmatmul.mubr.f32.gmra.mrb[0].mxu0 %v2550
      %v3181 = vpop.f32.mrb[0].mxu0
      %v3182 = vadd.f32 0.0, %v3181
      %v3183 = vpop.f32.mrb[0].mxu0
      %3184 = vmatprep.mubr.f32.mxu0 %v2799
      %3185 = vmatmul.mubr.f32.gmra.mrb[0].mxu0 %v2552
      %v3186 = vpop.f32.mrb[0].mxu0
      %v3187 = vadd.f32 0.0, %v3186
      %v3188 = vpop.f32.mrb[0].mxu0
      %3189 = vmatprep.mubr.f32.mxu0 %v2802
      %3190 = vmatmul.mubr.f32.gmra.mrb[0].mxu0 %v2554
      %v3191 = vpop.f32.mrb[0].mxu0
      %v3192 = vadd.f32 0.0, %v3191
      %v3193 = vpop.f32.mrb[0].mxu0
      %3194 = vmatprep.mubr.f32.mxu0 %v2805
      %3195 = vmatmul.mubr.f32.gmra.mrb[0].mxu0 %v2556
      %v3196 = vpop.f32.mrb[0].mxu0
      %v3197 = vadd.f32 0.0, %v3196
      %v3198 = vpop.f32.mrb[0].mxu0
      %3199 = vmatprep.mubr.f32.mxu0 %v2808
      %3200 = vmatmul.mubr.f32.gmra.mrb[0].mxu0 %v2558
      %v3201 = vpop.f32.mrb[0].mxu0
      %v3202 = vadd.f32 0.0, %v3201
      %v3203 = vpop.f32.mrb[0].mxu0
      %3204 = vmatprep.mubr.f32.mxu0 %v2811
      %3205 = vmatmul.mubr.f32.gmra.mrb[0].mxu0 %v2560
      %v3206 = vpop.f32.mrb[0].mxu0
      %v3207 = vadd.f32 0.0, %v3206
      %v3208 = vpop.f32.mrb[0].mxu0
      %3209 = vmatprep.mubr.f32.mxu0 %v2814
      %3210 = vmatmul.mubr.f32.gmra.mrb[0].mxu0 %v2562
      %v3211 = vpop.f32.mrb[0].mxu0
      %v3212 = vadd.f32 0.0, %v3211
      %v3213 = vpop.f32.mrb[0].mxu0
      %3214 = vmatprep.mubr.f32.mxu0 %v2817
      %3215 = vmatmul.mubr.f32.gmra.mrb[0].mxu0 %v2564
      %v3216 = vpop.f32.mrb[0].mxu0
      %v3217 = vadd.f32 0.0, %v3216
      %v3218 = vpop.f32.mrb[0].mxu0
      %3219 = vmatprep.mubr.f32.mxu0 %v2820
      %3220 = vmatmul.mubr.f32.gmra.mrb[0].mxu0 %v2566
      %v3221 = vpop.f32.mrb[0].mxu0
      %v3222 = vadd.f32 0.0, %v3221
      %v3223 = vpop.f32.mrb[0].mxu0
      %3224 = vmatprep.mubr.f32.mxu0 %v2823
      %3225 = vmatmul.mubr.f32.gmra.mrb[0].mxu0 %v2568
      %v3226 = vpop.f32.mrb[0].mxu0
      %v3227 = vadd.f32 0.0, %v3226
      %v3228 = vpop.f32.mrb[0].mxu0
      %3229 = vmatprep.mubr.f32.mxu0 %v2826
      %3230 = vmatmul.mubr.f32.gmra.mrb[0].mxu0 %v2570
      %v3231 = vpop.f32.mrb[0].mxu0
      %v3232 = vadd.f32 0.0, %v3231
      %v3233 = vpop.f32.mrb[0].mxu0
      %3234 = vmatprep.mubr.f32.mxu0 %v2829
      %3235 = vmatmul.mubr.f32.gmra.mrb[0].mxu0 %v2572
      %v3236 = vpop.f32.mrb[0].mxu0
      %v3237 = vadd.f32 0.0, %v3236
      %v3238 = vpop.f32.mrb[0].mxu0
      %3239 = vmatprep.mubr.f32.mxu0 %v2832
      %3240 = vmatmul.mubr.f32.gmra.mrb[0].mxu0 %v2574
      %v3241 = vpop.f32.mrb[0].mxu0
      %v3242 = vadd.f32 0.0, %v3241
      %v3243 = vpop.f32.mrb[0].mxu0
      %3244 = vmatprep.mubr.f32.mxu0 %v2835
      %3245 = vmatmul.mubr.f32.gmra.mrb[0].mxu0 %v2576
      %v3246 = vpop.f32.mrb[0].mxu0
      %v3247 = vadd.f32 0.0, %v3246
      %v3248 = vpop.f32.mrb[0].mxu0
      %3249 = vmatprep.mubr.f32.mxu0 %v2838
      %3250 = vmatmul.mubr.f32.gmra.mrb[0].mxu0 %v2578
      %v3251 = vpop.f32.mrb[0].mxu0
      %v3252 = vadd.f32 0.0, %v3251
      %v3253 = vpop.f32.mrb[0].mxu0
      %3254 = vmatprep.mubr.f32.mxu0 %v2841
      %3255 = vmatmul.mubr.f32.gmra.mrb[0].mxu0 %v2580
      %v3256 = vpop.f32.mrb[0].mxu0
      %v3257 = vadd.f32 0.0, %v3256
      %v3258 = vpop.f32.mrb[0].mxu0
      %3259 = vmatprep.mubr.f32.mxu0 %v2844
      %3260 = vmatmul.mubr.f32.gmra.mrb[0].mxu0 %v2582
      %v3261 = vpop.f32.mrb[0].mxu0
      %v3262 = vadd.f32 0.0, %v3261
      %v3263 = vpop.f32.mrb[0].mxu0
      %3264 = vmatprep.mubr.f32.mxu0 %v2847
      %3265 = vmatmul.mubr.f32.gmra.mrb[0].mxu0 %v2584
      %v3266 = vpop.f32.mrb[0].mxu0
      %v3267 = vadd.f32 0.0, %v3266
      %v3268 = vpop.f32.mrb[0].mxu0
      %3269 = vmatprep.mubr.f32.mxu0 %v2850
      %3270 = vmatmul.mubr.f32.gmra.mrb[0].mxu0 %v2586
      %v3271 = vpop.f32.mrb[0].mxu0
      %v3272 = vadd.f32 0.0, %v3271
      %v3273 = vpop.f32.mrb[0].mxu0
      %3274 = vmatprep.mubr.f32.mxu0 %v2853
      %3275 = vmatmul.mubr.f32.gmra.mrb[0].mxu0 %v2588
      %v3276 = vpop.f32.mrb[0].mxu0
      %v3277 = vadd.f32 0.0, %v3276
      %v3278 = vpop.f32.mrb[0].mxu0
      %3279 = vmatprep.mubr.f32.mxu0 %v2856
      %3280 = vmatmul.mubr.f32.gmra.mrb[0].mxu0 %v2590
      %v3281 = vpop.f32.mrb[0].mxu0
      %v3282 = vadd.f32 0.0, %v3281
      %v3283 = vpop.f32.mrb[0].mxu0
      %3284 = vmatprep.mubr.f32.mxu0 %v2859
      %3285 = vmatmul.mubr.f32.gmra.mrb[0].mxu0 %v2592
      %v3286 = vpop.f32.mrb[0].mxu0
      %v3287 = vadd.f32 0.0, %v3286
      %v3288 = vpop.f32.mrb[0].mxu0
      %3289 = vmatprep.mubr.f32.mxu0 %v2862
      %3290 = vmatmul.mubr.f32.gmra.mrb[0].mxu0 %v2594
      %v3291 = vpop.f32.mrb[0].mxu0
      %v3292 = vadd.f32 0.0, %v3291
      %v3293 = vpop.f32.mrb[0].mxu0
      %3294 = vmatprep.mubr.f32.mxu0 %v2865
      %3295 = vmatmul.mubr.f32.gmra.mrb[0].mxu0 %v2596
      %v3296 = vpop.f32.mrb[0].mxu0
      %v3297 = vadd.f32 0.0, %v3296
      %v3298 = vpop.f32.mrb[0].mxu0
      %3299 = vmatprep.mubr.f32.mxu0 %v2868
      %3300 = vmatmul.mubr.f32.gmra.mrb[0].mxu0 %v2598
      %v3301 = vpop.f32.mrb[0].mxu0
      %v3302 = vadd.f32 0.0, %v3301
      %v3303 = vpop.f32.mrb[0].mxu0
      %3304 = vmatprep.mubr.f32.mxu0 %v2871
      %3305 = vmatmul.mubr.f32.gmra.mrb[0].mxu0 %v2600
      %v3306 = vpop.f32.mrb[0].mxu0
      %v3307 = vadd.f32 0.0, %v3306
      %v3308 = vpop.f32.mrb[0].mxu0
      %3309 = vmatprep.mubr.f32.mxu0 %v2874
      %3310 = vmatmul.mubr.f32.gmra.mrb[0].mxu0 %v2602
      %v3311 = vpop.f32.mrb[0].mxu0
      %v3312 = vadd.f32 0.0, %v3311
      %v3313 = vpop.f32.mrb[0].mxu0
      %3314 = vmatprep.mubr.f32.mxu0 %v2877
      %3315 = vmatmul.mubr.f32.gmra.mrb[0].mxu0 %v2604
      %v3316 = vpop.f32.mrb[0].mxu0
      %v3317 = vadd.f32 0.0, %v3316
      %v3318 = vpop.f32.mrb[0].mxu0
      %3319 = vmatprep.mubr.f32.mxu0 %v2880
      %3320 = vmatmul.mubr.f32.gmra.mrb[0].mxu0 %v2606
      %v3321 = vpop.f32.mrb[0].mxu0
      %v3322 = vadd.f32 0.0, %v3321
      %v3323 = vpop.f32.mrb[0].mxu0
      %3324 = vmatprep.mubr.f32.mxu0 %v2883
      %3325 = vmatmul.mubr.f32.gmra.mrb[0].mxu0 %v2608
      %v3326 = vpop.f32.mrb[0].mxu0
      %v3327 = vadd.f32 0.0, %v3326
      %v3328 = vpop.f32.mrb[0].mxu0
      %3329 = vmatprep.mubr.f32.mxu0 %v2886
      %3330 = vmatmul.mubr.f32.gmra.mrb[0].mxu0 %v2610
      %v3331 = vpop.f32.mrb[0].mxu0
      %v3332 = vadd.f32 0.0, %v3331
      %v3333 = vpop.f32.mrb[0].mxu0
      %3334 = vmatprep.mubr.f32.mxu0 %v2889
      %3335 = vmatmul.mubr.f32.gmra.mrb[0].mxu0 %v2612
      %v3336 = vpop.f32.mrb[0].mxu0
      %v3337 = vadd.f32 0.0, %v3336
      %v3338 = vpop.f32.mrb[0].mxu0
      %3339 = vmatprep.mubr.f32.mxu0 %v2892
      %3340 = vmatmul.mubr.f32.gmra.mrb[0].mxu0 %v2614
      %v3341 = vpop.f32.mrb[0].mxu0
      %v3342 = vadd.f32 0.0, %v3341
      %v3343 = vpop.f32.mrb[0].mxu0
      %3344 = vmatprep.mubr.f32.mxu0 %v2895
      %3345 = vmatmul.mubr.f32.gmra.mrb[0].mxu0 %v2616
      %v3346 = vpop.f32.mrb[0].mxu0
      %v3347 = vadd.f32 0.0, %v3346
      %v3348 = vpop.f32.mrb[0].mxu0
      %3349 = vmatprep.mubr.f32.mxu0 %v2898
      %3350 = vmatmul.mubr.f32.gmra.mrb[0].mxu0 %v2618
      %v3351 = vpop.f32.mrb[0].mxu0
      %v3352 = vadd.f32 0.0, %v3351
      %v3353 = vpop.f32.mrb[0].mxu0
      %3354 = vmatprep.mubr.f32.mxu0 %v2901
      %3355 = vmatmul.mubr.f32.gmra.mrb[0].mxu0 %v2620
      %v3356 = vpop.f32.mrb[0].mxu0
      %v3357 = vadd.f32 0.0, %v3356
      %v3358 = vpop.f32.mrb[0].mxu0
      %3359 = vmatprep.mubr.f32.mxu0 %v2904
      %3360 = vmatmul.mubr.f32.gmra.mrb[0].mxu0 %v2622
      %v3361 = vpop.f32.mrb[0].mxu0
      %v3362 = vadd.f32 0.0, %v3361
      %v3363 = vpop.f32.mrb[0].mxu0
      %3364 = vmatprep.mubr.f32.mxu0 %v2907
      %3365 = vmatmul.mubr.f32.gmra.mrb[0].mxu0 %v2624
      %v3366 = vpop.f32.mrb[0].mxu0
      %v3367 = vadd.f32 0.0, %v3366
      %v3368 = vpop.f32.mrb[0].mxu0
      %3369 = vmatprep.mubr.f32.mxu0 %v2910
      %3370 = vmatmul.mubr.f32.gmra.mrb[0].mxu0 %v2626
      %v3371 = vpop.f32.mrb[0].mxu0
      %v3372 = vadd.f32 0.0, %v3371
      %v3373 = vpop.f32.mrb[0].mxu0
      %3374 = vmatprep.mubr.f32.mxu0 %v2913
      %3375 = vmatmul.mubr.f32.gmra.mrb[0].mxu0 %v2628
      %v3376 = vpop.f32.mrb[0].mxu0
      %v3377 = vadd.f32 0.0, %v3376
      %v3378 = vpop.f32.mrb[0].mxu0
      %3379 = vmatprep.mubr.f32.mxu0 %v2916
      %3380 = vmatmul.mubr.f32.gmra.mrb[0].mxu0 %v2630
      %v3381 = vpop.f32.mrb[0].mxu0
      %v3382 = vadd.f32 0.0, %v3381
      %v3383 = vpop.f32.mrb[0].mxu0
      %3384 = vmatprep.mubr.f32.mxu0 %v2919
      %3385 = vmatmul.mubr.f32.gmra.mrb[0].mxu0 %v2632
      %v3386 = vpop.f32.mrb[0].mxu0
      %v3387 = vadd.f32 0.0, %v3386
      %v3388 = vpop.f32.mrb[0].mxu0
      %3389 = vmatprep.mubr.f32.mxu0 %v2922
      %3390 = vmatmul.mubr.f32.gmra.mrb[0].mxu0 %v2634
      %v3391 = vpop.f32.mrb[0].mxu0
      %v3392 = vadd.f32 0.0, %v3391
      %v3393 = vpop.f32.mrb[0].mxu0
      %3394 = vmatprep.mubr.f32.mxu0 %v2925
      %3395 = vmatmul.mubr.f32.gmra.mrb[0].mxu0 %v2636
      %v3396 = vpop.f32.mrb[0].mxu0
      %v3397 = vadd.f32 0.0, %v3396
      %v3398 = vpop.f32.mrb[0].mxu0
      %3399 = vmatprep.mubr.f32.mxu0 %v2928
      %3400 = vmatmul.mubr.f32.gmra.mrb[0].mxu0 %v2638
      %v3401 = vpop.f32.mrb[0].mxu0
      %v3402 = vadd.f32 0.0, %v3401
      %v3403 = vpop.f32.mrb[0].mxu0
      %3404 = vmatprep.mubr.f32.mxu0 %v2931
      %3405 = vmatmul.mubr.f32.gmra.mrb[0].mxu0 %v2640
      %v3406 = vpop.f32.mrb[0].mxu0
      %v3407 = vadd.f32 0.0, %v3406
      %v3408 = vpop.f32.mrb[0].mxu0
      %3409 = vmatprep.mubr.f32.mxu0 %v2934
      %3410 = vmatmul.mubr.f32.gmra.mrb[0].mxu0 %v2642
      %v3411 = vpop.f32.mrb[0].mxu0
      %v3412 = vadd.f32 0.0, %v3411
      %v3413 = vpop.f32.mrb[0].mxu0
      %3414 = vmatprep.mubr.f32.mxu0 %v2937
      %3415 = vmatmul.mubr.f32.gmra.mrb[0].mxu0 %v2644
      %v3416 = vpop.f32.mrb[0].mxu0
      %v3417 = vadd.f32 0.0, %v3416
      %v3418 = vpop.f32.mrb[0].mxu0
      %3419 = vmatprep.mubr.f32.mxu0 %v2940
      %3420 = vmatmul.mubr.f32.gmra.mrb[0].mxu0 %v2646
      %v3421 = vpop.f32.mrb[0].mxu0
      %v3422 = vadd.f32 0.0, %v3421
      %v3423 = vpop.f32.mrb[0].mxu0
      %3424 = vmatprep.mubr.f32.mxu0 %v2943
      %3425 = vmatmul.mubr.f32.gmra.mrb[0].mxu0 %v2648
      %v3426 = vpop.f32.mrb[0].mxu0
      %v3427 = vadd.f32 0.0, %v3426
      %v3428 = vpop.f32.mrb[0].mxu0
      %3429 = vmatprep.mubr.f32.mxu0 %v2946
      %3430 = vmatmul.mubr.f32.gmra.mrb[0].mxu0 %v2650
      %v3431 = vpop.f32.mrb[0].mxu0
      %v3432 = vadd.f32 0.0, %v3431
      %v3433 = vpop.f32.mrb[0].mxu0
      %3434 = vmatprep.mubr.f32.mxu0 %v2949
      %3435 = vmatmul.mubr.f32.gmra.mrb[0].mxu0 %v2652
      %v3436 = vpop.f32.mrb[0].mxu0
      %v3437 = vadd.f32 0.0, %v3436
      %v3438 = vpop.f32.mrb[0].mxu0
      %3439 = vmatprep.mubr.f32.mxu0 %v2952
      %3440 = vmatmul.mubr.f32.gmra.mrb[0].mxu0 %v2654
      %v3441 = vpop.f32.mrb[0].mxu0
      %v3442 = vadd.f32 0.0, %v3441
      %v3443 = vpop.f32.mrb[0].mxu0
      %3444 = vmatprep.mubr.f32.mxu0 %v2955
      %3445 = vmatmul.mubr.f32.gmra.mrb[0].mxu0 %v2656
      %v3446 = vpop.f32.mrb[0].mxu0
      %v3447 = vadd.f32 0.0, %v3446
      %v3448 = vpop.f32.mrb[0].mxu0
      %3449 = vmatprep.mubr.f32.mxu0 %v2958
      %3450 = vmatmul.mubr.f32.gmra.mrb[0].mxu0 %v2658
      %v3451 = vpop.f32.mrb[0].mxu0
      %v3452 = vadd.f32 0.0, %v3451
      %v3453 = vpop.f32.mrb[0].mxu0
      %3454 = vmatprep.mubr.f32.mxu0 %v2961
      %3455 = vmatmul.mubr.f32.gmra.mrb[0].mxu0 %v2660
      %v3456 = vpop.f32.mrb[0].mxu0
      %v3457 = vadd.f32 0.0, %v3456
      %v3458 = vpop.f32.mrb[0].mxu0
      %3459 = vmatprep.mubr.f32.mxu0 %v2964
      %3460 = vmatmul.mubr.f32.gmra.mrb[0].mxu0 %v2662
      %v3461 = vpop.f32.mrb[0].mxu0
      %v3462 = vadd.f32 0.0, %v3461
      %v3463 = vpop.f32.mrb[0].mxu0
      %3464 = vmatprep.mubr.f32.mxu0 %v2967
      %3465 = vmatmul.mubr.f32.gmra.mrb[0].mxu0 %v2664
      %v3466 = vpop.f32.mrb[0].mxu0
      %v3467 = vadd.f32 0.0, %v3466
      %v3468 = vpop.f32.mrb[0].mxu0
      %3469 = vmatprep.mubr.f32.mxu0 %v2970
      %3470 = vmatmul.mubr.f32.gmra.mrb[0].mxu0 %v2666
      %v3471 = vpop.f32.mrb[0].mxu0
      %v3472 = vadd.f32 0.0, %v3471
      %v3473 = vpop.f32.mrb[0].mxu0
      %3474 = vmatprep.mubr.f32.mxu0 %v2973
      %3475 = vmatmul.mubr.f32.gmra.mrb[0].mxu0 %v2668
      %v3476 = vpop.f32.mrb[0].mxu0
      %v3477 = vadd.f32 0.0, %v3476
      %v3478 = vpop.f32.mrb[0].mxu0
      %3479 = vmatprep.mubr.f32.mxu0 %v2976
      %3480 = vmatmul.mubr.f32.gmra.mrb[0].mxu0 %v2670
      %v3481 = vpop.f32.mrb[0].mxu0
      %v3482 = vadd.f32 0.0, %v3481
      %v3483 = vpop.f32.mrb[0].mxu0
      %3484 = vmatprep.mubr.f32.mxu0 %v2979
      %3485 = vmatmul.mubr.f32.gmra.mrb[0].mxu0 %v2672
      %v3486 = vpop.f32.mrb[0].mxu0
      %v3487 = vadd.f32 0.0, %v3486
      %v3488 = vpop.f32.mrb[0].mxu0
      %3489 = vmatprep.mubr.f32.mxu0 %v2982
      %3490 = vmatmul.mubr.f32.gmra.mrb[0].mxu0 %v2674
      %v3491 = vpop.f32.mrb[0].mxu0
      %v3492 = vadd.f32 0.0, %v3491
      %v3493 = vpop.f32.mrb[0].mxu0
      %3494 = vmatprep.mubr.f32.mxu0 %v2985
      %3495 = vmatmul.mubr.f32.gmra.mrb[0].mxu0 %v2676
      %v3496 = vpop.f32.mrb[0].mxu0
      %v3497 = vadd.f32 0.0, %v3496
      %v3498 = vpop.f32.mrb[0].mxu0
      %3499 = vmatprep.mubr.f32.mxu0 %v2988
      %3500 = vmatmul.mubr.f32.gmra.mrb[0].mxu0 %v2678
      %v3501 = vpop.f32.mrb[0].mxu0
      %v3502 = vadd.f32 0.0, %v3501
      %v3503 = vpop.f32.mrb[0].mxu0
      %3504 = vmatprep.mubr.f32.mxu0 %v2991
      %3505 = vmatmul.mubr.f32.gmra.mrb[0].mxu0 %v2680
      %v3506 = vpop.f32.mrb[0].mxu0
      %v3507 = vadd.f32 0.0, %v3506
      %v3508 = vpop.f32.mrb[0].mxu0
      %3509 = vmatprep.mubr.f32.mxu0 %v2994
      %3510 = vmatmul.mubr.f32.gmra.mrb[0].mxu0 %v2682
      %v3511 = vpop.f32.mrb[0].mxu0
      %v3512 = vadd.f32 0.0, %v3511
      %v3513 = vpop.f32.mrb[0].mxu0
      %3514 = vmatprep.mubr.f32.mxu0 %v2997
      %3515 = vmatmul.mubr.f32.gmra.mrb[0].mxu0 %v2684
      %v3516 = vpop.f32.mrb[0].mxu0
      %v3517 = vadd.f32 0.0, %v3516
      %v3518 = vpop.f32.mrb[0].mxu0
      %3519 = vmatprep.mubr.f32.mxu0 %v3000
      %3520 = vmatmul.mubr.f32.gmra.mrb[0].mxu0 %v2686
      %v3521 = vpop.f32.mrb[0].mxu0
      %v3522 = vadd.f32 0.0, %v3521
      %v3523 = vpop.f32.mrb[0].mxu0
      %3524 = vmatprep.mubr.f32.mxu0 %v3003
      %3525 = vmatmul.mubr.f32.gmra.mrb[0].mxu0 %v2688
      %v3526 = vpop.f32.mrb[0].mxu0
      %v3527 = vadd.f32 0.0, %v3526
      %v3528 = vpop.f32.mrb[0].mxu0
      %3529 = vmatprep.mubr.f32.mxu0 %v3006
      %3530 = vmatmul.mubr.f32.gmra.mrb[0].mxu0 %v2690
      %v3531 = vpop.f32.mrb[0].mxu0
      %v3532 = vadd.f32 0.0, %v3531
      %v3533 = vpop.f32.mrb[0].mxu0
      %3534 = vmatprep.mubr.f32.mxu0 %v3009
      %3535 = vmatmul.mubr.f32.gmra.mrb[0].mxu0 %v2692
      %v3536 = vpop.f32.mrb[0].mxu0
      %v3537 = vadd.f32 0.0, %v3536
      %v3538 = vpop.f32.mrb[0].mxu0
      %3539 = vmatprep.mubr.f32.mxu0 %v3012
      %3540 = vmatmul.mubr.f32.gmra.mrb[0].mxu0 %v2694
      %v3541 = vpop.f32.mrb[0].mxu0
      %v3542 = vadd.f32 0.0, %v3541
      %v3543 = vpop.f32.mrb[0].mxu0
      %3544 = vmatprep.mubr.f32.mxu0 %v3015
      %3545 = vmatmul.mubr.f32.gmra.mrb[0].mxu0 %v2696
      %v3546 = vpop.f32.mrb[0].mxu0
      %v3547 = vadd.f32 0.0, %v3546
      %v3548 = vpop.f32.mrb[0].mxu0
      %3549 = vmatprep.mubr.f32.mxu0 %v3018
      %3550 = vmatmul.mubr.f32.gmra.mrb[0].mxu0 %v2698
      %v3551 = vpop.f32.mrb[0].mxu0
      %v3552 = vadd.f32 0.0, %v3551
      %v3553 = vpop.f32.mrb[0].mxu0
      %3554 = vmatprep.mubr.f32.mxu0 %v3021
      %3555 = vmatmul.mubr.f32.gmra.mrb[0].mxu0 %v2700
      %v3556 = vpop.f32.mrb[0].mxu0
      %v3557 = vadd.f32 0.0, %v3556
      %v3558 = vpop.f32.mrb[0].mxu0
      %3559 = vmatprep.mubr.f32.mxu0 %v3024
      %3560 = vmatmul.mubr.f32.gmra.mrb[0].mxu0 %v2702
      %v3561 = vpop.f32.mrb[0].mxu0
      %v3562 = vadd.f32 0.0, %v3561
      %v3563 = vpop.f32.mrb[0].mxu0
      %3564 = vmatprep.mubr.f32.mxu0 %v3027
      %3565 = vmatmul.mubr.f32.gmra.mrb[0].mxu0 %v2704
      %v3566 = vpop.f32.mrb[0].mxu0
      %v3567 = vadd.f32 0.0, %v3566
      %v3568 = vpop.f32.mrb[0].mxu0
      %3569 = vmatprep.mubr.f32.mxu0 %v3030
      %3570 = vmatmul.mubr.f32.gmra.mrb[0].mxu0 %v2706
      %v3571 = vpop.f32.mrb[0].mxu0
      %v3572 = vadd.f32 0.0, %v3571
      %v3573 = vpop.f32.mrb[0].mxu0
      %3574 = vmatprep.mubr.f32.mxu0 %v3033
      %3575 = vmatmul.mubr.f32.gmra.mrb[0].mxu0 %v2708
      %v3576 = vpop.f32.mrb[0].mxu0
      %v3577 = vadd.f32 0.0, %v3576
      %v3578 = vpop.f32.mrb[0].mxu0
      %3579 = vdwg.mxu0
      %3580 = vmatprep.subr.mxu0 0.0
      %3581 = vmatpush1.msra.mxu0 %v2728
      %3582 = vmatprep.subr.mxu0 0.0
      %3583 = vmatpush1.msra.mxu0 %v2729
      %3584 = vmatprep.subr.mxu0 0.0
      %3585 = vmatpush1.msra.mxu0 %v2730
      %3586 = vmatprep.subr.mxu0 0.0
      %3587 = vmatpush1.msra.mxu0 %v2731
      %3588 = vmatprep.subr.mxu0 0.0
      %3589 = vmatpush1.msra.mxu0 %v2732
      %3590 = vmatprep.subr.mxu0 0.0
      %3591 = vmatpush1.msra.mxu0 %v2733
      %3592 = vmatprep.subr.mxu0 0.0
      %3593 = vmatpush1.msra.mxu0 %v2734
      %3594 = vmatprep.subr.mxu0 0.0
      %3595 = vmatpush1.msra.mxu0 %v2735
      %3596 = vmatprep.subr.mxu0 0.0
      %3597 = vmatpush1.msra.mxu0 %v2736
      %3598 = vmatprep.subr.mxu0 0.0
      %3599 = vmatpush1.msra.mxu0 %v2737
      %3600 = vmatprep.subr.mxu0 0.0
      %3601 = vmatpush1.msra.mxu0 %v2738
      %3602 = vmatprep.subr.mxu0 0.0
      %3603 = vmatpush1.msra.mxu0 %v2739
      %3604 = vmatprep.subr.mxu0 0.0
      %3605 = vmatpush1.msra.mxu0 %v2740
      %3606 = vmatprep.subr.mxu0 0.0
      %3607 = vmatpush1.msra.mxu0 %v2741
      %3608 = vmatprep.subr.mxu0 0.0
      %3609 = vmatpush1.msra.mxu0 %v2742
      %3610 = vmatprep.subr.mxu0 0.0
      %3611 = vmatpush1.msra.mxu0 %v2743
      %3612 = vmatprep.subr.mxu0 0.0
      %3613 = vmatpush1.msra.mxu0 %v2744
      %3614 = vmatprep.subr.mxu0 0.0
      %3615 = vmatpush1.msra.mxu0 %v2745
      %3616 = vmatprep.subr.mxu0 0.0
      %3617 = vmatpush1.msra.mxu0 0.0
      %3618 = vmatprep.subr.mxu0 0.0
      %3619 = vmatpush1.msra.mxu0 0.0
      %3620 = vmatprep.subr.mxu0 0.0
      %3621 = vmatpush1.msra.mxu0 0.0
      %3622 = vmatprep.subr.mxu0 0.0
      %3623 = vmatpush1.msra.mxu0 0.0
      %3624 = vmatprep.subr.mxu0 0.0
      %3625 = vmatpush1.msra.mxu0 0.0
      %3626 = vmatprep.subr.mxu0 0.0
      %3627 = vmatpush1.msra.mxu0 0.0
      %3628 = vmatprep.subr.mxu0 0.0
      %3629 = vmatpush1.msra.mxu0 0.0
      %3630 = vmatprep.subr.mxu0 0.0
      %3631 = vmatpush1.msra.mxu0 0.0
      %3632 = vmatprep.subr.mxu0 0.0
      %3633 = vmatpush1.msra.mxu0 0.0
      %3634 = vmatprep.subr.mxu0 0.0
      %3635 = vmatpush1.msra.mxu0 0.0
      %3636 = vmatprep.subr.mxu0 0.0
      %3637 = vmatpush1.msra.mxu0 0.0
      %3638 = vmatprep.subr.mxu0 0.0
      %3639 = vmatpush1.msra.mxu0 0.0
      %3640 = vmatprep.subr.mxu0 0.0
      %3641 = vmatpush1.msra.mxu0 0.0
      %3642 = vmatprep.subr.mxu0 0.0
      %3643 = vmatpush1.msra.mxu0 0.0
      %3644 = vmatprep.mubr.f32.mxu0 %v2748
      %3645 = vmatmul.mubr.f32.gmra.mrb[0].mxu0 %v2518
      %v3646 = vpop.f32.mrb[0].mxu0
      %v3647 = vadd.f32 0.0, %v3646
      %v3648 = vpop.f32.mrb[0].mxu0
      %3649 = vmatprep.mubr.f32.mxu0 %v2751
      %3650 = vmatmul.mubr.f32.gmra.mrb[0].mxu0 %v2520
      %v3651 = vpop.f32.mrb[0].mxu0
      %v3652 = vadd.f32 0.0, %v3651
      %v3653 = vpop.f32.mrb[0].mxu0
      %3654 = vmatprep.mubr.f32.mxu0 %v2754
      %3655 = vmatmul.mubr.f32.gmra.mrb[0].mxu0 %v2522
      %v3656 = vpop.f32.mrb[0].mxu0
      %v3657 = vadd.f32 0.0, %v3656
      %v3658 = vpop.f32.mrb[0].mxu0
      %3659 = vmatprep.mubr.f32.mxu0 %v2757
      %3660 = vmatmul.mubr.f32.gmra.mrb[0].mxu0 %v2524
      %v3661 = vpop.f32.mrb[0].mxu0
      %v3662 = vadd.f32 0.0, %v3661
      %v3663 = vpop.f32.mrb[0].mxu0
      %3664 = vmatprep.mubr.f32.mxu0 %v2760
      %3665 = vmatmul.mubr.f32.gmra.mrb[0].mxu0 %v2526
      %v3666 = vpop.f32.mrb[0].mxu0
      %v3667 = vadd.f32 0.0, %v3666
      %v3668 = vpop.f32.mrb[0].mxu0
      %3669 = vmatprep.mubr.f32.mxu0 %v2763
      %3670 = vmatmul.mubr.f32.gmra.mrb[0].mxu0 %v2528
      %v3671 = vpop.f32.mrb[0].mxu0
      %v3672 = vadd.f32 0.0, %v3671
      %v3673 = vpop.f32.mrb[0].mxu0
      %3674 = vmatprep.mubr.f32.mxu0 %v2766
      %3675 = vmatmul.mubr.f32.gmra.mrb[0].mxu0 %v2530
      %v3676 = vpop.f32.mrb[0].mxu0
      %v3677 = vadd.f32 0.0, %v3676
      %v3678 = vpop.f32.mrb[0].mxu0
      %3679 = vmatprep.mubr.f32.mxu0 %v2769
      %3680 = vmatmul.mubr.f32.gmra.mrb[0].mxu0 %v2532
      %v3681 = vpop.f32.mrb[0].mxu0
      %v3682 = vadd.f32 0.0, %v3681
      %v3683 = vpop.f32.mrb[0].mxu0
      %3684 = vmatprep.mubr.f32.mxu0 %v2772
      %3685 = vmatmul.mubr.f32.gmra.mrb[0].mxu0 %v2534
      %v3686 = vpop.f32.mrb[0].mxu0
      %v3687 = vadd.f32 0.0, %v3686
      %v3688 = vpop.f32.mrb[0].mxu0
      %3689 = vmatprep.mubr.f32.mxu0 %v2775
      %3690 = vmatmul.mubr.f32.gmra.mrb[0].mxu0 %v2536
      %v3691 = vpop.f32.mrb[0].mxu0
      %v3692 = vadd.f32 0.0, %v3691
      %v3693 = vpop.f32.mrb[0].mxu0
      %3694 = vmatprep.mubr.f32.mxu0 %v2778
      %3695 = vmatmul.mubr.f32.gmra.mrb[0].mxu0 %v2538
      %v3696 = vpop.f32.mrb[0].mxu0
      %v3697 = vadd.f32 0.0, %v3696
      %v3698 = vpop.f32.mrb[0].mxu0
      %3699 = vmatprep.mubr.f32.mxu0 %v2781
      %3700 = vmatmul.mubr.f32.gmra.mrb[0].mxu0 %v2540
      %v3701 = vpop.f32.mrb[0].mxu0
      %v3702 = vadd.f32 0.0, %v3701
      %v3703 = vpop.f32.mrb[0].mxu0
      %3704 = vmatprep.mubr.f32.mxu0 %v2784
      %3705 = vmatmul.mubr.f32.gmra.mrb[0].mxu0 %v2542
      %v3706 = vpop.f32.mrb[0].mxu0
      %v3707 = vadd.f32 0.0, %v3706
      %v3708 = vpop.f32.mrb[0].mxu0
      %3709 = vmatprep.mubr.f32.mxu0 %v2787
      %3710 = vmatmul.mubr.f32.gmra.mrb[0].mxu0 %v2544
      %v3711 = vpop.f32.mrb[0].mxu0
      %v3712 = vadd.f32 0.0, %v3711
      %v3713 = vpop.f32.mrb[0].mxu0
      %3714 = vmatprep.mubr.f32.mxu0 %v2790
      %3715 = vmatmul.mubr.f32.gmra.mrb[0].mxu0 %v2546
      %v3716 = vpop.f32.mrb[0].mxu0
      %v3717 = vadd.f32 0.0, %v3716
      %v3718 = vpop.f32.mrb[0].mxu0
      %3719 = vmatprep.mubr.f32.mxu0 %v2793
      %3720 = vmatmul.mubr.f32.gmra.mrb[0].mxu0 %v2548
      %v3721 = vpop.f32.mrb[0].mxu0
      %v3722 = vadd.f32 0.0, %v3721
      %v3723 = vpop.f32.mrb[0].mxu0
      %3724 = vmatprep.mubr.f32.mxu0 %v2796
      %3725 = vmatmul.mubr.f32.gmra.mrb[0].mxu0 %v2550
      %v3726 = vpop.f32.mrb[0].mxu0
      %v3727 = vadd.f32 0.0, %v3726
      %v3728 = vpop.f32.mrb[0].mxu0
      %3729 = vmatprep.mubr.f32.mxu0 %v2799
      %3730 = vmatmul.mubr.f32.gmra.mrb[0].mxu0 %v2552
      %v3731 = vpop.f32.mrb[0].mxu0
      %v3732 = vadd.f32 0.0, %v3731
      %v3733 = vpop.f32.mrb[0].mxu0
      %3734 = vmatprep.mubr.f32.mxu0 %v2802
      %3735 = vmatmul.mubr.f32.gmra.mrb[0].mxu0 %v2554
      %v3736 = vpop.f32.mrb[0].mxu0
      %v3737 = vadd.f32 0.0, %v3736
      %v3738 = vpop.f32.mrb[0].mxu0
      %3739 = vmatprep.mubr.f32.mxu0 %v2805
      %3740 = vmatmul.mubr.f32.gmra.mrb[0].mxu0 %v2556
      %v3741 = vpop.f32.mrb[0].mxu0
      %v3742 = vadd.f32 0.0, %v3741
      %v3743 = vpop.f32.mrb[0].mxu0
      %3744 = vmatprep.mubr.f32.mxu0 %v2808
      %3745 = vmatmul.mubr.f32.gmra.mrb[0].mxu0 %v2558
      %v3746 = vpop.f32.mrb[0].mxu0
      %v3747 = vadd.f32 0.0, %v3746
      %v3748 = vpop.f32.mrb[0].mxu0
      %3749 = vmatprep.mubr.f32.mxu0 %v2811
      %3750 = vmatmul.mubr.f32.gmra.mrb[0].mxu0 %v2560
      %v3751 = vpop.f32.mrb[0].mxu0
      %v3752 = vadd.f32 0.0, %v3751
      %v3753 = vpop.f32.mrb[0].mxu0
      %3754 = vmatprep.mubr.f32.mxu0 %v2814
      %3755 = vmatmul.mubr.f32.gmra.mrb[0].mxu0 %v2562
      %v3756 = vpop.f32.mrb[0].mxu0
      %v3757 = vadd.f32 0.0, %v3756
      %v3758 = vpop.f32.mrb[0].mxu0
      %3759 = vmatprep.mubr.f32.mxu0 %v2817
      %3760 = vmatmul.mubr.f32.gmra.mrb[0].mxu0 %v2564
      %v3761 = vpop.f32.mrb[0].mxu0
      %v3762 = vadd.f32 0.0, %v3761
      %v3763 = vpop.f32.mrb[0].mxu0
      %3764 = vmatprep.mubr.f32.mxu0 %v2820
      %3765 = vmatmul.mubr.f32.gmra.mrb[0].mxu0 %v2566
      %v3766 = vpop.f32.mrb[0].mxu0
      %v3767 = vadd.f32 0.0, %v3766
      %v3768 = vpop.f32.mrb[0].mxu0
      %3769 = vmatprep.mubr.f32.mxu0 %v2823
      %3770 = vmatmul.mubr.f32.gmra.mrb[0].mxu0 %v2568
      %v3771 = vpop.f32.mrb[0].mxu0
      %v3772 = vadd.f32 0.0, %v3771
      %v3773 = vpop.f32.mrb[0].mxu0
      %3774 = vmatprep.mubr.f32.mxu0 %v2826
      %3775 = vmatmul.mubr.f32.gmra.mrb[0].mxu0 %v2570
      %v3776 = vpop.f32.mrb[0].mxu0
      %v3777 = vadd.f32 0.0, %v3776
      %v3778 = vpop.f32.mrb[0].mxu0
      %3779 = vmatprep.mubr.f32.mxu0 %v2829
      %3780 = vmatmul.mubr.f32.gmra.mrb[0].mxu0 %v2572
      %v3781 = vpop.f32.mrb[0].mxu0
      %v3782 = vadd.f32 0.0, %v3781
      %v3783 = vpop.f32.mrb[0].mxu0
      %3784 = vmatprep.mubr.f32.mxu0 %v2832
      %3785 = vmatmul.mubr.f32.gmra.mrb[0].mxu0 %v2574
      %v3786 = vpop.f32.mrb[0].mxu0
      %v3787 = vadd.f32 0.0, %v3786
      %v3788 = vpop.f32.mrb[0].mxu0
      %3789 = vmatprep.mubr.f32.mxu0 %v2835
      %3790 = vmatmul.mubr.f32.gmra.mrb[0].mxu0 %v2576
      %v3791 = vpop.f32.mrb[0].mxu0
      %v3792 = vadd.f32 0.0, %v3791
      %v3793 = vpop.f32.mrb[0].mxu0
      %3794 = vmatprep.mubr.f32.mxu0 %v2838
      %3795 = vmatmul.mubr.f32.gmra.mrb[0].mxu0 %v2578
      %v3796 = vpop.f32.mrb[0].mxu0
      %v3797 = vadd.f32 0.0, %v3796
      %v3798 = vpop.f32.mrb[0].mxu0
      %3799 = vmatprep.mubr.f32.mxu0 %v2841
      %3800 = vmatmul.mubr.f32.gmra.mrb[0].mxu0 %v2580
      %v3801 = vpop.f32.mrb[0].mxu0
      %v3802 = vadd.f32 0.0, %v3801
      %v3803 = vpop.f32.mrb[0].mxu0
      %3804 = vmatprep.mubr.f32.mxu0 %v2844
      %3805 = vmatmul.mubr.f32.gmra.mrb[0].mxu0 %v2582
      %v3806 = vpop.f32.mrb[0].mxu0
      %v3807 = vadd.f32 0.0, %v3806
      %v3808 = vpop.f32.mrb[0].mxu0
      %3809 = vmatprep.mubr.f32.mxu0 %v2847
      %3810 = vmatmul.mubr.f32.gmra.mrb[0].mxu0 %v2584
      %v3811 = vpop.f32.mrb[0].mxu0
      %v3812 = vadd.f32 0.0, %v3811
      %v3813 = vpop.f32.mrb[0].mxu0
      %3814 = vmatprep.mubr.f32.mxu0 %v2850
      %3815 = vmatmul.mubr.f32.gmra.mrb[0].mxu0 %v2586
      %v3816 = vpop.f32.mrb[0].mxu0
      %v3817 = vadd.f32 0.0, %v3816
      %v3818 = vpop.f32.mrb[0].mxu0
      %3819 = vmatprep.mubr.f32.mxu0 %v2853
      %3820 = vmatmul.mubr.f32.gmra.mrb[0].mxu0 %v2588
      %v3821 = vpop.f32.mrb[0].mxu0
      %v3822 = vadd.f32 0.0, %v3821
      %v3823 = vpop.f32.mrb[0].mxu0
      %3824 = vmatprep.mubr.f32.mxu0 %v2856
      %3825 = vmatmul.mubr.f32.gmra.mrb[0].mxu0 %v2590
      %v3826 = vpop.f32.mrb[0].mxu0
      %v3827 = vadd.f32 0.0, %v3826
      %v3828 = vpop.f32.mrb[0].mxu0
      %3829 = vmatprep.mubr.f32.mxu0 %v2859
      %3830 = vmatmul.mubr.f32.gmra.mrb[0].mxu0 %v2592
      %v3831 = vpop.f32.mrb[0].mxu0
      %v3832 = vadd.f32 0.0, %v3831
      %v3833 = vpop.f32.mrb[0].mxu0
      %3834 = vmatprep.mubr.f32.mxu0 %v2862
      %3835 = vmatmul.mubr.f32.gmra.mrb[0].mxu0 %v2594
      %v3836 = vpop.f32.mrb[0].mxu0
      %v3837 = vadd.f32 0.0, %v3836
      %v3838 = vpop.f32.mrb[0].mxu0
      %3839 = vmatprep.mubr.f32.mxu0 %v2865
      %3840 = vmatmul.mubr.f32.gmra.mrb[0].mxu0 %v2596
      %v3841 = vpop.f32.mrb[0].mxu0
      %v3842 = vadd.f32 0.0, %v3841
      %v3843 = vpop.f32.mrb[0].mxu0
      %3844 = vmatprep.mubr.f32.mxu0 %v2868
      %3845 = vmatmul.mubr.f32.gmra.mrb[0].mxu0 %v2598
      %v3846 = vpop.f32.mrb[0].mxu0
      %v3847 = vadd.f32 0.0, %v3846
      %v3848 = vpop.f32.mrb[0].mxu0
      %3849 = vmatprep.mubr.f32.mxu0 %v2871
      %3850 = vmatmul.mubr.f32.gmra.mrb[0].mxu0 %v2600
      %v3851 = vpop.f32.mrb[0].mxu0
      %v3852 = vadd.f32 0.0, %v3851
      %v3853 = vpop.f32.mrb[0].mxu0
      %3854 = vmatprep.mubr.f32.mxu0 %v2874
      %3855 = vmatmul.mubr.f32.gmra.mrb[0].mxu0 %v2602
      %v3856 = vpop.f32.mrb[0].mxu0
      %v3857 = vadd.f32 0.0, %v3856
      %v3858 = vpop.f32.mrb[0].mxu0
      %3859 = vmatprep.mubr.f32.mxu0 %v2877
      %3860 = vmatmul.mubr.f32.gmra.mrb[0].mxu0 %v2604
      %v3861 = vpop.f32.mrb[0].mxu0
      %v3862 = vadd.f32 0.0, %v3861
      %v3863 = vpop.f32.mrb[0].mxu0
      %3864 = vmatprep.mubr.f32.mxu0 %v2880
      %3865 = vmatmul.mubr.f32.gmra.mrb[0].mxu0 %v2606
      %v3866 = vpop.f32.mrb[0].mxu0
      %v3867 = vadd.f32 0.0, %v3866
      %v3868 = vpop.f32.mrb[0].mxu0
      %3869 = vmatprep.mubr.f32.mxu0 %v2883
      %3870 = vmatmul.mubr.f32.gmra.mrb[0].mxu0 %v2608
      %v3871 = vpop.f32.mrb[0].mxu0
      %v3872 = vadd.f32 0.0, %v3871
      %v3873 = vpop.f32.mrb[0].mxu0
      %3874 = vmatprep.mubr.f32.mxu0 %v2886
      %3875 = vmatmul.mubr.f32.gmra.mrb[0].mxu0 %v2610
      %v3876 = vpop.f32.mrb[0].mxu0
      %v3877 = vadd.f32 0.0, %v3876
      %v3878 = vpop.f32.mrb[0].mxu0
      %3879 = vmatprep.mubr.f32.mxu0 %v2889
      %3880 = vmatmul.mubr.f32.gmra.mrb[0].mxu0 %v2612
      %v3881 = vpop.f32.mrb[0].mxu0
      %v3882 = vadd.f32 0.0, %v3881
      %v3883 = vpop.f32.mrb[0].mxu0
      %3884 = vmatprep.mubr.f32.mxu0 %v2892
      %3885 = vmatmul.mubr.f32.gmra.mrb[0].mxu0 %v2614
      %v3886 = vpop.f32.mrb[0].mxu0
      %v3887 = vadd.f32 0.0, %v3886
      %v3888 = vpop.f32.mrb[0].mxu0
      %3889 = vmatprep.mubr.f32.mxu0 %v2895
      %3890 = vmatmul.mubr.f32.gmra.mrb[0].mxu0 %v2616
      %v3891 = vpop.f32.mrb[0].mxu0
      %v3892 = vadd.f32 0.0, %v3891
      %v3893 = vpop.f32.mrb[0].mxu0
      %3894 = vmatprep.mubr.f32.mxu0 %v2898
      %3895 = vmatmul.mubr.f32.gmra.mrb[0].mxu0 %v2618
      %v3896 = vpop.f32.mrb[0].mxu0
      %v3897 = vadd.f32 0.0, %v3896
      %v3898 = vpop.f32.mrb[0].mxu0
      %3899 = vmatprep.mubr.f32.mxu0 %v2901
      %3900 = vmatmul.mubr.f32.gmra.mrb[0].mxu0 %v2620
      %v3901 = vpop.f32.mrb[0].mxu0
      %v3902 = vadd.f32 0.0, %v3901
      %v3903 = vpop.f32.mrb[0].mxu0
      %3904 = vmatprep.mubr.f32.mxu0 %v2904
      %3905 = vmatmul.mubr.f32.gmra.mrb[0].mxu0 %v2622
      %v3906 = vpop.f32.mrb[0].mxu0
      %v3907 = vadd.f32 0.0, %v3906
      %v3908 = vpop.f32.mrb[0].mxu0
      %3909 = vmatprep.mubr.f32.mxu0 %v2907
      %3910 = vmatmul.mubr.f32.gmra.mrb[0].mxu0 %v2624
      %v3911 = vpop.f32.mrb[0].mxu0
      %v3912 = vadd.f32 0.0, %v3911
      %v3913 = vpop.f32.mrb[0].mxu0
      %3914 = vmatprep.mubr.f32.mxu0 %v2910
      %3915 = vmatmul.mubr.f32.gmra.mrb[0].mxu0 %v2626
      %v3916 = vpop.f32.mrb[0].mxu0
      %v3917 = vadd.f32 0.0, %v3916
      %v3918 = vpop.f32.mrb[0].mxu0
      %3919 = vmatprep.mubr.f32.mxu0 %v2913
      %3920 = vmatmul.mubr.f32.gmra.mrb[0].mxu0 %v2628
      %v3921 = vpop.f32.mrb[0].mxu0
      %v3922 = vadd.f32 0.0, %v3921
      %v3923 = vpop.f32.mrb[0].mxu0
      %3924 = vmatprep.mubr.f32.mxu0 %v2916
      %3925 = vmatmul.mubr.f32.gmra.mrb[0].mxu0 %v2630
      %v3926 = vpop.f32.mrb[0].mxu0
      %v3927 = vadd.f32 0.0, %v3926
      %v3928 = vpop.f32.mrb[0].mxu0
      %3929 = vmatprep.mubr.f32.mxu0 %v2919
      %3930 = vmatmul.mubr.f32.gmra.mrb[0].mxu0 %v2632
      %v3931 = vpop.f32.mrb[0].mxu0
      %v3932 = vadd.f32 0.0, %v3931
      %v3933 = vpop.f32.mrb[0].mxu0
      %3934 = vmatprep.mubr.f32.mxu0 %v2922
      %3935 = vmatmul.mubr.f32.gmra.mrb[0].mxu0 %v2634
      %v3936 = vpop.f32.mrb[0].mxu0
      %v3937 = vadd.f32 0.0, %v3936
      %v3938 = vpop.f32.mrb[0].mxu0
      %3939 = vmatprep.mubr.f32.mxu0 %v2925
      %3940 = vmatmul.mubr.f32.gmra.mrb[0].mxu0 %v2636
      %v3941 = vpop.f32.mrb[0].mxu0
      %v3942 = vadd.f32 0.0, %v3941
      %v3943 = vpop.f32.mrb[0].mxu0
      %3944 = vmatprep.mubr.f32.mxu0 %v2928
      %3945 = vmatmul.mubr.f32.gmra.mrb[0].mxu0 %v2638
      %v3946 = vpop.f32.mrb[0].mxu0
      %v3947 = vadd.f32 0.0, %v3946
      %v3948 = vpop.f32.mrb[0].mxu0
      %3949 = vmatprep.mubr.f32.mxu0 %v2931
      %3950 = vmatmul.mubr.f32.gmra.mrb[0].mxu0 %v2640
      %v3951 = vpop.f32.mrb[0].mxu0
      %v3952 = vadd.f32 0.0, %v3951
      %v3953 = vpop.f32.mrb[0].mxu0
      %3954 = vmatprep.mubr.f32.mxu0 %v2934
      %3955 = vmatmul.mubr.f32.gmra.mrb[0].mxu0 %v2642
      %v3956 = vpop.f32.mrb[0].mxu0
      %v3957 = vadd.f32 0.0, %v3956
      %v3958 = vpop.f32.mrb[0].mxu0
      %3959 = vmatprep.mubr.f32.mxu0 %v2937
      %3960 = vmatmul.mubr.f32.gmra.mrb[0].mxu0 %v2644
      %v3961 = vpop.f32.mrb[0].mxu0
      %v3962 = vadd.f32 0.0, %v3961
      %v3963 = vpop.f32.mrb[0].mxu0
      %3964 = vmatprep.mubr.f32.mxu0 %v2940
      %3965 = vmatmul.mubr.f32.gmra.mrb[0].mxu0 %v2646
      %v3966 = vpop.f32.mrb[0].mxu0
      %v3967 = vadd.f32 0.0, %v3966
      %v3968 = vpop.f32.mrb[0].mxu0
      %3969 = vmatprep.mubr.f32.mxu0 %v2943
      %3970 = vmatmul.mubr.f32.gmra.mrb[0].mxu0 %v2648
      %v3971 = vpop.f32.mrb[0].mxu0
      %v3972 = vadd.f32 0.0, %v3971
      %v3973 = vpop.f32.mrb[0].mxu0
      %3974 = vmatprep.mubr.f32.mxu0 %v2946
      %3975 = vmatmul.mubr.f32.gmra.mrb[0].mxu0 %v2650
      %v3976 = vpop.f32.mrb[0].mxu0
      %v3977 = vadd.f32 0.0, %v3976
      %v3978 = vpop.f32.mrb[0].mxu0
      %3979 = vmatprep.mubr.f32.mxu0 %v2949
      %3980 = vmatmul.mubr.f32.gmra.mrb[0].mxu0 %v2652
      %v3981 = vpop.f32.mrb[0].mxu0
      %v3982 = vadd.f32 0.0, %v3981
      %v3983 = vpop.f32.mrb[0].mxu0
      %3984 = vmatprep.mubr.f32.mxu0 %v2952
      %3985 = vmatmul.mubr.f32.gmra.mrb[0].mxu0 %v2654
      %v3986 = vpop.f32.mrb[0].mxu0
      %v3987 = vadd.f32 0.0, %v3986
      %v3988 = vpop.f32.mrb[0].mxu0
      %3989 = vmatprep.mubr.f32.mxu0 %v2955
      %3990 = vmatmul.mubr.f32.gmra.mrb[0].mxu0 %v2656
      %v3991 = vpop.f32.mrb[0].mxu0
      %v3992 = vadd.f32 0.0, %v3991
      %v3993 = vpop.f32.mrb[0].mxu0
      %3994 = vmatprep.mubr.f32.mxu0 %v2958
      %3995 = vmatmul.mubr.f32.gmra.mrb[0].mxu0 %v2658
      %v3996 = vpop.f32.mrb[0].mxu0
      %v3997 = vadd.f32 0.0, %v3996
      %v3998 = vpop.f32.mrb[0].mxu0
      %3999 = vmatprep.mubr.f32.mxu0 %v2961
      %4000 = vmatmul.mubr.f32.gmra.mrb[0].mxu0 %v2660
      %v4001 = vpop.f32.mrb[0].mxu0
      %v4002 = vadd.f32 0.0, %v4001
      %v4003 = vpop.f32.mrb[0].mxu0
      %4004 = vmatprep.mubr.f32.mxu0 %v2964
      %4005 = vmatmul.mubr.f32.gmra.mrb[0].mxu0 %v2662
      %v4006 = vpop.f32.mrb[0].mxu0
      %v4007 = vadd.f32 0.0, %v4006
      %v4008 = vpop.f32.mrb[0].mxu0
      %4009 = vmatprep.mubr.f32.mxu0 %v2967
      %4010 = vmatmul.mubr.f32.gmra.mrb[0].mxu0 %v2664
      %v4011 = vpop.f32.mrb[0].mxu0
      %v4012 = vadd.f32 0.0, %v4011
      %v4013 = vpop.f32.mrb[0].mxu0
      %4014 = vmatprep.mubr.f32.mxu0 %v2970
      %4015 = vmatmul.mubr.f32.gmra.mrb[0].mxu0 %v2666
      %v4016 = vpop.f32.mrb[0].mxu0
      %v4017 = vadd.f32 0.0, %v4016
      %v4018 = vpop.f32.mrb[0].mxu0
      %4019 = vmatprep.mubr.f32.mxu0 %v2973
      %4020 = vmatmul.mubr.f32.gmra.mrb[0].mxu0 %v2668
      %v4021 = vpop.f32.mrb[0].mxu0
      %v4022 = vadd.f32 0.0, %v4021
      %v4023 = vpop.f32.mrb[0].mxu0
      %4024 = vmatprep.mubr.f32.mxu0 %v2976
      %4025 = vmatmul.mubr.f32.gmra.mrb[0].mxu0 %v2670
      %v4026 = vpop.f32.mrb[0].mxu0
      %v4027 = vadd.f32 0.0, %v4026
      %v4028 = vpop.f32.mrb[0].mxu0
      %4029 = vmatprep.mubr.f32.mxu0 %v2979
      %4030 = vmatmul.mubr.f32.gmra.mrb[0].mxu0 %v2672
      %v4031 = vpop.f32.mrb[0].mxu0
      %v4032 = vadd.f32 0.0, %v4031
      %v4033 = vpop.f32.mrb[0].mxu0
      %4034 = vmatprep.mubr.f32.mxu0 %v2982
      %4035 = vmatmul.mubr.f32.gmra.mrb[0].mxu0 %v2674
      %v4036 = vpop.f32.mrb[0].mxu0
      %v4037 = vadd.f32 0.0, %v4036
      %v4038 = vpop.f32.mrb[0].mxu0
      %4039 = vmatprep.mubr.f32.mxu0 %v2985
      %4040 = vmatmul.mubr.f32.gmra.mrb[0].mxu0 %v2676
      %v4041 = vpop.f32.mrb[0].mxu0
      %v4042 = vadd.f32 0.0, %v4041
      %v4043 = vpop.f32.mrb[0].mxu0
      %4044 = vmatprep.mubr.f32.mxu0 %v2988
      %4045 = vmatmul.mubr.f32.gmra.mrb[0].mxu0 %v2678
      %v4046 = vpop.f32.mrb[0].mxu0
      %v4047 = vadd.f32 0.0, %v4046
      %v4048 = vpop.f32.mrb[0].mxu0
      %4049 = vmatprep.mubr.f32.mxu0 %v2991
      %4050 = vmatmul.mubr.f32.gmra.mrb[0].mxu0 %v2680
      %v4051 = vpop.f32.mrb[0].mxu0
      %v4052 = vadd.f32 0.0, %v4051
      %v4053 = vpop.f32.mrb[0].mxu0
      %4054 = vmatprep.mubr.f32.mxu0 %v2994
      %4055 = vmatmul.mubr.f32.gmra.mrb[0].mxu0 %v2682
      %v4056 = vpop.f32.mrb[0].mxu0
      %v4057 = vadd.f32 0.0, %v4056
      %v4058 = vpop.f32.mrb[0].mxu0
      %4059 = vmatprep.mubr.f32.mxu0 %v2997
      %4060 = vmatmul.mubr.f32.gmra.mrb[0].mxu0 %v2684
      %v4061 = vpop.f32.mrb[0].mxu0
      %v4062 = vadd.f32 0.0, %v4061
      %v4063 = vpop.f32.mrb[0].mxu0
      %4064 = vmatprep.mubr.f32.mxu0 %v3000
      %4065 = vmatmul.mubr.f32.gmra.mrb[0].mxu0 %v2686
      %v4066 = vpop.f32.mrb[0].mxu0
      %v4067 = vadd.f32 0.0, %v4066
      %v4068 = vpop.f32.mrb[0].mxu0
      %4069 = vmatprep.mubr.f32.mxu0 %v3003
      %4070 = vmatmul.mubr.f32.gmra.mrb[0].mxu0 %v2688
      %v4071 = vpop.f32.mrb[0].mxu0
      %v4072 = vadd.f32 0.0, %v4071
      %v4073 = vpop.f32.mrb[0].mxu0
      %4074 = vmatprep.mubr.f32.mxu0 %v3006
      %4075 = vmatmul.mubr.f32.gmra.mrb[0].mxu0 %v2690
      %v4076 = vpop.f32.mrb[0].mxu0
      %v4077 = vadd.f32 0.0, %v4076
      %v4078 = vpop.f32.mrb[0].mxu0
      %4079 = vmatprep.mubr.f32.mxu0 %v3009
      %4080 = vmatmul.mubr.f32.gmra.mrb[0].mxu0 %v2692
      %v4081 = vpop.f32.mrb[0].mxu0
      %v4082 = vadd.f32 0.0, %v4081
      %v4083 = vpop.f32.mrb[0].mxu0
      %4084 = vmatprep.mubr.f32.mxu0 %v3012
      %4085 = vmatmul.mubr.f32.gmra.mrb[0].mxu0 %v2694
      %v4086 = vpop.f32.mrb[0].mxu0
      %v4087 = vadd.f32 0.0, %v4086
      %v4088 = vpop.f32.mrb[0].mxu0
      %4089 = vmatprep.mubr.f32.mxu0 %v3015
      %4090 = vmatmul.mubr.f32.gmra.mrb[0].mxu0 %v2696
      %v4091 = vpop.f32.mrb[0].mxu0
      %v4092 = vadd.f32 0.0, %v4091
      %v4093 = vpop.f32.mrb[0].mxu0
      %4094 = vmatprep.mubr.f32.mxu0 %v3018
      %4095 = vmatmul.mubr.f32.gmra.mrb[0].mxu0 %v2698
      %v4096 = vpop.f32.mrb[0].mxu0
      %v4097 = vadd.f32 0.0, %v4096
      %v4098 = vpop.f32.mrb[0].mxu0
      %4099 = vmatprep.mubr.f32.mxu0 %v3021
      %4100 = vmatmul.mubr.f32.gmra.mrb[0].mxu0 %v2700
      %v4101 = vpop.f32.mrb[0].mxu0
      %v4102 = vadd.f32 0.0, %v4101
      %v4103 = vpop.f32.mrb[0].mxu0
      %4104 = vmatprep.mubr.f32.mxu0 %v3024
      %4105 = vmatmul.mubr.f32.gmra.mrb[0].mxu0 %v2702
      %v4106 = vpop.f32.mrb[0].mxu0
      %v4107 = vadd.f32 0.0, %v4106
      %v4108 = vpop.f32.mrb[0].mxu0
      %4109 = vmatprep.mubr.f32.mxu0 %v3027
      %4110 = vmatmul.mubr.f32.gmra.mrb[0].mxu0 %v2704
      %v4111 = vpop.f32.mrb[0].mxu0
      %v4112 = vadd.f32 0.0, %v4111
      %v4113 = vpop.f32.mrb[0].mxu0
      %4114 = vmatprep.mubr.f32.mxu0 %v3030
      %4115 = vmatmul.mubr.f32.gmra.mrb[0].mxu0 %v2706
      %v4116 = vpop.f32.mrb[0].mxu0
      %v4117 = vadd.f32 0.0, %v4116
      %v4118 = vpop.f32.mrb[0].mxu0
      %4119 = vmatprep.mubr.f32.mxu0 %v3033
      %4120 = vmatmul.mubr.f32.gmra.mrb[0].mxu0 %v2708
      %v4121 = vpop.f32.mrb[0].mxu0
      %v4122 = vadd.f32 0.0, %v4121
      %v4123 = vpop.f32.mrb[0].mxu0
      %4124 = vdwg.mxu0
      %v4125 = vmax.f32 %v3102, %v3647
      %v4126 = vmax.f32 %v3107, %v3652
      %v4127 = vmax.f32 %v3112, %v3657
      %v4128 = vmax.f32 %v3117, %v3662
      %v4129 = vmax.f32 %v3122, %v3667
      %v4130 = vmax.f32 %v3127, %v3672
      %v4131 = vmax.f32 %v3132, %v3677
      %v4132 = vmax.f32 %v3137, %v3682
      %v4133 = vmax.f32 %v3142, %v3687
      %v4134 = vmax.f32 %v3147, %v3692
      %v4135 = vmax.f32 %v3152, %v3697
      %v4136 = vmax.f32 %v3157, %v3702
      %v4137 = vmax.f32 %v3162, %v3707
      %v4138 = vmax.f32 %v3167, %v3712
      %v4139 = vmax.f32 %v3172, %v3717
      %v4140 = vmax.f32 %v3177, %v3722
      %v4141 = vmax.f32 %v3182, %v3727
      %v4142 = vmax.f32 %v3187, %v3732
      %v4143 = vmax.f32 %v3192, %v3737
      %v4144 = vmax.f32 %v3197, %v3742
      %v4145 = vmax.f32 %v3202, %v3747
      %v4146 = vmax.f32 %v3207, %v3752
      %v4147 = vmax.f32 %v3212, %v3757
      %v4148 = vmax.f32 %v3217, %v3762
      %v4149 = vmax.f32 %v3222, %v3767
      %v4150 = vmax.f32 %v3227, %v3772
      %v4151 = vmax.f32 %v3232, %v3777
      %v4152 = vmax.f32 %v3237, %v3782
      %v4153 = vmax.f32 %v3242, %v3787
      %v4154 = vmax.f32 %v3247, %v3792
      %v4155 = vmax.f32 %v3252, %v3797
      %v4156 = vmax.f32 %v3257, %v3802
      %v4157 = vmax.f32 %v3262, %v3807
      %v4158 = vmax.f32 %v3267, %v3812
      %v4159 = vmax.f32 %v3272, %v3817
      %v4160 = vmax.f32 %v3277, %v3822
      %v4161 = vmax.f32 %v3282, %v3827
      %v4162 = vmax.f32 %v3287, %v3832
      %v4163 = vmax.f32 %v3292, %v3837
      %v4164 = vmax.f32 %v3297, %v3842
      %v4165 = vmax.f32 %v3302, %v3847
      %v4166 = vmax.f32 %v3307, %v3852
      %v4167 = vmax.f32 %v3312, %v3857
      %v4168 = vmax.f32 %v3317, %v3862
      %v4169 = vmax.f32 %v3322, %v3867
      %v4170 = vmax.f32 %v3327, %v3872
      %v4171 = vmax.f32 %v3332, %v3877
      %v4172 = vmax.f32 %v3337, %v3882
      %v4173 = vmax.f32 %v3342, %v3887
      %v4174 = vmax.f32 %v3347, %v3892
      %v4175 = vmax.f32 %v3352, %v3897
      %v4176 = vmax.f32 %v3357, %v3902
      %v4177 = vmax.f32 %v3362, %v3907
      %v4178 = vmax.f32 %v3367, %v3912
      %v4179 = vmax.f32 %v3372, %v3917
      %v4180 = vmax.f32 %v3377, %v3922
      %v4181 = vmax.f32 %v3382, %v3927
      %v4182 = vmax.f32 %v3387, %v3932
      %v4183 = vmax.f32 %v3392, %v3937
      %v4184 = vmax.f32 %v3397, %v3942
      %v4185 = vmax.f32 %v3402, %v3947
      %v4186 = vmax.f32 %v3407, %v3952
      %v4187 = vmax.f32 %v3412, %v3957
      %v4188 = vmax.f32 %v3417, %v3962
      %v4189 = vmax.f32 %v3422, %v3967
      %v4190 = vmax.f32 %v3427, %v3972
      %v4191 = vmax.f32 %v3432, %v3977
      %v4192 = vmax.f32 %v3437, %v3982
      %v4193 = vmax.f32 %v3442, %v3987
      %v4194 = vmax.f32 %v3447, %v3992
      %v4195 = vmax.f32 %v3452, %v3997
      %v4196 = vmax.f32 %v3457, %v4002
      %v4197 = vmax.f32 %v3462, %v4007
      %v4198 = vmax.f32 %v3467, %v4012
      %v4199 = vmax.f32 %v3472, %v4017
      %v4200 = vmax.f32 %v3477, %v4022
      %v4201 = vmax.f32 %v3482, %v4027
      %v4202 = vmax.f32 %v3487, %v4032
      %v4203 = vmax.f32 %v3492, %v4037
      %v4204 = vmax.f32 %v3497, %v4042
      %v4205 = vmax.f32 %v3502, %v4047
      %v4206 = vmax.f32 %v3507, %v4052
      %v4207 = vmax.f32 %v3512, %v4057
      %v4208 = vmax.f32 %v3517, %v4062
      %v4209 = vmax.f32 %v3522, %v4067
      %v4210 = vmax.f32 %v3527, %v4072
      %v4211 = vmax.f32 %v3532, %v4077
      %v4212 = vmax.f32 %v3537, %v4082
      %v4213 = vmax.f32 %v3542, %v4087
      %v4214 = vmax.f32 %v3547, %v4092
      %v4215 = vmax.f32 %v3552, %v4097
      %v4216 = vmax.f32 %v3557, %v4102
      %v4217 = vmax.f32 %v3562, %v4107
      %v4218 = vmax.f32 %v3567, %v4112
      %v4219 = vmax.f32 %v3572, %v4117
      %v4220 = vmax.f32 %v3577, %v4122
      %vm4221 = vcmask 588800
      %4222 = vst.msk [vmem:[%s267] sm:$0xff] %vm4221, %v4125
      %4223 = vst.msk [vmem:[%s267 + $0x8] sm:$0xff] %vm4221, %v4126
      %4224 = vst.msk [vmem:[%s267 + $0x10] sm:$0xff] %vm4221, %v4127
      %4225 = vst.msk [vmem:[%s267 + $0x18] sm:$0xff] %vm4221, %v4128
      %4226 = vst.msk [vmem:[%s267 + $0x20] sm:$0xff] %vm4221, %v4129
      %4227 = vst.msk [vmem:[%s267 + $0x28] sm:$0xff] %vm4221, %v4130
      %4228 = vst.msk [vmem:[%s267 + $0x30] sm:$0xff] %vm4221, %v4131
      %4229 = vst.msk [vmem:[%s267 + $0x38] sm:$0xff] %vm4221, %v4132
      %4230 = vst.msk [vmem:[%s267 + $0x40] sm:$0xff] %vm4221, %v4133
      %4231 = vst.msk [vmem:[%s267 + $0x48] sm:$0xff] %vm4221, %v4134
      %4232 = vst.msk [vmem:[%s267 + $0x50] sm:$0xff] %vm4221, %v4135
      %4233 = vst.msk [vmem:[%s267 + $0x58] sm:$0xff] %vm4221, %v4136
      %4234 = vst.msk [vmem:[%s267 + $0x60] sm:$0xff] %vm4221, %v4137
      %4235 = vst.msk [vmem:[%s267 + $0x68] sm:$0xff] %vm4221, %v4138
      %4236 = vst.msk [vmem:[%s267 + $0x70] sm:$0xff] %vm4221, %v4139
      %4237 = vst.msk [vmem:[%s267 + $0x78] sm:$0xff] %vm4221, %v4140
      %4238 = vst.msk [vmem:[%s267 + $0x80] sm:$0xff] %vm4221, %v4141
      %4239 = vst.msk [vmem:[%s267 + $0x88] sm:$0xff] %vm4221, %v4142
      %4240 = vst.msk [vmem:[%s267 + $0x90] sm:$0xff] %vm4221, %v4143
      %4241 = vst.msk [vmem:[%s267 + $0x98] sm:$0xff] %vm4221, %v4144
      %4242 = vst.msk [vmem:[%s267 + $0xa0] sm:$0xff] %vm4221, %v4145
      %4243 = vst.msk [vmem:[%s267 + $0xa8] sm:$0xff] %vm4221, %v4146
      %4244 = vst.msk [vmem:[%s267 + $0xb0] sm:$0xff] %vm4221, %v4147
      %4245 = vst.msk [vmem:[%s267 + $0xb8] sm:$0xff] %vm4221, %v4148
      %4246 = vst.msk [vmem:[%s267 + $0xc0] sm:$0xff] %vm4221, %v4149
      %4247 = vst.msk [vmem:[%s267 + $0xc8] sm:$0xff] %vm4221, %v4150
      %4248 = vst.msk [vmem:[%s267 + $0xd0] sm:$0xff] %vm4221, %v4151
      %4249 = vst.msk [vmem:[%s267 + $0xd8] sm:$0xff] %vm4221, %v4152
      %4250 = vst.msk [vmem:[%s267 + $0xe0] sm:$0xff] %vm4221, %v4153
      %4251 = vst.msk [vmem:[%s267 + $0xe8] sm:$0xff] %vm4221, %v4154
      %4252 = vst.msk [vmem:[%s267 + $0xf0] sm:$0xff] %vm4221, %v4155
      %4253 = vst.msk [vmem:[%s267 + $0xf8] sm:$0xff] %vm4221, %v4156
      %4254 = vst.msk [vmem:[%s267 + $0x100] sm:$0xff] %vm4221, %v4157
      %4255 = vst.msk [vmem:[%s267 + $0x108] sm:$0xff] %vm4221, %v4158
      %4256 = vst.msk [vmem:[%s267 + $0x110] sm:$0xff] %vm4221, %v4159
      %4257 = vst.msk [vmem:[%s267 + $0x118] sm:$0xff] %vm4221, %v4160
      %4258 = vst.msk [vmem:[%s267 + $0x120] sm:$0xff] %vm4221, %v4161
      %4259 = vst.msk [vmem:[%s267 + $0x128] sm:$0xff] %vm4221, %v4162
      %4260 = vst.msk [vmem:[%s267 + $0x130] sm:$0xff] %vm4221, %v4163
      %4261 = vst.msk [vmem:[%s267 + $0x138] sm:$0xff] %vm4221, %v4164
      %4262 = vst.msk [vmem:[%s267 + $0x140] sm:$0xff] %vm4221, %v4165
      %4263 = vst.msk [vmem:[%s267 + $0x148] sm:$0xff] %vm4221, %v4166
      %4264 = vst.msk [vmem:[%s267 + $0x150] sm:$0xff] %vm4221, %v4167
      %4265 = vst.msk [vmem:[%s267 + $0x158] sm:$0xff] %vm4221, %v4168
      %4266 = vst.msk [vmem:[%s267 + $0x160] sm:$0xff] %vm4221, %v4169
      %4267 = vst.msk [vmem:[%s267 + $0x168] sm:$0xff] %vm4221, %v4170
      %4268 = vst.msk [vmem:[%s267 + $0x170] sm:$0xff] %vm4221, %v4171
      %4269 = vst.msk [vmem:[%s267 + $0x178] sm:$0xff] %vm4221, %v4172
      %4270 = vst.msk [vmem:[%s267 + $0x180] sm:$0xff] %vm4221, %v4173
      %4271 = vst.msk [vmem:[%s267 + $0x188] sm:$0xff] %vm4221, %v4174
      %4272 = vst.msk [vmem:[%s267 + $0x190] sm:$0xff] %vm4221, %v4175
      %4273 = vst.msk [vmem:[%s267 + $0x198] sm:$0xff] %vm4221, %v4176
      %4274 = vst.msk [vmem:[%s267 + $0x1a0] sm:$0xff] %vm4221, %v4177
      %4275 = vst.msk [vmem:[%s267 + $0x1a8] sm:$0xff] %vm4221, %v4178
      %4276 = vst.msk [vmem:[%s267 + $0x1b0] sm:$0xff] %vm4221, %v4179
      %4277 = vst.msk [vmem:[%s267 + $0x1b8] sm:$0xff] %vm4221, %v4180
      %4278 = vst.msk [vmem:[%s267 + $0x1c0] sm:$0xff] %vm4221, %v4181
      %4279 = vst.msk [vmem:[%s267 + $0x1c8] sm:$0xff] %vm4221, %v4182
      %4280 = vst.msk [vmem:[%s267 + $0x1d0] sm:$0xff] %vm4221, %v4183
      %4281 = vst.msk [vmem:[%s267 + $0x1d8] sm:$0xff] %vm4221, %v4184
      %4282 = vst.msk [vmem:[%s267 + $0x1e0] sm:$0xff] %vm4221, %v4185
      %4283 = vst.msk [vmem:[%s267 + $0x1e8] sm:$0xff] %vm4221, %v4186
      %4284 = vst.msk [vmem:[%s267 + $0x1f0] sm:$0xff] %vm4221, %v4187
      %4285 = vst.msk [vmem:[%s267 + $0x1f8] sm:$0xff] %vm4221, %v4188
      %4286 = vst.msk [vmem:[%s267 + $0x200] sm:$0xff] %vm4221, %v4189
      %4287 = vst.msk [vmem:[%s267 + $0x208] sm:$0xff] %vm4221, %v4190
      %4288 = vst.msk [vmem:[%s267 + $0x210] sm:$0xff] %vm4221, %v4191
      %4289 = vst.msk [vmem:[%s267 + $0x218] sm:$0xff] %vm4221, %v4192
      %4290 = vst.msk [vmem:[%s267 + $0x220] sm:$0xff] %vm4221, %v4193
      %4291 = vst.msk [vmem:[%s267 + $0x228] sm:$0xff] %vm4221, %v4194
      %4292 = vst.msk [vmem:[%s267 + $0x230] sm:$0xff] %vm4221, %v4195
      %4293 = vst.msk [vmem:[%s267 + $0x238] sm:$0xff] %vm4221, %v4196
      %4294 = vst.msk [vmem:[%s267 + $0x240] sm:$0xff] %vm4221, %v4197
      %4295 = vst.msk [vmem:[%s267 + $0x248] sm:$0xff] %vm4221, %v4198
      %4296 = vst.msk [vmem:[%s267 + $0x250] sm:$0xff] %vm4221, %v4199
      %4297 = vst.msk [vmem:[%s267 + $0x258] sm:$0xff] %vm4221, %v4200
      %4298 = vst.msk [vmem:[%s267 + $0x260] sm:$0xff] %vm4221, %v4201
      %4299 = vst.msk [vmem:[%s267 + $0x268] sm:$0xff] %vm4221, %v4202
      %4300 = vst.msk [vmem:[%s267 + $0x270] sm:$0xff] %vm4221, %v4203
      %4301 = vst.msk [vmem:[%s267 + $0x278] sm:$0xff] %vm4221, %v4204
      %4302 = vst.msk [vmem:[%s267 + $0x280] sm:$0xff] %vm4221, %v4205
      %4303 = vst.msk [vmem:[%s267 + $0x288] sm:$0xff] %vm4221, %v4206
      %4304 = vst.msk [vmem:[%s267 + $0x290] sm:$0xff] %vm4221, %v4207
      %4305 = vst.msk [vmem:[%s267 + $0x298] sm:$0xff] %vm4221, %v4208
      %4306 = vst.msk [vmem:[%s267 + $0x2a0] sm:$0xff] %vm4221, %v4209
      %4307 = vst.msk [vmem:[%s267 + $0x2a8] sm:$0xff] %vm4221, %v4210
      %4308 = vst.msk [vmem:[%s267 + $0x2b0] sm:$0xff] %vm4221, %v4211
      %4309 = vst.msk [vmem:[%s267 + $0x2b8] sm:$0xff] %vm4221, %v4212
      %4310 = vst.msk [vmem:[%s267 + $0x2c0] sm:$0xff] %vm4221, %v4213
      %4311 = vst.msk [vmem:[%s267 + $0x2c8] sm:$0xff] %vm4221, %v4214
      %4312 = vst.msk [vmem:[%s267 + $0x2d0] sm:$0xff] %vm4221, %v4215
      %4313 = vst.msk [vmem:[%s267 + $0x2d8] sm:$0xff] %vm4221, %v4216
      %4314 = vst.msk [vmem:[%s267 + $0x2e0] sm:$0xff] %vm4221, %v4217
      %4315 = vst.msk [vmem:[%s267 + $0x2e8] sm:$0xff] %vm4221, %v4218
      %4316 = vst.msk [vmem:[%s267 + $0x2f0] sm:$0xff] %vm4221, %v4219
      %4317 = vst.msk [vmem:[%s267 + $0x2f8] sm:$0xff] %vm4221, %v4220
      %v4318 = vsel %vm4221, %v4125, 0.0
      %v4319 = vsel %vm4221, %v4126, 0.0
      %v4320 = vadd.f32 %v4318, %v4319
      %v4321 = vsel %vm4221, %v4127, 0.0
      %v4322 = vadd.f32 %v4320, %v4321
      %v4323 = vsel %vm4221, %v4128, 0.0
      %v4324 = vadd.f32 %v4322, %v4323
      %v4325 = vsel %vm4221, %v4129, 0.0
      %v4326 = vadd.f32 %v4324, %v4325
      %v4327 = vsel %vm4221, %v4130, 0.0
      %v4328 = vadd.f32 %v4326, %v4327
      %v4329 = vsel %vm4221, %v4131, 0.0
      %v4330 = vadd.f32 %v4328, %v4329
      %v4331 = vsel %vm4221, %v4132, 0.0
      %v4332 = vadd.f32 %v4330, %v4331
      %v4333 = vsel %vm4221, %v4133, 0.0
      %v4334 = vadd.f32 %v4332, %v4333
      %v4335 = vsel %vm4221, %v4134, 0.0
      %v4336 = vadd.f32 %v4334, %v4335
      %v4337 = vsel %vm4221, %v4135, 0.0
      %v4338 = vadd.f32 %v4336, %v4337
      %v4339 = vsel %vm4221, %v4136, 0.0
      %v4340 = vadd.f32 %v4338, %v4339
      %v4341 = vsel %vm4221, %v4137, 0.0
      %v4342 = vadd.f32 %v4340, %v4341
      %v4343 = vsel %vm4221, %v4138, 0.0
      %v4344 = vadd.f32 %v4342, %v4343
      %v4345 = vsel %vm4221, %v4139, 0.0
      %v4346 = vadd.f32 %v4344, %v4345
      %v4347 = vsel %vm4221, %v4140, 0.0
      %v4348 = vadd.f32 %v4346, %v4347
      %v4349 = vsel %vm4221, %v4141, 0.0
      %v4350 = vadd.f32 %v4348, %v4349
      %v4351 = vsel %vm4221, %v4142, 0.0
      %v4352 = vadd.f32 %v4350, %v4351
      %v4353 = vsel %vm4221, %v4143, 0.0
      %v4354 = vadd.f32 %v4352, %v4353
      %v4355 = vsel %vm4221, %v4144, 0.0
      %v4356 = vadd.f32 %v4354, %v4355
      %v4357 = vsel %vm4221, %v4145, 0.0
      %v4358 = vadd.f32 %v4356, %v4357
      %v4359 = vsel %vm4221, %v4146, 0.0
      %v4360 = vadd.f32 %v4358, %v4359
      %v4361 = vsel %vm4221, %v4147, 0.0
      %v4362 = vadd.f32 %v4360, %v4361
      %v4363 = vsel %vm4221, %v4148, 0.0
      %v4364 = vadd.f32 %v4362, %v4363
      %v4365 = vsel %vm4221, %v4149, 0.0
      %v4366 = vadd.f32 %v4364, %v4365
      %v4367 = vsel %vm4221, %v4150, 0.0
      %v4368 = vadd.f32 %v4366, %v4367
      %v4369 = vsel %vm4221, %v4151, 0.0
      %v4370 = vadd.f32 %v4368, %v4369
      %v4371 = vsel %vm4221, %v4152, 0.0
      %v4372 = vadd.f32 %v4370, %v4371
      %v4373 = vsel %vm4221, %v4153, 0.0
      %v4374 = vadd.f32 %v4372, %v4373
      %v4375 = vsel %vm4221, %v4154, 0.0
      %v4376 = vadd.f32 %v4374, %v4375
      %v4377 = vsel %vm4221, %v4155, 0.0
      %v4378 = vadd.f32 %v4376, %v4377
      %v4379 = vsel %vm4221, %v4156, 0.0
      %v4380 = vadd.f32 %v4378, %v4379
      %v4381 = vsel %vm4221, %v4157, 0.0
      %v4382 = vadd.f32 %v4380, %v4381
      %v4383 = vsel %vm4221, %v4158, 0.0
      %v4384 = vadd.f32 %v4382, %v4383
      %v4385 = vsel %vm4221, %v4159, 0.0
      %v4386 = vadd.f32 %v4384, %v4385
      %v4387 = vsel %vm4221, %v4160, 0.0
      %v4388 = vadd.f32 %v4386, %v4387
      %v4389 = vsel %vm4221, %v4161, 0.0
      %v4390 = vadd.f32 %v4388, %v4389
      %v4391 = vsel %vm4221, %v4162, 0.0
      %v4392 = vadd.f32 %v4390, %v4391
      %v4393 = vsel %vm4221, %v4163, 0.0
      %v4394 = vadd.f32 %v4392, %v4393
      %v4395 = vsel %vm4221, %v4164, 0.0
      %v4396 = vadd.f32 %v4394, %v4395
      %v4397 = vsel %vm4221, %v4165, 0.0
      %v4398 = vadd.f32 %v4396, %v4397
      %v4399 = vsel %vm4221, %v4166, 0.0
      %v4400 = vadd.f32 %v4398, %v4399
      %v4401 = vsel %vm4221, %v4167, 0.0
      %v4402 = vadd.f32 %v4400, %v4401
      %v4403 = vsel %vm4221, %v4168, 0.0
      %v4404 = vadd.f32 %v4402, %v4403
      %v4405 = vsel %vm4221, %v4169, 0.0
      %v4406 = vadd.f32 %v4404, %v4405
      %v4407 = vsel %vm4221, %v4170, 0.0
      %v4408 = vadd.f32 %v4406, %v4407
      %v4409 = vsel %vm4221, %v4171, 0.0
      %v4410 = vadd.f32 %v4408, %v4409
      %v4411 = vsel %vm4221, %v4172, 0.0
      %v4412 = vadd.f32 %v4410, %v4411
      %v4413 = vsel %vm4221, %v4173, 0.0
      %v4414 = vadd.f32 %v4412, %v4413
      %v4415 = vsel %vm4221, %v4174, 0.0
      %v4416 = vadd.f32 %v4414, %v4415
      %v4417 = vsel %vm4221, %v4175, 0.0
      %v4418 = vadd.f32 %v4416, %v4417
      %v4419 = vsel %vm4221, %v4176, 0.0
      %v4420 = vadd.f32 %v4418, %v4419
      %v4421 = vsel %vm4221, %v4177, 0.0
      %v4422 = vadd.f32 %v4420, %v4421
      %v4423 = vsel %vm4221, %v4178, 0.0
      %v4424 = vadd.f32 %v4422, %v4423
      %v4425 = vsel %vm4221, %v4179, 0.0
      %v4426 = vadd.f32 %v4424, %v4425
      %v4427 = vsel %vm4221, %v4180, 0.0
      %v4428 = vadd.f32 %v4426, %v4427
      %v4429 = vsel %vm4221, %v4181, 0.0
      %v4430 = vadd.f32 %v4428, %v4429
      %v4431 = vsel %vm4221, %v4182, 0.0
      %v4432 = vadd.f32 %v4430, %v4431
      %v4433 = vsel %vm4221, %v4183, 0.0
      %v4434 = vadd.f32 %v4432, %v4433
      %v4435 = vsel %vm4221, %v4184, 0.0
      %v4436 = vadd.f32 %v4434, %v4435
      %v4437 = vsel %vm4221, %v4185, 0.0
      %v4438 = vadd.f32 %v4436, %v4437
      %v4439 = vsel %vm4221, %v4186, 0.0
      %v4440 = vadd.f32 %v4438, %v4439
      %v4441 = vsel %vm4221, %v4187, 0.0
      %v4442 = vadd.f32 %v4440, %v4441
      %v4443 = vsel %vm4221, %v4188, 0.0
      %v4444 = vadd.f32 %v4442, %v4443
      %v4445 = vsel %vm4221, %v4189, 0.0
      %v4446 = vadd.f32 %v4444, %v4445
      %v4447 = vsel %vm4221, %v4190, 0.0
      %v4448 = vadd.f32 %v4446, %v4447
      %v4449 = vsel %vm4221, %v4191, 0.0
      %v4450 = vadd.f32 %v4448, %v4449
      %v4451 = vsel %vm4221, %v4192, 0.0
      %v4452 = vadd.f32 %v4450, %v4451
      %v4453 = vsel %vm4221, %v4193, 0.0
      %v4454 = vadd.f32 %v4452, %v4453
      %v4455 = vsel %vm4221, %v4194, 0.0
      %v4456 = vadd.f32 %v4454, %v4455
      %v4457 = vsel %vm4221, %v4195, 0.0
      %v4458 = vadd.f32 %v4456, %v4457
      %v4459 = vsel %vm4221, %v4196, 0.0
      %v4460 = vadd.f32 %v4458, %v4459
      %v4461 = vsel %vm4221, %v4197, 0.0
      %v4462 = vadd.f32 %v4460, %v4461
      %v4463 = vsel %vm4221, %v4198, 0.0
      %v4464 = vadd.f32 %v4462, %v4463
      %v4465 = vsel %vm4221, %v4199, 0.0
      %v4466 = vadd.f32 %v4464, %v4465
      %v4467 = vsel %vm4221, %v4200, 0.0
      %v4468 = vadd.f32 %v4466, %v4467
      %v4469 = vsel %vm4221, %v4201, 0.0
      %v4470 = vadd.f32 %v4468, %v4469
      %v4471 = vsel %vm4221, %v4202, 0.0
      %v4472 = vadd.f32 %v4470, %v4471
      %v4473 = vsel %vm4221, %v4203, 0.0
      %v4474 = vadd.f32 %v4472, %v4473
      %v4475 = vsel %vm4221, %v4204, 0.0
      %v4476 = vadd.f32 %v4474, %v4475
      %v4477 = vsel %vm4221, %v4205, 0.0
      %v4478 = vadd.f32 %v4476, %v4477
      %v4479 = vsel %vm4221, %v4206, 0.0
      %v4480 = vadd.f32 %v4478, %v4479
      %v4481 = vsel %vm4221, %v4207, 0.0
      %v4482 = vadd.f32 %v4480, %v4481
      %v4483 = vsel %vm4221, %v4208, 0.0
      %v4484 = vadd.f32 %v4482, %v4483
      %v4485 = vsel %vm4221, %v4209, 0.0
      %v4486 = vadd.f32 %v4484, %v4485
      %v4487 = vsel %vm4221, %v4210, 0.0
      %v4488 = vadd.f32 %v4486, %v4487
      %v4489 = vsel %vm4221, %v4211, 0.0
      %v4490 = vadd.f32 %v4488, %v4489
      %v4491 = vsel %vm4221, %v4212, 0.0
      %v4492 = vadd.f32 %v4490, %v4491
      %v4493 = vsel %vm4221, %v4213, 0.0
      %v4494 = vadd.f32 %v4492, %v4493
      %v4495 = vsel %vm4221, %v4214, 0.0
      %v4496 = vadd.f32 %v4494, %v4495
      %v4497 = vsel %vm4221, %v4215, 0.0
      %v4498 = vadd.f32 %v4496, %v4497
      %v4499 = vsel %vm4221, %v4216, 0.0
      %v4500 = vadd.f32 %v4498, %v4499
      %v4501 = vsel %vm4221, %v4217, 0.0
      %v4502 = vadd.f32 %v4500, %v4501
      %v4503 = vsel %vm4221, %v4218, 0.0
      %v4504 = vadd.f32 %v4502, %v4503
      %v4505 = vsel %vm4221, %v4219, 0.0
      %v4506 = vadd.f32 %v4504, %v4505
      %v4507 = vsel %vm4221, %v4220, 0.0
      %v4508 = vadd.f32 %v4506, %v4507
      %v4509 = vrot.slane %v4508, 4
      %v4510 = vadd.f32 %v4508, %v4509
      %v4511 = vrot.slane %v4510, 2
      %v4512 = vadd.f32 %v4510, %v4511
      %v4513 = vrot.slane %v4512, 1
      %v4514 = vadd.f32 %v4512, %v4513
      %vm4515 = vcmask 581632
      %4516 = vst.msk [vmem:[%s271] sm:$0x1] %vm4515, %v4514
      %v4517 = vmul.f32 %v4125, %v4125
      %v4518 = vmul.f32 %v4126, %v4126
      %v4519 = vmul.f32 %v4127, %v4127
      %v4520 = vmul.f32 %v4128, %v4128
      %v4521 = vmul.f32 %v4129, %v4129
      %v4522 = vmul.f32 %v4130, %v4130
      %v4523 = vmul.f32 %v4131, %v4131
      %v4524 = vmul.f32 %v4132, %v4132
      %v4525 = vmul.f32 %v4133, %v4133
      %v4526 = vmul.f32 %v4134, %v4134
      %v4527 = vmul.f32 %v4135, %v4135
      %v4528 = vmul.f32 %v4136, %v4136
      %v4529 = vmul.f32 %v4137, %v4137
      %v4530 = vmul.f32 %v4138, %v4138
      %v4531 = vmul.f32 %v4139, %v4139
      %v4532 = vmul.f32 %v4140, %v4140
      %v4533 = vmul.f32 %v4141, %v4141
      %v4534 = vmul.f32 %v4142, %v4142
      %v4535 = vmul.f32 %v4143, %v4143
      %v4536 = vmul.f32 %v4144, %v4144
      %v4537 = vmul.f32 %v4145, %v4145
      %v4538 = vmul.f32 %v4146, %v4146
      %v4539 = vmul.f32 %v4147, %v4147
      %v4540 = vmul.f32 %v4148, %v4148
      %v4541 = vmul.f32 %v4149, %v4149
      %v4542 = vmul.f32 %v4150, %v4150
      %v4543 = vmul.f32 %v4151, %v4151
      %v4544 = vmul.f32 %v4152, %v4152
      %v4545 = vmul.f32 %v4153, %v4153
      %v4546 = vmul.f32 %v4154, %v4154
      %v4547 = vmul.f32 %v4155, %v4155
      %v4548 = vmul.f32 %v4156, %v4156
      %v4549 = vmul.f32 %v4157, %v4157
      %v4550 = vmul.f32 %v4158, %v4158
      %v4551 = vmul.f32 %v4159, %v4159
      %v4552 = vmul.f32 %v4160, %v4160
      %v4553 = vmul.f32 %v4161, %v4161
      %v4554 = vmul.f32 %v4162, %v4162
      %v4555 = vmul.f32 %v4163, %v4163
      %v4556 = vmul.f32 %v4164, %v4164
      %v4557 = vmul.f32 %v4165, %v4165
      %v4558 = vmul.f32 %v4166, %v4166
      %v4559 = vmul.f32 %v4167, %v4167
      %v4560 = vmul.f32 %v4168, %v4168
      %v4561 = vmul.f32 %v4169, %v4169
      %v4562 = vmul.f32 %v4170, %v4170
      %v4563 = vmul.f32 %v4171, %v4171
      %v4564 = vmul.f32 %v4172, %v4172
      %v4565 = vmul.f32 %v4173, %v4173
      %v4566 = vmul.f32 %v4174, %v4174
      %v4567 = vmul.f32 %v4175, %v4175
      %v4568 = vmul.f32 %v4176, %v4176
      %v4569 = vmul.f32 %v4177, %v4177
      %v4570 = vmul.f32 %v4178, %v4178
      %v4571 = vmul.f32 %v4179, %v4179
      %v4572 = vmul.f32 %v4180, %v4180
      %v4573 = vmul.f32 %v4181, %v4181
      %v4574 = vmul.f32 %v4182, %v4182
      %v4575 = vmul.f32 %v4183, %v4183
      %v4576 = vmul.f32 %v4184, %v4184
      %v4577 = vmul.f32 %v4185, %v4185
      %v4578 = vmul.f32 %v4186, %v4186
      %v4579 = vmul.f32 %v4187, %v4187
      %v4580 = vmul.f32 %v4188, %v4188
      %v4581 = vmul.f32 %v4189, %v4189
      %v4582 = vmul.f32 %v4190, %v4190
      %v4583 = vmul.f32 %v4191, %v4191
      %v4584 = vmul.f32 %v4192, %v4192
      %v4585 = vmul.f32 %v4193, %v4193
      %v4586 = vmul.f32 %v4194, %v4194
      %v4587 = vmul.f32 %v4195, %v4195
      %v4588 = vmul.f32 %v4196, %v4196
      %v4589 = vmul.f32 %v4197, %v4197
      %v4590 = vmul.f32 %v4198, %v4198
      %v4591 = vmul.f32 %v4199, %v4199
      %v4592 = vmul.f32 %v4200, %v4200
      %v4593 = vmul.f32 %v4201, %v4201
      %v4594 = vmul.f32 %v4202, %v4202
      %v4595 = vmul.f32 %v4203, %v4203
      %v4596 = vmul.f32 %v4204, %v4204
      %v4597 = vmul.f32 %v4205, %v4205
      %v4598 = vmul.f32 %v4206, %v4206
      %v4599 = vmul.f32 %v4207, %v4207
      %v4600 = vmul.f32 %v4208, %v4208
      %v4601 = vmul.f32 %v4209, %v4209
      %v4602 = vmul.f32 %v4210, %v4210
      %v4603 = vmul.f32 %v4211, %v4211
      %v4604 = vmul.f32 %v4212, %v4212
      %v4605 = vmul.f32 %v4213, %v4213
      %v4606 = vmul.f32 %v4214, %v4214
      %v4607 = vmul.f32 %v4215, %v4215
      %v4608 = vmul.f32 %v4216, %v4216
      %v4609 = vmul.f32 %v4217, %v4217
      %v4610 = vmul.f32 %v4218, %v4218
      %v4611 = vmul.f32 %v4219, %v4219
      %v4612 = vmul.f32 %v4220, %v4220
      %v4613 = vsel %vm4221, %v4517, 0.0
      %v4614 = vsel %vm4221, %v4518, 0.0
      %v4615 = vadd.f32 %v4613, %v4614
      %v4616 = vsel %vm4221, %v4519, 0.0
      %v4617 = vadd.f32 %v4615, %v4616
      %v4618 = vsel %vm4221, %v4520, 0.0
      %v4619 = vadd.f32 %v4617, %v4618
      %v4620 = vsel %vm4221, %v4521, 0.0
      %v4621 = vadd.f32 %v4619, %v4620
      %v4622 = vsel %vm4221, %v4522, 0.0
      %v4623 = vadd.f32 %v4621, %v4622
      %v4624 = vsel %vm4221, %v4523, 0.0
      %v4625 = vadd.f32 %v4623, %v4624
      %v4626 = vsel %vm4221, %v4524, 0.0
      %v4627 = vadd.f32 %v4625, %v4626
      %v4628 = vsel %vm4221, %v4525, 0.0
      %v4629 = vadd.f32 %v4627, %v4628
      %v4630 = vsel %vm4221, %v4526, 0.0
      %v4631 = vadd.f32 %v4629, %v4630
      %v4632 = vsel %vm4221, %v4527, 0.0
      %v4633 = vadd.f32 %v4631, %v4632
      %v4634 = vsel %vm4221, %v4528, 0.0
      %v4635 = vadd.f32 %v4633, %v4634
      %v4636 = vsel %vm4221, %v4529, 0.0
      %v4637 = vadd.f32 %v4635, %v4636
      %v4638 = vsel %vm4221, %v4530, 0.0
      %v4639 = vadd.f32 %v4637, %v4638
      %v4640 = vsel %vm4221, %v4531, 0.0
      %v4641 = vadd.f32 %v4639, %v4640
      %v4642 = vsel %vm4221, %v4532, 0.0
      %v4643 = vadd.f32 %v4641, %v4642
      %v4644 = vsel %vm4221, %v4533, 0.0
      %v4645 = vadd.f32 %v4643, %v4644
      %v4646 = vsel %vm4221, %v4534, 0.0
      %v4647 = vadd.f32 %v4645, %v4646
      %v4648 = vsel %vm4221, %v4535, 0.0
      %v4649 = vadd.f32 %v4647, %v4648
      %v4650 = vsel %vm4221, %v4536, 0.0
      %v4651 = vadd.f32 %v4649, %v4650
      %v4652 = vsel %vm4221, %v4537, 0.0
      %v4653 = vadd.f32 %v4651, %v4652
      %v4654 = vsel %vm4221, %v4538, 0.0
      %v4655 = vadd.f32 %v4653, %v4654
      %v4656 = vsel %vm4221, %v4539, 0.0
      %v4657 = vadd.f32 %v4655, %v4656
      %v4658 = vsel %vm4221, %v4540, 0.0
      %v4659 = vadd.f32 %v4657, %v4658
      %v4660 = vsel %vm4221, %v4541, 0.0
      %v4661 = vadd.f32 %v4659, %v4660
      %v4662 = vsel %vm4221, %v4542, 0.0
      %v4663 = vadd.f32 %v4661, %v4662
      %v4664 = vsel %vm4221, %v4543, 0.0
      %v4665 = vadd.f32 %v4663, %v4664
      %v4666 = vsel %vm4221, %v4544, 0.0
      %v4667 = vadd.f32 %v4665, %v4666
      %v4668 = vsel %vm4221, %v4545, 0.0
      %v4669 = vadd.f32 %v4667, %v4668
      %v4670 = vsel %vm4221, %v4546, 0.0
      %v4671 = vadd.f32 %v4669, %v4670
      %v4672 = vsel %vm4221, %v4547, 0.0
      %v4673 = vadd.f32 %v4671, %v4672
      %v4674 = vsel %vm4221, %v4548, 0.0
      %v4675 = vadd.f32 %v4673, %v4674
      %v4676 = vsel %vm4221, %v4549, 0.0
      %v4677 = vadd.f32 %v4675, %v4676
      %v4678 = vsel %vm4221, %v4550, 0.0
      %v4679 = vadd.f32 %v4677, %v4678
      %v4680 = vsel %vm4221, %v4551, 0.0
      %v4681 = vadd.f32 %v4679, %v4680
      %v4682 = vsel %vm4221, %v4552, 0.0
      %v4683 = vadd.f32 %v4681, %v4682
      %v4684 = vsel %vm4221, %v4553, 0.0
      %v4685 = vadd.f32 %v4683, %v4684
      %v4686 = vsel %vm4221, %v4554, 0.0
      %v4687 = vadd.f32 %v4685, %v4686
      %v4688 = vsel %vm4221, %v4555, 0.0
      %v4689 = vadd.f32 %v4687, %v4688
      %v4690 = vsel %vm4221, %v4556, 0.0
      %v4691 = vadd.f32 %v4689, %v4690
      %v4692 = vsel %vm4221, %v4557, 0.0
      %v4693 = vadd.f32 %v4691, %v4692
      %v4694 = vsel %vm4221, %v4558, 0.0
      %v4695 = vadd.f32 %v4693, %v4694
      %v4696 = vsel %vm4221, %v4559, 0.0
      %v4697 = vadd.f32 %v4695, %v4696
      %v4698 = vsel %vm4221, %v4560, 0.0
      %v4699 = vadd.f32 %v4697, %v4698
      %v4700 = vsel %vm4221, %v4561, 0.0
      %v4701 = vadd.f32 %v4699, %v4700
      %v4702 = vsel %vm4221, %v4562, 0.0
      %v4703 = vadd.f32 %v4701, %v4702
      %v4704 = vsel %vm4221, %v4563, 0.0
      %v4705 = vadd.f32 %v4703, %v4704
      %v4706 = vsel %vm4221, %v4564, 0.0
      %v4707 = vadd.f32 %v4705, %v4706
      %v4708 = vsel %vm4221, %v4565, 0.0
      %v4709 = vadd.f32 %v4707, %v4708
      %v4710 = vsel %vm4221, %v4566, 0.0
      %v4711 = vadd.f32 %v4709, %v4710
      %v4712 = vsel %vm4221, %v4567, 0.0
      %v4713 = vadd.f32 %v4711, %v4712
      %v4714 = vsel %vm4221, %v4568, 0.0
      %v4715 = vadd.f32 %v4713, %v4714
      %v4716 = vsel %vm4221, %v4569, 0.0
      %v4717 = vadd.f32 %v4715, %v4716
      %v4718 = vsel %vm4221, %v4570, 0.0
      %v4719 = vadd.f32 %v4717, %v4718
      %v4720 = vsel %vm4221, %v4571, 0.0
      %v4721 = vadd.f32 %v4719, %v4720
      %v4722 = vsel %vm4221, %v4572, 0.0
      %v4723 = vadd.f32 %v4721, %v4722
      %v4724 = vsel %vm4221, %v4573, 0.0
      %v4725 = vadd.f32 %v4723, %v4724
      %v4726 = vsel %vm4221, %v4574, 0.0
      %v4727 = vadd.f32 %v4725, %v4726
      %v4728 = vsel %vm4221, %v4575, 0.0
      %v4729 = vadd.f32 %v4727, %v4728
      %v4730 = vsel %vm4221, %v4576, 0.0
      %v4731 = vadd.f32 %v4729, %v4730
      %v4732 = vsel %vm4221, %v4577, 0.0
      %v4733 = vadd.f32 %v4731, %v4732
      %v4734 = vsel %vm4221, %v4578, 0.0
      %v4735 = vadd.f32 %v4733, %v4734
      %v4736 = vsel %vm4221, %v4579, 0.0
      %v4737 = vadd.f32 %v4735, %v4736
      %v4738 = vsel %vm4221, %v4580, 0.0
      %v4739 = vadd.f32 %v4737, %v4738
      %v4740 = vsel %vm4221, %v4581, 0.0
      %v4741 = vadd.f32 %v4739, %v4740
      %v4742 = vsel %vm4221, %v4582, 0.0
      %v4743 = vadd.f32 %v4741, %v4742
      %v4744 = vsel %vm4221, %v4583, 0.0
      %v4745 = vadd.f32 %v4743, %v4744
      %v4746 = vsel %vm4221, %v4584, 0.0
      %v4747 = vadd.f32 %v4745, %v4746
      %v4748 = vsel %vm4221, %v4585, 0.0
      %v4749 = vadd.f32 %v4747, %v4748
      %v4750 = vsel %vm4221, %v4586, 0.0
      %v4751 = vadd.f32 %v4749, %v4750
      %v4752 = vsel %vm4221, %v4587, 0.0
      %v4753 = vadd.f32 %v4751, %v4752
      %v4754 = vsel %vm4221, %v4588, 0.0
      %v4755 = vadd.f32 %v4753, %v4754
      %v4756 = vsel %vm4221, %v4589, 0.0
      %v4757 = vadd.f32 %v4755, %v4756
      %v4758 = vsel %vm4221, %v4590, 0.0
      %v4759 = vadd.f32 %v4757, %v4758
      %v4760 = vsel %vm4221, %v4591, 0.0
      %v4761 = vadd.f32 %v4759, %v4760
      %v4762 = vsel %vm4221, %v4592, 0.0
      %v4763 = vadd.f32 %v4761, %v4762
      %v4764 = vsel %vm4221, %v4593, 0.0
      %v4765 = vadd.f32 %v4763, %v4764
      %v4766 = vsel %vm4221, %v4594, 0.0
      %v4767 = vadd.f32 %v4765, %v4766
      %v4768 = vsel %vm4221, %v4595, 0.0
      %v4769 = vadd.f32 %v4767, %v4768
      %v4770 = vsel %vm4221, %v4596, 0.0
      %v4771 = vadd.f32 %v4769, %v4770
      %v4772 = vsel %vm4221, %v4597, 0.0
      %v4773 = vadd.f32 %v4771, %v4772
      %v4774 = vsel %vm4221, %v4598, 0.0
      %v4775 = vadd.f32 %v4773, %v4774
      %v4776 = vsel %vm4221, %v4599, 0.0
      %v4777 = vadd.f32 %v4775, %v4776
      %v4778 = vsel %vm4221, %v4600, 0.0
      %v4779 = vadd.f32 %v4777, %v4778
      %v4780 = vsel %vm4221, %v4601, 0.0
      %v4781 = vadd.f32 %v4779, %v4780
      %v4782 = vsel %vm4221, %v4602, 0.0
      %v4783 = vadd.f32 %v4781, %v4782
      %v4784 = vsel %vm4221, %v4603, 0.0
      %v4785 = vadd.f32 %v4783, %v4784
      %v4786 = vsel %vm4221, %v4604, 0.0
      %v4787 = vadd.f32 %v4785, %v4786
      %v4788 = vsel %vm4221, %v4605, 0.0
      %v4789 = vadd.f32 %v4787, %v4788
      %v4790 = vsel %vm4221, %v4606, 0.0
      %v4791 = vadd.f32 %v4789, %v4790
      %v4792 = vsel %vm4221, %v4607, 0.0
      %v4793 = vadd.f32 %v4791, %v4792
      %v4794 = vsel %vm4221, %v4608, 0.0
      %v4795 = vadd.f32 %v4793, %v4794
      %v4796 = vsel %vm4221, %v4609, 0.0
      %v4797 = vadd.f32 %v4795, %v4796
      %v4798 = vsel %vm4221, %v4610, 0.0
      %v4799 = vadd.f32 %v4797, %v4798
      %v4800 = vsel %vm4221, %v4611, 0.0
      %v4801 = vadd.f32 %v4799, %v4800
      %v4802 = vsel %vm4221, %v4612, 0.0
      %v4803 = vadd.f32 %v4801, %v4802
      %v4804 = vrot.slane %v4803, 4
      %v4805 = vadd.f32 %v4803, %v4804
      %v4806 = vrot.slane %v4805, 2
      %v4807 = vadd.f32 %v4805, %v4806
      %v4808 = vrot.slane %v4807, 1
      %v4809 = vadd.f32 %v4807, %v4808
      %4810 = vst.msk [vmem:[%s274] sm:$0x1] %vm4515, %v4809
      %s4811 = smul.u32 96, %s18
      %p4812 = scmp.lt.s32.totalorder %s4811, 191
      %s4813 = scalar_select %p4812, %s4811, 191
      %s4814 = smul.addr %s4813, 8
      %s4815 = scalar_lea.vmem %s4, %s4814
      %p4816 = scmp.lt.s32.totalorder %s18, 1
      %s4817 = scalar_select %p4816, %s18, 1
      %s4818 = scalar_lea.vmem %s5, %s4817
      %p4819 = scmp.lt.s32.totalorder %s18, 1
      %s4820 = scalar_select %p4819, %s18, 1
      %s4821 = scalar_lea.vmem %s6, %s4820
      // Predicated region
      $region37: #{network_forward.3} parent=35 // pred_check
        %p4822 = pneg %p125
      $region38: #{network_forward.3} parent=35 // pred_check_branch
        %4824 = sbr.rel (%p4822) target = $region40
      $region39: #{network_forward.3} parent=35 // pred_region
        %s4825 = smul.u32 96, %s18
      $region40: #{network_forward.3} parent=35 // pred_fallthru
        _
      // Predicated region
      $region41: #{network_forward.3} parent=35 // pred_check
        %p4826 = pneg %p151
      $region42: #{network_forward.3} parent=35 // pred_check_branch
        %4828 = sbr.rel (%p4826) target = $region44
      $region43: #{network_forward.3} parent=35 // pred_region
        _
      $region44: #{network_forward.3} parent=35 // pred_fallthru
        _
      // Predicated region
      $region45: #{network_forward.3} parent=35 // pred_check
        %p4829 = pneg %p177
      $region46: #{network_forward.3} parent=35 // pred_check_branch
        %4831 = sbr.rel (%p4829) target = $region48
      $region47: #{network_forward.3} parent=35 // pred_region
        _
      $region48: #{network_forward.3} parent=35 // pred_fallthru
        _
    $region36: #{network_forward.3} parent=5 // pred_fallthru
      _
    %p4832 = scmp.le.s32.totalorder 2, %s13
    // Predicated region
    $region49: #{network_forward.3} parent=5 // pred_check
      %p4833 = pneg %p4832
    $region50: #{network_forward.3} parent=5 // pred_check_branch
      %4835 = sbr.rel (%p4833) target = $region52
    $region51: #{network_forward.3} parent=5 // pred_region
      %s4836 = ssub.s32 %s13, 2
      // Predicated region
      $region53: #{network_forward.3} parent=51 // pred_check
        %p4837 = pneg %p131
      $region54: #{network_forward.3} parent=51 // pred_check_branch
        %4839 = sbr.rel (%p4837) target = $region56
      $region55: #{network_forward.3} parent=51 // pred_region
        %s4840 = smul.u32 96, %s19
        %p4841 = scmp.lt.s32.totalorder %s4840, 191
        %s4842 = scalar_select %p4841, %s4840, 191
        %s4843 = smul.addr %s4842, 8
        %s4844 = scalar_lea.vmem %s4, %s4843
      $region56: #{network_forward.3} parent=51 // pred_fallthru
        _
      // Predicated region
      $region57: #{network_forward.3} parent=51 // pred_check
        %p4845 = pneg %p157
      $region58: #{network_forward.3} parent=51 // pred_check_branch
        %4847 = sbr.rel (%p4845) target = $region60
      $region59: #{network_forward.3} parent=51 // pred_region
        %p4848 = scmp.lt.s32.totalorder %s19, 1
        %s4849 = scalar_select %p4848, %s19, 1
        %s4850 = scalar_lea.vmem %s5, %s4849
      $region60: #{network_forward.3} parent=51 // pred_fallthru
        _
      // Predicated region
      $region61: #{network_forward.3} parent=51 // pred_check
        %p4851 = pneg %p183
      $region62: #{network_forward.3} parent=51 // pred_check_branch
        %4853 = sbr.rel (%p4851) target = $region64
      $region63: #{network_forward.3} parent=51 // pred_region
        %p4854 = scmp.lt.s32.totalorder %s19, 1
        %s4855 = scalar_select %p4854, %s19, 1
        %s4856 = scalar_lea.vmem %s6, %s4855
      $region64: #{network_forward.3} parent=51 // pred_fallthru
        _
    $region52: #{network_forward.3} parent=5 // pred_fallthru
      _
  $region6: #{network_forward.3} parent=0 // loop_footer
    %s17 = sadd.s32 1, %s13
  $region7: #{network_forward.3} parent=0 // loop_footer_branch
    %12 = sbr.rel target = $region3
  $region8: #{network_forward.3} parent=0 // loop_exit
    _

// kernel: network_forward.5
$region0: #{network_forward.5}
  #allocation0 [shape = 'u32[]', space=smem, size = 0x4, offset = 0x4, fixed_abs, tag = 'smem constant byte address 0x4 - core index']
  #allocation1 [shape = 'u32[144,128]{1,0:T(1,128)}', space=vmem, size = 0x12000, scoped, tag = 'internal scratch']
  %s0 = inlined_call_operand.vmem [shape: f32[128,120], index: 0, kind: input, shape index: {}]
  %s1 = inlined_call_operand.vmem [shape: f32[2,120], index: 1, kind: input, shape index: {}]
  %s2 = inlined_call_operand.vmem [shape: f32[120,60], index: 2, kind: input, shape index: {}]
  %s3 = inlined_call_operand.vmem [shape: f32[1,60], index: 3, kind: input, shape index: {}]
  %s4 = inlined_call_operand.vmem [shape: f32[60,10], index: 4, kind: input, shape index: {}]
  %s5 = inlined_call_operand.vmem [shape: f32[1,10], index: 5, kind: input, shape index: {}]
  %s6 = inlined_call_operand.vmem [shape: f32[128,10], index: 6, kind: output, shape index: {}]
  %s7 = sld [smem:[#allocation0]]
  $region34: #{network_forward.5} parent=0
    _
  %s9 = ssub.s32 1, %s7
  %s10 = scalar_select 0, %s9, %s7
  // Predicated region
  $region2: #{network_forward.5} parent=0 // pred_check
    _
  $region3: #{network_forward.5} parent=0 // pred_check_branch
    %12 = sbr.rel (0) target = $region5
  $region4: #{network_forward.5} parent=0 // pred_region
    _
  $region5: #{network_forward.5} parent=0 // pred_fallthru
    _
  // Predicated region
  $region6: #{network_forward.5} parent=0 // pred_check
    _
  $region7: #{network_forward.5} parent=0 // pred_check_branch
    %14 = sbr.rel (0) target = $region9
  $region8: #{network_forward.5} parent=0 // pred_region
    _
  $region9: #{network_forward.5} parent=0 // pred_fallthru
    _
  // Predicated region
  $region10: #{network_forward.5} parent=0 // pred_check
    _
  $region11: #{network_forward.5} parent=0 // pred_check_branch
    %16 = sbr.rel (0) target = $region13
  $region12: #{network_forward.5} parent=0 // pred_region
    _
  $region13: #{network_forward.5} parent=0 // pred_fallthru
    _
  // Predicated region
  $region14: #{network_forward.5} parent=0 // pred_check
    _
  $region15: #{network_forward.5} parent=0 // pred_check_branch
    %18 = sbr.rel (0) target = $region17
  $region16: #{network_forward.5} parent=0 // pred_region
    _
  $region17: #{network_forward.5} parent=0 // pred_fallthru
    _
  // Predicated region
  $region18: #{network_forward.5} parent=0 // pred_check
    _
  $region19: #{network_forward.5} parent=0 // pred_check_branch
    %20 = sbr.rel (0) target = $region21
  $region20: #{network_forward.5} parent=0 // pred_region
    _
  $region21: #{network_forward.5} parent=0 // pred_fallthru
    _
  // Predicated region
  $region22: #{network_forward.5} parent=0 // pred_check
    _
  $region23: #{network_forward.5} parent=0 // pred_check_branch
    %22 = sbr.rel (0) target = $region25
  $region24: #{network_forward.5} parent=0 // pred_region
    _
  $region25: #{network_forward.5} parent=0 // pred_fallthru
    _
  %v23 = vld [vmem:[%s0] sm:$0xff]
  %v24 = vld [vmem:[%s0 + $0x8] sm:$0xff]
  %v25 = vld [vmem:[%s0 + $0x10] sm:$0xff]
  %v26 = vld [vmem:[%s0 + $0x18] sm:$0xff]
  %v27 = vld [vmem:[%s0 + $0x20] sm:$0xff]
  %v28 = vld [vmem:[%s0 + $0x28] sm:$0xff]
  %v29 = vld [vmem:[%s0 + $0x30] sm:$0xff]
  %v30 = vld [vmem:[%s0 + $0x38] sm:$0xff]
  %v31 = vld [vmem:[%s0 + $0x40] sm:$0xff]
  %v32 = vld [vmem:[%s0 + $0x48] sm:$0xff]
  %v33 = vld [vmem:[%s0 + $0x50] sm:$0xff]
  %v34 = vld [vmem:[%s0 + $0x58] sm:$0xff]
  %v35 = vld [vmem:[%s0 + $0x60] sm:$0xff]
  %v36 = vld [vmem:[%s0 + $0x68] sm:$0xff]
  %v37 = vld [vmem:[%s0 + $0x70] sm:$0xff]
  %v38 = vld [vmem:[%s0 + $0x78] sm:$0xff]
  %v39 = vld [vmem:[%s1] sm:$0x1]
  %v40 = vlaneseq
  %v41 = vshrl.u32 %v40, 7
  %v42 = vsub.s32 0, %v41
  %v43 = vrot.slane %v39, %v42
  %v44 = vmul.f32 %v23, %v43
  %v45 = vmul.f32 %v24, %v43
  %v46 = vmul.f32 %v25, %v43
  %v47 = vmul.f32 %v26, %v43
  %v48 = vmul.f32 %v27, %v43
  %v49 = vmul.f32 %v28, %v43
  %v50 = vmul.f32 %v29, %v43
  %v51 = vmul.f32 %v30, %v43
  %v52 = vmul.f32 %v31, %v43
  %v53 = vmul.f32 %v32, %v43
  %v54 = vmul.f32 %v33, %v43
  %v55 = vmul.f32 %v34, %v43
  %v56 = vmul.f32 %v35, %v43
  %v57 = vmul.f32 %v36, %v43
  %v58 = vmul.f32 %v37, %v43
  %v59 = vmul.f32 %v38, %v43
  %v60 = vld [vmem:[%s1 + $0x1] sm:$0x1]
  %v61 = vlaneseq
  %v62 = vshrl.u32 %v61, 7
  %v63 = vsub.s32 0, %v62
  %v64 = vrot.slane %v60, %v63
  %v65 = vadd.f32 %v44, %v64
  %v66 = vadd.f32 %v45, %v64
  %v67 = vadd.f32 %v46, %v64
  %v68 = vadd.f32 %v47, %v64
  %v69 = vadd.f32 %v48, %v64
  %v70 = vadd.f32 %v49, %v64
  %v71 = vadd.f32 %v50, %v64
  %v72 = vadd.f32 %v51, %v64
  %v73 = vadd.f32 %v52, %v64
  %v74 = vadd.f32 %v53, %v64
  %v75 = vadd.f32 %v54, %v64
  %v76 = vadd.f32 %v55, %v64
  %v77 = vadd.f32 %v56, %v64
  %v78 = vadd.f32 %v57, %v64
  %v79 = vadd.f32 %v58, %v64
  %v80 = vadd.f32 %v59, %v64
  %v81 = vld [vmem:[%s2] sm:$0xff]
  %v82 = vld [vmem:[%s2 + $0x8] sm:$0xff]
  %v83 = vld [vmem:[%s2 + $0x10] sm:$0xff]
  %v84 = vld [vmem:[%s2 + $0x18] sm:$0xff]
  %v85 = vld [vmem:[%s2 + $0x20] sm:$0xff]
  %v86 = vld [vmem:[%s2 + $0x28] sm:$0xff]
  %v87 = vld [vmem:[%s2 + $0x30] sm:$0xff]
  %v88 = vld [vmem:[%s2 + $0x38] sm:$0xff]
  %v89 = vld [vmem:[%s2 + $0x40] sm:$0xff]
  %v90 = vld [vmem:[%s2 + $0x48] sm:$0xff]
  %v91 = vld [vmem:[%s2 + $0x50] sm:$0xff]
  %v92 = vld [vmem:[%s2 + $0x58] sm:$0xff]
  %v93 = vld [vmem:[%s2 + $0x60] sm:$0xff]
  %v94 = vld [vmem:[%s2 + $0x68] sm:$0xff]
  %v95 = vld [vmem:[%s2 + $0x70] sm:$0xff]
  %v96 = vld [vmem:[%s3] sm:$0x1]
  %v98 = vlaneseq
  %v99 = vshrl.u32 %v98, 7
  %v100 = vsub.s32 0, %v99
  %v101 = vrot.slane %v96, %v100
  %vm103 = vcmask 982016
  %v105 = vsel %vm103, %v65, 0
  %v108 = vsel %vm103, %v66, 0
  %v111 = vsel %vm103, %v67, 0
  %v114 = vsel %vm103, %v68, 0
  %v117 = vsel %vm103, %v69, 0
  %v120 = vsel %vm103, %v70, 0
  %v123 = vsel %vm103, %v71, 0
  %v126 = vsel %vm103, %v72, 0
  %v129 = vsel %vm103, %v73, 0
  %v132 = vsel %vm103, %v74, 0
  %v135 = vsel %vm103, %v75, 0
  %v138 = vsel %vm103, %v76, 0
  %v141 = vsel %vm103, %v77, 0
  %v144 = vsel %vm103, %v78, 0
  %v147 = vsel %vm103, %v79, 0
  %v150 = vsel %vm103, %v80, 0
  %152 = vmatprep.subr.mxu0 0.0
  %153 = vmatpush1.msra.mxu0 %v81
  %154 = vmatprep.subr.mxu0 0.0
  %155 = vmatpush1.msra.mxu0 %v82
  %156 = vmatprep.subr.mxu0 0.0
  %157 = vmatpush1.msra.mxu0 %v83
  %158 = vmatprep.subr.mxu0 0.0
  %159 = vmatpush1.msra.mxu0 %v84
  %160 = vmatprep.subr.mxu0 0.0
  %161 = vmatpush1.msra.mxu0 %v85
  %162 = vmatprep.subr.mxu0 0.0
  %163 = vmatpush1.msra.mxu0 %v86
  %164 = vmatprep.subr.mxu0 0.0
  %165 = vmatpush1.msra.mxu0 %v87
  %166 = vmatprep.subr.mxu0 0.0
  %167 = vmatpush1.msra.mxu0 %v88
  %168 = vmatprep.subr.mxu0 0.0
  %169 = vmatpush1.msra.mxu0 %v89
  %170 = vmatprep.subr.mxu0 0.0
  %171 = vmatpush1.msra.mxu0 %v90
  %172 = vmatprep.subr.mxu0 0.0
  %173 = vmatpush1.msra.mxu0 %v91
  %174 = vmatprep.subr.mxu0 0.0
  %175 = vmatpush1.msra.mxu0 %v92
  %176 = vmatprep.subr.mxu0 0.0
  %177 = vmatpush1.msra.mxu0 %v93
  %178 = vmatprep.subr.mxu0 0.0
  %179 = vmatpush1.msra.mxu0 %v94
  %180 = vmatprep.subr.mxu0 0.0
  %181 = vmatpush1.msra.mxu0 %v95
  %182 = vmatprep.subr.mxu0 0.0
  %183 = vmatpush1.msra.mxu0 0.0
  %184 = vmatprep.subr.mxu0 0.0
  %185 = vmatpush1.msra.mxu0 0.0
  %186 = vmatprep.subr.mxu0 0.0
  %187 = vmatpush1.msra.mxu0 0.0
  %188 = vmatprep.subr.mxu0 0.0
  %189 = vmatpush1.msra.mxu0 0.0
  %190 = vmatprep.subr.mxu0 0.0
  %191 = vmatpush1.msra.mxu0 0.0
  %192 = vmatprep.subr.mxu0 0.0
  %193 = vmatpush1.msra.mxu0 0.0
  %194 = vmatprep.subr.mxu0 0.0
  %195 = vmatpush1.msra.mxu0 0.0
  %196 = vmatprep.subr.mxu0 0.0
  %197 = vmatpush1.msra.mxu0 0.0
  %198 = vmatprep.subr.mxu0 0.0
  %199 = vmatpush1.msra.mxu0 0.0
  %200 = vmatprep.subr.mxu0 0.0
  %201 = vmatpush1.msra.mxu0 0.0
  %202 = vmatprep.subr.mxu0 0.0
  %203 = vmatpush1.msra.mxu0 0.0
  %204 = vmatprep.subr.mxu0 0.0
  %205 = vmatpush1.msra.mxu0 0.0
  %206 = vmatprep.subr.mxu0 0.0
  %207 = vmatpush1.msra.mxu0 0.0
  %208 = vmatprep.subr.mxu0 0.0
  %209 = vmatpush1.msra.mxu0 0.0
  %210 = vmatprep.subr.mxu0 0.0
  %211 = vmatpush1.msra.mxu0 0.0
  %212 = vmatprep.subr.mxu0 0.0
  %213 = vmatpush1.msra.mxu0 0.0
  %214 = vmatprep.subr.mxu0 0.0
  %215 = vmatpush1.msra.mxu0 0.0
  %216 = vmatprep.mubr.f32.mxu0 0.0
  %217 = vmatmul.mubr.f32.gmra.mrb[0].mxu0 %v105
  %v218 = vpop.f32.mrb[0].mxu0
  %v219 = vadd.f32 %v101, %v218
  %v220 = vpop.f32.mrb[0].mxu0
  %221 = vmatprep.mubr.f32.mxu0 0.0
  %222 = vmatmul.mubr.f32.gmra.mrb[0].mxu0 %v108
  %v223 = vpop.f32.mrb[0].mxu0
  %v224 = vadd.f32 %v101, %v223
  %v225 = vpop.f32.mrb[0].mxu0
  %226 = vmatprep.mubr.f32.mxu0 0.0
  %227 = vmatmul.mubr.f32.gmra.mrb[0].mxu0 %v111
  %v228 = vpop.f32.mrb[0].mxu0
  %v229 = vadd.f32 %v101, %v228
  %v230 = vpop.f32.mrb[0].mxu0
  %231 = vmatprep.mubr.f32.mxu0 0.0
  %232 = vmatmul.mubr.f32.gmra.mrb[0].mxu0 %v114
  %v233 = vpop.f32.mrb[0].mxu0
  %v234 = vadd.f32 %v101, %v233
  %v235 = vpop.f32.mrb[0].mxu0
  %236 = vmatprep.mubr.f32.mxu0 0.0
  %237 = vmatmul.mubr.f32.gmra.mrb[0].mxu0 %v117
  %v238 = vpop.f32.mrb[0].mxu0
  %v239 = vadd.f32 %v101, %v238
  %v240 = vpop.f32.mrb[0].mxu0
  %241 = vmatprep.mubr.f32.mxu0 0.0
  %242 = vmatmul.mubr.f32.gmra.mrb[0].mxu0 %v120
  %v243 = vpop.f32.mrb[0].mxu0
  %v244 = vadd.f32 %v101, %v243
  %v245 = vpop.f32.mrb[0].mxu0
  %246 = vmatprep.mubr.f32.mxu0 0.0
  %247 = vmatmul.mubr.f32.gmra.mrb[0].mxu0 %v123
  %v248 = vpop.f32.mrb[0].mxu0
  %v249 = vadd.f32 %v101, %v248
  %v250 = vpop.f32.mrb[0].mxu0
  %251 = vmatprep.mubr.f32.mxu0 0.0
  %252 = vmatmul.mubr.f32.gmra.mrb[0].mxu0 %v126
  %v253 = vpop.f32.mrb[0].mxu0
  %v254 = vadd.f32 %v101, %v253
  %v255 = vpop.f32.mrb[0].mxu0
  %256 = vmatprep.mubr.f32.mxu0 0.0
  %257 = vmatmul.mubr.f32.gmra.mrb[0].mxu0 %v129
  %v258 = vpop.f32.mrb[0].mxu0
  %v259 = vadd.f32 %v101, %v258
  %v260 = vpop.f32.mrb[0].mxu0
  %261 = vmatprep.mubr.f32.mxu0 0.0
  %262 = vmatmul.mubr.f32.gmra.mrb[0].mxu0 %v132
  %v263 = vpop.f32.mrb[0].mxu0
  %v264 = vadd.f32 %v101, %v263
  %v265 = vpop.f32.mrb[0].mxu0
  %266 = vmatprep.mubr.f32.mxu0 0.0
  %267 = vmatmul.mubr.f32.gmra.mrb[0].mxu0 %v135
  %v268 = vpop.f32.mrb[0].mxu0
  %v269 = vadd.f32 %v101, %v268
  %v270 = vpop.f32.mrb[0].mxu0
  %271 = vmatprep.mubr.f32.mxu0 0.0
  %272 = vmatmul.mubr.f32.gmra.mrb[0].mxu0 %v138
  %v273 = vpop.f32.mrb[0].mxu0
  %v274 = vadd.f32 %v101, %v273
  %v275 = vpop.f32.mrb[0].mxu0
  %276 = vmatprep.mubr.f32.mxu0 0.0
  %277 = vmatmul.mubr.f32.gmra.mrb[0].mxu0 %v141
  %v278 = vpop.f32.mrb[0].mxu0
  %v279 = vadd.f32 %v101, %v278
  %v280 = vpop.f32.mrb[0].mxu0
  %281 = vmatprep.mubr.f32.mxu0 0.0
  %282 = vmatmul.mubr.f32.gmra.mrb[0].mxu0 %v144
  %v283 = vpop.f32.mrb[0].mxu0
  %v284 = vadd.f32 %v101, %v283
  %v285 = vpop.f32.mrb[0].mxu0
  %286 = vmatprep.mubr.f32.mxu0 0.0
  %287 = vmatmul.mubr.f32.gmra.mrb[0].mxu0 %v147
  %v288 = vpop.f32.mrb[0].mxu0
  %v289 = vadd.f32 %v101, %v288
  %v290 = vpop.f32.mrb[0].mxu0
  %291 = vmatprep.mubr.f32.mxu0 0.0
  %292 = vmatmul.mubr.f32.gmra.mrb[0].mxu0 %v150
  %v293 = vpop.f32.mrb[0].mxu0
  %v294 = vadd.f32 %v101, %v293
  %v295 = vpop.f32.mrb[0].mxu0
  %296 = vdwg.mxu0
  %v297 = vmax.f32 %v219, 0.0
  %v298 = vmax.f32 %v224, 0.0
  %v299 = vmax.f32 %v229, 0.0
  %v300 = vmax.f32 %v234, 0.0
  %v301 = vmax.f32 %v239, 0.0
  %v302 = vmax.f32 %v244, 0.0
  %v303 = vmax.f32 %v249, 0.0
  %v304 = vmax.f32 %v254, 0.0
  %v305 = vmax.f32 %v259, 0.0
  %v306 = vmax.f32 %v264, 0.0
  %v307 = vmax.f32 %v269, 0.0
  %v308 = vmax.f32 %v274, 0.0
  %v309 = vmax.f32 %v279, 0.0
  %v310 = vmax.f32 %v284, 0.0
  %v311 = vmax.f32 %v289, 0.0
  %v312 = vmax.f32 %v294, 0.0
  %v313 = vld [vmem:[%s4] sm:$0xff]
  %v314 = vld [vmem:[%s4 + $0x8] sm:$0xff]
  %v315 = vld [vmem:[%s4 + $0x10] sm:$0xff]
  %v316 = vld [vmem:[%s4 + $0x18] sm:$0xff]
  %v317 = vld [vmem:[%s4 + $0x20] sm:$0xff]
  %v318 = vld [vmem:[%s4 + $0x28] sm:$0xff]
  %v319 = vld [vmem:[%s4 + $0x30] sm:$0xff]
  %v320 = vld [vmem:[%s4 + $0x38] sm:$0xf]
  %v321 = vld [vmem:[%s5] sm:$0x1]
  %v323 = vlaneseq
  %v324 = vshrl.u32 %v323, 7
  %v325 = vsub.s32 0, %v324
  %v326 = vrot.slane %v321, %v325
  %vm328 = vcmask 490496
  %v330 = vsel %vm328, %v297, 0
  %v333 = vsel %vm328, %v298, 0
  %v336 = vsel %vm328, %v299, 0
  %v339 = vsel %vm328, %v300, 0
  %v342 = vsel %vm328, %v301, 0
  %v345 = vsel %vm328, %v302, 0
  %v348 = vsel %vm328, %v303, 0
  %v351 = vsel %vm328, %v304, 0
  %v354 = vsel %vm328, %v305, 0
  %v357 = vsel %vm328, %v306, 0
  %v360 = vsel %vm328, %v307, 0
  %v363 = vsel %vm328, %v308, 0
  %v366 = vsel %vm328, %v309, 0
  %v369 = vsel %vm328, %v310, 0
  %v372 = vsel %vm328, %v311, 0
  %v375 = vsel %vm328, %v312, 0
  %vm377 = vcmask 1043456
  %v379 = vsel %vm377, %v320, 0
  %381 = vmatprep.subr.mxu0 0.0
  %382 = vmatpush1.msra.mxu0 %v313
  %383 = vmatprep.subr.mxu0 0.0
  %384 = vmatpush1.msra.mxu0 %v314
  %385 = vmatprep.subr.mxu0 0.0
  %386 = vmatpush1.msra.mxu0 %v315
  %387 = vmatprep.subr.mxu0 0.0
  %388 = vmatpush1.msra.mxu0 %v316
  %389 = vmatprep.subr.mxu0 0.0
  %390 = vmatpush1.msra.mxu0 %v317
  %391 = vmatprep.subr.mxu0 0.0
  %392 = vmatpush1.msra.mxu0 %v318
  %393 = vmatprep.subr.mxu0 0.0
  %394 = vmatpush1.msra.mxu0 %v319
  %395 = vmatprep.subr.mxu0 0.0
  %396 = vmatpush1.msra.mxu0 %v379
  %397 = vmatprep.subr.mxu0 0.0
  %398 = vmatpush1.msra.mxu0 0.0
  %399 = vmatprep.subr.mxu0 0.0
  %400 = vmatpush1.msra.mxu0 0.0
  %401 = vmatprep.subr.mxu0 0.0
  %402 = vmatpush1.msra.mxu0 0.0
  %403 = vmatprep.subr.mxu0 0.0
  %404 = vmatpush1.msra.mxu0 0.0
  %405 = vmatprep.subr.mxu0 0.0
  %406 = vmatpush1.msra.mxu0 0.0
  %407 = vmatprep.subr.mxu0 0.0
  %408 = vmatpush1.msra.mxu0 0.0
  %409 = vmatprep.subr.mxu0 0.0
  %410 = vmatpush1.msra.mxu0 0.0
  %411 = vmatprep.subr.mxu0 0.0
  %412 = vmatpush1.msra.mxu0 0.0
  %413 = vmatprep.subr.mxu0 0.0
  %414 = vmatpush1.msra.mxu0 0.0
  %415 = vmatprep.subr.mxu0 0.0
  %416 = vmatpush1.msra.mxu0 0.0
  %417 = vmatprep.subr.mxu0 0.0
  %418 = vmatpush1.msra.mxu0 0.0
  %419 = vmatprep.subr.mxu0 0.0
  %420 = vmatpush1.msra.mxu0 0.0
  %421 = vmatprep.subr.mxu0 0.0
  %422 = vmatpush1.msra.mxu0 0.0
  %423 = vmatprep.subr.mxu0 0.0
  %424 = vmatpush1.msra.mxu0 0.0
  %425 = vmatprep.subr.mxu0 0.0
  %426 = vmatpush1.msra.mxu0 0.0
  %427 = vmatprep.subr.mxu0 0.0
  %428 = vmatpush1.msra.mxu0 0.0
  %429 = vmatprep.subr.mxu0 0.0
  %430 = vmatpush1.msra.mxu0 0.0
  %431 = vmatprep.subr.mxu0 0.0
  %432 = vmatpush1.msra.mxu0 0.0
  %433 = vmatprep.subr.mxu0 0.0
  %434 = vmatpush1.msra.mxu0 0.0
  %435 = vmatprep.subr.mxu0 0.0
  %436 = vmatpush1.msra.mxu0 0.0
  %437 = vmatprep.subr.mxu0 0.0
  %438 = vmatpush1.msra.mxu0 0.0
  %439 = vmatprep.subr.mxu0 0.0
  %440 = vmatpush1.msra.mxu0 0.0
  %441 = vmatprep.subr.mxu0 0.0
  %442 = vmatpush1.msra.mxu0 0.0
  %443 = vmatprep.subr.mxu0 0.0
  %444 = vmatpush1.msra.mxu0 0.0
  %445 = vmatprep.mubr.f32.mxu0 0.0
  %446 = vmatmul.mubr.f32.gmra.mrb[0].mxu0 %v330
  %v447 = vpop.f32.mrb[0].mxu0
  %v448 = vadd.f32 %v326, %v447
  %v449 = vpop.f32.mrb[0].mxu0
  %450 = vmatprep.mubr.f32.mxu0 0.0
  %451 = vmatmul.mubr.f32.gmra.mrb[0].mxu0 %v333
  %v452 = vpop.f32.mrb[0].mxu0
  %v453 = vadd.f32 %v326, %v452
  %v454 = vpop.f32.mrb[0].mxu0
  %455 = vmatprep.mubr.f32.mxu0 0.0
  %456 = vmatmul.mubr.f32.gmra.mrb[0].mxu0 %v336
  %v457 = vpop.f32.mrb[0].mxu0
  %v458 = vadd.f32 %v326, %v457
  %v459 = vpop.f32.mrb[0].mxu0
  %460 = vmatprep.mubr.f32.mxu0 0.0
  %461 = vmatmul.mubr.f32.gmra.mrb[0].mxu0 %v339
  %v462 = vpop.f32.mrb[0].mxu0
  %v463 = vadd.f32 %v326, %v462
  %v464 = vpop.f32.mrb[0].mxu0
  %465 = vmatprep.mubr.f32.mxu0 0.0
  %466 = vmatmul.mubr.f32.gmra.mrb[0].mxu0 %v342
  %v467 = vpop.f32.mrb[0].mxu0
  %v468 = vadd.f32 %v326, %v467
  %v469 = vpop.f32.mrb[0].mxu0
  %470 = vmatprep.mubr.f32.mxu0 0.0
  %471 = vmatmul.mubr.f32.gmra.mrb[0].mxu0 %v345
  %v472 = vpop.f32.mrb[0].mxu0
  %v473 = vadd.f32 %v326, %v472
  %v474 = vpop.f32.mrb[0].mxu0
  %475 = vmatprep.mubr.f32.mxu0 0.0
  %476 = vmatmul.mubr.f32.gmra.mrb[0].mxu0 %v348
  %v477 = vpop.f32.mrb[0].mxu0
  %v478 = vadd.f32 %v326, %v477
  %v479 = vpop.f32.mrb[0].mxu0
  %480 = vmatprep.mubr.f32.mxu0 0.0
  %481 = vmatmul.mubr.f32.gmra.mrb[0].mxu0 %v351
  %v482 = vpop.f32.mrb[0].mxu0
  %v483 = vadd.f32 %v326, %v482
  %v484 = vpop.f32.mrb[0].mxu0
  %485 = vmatprep.mubr.f32.mxu0 0.0
  %486 = vmatmul.mubr.f32.gmra.mrb[0].mxu0 %v354
  %v487 = vpop.f32.mrb[0].mxu0
  %v488 = vadd.f32 %v326, %v487
  %v489 = vpop.f32.mrb[0].mxu0
  %490 = vmatprep.mubr.f32.mxu0 0.0
  %491 = vmatmul.mubr.f32.gmra.mrb[0].mxu0 %v357
  %v492 = vpop.f32.mrb[0].mxu0
  %v493 = vadd.f32 %v326, %v492
  %v494 = vpop.f32.mrb[0].mxu0
  %495 = vmatprep.mubr.f32.mxu0 0.0
  %496 = vmatmul.mubr.f32.gmra.mrb[0].mxu0 %v360
  %v497 = vpop.f32.mrb[0].mxu0
  %v498 = vadd.f32 %v326, %v497
  %v499 = vpop.f32.mrb[0].mxu0
  %500 = vmatprep.mubr.f32.mxu0 0.0
  %501 = vmatmul.mubr.f32.gmra.mrb[0].mxu0 %v363
  %v502 = vpop.f32.mrb[0].mxu0
  %v503 = vadd.f32 %v326, %v502
  %v504 = vpop.f32.mrb[0].mxu0
  %505 = vmatprep.mubr.f32.mxu0 0.0
  %506 = vmatmul.mubr.f32.gmra.mrb[0].mxu0 %v366
  %v507 = vpop.f32.mrb[0].mxu0
  %v508 = vadd.f32 %v326, %v507
  %v509 = vpop.f32.mrb[0].mxu0
  %510 = vmatprep.mubr.f32.mxu0 0.0
  %511 = vmatmul.mubr.f32.gmra.mrb[0].mxu0 %v369
  %v512 = vpop.f32.mrb[0].mxu0
  %v513 = vadd.f32 %v326, %v512
  %v514 = vpop.f32.mrb[0].mxu0
  %515 = vmatprep.mubr.f32.mxu0 0.0
  %516 = vmatmul.mubr.f32.gmra.mrb[0].mxu0 %v372
  %v517 = vpop.f32.mrb[0].mxu0
  %v518 = vadd.f32 %v326, %v517
  %v519 = vpop.f32.mrb[0].mxu0
  %520 = vmatprep.mubr.f32.mxu0 0.0
  %521 = vmatmul.mubr.f32.gmra.mrb[0].mxu0 %v375
  %v522 = vpop.f32.mrb[0].mxu0
  %v523 = vadd.f32 %v326, %v522
  %v524 = vpop.f32.mrb[0].mxu0
  %525 = vdwg.mxu0
  %vm526 = vcmask 80896
  %527 = vst.msk [vmem:[%s6] sm:$0xff] %vm526, %v448
  %528 = vst.msk [vmem:[%s6 + $0x8] sm:$0xff] %vm526, %v453
  %529 = vst.msk [vmem:[%s6 + $0x10] sm:$0xff] %vm526, %v458
  %530 = vst.msk [vmem:[%s6 + $0x18] sm:$0xff] %vm526, %v463
  %531 = vst.msk [vmem:[%s6 + $0x20] sm:$0xff] %vm526, %v468
  %532 = vst.msk [vmem:[%s6 + $0x28] sm:$0xff] %vm526, %v473
  %533 = vst.msk [vmem:[%s6 + $0x30] sm:$0xff] %vm526, %v478
  %534 = vst.msk [vmem:[%s6 + $0x38] sm:$0xff] %vm526, %v483
  %535 = vst.msk [vmem:[%s6 + $0x40] sm:$0xff] %vm526, %v488
  %536 = vst.msk [vmem:[%s6 + $0x48] sm:$0xff] %vm526, %v493
  %537 = vst.msk [vmem:[%s6 + $0x50] sm:$0xff] %vm526, %v498
  %538 = vst.msk [vmem:[%s6 + $0x58] sm:$0xff] %vm526, %v503
  %539 = vst.msk [vmem:[%s6 + $0x60] sm:$0xff] %vm526, %v508
  %540 = vst.msk [vmem:[%s6 + $0x68] sm:$0xff] %vm526, %v513
  %541 = vst.msk [vmem:[%s6 + $0x70] sm:$0xff] %vm526, %v518
  %542 = vst.msk [vmem:[%s6 + $0x78] sm:$0xff] %vm526, %v523
  // Predicated region
  $region26: #{network_forward.5} parent=0 // pred_check
    _
  $region27: #{network_forward.5} parent=0 // pred_check_branch
    %544 = sbr.rel (0) target = $region29
  $region28: #{network_forward.5} parent=0 // pred_region
    _
  $region29: #{network_forward.5} parent=0 // pred_fallthru
    _
  // Predicated region
  $region30: #{network_forward.5} parent=0 // pred_check
    _
  $region31: #{network_forward.5} parent=0 // pred_check_branch
    %546 = sbr.rel (0) target = $region33
  $region32: #{network_forward.5} parent=0 // pred_region
    _
  $region33: #{network_forward.5} parent=0 // pred_fallthru
    _

// kernel: network_forward.4
$region0: #{network_forward.4}
  #allocation0 [shape = 'u32[]', space=smem, size = 0x4, offset = 0x4, fixed_abs, tag = 'smem constant byte address 0x4 - core index']
  #allocation1 [shape = 'u32[144,128]{1,0:T(1,128)}', space=vmem, size = 0x12000, scoped, tag = 'internal scratch']
  %s0 = inlined_call_operand.vmem [shape: f32[128,864], index: 0, kind: input, shape index: {}]
  %s1 = inlined_call_operand.vmem [shape: f32[2,864], index: 1, kind: input, shape index: {}]
  %s2 = inlined_call_operand.vmem [shape: f32[864,768], index: 2, kind: input, shape index: {}]
  %s3 = inlined_call_operand.vmem [shape: f32[1,384], index: 3, kind: input, shape index: {}]
  %s4 = inlined_call_operand.vmem [shape: f32[768,192], index: 4, kind: input, shape index: {}]
  %s5 = inlined_call_operand.vmem [shape: f32[192,120], index: 5, kind: input, shape index: {}]
  %s6 = inlined_call_operand.vmem [shape: f32[1,120], index: 6, kind: input, shape index: {}]
  %s7 = inlined_call_operand.vmem [shape: f32[128,120], index: 7, kind: output, shape index: {0}]
  %s8 = inlined_call_operand.vmem [shape: f32[2,1,120], index: 8, kind: output, shape index: {1}]
  %s9 = inlined_call_operand.vmem [shape: f32[2,1,120], index: 9, kind: output, shape index: {2}]
  %10 = xla_tuple %s7, %s8, %s9
  %s11 = sld [smem:[#allocation0]]
  $region77: #{network_forward.4} parent=0
    _
  %s13 = ssub.s32 1, %s11
  %s14 = scalar_select 0, %s13, %s11
  loop: start=0, step=1, limit=4
  $region2: #{network_forward.4} parent=0 // loop_pre_header
    _
  $region3: #{network_forward.4} parent=0 // loop_header
    %s16 = sphi 0, %s20
    %p17 = scmp.ge.s32.totalorder %s16, 4
    %s26 = sphi 0, %s28
    %s29 = sphi 0, %s26
    %s30 = sphi 0, %s29
    %s46 = sphi 0, %s30
    %s50 = sphi 0, %s50
    %s52 = sphi 0, %s50
    %s53 = sphi 0, %s52
    %s67 = sphi 0, %s53
    %s71 = sphi 0, %s71
    %s73 = sphi 0, %s71
    %s74 = sphi 0, %s73
    %s88 = sphi 0, %s74
    %s92 = sphi 0, %s92
    %s94 = sphi 0, %s92
    %s95 = sphi 0, %s94
    %s109 = sphi 0, %s95
    %s113 = sphi 0, %s113
    %s115 = sphi 0, %s113
    %s116 = sphi 0, %s115
    %s130 = sphi 0, %s116
    %s134 = sphi 0, %s134
    %s136 = sphi 0, %s134
    %s137 = sphi 0, %s136
    %s151 = sphi 0, %s137
    %s155 = sphi 0, %s155
    %s157 = sphi 0, %s155
    %s158 = sphi 0, %s157
    %s172 = sphi 0, %s158
    %s178 = sphi 0, %s180
    %s181 = sphi 0, %s178
    %s182 = sphi 0, %s181
    %s198 = sphi 0, %s182
    %s204 = sphi 0, %s206
    %s207 = sphi 0, %s204
    %s208 = sphi 0, %s207
    %s224 = sphi 0, %s208
    %s230 = sphi 0, %s232
    %s233 = sphi 0, %s230
    %s234 = sphi 0, %s233
    %s250 = sphi 0, %s234
  $region4: #{network_forward.4} parent=0 // loop_header_branch
    %19 = sbr.rel (%p17) target = $region8
  $region5: #{network_forward.4} parent=0 // loop_body
    %s21 = ssub.s32 %s16, 1
    %s22 = ssub.s32 %s16, 2
    %s23 = sadd.s32 %s16, 1
    %s24 = ssub.s32 %s16, %s23
    %p25 = scmp.eq.s32.totalorder %s24, 0
    %s27 = sadd.s32 %s26, 1
    %s28 = scalar_select %p25, %s26, %s27
    %p31 = pneg %p25
    %p32 = scmp.eq.s32.totalorder %s16, 1
    %p33 = por %p31, %p32
    %p34 = scmp.ne.s32.totalorder %s26, %s29
    %p35 = scmp.eq.s32.totalorder %s16, 0
    %p36 = por %p34, %p35
    %p37 = scmp.ne.s32.totalorder %s26, %s29
    %p38 = scmp.eq.s32.totalorder %s21, 1
    %p39 = por %p37, %p38
    %p40 = scmp.ne.s32.totalorder %s29, %s30
    %p41 = scmp.eq.s32.totalorder %s21, 0
    %p42 = por %p40, %p41
    %p43 = scmp.ne.s32.totalorder %s29, %s30
    %p44 = scmp.eq.s32.totalorder %s22, 1
    %p45 = por %p43, %p44
    %p47 = scmp.ne.s32.totalorder %s30, %s46
    %p48 = scmp.eq.s32.totalorder %s22, 0
    %p49 = por %p47, %p48
    %s51 = sadd.s32 %s50, 1
    %p54 = scmp.eq.s32.totalorder %s16, 1
    %p55 = scmp.ne.s32.totalorder %s50, %s52
    %p56 = scmp.eq.s32.totalorder %s16, 0
    %p57 = por %p55, %p56
    %p58 = scmp.ne.s32.totalorder %s50, %s52
    %p59 = scmp.eq.s32.totalorder %s21, 1
    %p60 = por %p58, %p59
    %p61 = scmp.ne.s32.totalorder %s52, %s53
    %p62 = scmp.eq.s32.totalorder %s21, 0
    %p63 = por %p61, %p62
    %p64 = scmp.ne.s32.totalorder %s52, %s53
    %p65 = scmp.eq.s32.totalorder %s22, 1
    %p66 = por %p64, %p65
    %p68 = scmp.ne.s32.totalorder %s53, %s67
    %p69 = scmp.eq.s32.totalorder %s22, 0
    %p70 = por %p68, %p69
    %s72 = sadd.s32 %s71, 1
    %p75 = scmp.eq.s32.totalorder %s16, 1
    %p76 = scmp.ne.s32.totalorder %s71, %s73
    %p77 = scmp.eq.s32.totalorder %s16, 0
    %p78 = por %p76, %p77
    %p79 = scmp.ne.s32.totalorder %s71, %s73
    %p80 = scmp.eq.s32.totalorder %s21, 1
    %p81 = por %p79, %p80
    %p82 = scmp.ne.s32.totalorder %s73, %s74
    %p83 = scmp.eq.s32.totalorder %s21, 0
    %p84 = por %p82, %p83
    %p85 = scmp.ne.s32.totalorder %s73, %s74
    %p86 = scmp.eq.s32.totalorder %s22, 1
    %p87 = por %p85, %p86
    %p89 = scmp.ne.s32.totalorder %s74, %s88
    %p90 = scmp.eq.s32.totalorder %s22, 0
    %p91 = por %p89, %p90
    %s93 = sadd.s32 %s92, 1
    %p96 = scmp.eq.s32.totalorder %s16, 1
    %p97 = scmp.ne.s32.totalorder %s92, %s94
    %p98 = scmp.eq.s32.totalorder %s16, 0
    %p99 = por %p97, %p98
    %p100 = scmp.ne.s32.totalorder %s92, %s94
    %p101 = scmp.eq.s32.totalorder %s21, 1
    %p102 = por %p100, %p101
    %p103 = scmp.ne.s32.totalorder %s94, %s95
    %p104 = scmp.eq.s32.totalorder %s21, 0
    %p105 = por %p103, %p104
    %p106 = scmp.ne.s32.totalorder %s94, %s95
    %p107 = scmp.eq.s32.totalorder %s22, 1
    %p108 = por %p106, %p107
    %p110 = scmp.ne.s32.totalorder %s95, %s109
    %p111 = scmp.eq.s32.totalorder %s22, 0
    %p112 = por %p110, %p111
    %s114 = sadd.s32 %s113, 1
    %p117 = scmp.eq.s32.totalorder %s16, 1
    %p118 = scmp.ne.s32.totalorder %s113, %s115
    %p119 = scmp.eq.s32.totalorder %s16, 0
    %p120 = por %p118, %p119
    %p121 = scmp.ne.s32.totalorder %s113, %s115
    %p122 = scmp.eq.s32.totalorder %s21, 1
    %p123 = por %p121, %p122
    %p124 = scmp.ne.s32.totalorder %s115, %s116
    %p125 = scmp.eq.s32.totalorder %s21, 0
    %p126 = por %p124, %p125
    %p127 = scmp.ne.s32.totalorder %s115, %s116
    %p128 = scmp.eq.s32.totalorder %s22, 1
    %p129 = por %p127, %p128
    %p131 = scmp.ne.s32.totalorder %s116, %s130
    %p132 = scmp.eq.s32.totalorder %s22, 0
    %p133 = por %p131, %p132
    %s135 = sadd.s32 %s134, 1
    %p138 = scmp.eq.s32.totalorder %s16, 1
    %p139 = scmp.ne.s32.totalorder %s134, %s136
    %p140 = scmp.eq.s32.totalorder %s16, 0
    %p141 = por %p139, %p140
    %p142 = scmp.ne.s32.totalorder %s134, %s136
    %p143 = scmp.eq.s32.totalorder %s21, 1
    %p144 = por %p142, %p143
    %p145 = scmp.ne.s32.totalorder %s136, %s137
    %p146 = scmp.eq.s32.totalorder %s21, 0
    %p147 = por %p145, %p146
    %p148 = scmp.ne.s32.totalorder %s136, %s137
    %p149 = scmp.eq.s32.totalorder %s22, 1
    %p150 = por %p148, %p149
    %p152 = scmp.ne.s32.totalorder %s137, %s151
    %p153 = scmp.eq.s32.totalorder %s22, 0
    %p154 = por %p152, %p153
    %s156 = sadd.s32 %s155, 1
    %p159 = scmp.eq.s32.totalorder %s16, 1
    %p160 = scmp.ne.s32.totalorder %s155, %s157
    %p161 = scmp.eq.s32.totalorder %s16, 0
    %p162 = por %p160, %p161
    %p163 = scmp.ne.s32.totalorder %s155, %s157
    %p164 = scmp.eq.s32.totalorder %s21, 1
    %p165 = por %p163, %p164
    %p166 = scmp.ne.s32.totalorder %s157, %s158
    %p167 = scmp.eq.s32.totalorder %s21, 0
    %p168 = por %p166, %p167
    %p169 = scmp.ne.s32.totalorder %s157, %s158
    %p170 = scmp.eq.s32.totalorder %s22, 1
    %p171 = por %p169, %p170
    %p173 = scmp.ne.s32.totalorder %s158, %s172
    %p174 = scmp.eq.s32.totalorder %s22, 0
    %p175 = por %p173, %p174
    %s176 = ssub.s32 %s16, %s23
    %p177 = scmp.eq.s32.totalorder %s176, 0
    %s179 = sadd.s32 %s178, 1
    %s180 = scalar_select %p177, %s178, %s179
    %p183 = pneg %p177
    %p184 = scmp.eq.s32.totalorder %s16, 1
    %p185 = por %p183, %p184
    %p186 = scmp.ne.s32.totalorder %s178, %s181
    %p187 = scmp.eq.s32.totalorder %s16, 0
    %p188 = por %p186, %p187
    %p189 = scmp.ne.s32.totalorder %s178, %s181
    %p190 = scmp.eq.s32.totalorder %s21, 1
    %p191 = por %p189, %p190
    %p192 = scmp.ne.s32.totalorder %s181, %s182
    %p193 = scmp.eq.s32.totalorder %s21, 0
    %p194 = por %p192, %p193
    %p195 = scmp.ne.s32.totalorder %s181, %s182
    %p196 = scmp.eq.s32.totalorder %s22, 1
    %p197 = por %p195, %p196
    %p199 = scmp.ne.s32.totalorder %s182, %s198
    %p200 = scmp.eq.s32.totalorder %s22, 0
    %p201 = por %p199, %p200
    %s202 = ssub.s32 %s16, %s23
    %p203 = scmp.eq.s32.totalorder %s202, 0
    %s205 = sadd.s32 %s204, 1
    %s206 = scalar_select %p203, %s204, %s205
    %p209 = pneg %p203
    %p210 = scmp.eq.s32.totalorder %s16, 1
    %p211 = por %p209, %p210
    %p212 = scmp.ne.s32.totalorder %s204, %s207
    %p213 = scmp.eq.s32.totalorder %s16, 0
    %p214 = por %p212, %p213
    %p215 = scmp.ne.s32.totalorder %s204, %s207
    %p216 = scmp.eq.s32.totalorder %s21, 1
    %p217 = por %p215, %p216
    %p218 = scmp.ne.s32.totalorder %s207, %s208
    %p219 = scmp.eq.s32.totalorder %s21, 0
    %p220 = por %p218, %p219
    %p221 = scmp.ne.s32.totalorder %s207, %s208
    %p222 = scmp.eq.s32.totalorder %s22, 1
    %p223 = por %p221, %p222
    %p225 = scmp.ne.s32.totalorder %s208, %s224
    %p226 = scmp.eq.s32.totalorder %s22, 0
    %p227 = por %p225, %p226
    %s228 = ssub.s32 %s16, %s23
    %p229 = scmp.eq.s32.totalorder %s228, 0
    %s231 = sadd.s32 %s230, 1
    %s232 = scalar_select %p229, %s230, %s231
    %p235 = pneg %p229
    %p236 = scmp.eq.s32.totalorder %s16, 1
    %p237 = por %p235, %p236
    %p238 = scmp.ne.s32.totalorder %s230, %s233
    %p239 = scmp.eq.s32.totalorder %s16, 0
    %p240 = por %p238, %p239
    %p241 = scmp.ne.s32.totalorder %s230, %s233
    %p242 = scmp.eq.s32.totalorder %s21, 1
    %p243 = por %p241, %p242
    %p244 = scmp.ne.s32.totalorder %s233, %s234
    %p245 = scmp.eq.s32.totalorder %s21, 0
    %p246 = por %p244, %p245
    %p247 = scmp.ne.s32.totalorder %s233, %s234
    %p248 = scmp.eq.s32.totalorder %s22, 1
    %p249 = por %p247, %p248
    %p251 = scmp.ne.s32.totalorder %s234, %s250
    %p252 = scmp.eq.s32.totalorder %s22, 0
    %p253 = por %p251, %p252
    %p254 = scmp.le.s32.totalorder 1, %s16
    %p255 = scmp.lt.s32.totalorder %s16, 3
    %p256 = pnand %p254, %p255
    %p257 = pneg %p256
    // Predicated region
    $region9: #{network_forward.4} parent=5 // pred_check
      _
    $region10: #{network_forward.4} parent=5 // pred_check_branch
      %259 = sbr.rel (%p256) target = $region12
    $region11: #{network_forward.4} parent=5 // pred_region
      %s260 = ssub.s32 %s16, 1
      // Predicated region
      $region13: #{network_forward.4} parent=11 // pred_check
        %p261 = pneg %p63
      $region14: #{network_forward.4} parent=11 // pred_check_branch
        %263 = sbr.rel (%p261) target = $region16
      $region15: #{network_forward.4} parent=11 // pred_region
        _
      $region16: #{network_forward.4} parent=11 // pred_fallthru
        _
      // Predicated region
      $region17: #{network_forward.4} parent=11 // pred_check
        %p264 = pneg %p84
      $region18: #{network_forward.4} parent=11 // pred_check_branch
        %266 = sbr.rel (%p264) target = $region20
      $region19: #{network_forward.4} parent=11 // pred_region
        _
      $region20: #{network_forward.4} parent=11 // pred_fallthru
        _
      // Predicated region
      $region21: #{network_forward.4} parent=11 // pred_check
        %p267 = pneg %p105
      $region22: #{network_forward.4} parent=11 // pred_check_branch
        %269 = sbr.rel (%p267) target = $region24
      $region23: #{network_forward.4} parent=11 // pred_region
        _
      $region24: #{network_forward.4} parent=11 // pred_fallthru
        _
      // Predicated region
      $region25: #{network_forward.4} parent=11 // pred_check
        %p270 = pneg %p126
      $region26: #{network_forward.4} parent=11 // pred_check_branch
        %272 = sbr.rel (%p270) target = $region28
      $region27: #{network_forward.4} parent=11 // pred_region
        _
      $region28: #{network_forward.4} parent=11 // pred_fallthru
        _
      // Predicated region
      $region29: #{network_forward.4} parent=11 // pred_check
        %p273 = pneg %p147
      $region30: #{network_forward.4} parent=11 // pred_check_branch
        %275 = sbr.rel (%p273) target = $region32
      $region31: #{network_forward.4} parent=11 // pred_region
        _
      $region32: #{network_forward.4} parent=11 // pred_fallthru
        _
      // Predicated region
      $region33: #{network_forward.4} parent=11 // pred_check
        %p276 = pneg %p168
      $region34: #{network_forward.4} parent=11 // pred_check_branch
        %278 = sbr.rel (%p276) target = $region36
      $region35: #{network_forward.4} parent=11 // pred_region
        _
      $region36: #{network_forward.4} parent=11 // pred_fallthru
        _
    $region12: #{network_forward.4} parent=5 // pred_fallthru
      _
    %p279 = scmp.lt.s32.totalorder %s16, 2
    // Predicated region
    $region37: #{network_forward.4} parent=5 // pred_check
      %p280 = pneg %p279
    $region38: #{network_forward.4} parent=5 // pred_check_branch
      %282 = sbr.rel (%p280) target = $region40
    $region39: #{network_forward.4} parent=5 // pred_region
      // Predicated region
      $region41: #{network_forward.4} parent=39 // pred_check
        %p283 = pneg %p36
      $region42: #{network_forward.4} parent=39 // pred_check_branch
        %285 = sbr.rel (%p283) target = $region44
      $region43: #{network_forward.4} parent=39 // pred_region
        %s286 = smul.u32 8, %s16
        %p287 = scmp.lt.s32.totalorder %s286, 15
        %s288 = scalar_select %p287, %s286, 15
        %s289 = smul.addr %s288, 7
        %s290 = smul.addr %s289, 8
        %s291 = scalar_lea.vmem %s0, %s290
        %s292 = smul.u32 8, %s16
      $region44: #{network_forward.4} parent=39 // pred_fallthru
        _
    $region40: #{network_forward.4} parent=5 // pred_fallthru
      _
    %p293 = scmp.le.s32.totalorder 1, %s16
    %p294 = scmp.lt.s32.totalorder %s16, 3
    %p295 = pnand %p293, %p294
    %p296 = pneg %p295
    // Predicated region
    $region45: #{network_forward.4} parent=5 // pred_check
      _
    $region46: #{network_forward.4} parent=5 // pred_check_branch
      %298 = sbr.rel (%p295) target = $region48
    $region47: #{network_forward.4} parent=5 // pred_region
      %s299 = ssub.s32 %s16, 1
      %s300 = smul.u32 8, %s21
      %p301 = scmp.lt.s32.totalorder %s300, 15
      %s302 = scalar_select %p301, %s300, 15
      %s303 = smul.addr %s302, 7
      %s304 = smul.addr %s303, 8
      %s305 = scalar_lea.vmem %s0, %s304
      %p306 = pneg %p42
      %p307 = pneg %p39
      %p308 = pneg %p63
      %p309 = pneg %p60
      %p310 = pneg %p84
      %p311 = pneg %p81
      %p312 = pneg %p105
      %p313 = pneg %p102
      %p314 = pneg %p126
      %p315 = pneg %p123
      %p316 = pneg %p147
      %p317 = pneg %p144
      %p318 = pneg %p168
      %p319 = pneg %p165
      %p320 = pneg %p194
      %p321 = pneg %p191
      %s322 = smul.u32 8, %s21
      %p323 = scmp.lt.s32.totalorder %s322, 15
      %s324 = scalar_select %p323, %s322, 15
      %s325 = smul.addr %s324, 8
      %s326 = scalar_lea.vmem %s7, %s325
      %p327 = pneg %p220
      %p328 = pneg %p217
      %p329 = scmp.lt.s32.totalorder %s21, 1
      %s330 = scalar_select %p329, %s21, 1
      %s331 = scalar_lea.vmem %s8, %s330
      %p332 = pneg %p246
      %p333 = pneg %p243
      %p334 = scmp.lt.s32.totalorder %s21, 1
      %s335 = scalar_select %p334, %s21, 1
      %s336 = scalar_lea.vmem %s9, %s335
      %s337 = smul.u32 8, %s21
      %p338 = scmp.lt.s32.totalorder %s337, 15
      %s339 = scalar_select %p338, %s337, 15
      %s340 = smul.addr %s339, 7
      %s341 = smul.addr %s340, 8
      %s342 = scalar_lea.vmem %s0, %s341
      %s343 = smul.u32 8, %s21
      %s344 = smul.u32 8, %s21
      %p345 = scmp.lt.s32.totalorder %s344, 15
      %s346 = scalar_select %p345, %s344, 15
      %s347 = smul.addr %s346, 8
      %s348 = scalar_lea.vmem %s7, %s347
      %s349 = smul.u32 8, %s21
      %p350 = scmp.lt.s32.totalorder %s21, 1
      %s351 = scalar_select %p350, %s21, 1
      %s352 = scalar_lea.vmem %s8, %s351
      %p353 = scmp.lt.s32.totalorder %s21, 1
      %s354 = scalar_select %p353, %s21, 1
      %s355 = scalar_lea.vmem %s9, %s354
      %v356 = vld [vmem:[%s342] sm:$0xff]
      %v357 = vld [vmem:[%s342 + $0x8] sm:$0xff]
      %v358 = vld [vmem:[%s342 + $0x10] sm:$0xff]
      %v359 = vld [vmem:[%s342 + $0x18] sm:$0xff]
      %v360 = vld [vmem:[%s342 + $0x20] sm:$0xff]
      %v361 = vld [vmem:[%s342 + $0x28] sm:$0xff]
      %v362 = vld [vmem:[%s342 + $0x30] sm:$0xff]
      %v363 = vld [vmem:[%s342 + $0x38] sm:$0xff]
      %v364 = vld [vmem:[%s342 + $0x40] sm:$0xff]
      %v365 = vld [vmem:[%s342 + $0x48] sm:$0xff]
      %v366 = vld [vmem:[%s342 + $0x50] sm:$0xff]
      %v367 = vld [vmem:[%s342 + $0x58] sm:$0xff]
      %v368 = vld [vmem:[%s342 + $0x60] sm:$0xff]
      %v369 = vld [vmem:[%s342 + $0x68] sm:$0xff]
      %v370 = vld [vmem:[%s342 + $0x70] sm:$0xff]
      %v371 = vld [vmem:[%s342 + $0x78] sm:$0xff]
      %v372 = vld [vmem:[%s342 + $0x80] sm:$0xff]
      %v373 = vld [vmem:[%s342 + $0x88] sm:$0xff]
      %v374 = vld [vmem:[%s342 + $0x90] sm:$0xff]
      %v375 = vld [vmem:[%s342 + $0x98] sm:$0xff]
      %v376 = vld [vmem:[%s342 + $0xa0] sm:$0xff]
      %v377 = vld [vmem:[%s342 + $0xa8] sm:$0xff]
      %v378 = vld [vmem:[%s342 + $0xb0] sm:$0xff]
      %v379 = vld [vmem:[%s342 + $0xb8] sm:$0xff]
      %v380 = vld [vmem:[%s342 + $0xc0] sm:$0xff]
      %v381 = vld [vmem:[%s342 + $0xc8] sm:$0xff]
      %v382 = vld [vmem:[%s342 + $0xd0] sm:$0xff]
      %v383 = vld [vmem:[%s342 + $0xd8] sm:$0xff]
      %v384 = vld [vmem:[%s342 + $0xe0] sm:$0xff]
      %v385 = vld [vmem:[%s342 + $0xe8] sm:$0xff]
      %v386 = vld [vmem:[%s342 + $0xf0] sm:$0xff]
      %v387 = vld [vmem:[%s342 + $0xf8] sm:$0xff]
      %v388 = vld [vmem:[%s342 + $0x100] sm:$0xff]
      %v389 = vld [vmem:[%s342 + $0x108] sm:$0xff]
      %v390 = vld [vmem:[%s342 + $0x110] sm:$0xff]
      %v391 = vld [vmem:[%s342 + $0x118] sm:$0xff]
      %v392 = vld [vmem:[%s342 + $0x120] sm:$0xff]
      %v393 = vld [vmem:[%s342 + $0x128] sm:$0xff]
      %v394 = vld [vmem:[%s342 + $0x130] sm:$0xff]
      %v395 = vld [vmem:[%s342 + $0x138] sm:$0xff]
      %v396 = vld [vmem:[%s342 + $0x140] sm:$0xff]
      %v397 = vld [vmem:[%s342 + $0x148] sm:$0xff]
      %v398 = vld [vmem:[%s342 + $0x150] sm:$0xff]
      %v399 = vld [vmem:[%s342 + $0x158] sm:$0xff]
      %v400 = vld [vmem:[%s342 + $0x160] sm:$0xff]
      %v401 = vld [vmem:[%s342 + $0x168] sm:$0xff]
      %v402 = vld [vmem:[%s342 + $0x170] sm:$0xff]
      %v403 = vld [vmem:[%s342 + $0x178] sm:$0xff]
      %v404 = vld [vmem:[%s342 + $0x180] sm:$0xff]
      %v405 = vld [vmem:[%s342 + $0x188] sm:$0xff]
      %v406 = vld [vmem:[%s342 + $0x190] sm:$0xff]
      %v407 = vld [vmem:[%s342 + $0x198] sm:$0xff]
      %v408 = vld [vmem:[%s342 + $0x1a0] sm:$0xff]
      %v409 = vld [vmem:[%s342 + $0x1a8] sm:$0xff]
      %v410 = vld [vmem:[%s342 + $0x1b0] sm:$0xff]
      %v411 = vld [vmem:[%s342 + $0x1b8] sm:$0xff]
      %v412 = vld [vmem:[%s1] ss:$2 sm:$0x7f]
      %v414 = vlaneseq
      %v415 = vshrl.u32 %v414, 7
      %v416 = vsub.s32 0, %v415
      %v417 = vrot.slane %v412, %v416
      %v418 = vlaneseq
      %v419 = vshrl.u32 %v418, 7
      %v420 = vsub.s32 1, %v419
      %v421 = vrot.slane %v412, %v420
      %v422 = vlaneseq
      %v423 = vshrl.u32 %v422, 7
      %v424 = vsub.s32 2, %v423
      %v425 = vrot.slane %v412, %v424
      %v426 = vlaneseq
      %v427 = vshrl.u32 %v426, 7
      %v428 = vsub.s32 3, %v427
      %v429 = vrot.slane %v412, %v428
      %v430 = vlaneseq
      %v431 = vshrl.u32 %v430, 7
      %v432 = vsub.s32 4, %v431
      %v433 = vrot.slane %v412, %v432
      %v434 = vlaneseq
      %v435 = vshrl.u32 %v434, 7
      %v436 = vsub.s32 5, %v435
      %v437 = vrot.slane %v412, %v436
      %v438 = vlaneseq
      %v439 = vshrl.u32 %v438, 7
      %v440 = vsub.s32 6, %v439
      %v441 = vrot.slane %v412, %v440
      %v449 = vmul.f32 %v356, %v417
      %v450 = vmul.f32 %v357, %v421
      %v451 = vmul.f32 %v358, %v425
      %v452 = vmul.f32 %v359, %v429
      %v453 = vmul.f32 %v360, %v433
      %v454 = vmul.f32 %v361, %v437
      %v455 = vmul.f32 %v362, %v441
      %v456 = vmul.f32 %v363, %v417
      %v457 = vmul.f32 %v364, %v421
      %v458 = vmul.f32 %v365, %v425
      %v459 = vmul.f32 %v366, %v429
      %v460 = vmul.f32 %v367, %v433
      %v461 = vmul.f32 %v368, %v437
      %v462 = vmul.f32 %v369, %v441
      %v463 = vmul.f32 %v370, %v417
      %v464 = vmul.f32 %v371, %v421
      %v465 = vmul.f32 %v372, %v425
      %v466 = vmul.f32 %v373, %v429
      %v467 = vmul.f32 %v374, %v433
      %v468 = vmul.f32 %v375, %v437
      %v469 = vmul.f32 %v376, %v441
      %v470 = vmul.f32 %v377, %v417
      %v471 = vmul.f32 %v378, %v421
      %v472 = vmul.f32 %v379, %v425
      %v473 = vmul.f32 %v380, %v429
      %v474 = vmul.f32 %v381, %v433
      %v475 = vmul.f32 %v382, %v437
      %v476 = vmul.f32 %v383, %v441
      %v477 = vmul.f32 %v384, %v417
      %v478 = vmul.f32 %v385, %v421
      %v479 = vmul.f32 %v386, %v425
      %v480 = vmul.f32 %v387, %v429
      %v481 = vmul.f32 %v388, %v433
      %v482 = vmul.f32 %v389, %v437
      %v483 = vmul.f32 %v390, %v441
      %v484 = vmul.f32 %v391, %v417
      %v485 = vmul.f32 %v392, %v421
      %v486 = vmul.f32 %v393, %v425
      %v487 = vmul.f32 %v394, %v429
      %v488 = vmul.f32 %v395, %v433
      %v489 = vmul.f32 %v396, %v437
      %v490 = vmul.f32 %v397, %v441
      %v491 = vmul.f32 %v398, %v417
      %v492 = vmul.f32 %v399, %v421
      %v493 = vmul.f32 %v400, %v425
      %v494 = vmul.f32 %v401, %v429
      %v495 = vmul.f32 %v402, %v433
      %v496 = vmul.f32 %v403, %v437
      %v497 = vmul.f32 %v404, %v441
      %v498 = vmul.f32 %v405, %v417
      %v499 = vmul.f32 %v406, %v421
      %v500 = vmul.f32 %v407, %v425
      %v501 = vmul.f32 %v408, %v429
      %v502 = vmul.f32 %v409, %v433
      %v503 = vmul.f32 %v410, %v437
      %v504 = vmul.f32 %v411, %v441
      %s505 = scalar_lea.vmem %s1, 1
      %v506 = vld [vmem:[%s505] ss:$2 sm:$0x7f]
      %v508 = vlaneseq
      %v509 = vshrl.u32 %v508, 7
      %v510 = vsub.s32 0, %v509
      %v511 = vrot.slane %v506, %v510
      %v512 = vlaneseq
      %v513 = vshrl.u32 %v512, 7
      %v514 = vsub.s32 1, %v513
      %v515 = vrot.slane %v506, %v514
      %v516 = vlaneseq
      %v517 = vshrl.u32 %v516, 7
      %v518 = vsub.s32 2, %v517
      %v519 = vrot.slane %v506, %v518
      %v520 = vlaneseq
      %v521 = vshrl.u32 %v520, 7
      %v522 = vsub.s32 3, %v521
      %v523 = vrot.slane %v506, %v522
      %v524 = vlaneseq
      %v525 = vshrl.u32 %v524, 7
      %v526 = vsub.s32 4, %v525
      %v527 = vrot.slane %v506, %v526
      %v528 = vlaneseq
      %v529 = vshrl.u32 %v528, 7
      %v530 = vsub.s32 5, %v529
      %v531 = vrot.slane %v506, %v530
      %v532 = vlaneseq
      %v533 = vshrl.u32 %v532, 7
      %v534 = vsub.s32 6, %v533
      %v535 = vrot.slane %v506, %v534
      %v543 = vadd.f32 %v449, %v511
      %v544 = vadd.f32 %v450, %v515
      %v545 = vadd.f32 %v451, %v519
      %v546 = vadd.f32 %v452, %v523
      %v547 = vadd.f32 %v453, %v527
      %v548 = vadd.f32 %v454, %v531
      %v549 = vadd.f32 %v455, %v535
      %v550 = vadd.f32 %v456, %v511
      %v551 = vadd.f32 %v457, %v515
      %v552 = vadd.f32 %v458, %v519
      %v553 = vadd.f32 %v459, %v523
      %v554 = vadd.f32 %v460, %v527
      %v555 = vadd.f32 %v461, %v531
      %v556 = vadd.f32 %v462, %v535
      %v557 = vadd.f32 %v463, %v511
      %v558 = vadd.f32 %v464, %v515
      %v559 = vadd.f32 %v465, %v519
      %v560 = vadd.f32 %v466, %v523
      %v561 = vadd.f32 %v467, %v527
      %v562 = vadd.f32 %v468, %v531
      %v563 = vadd.f32 %v469, %v535
      %v564 = vadd.f32 %v470, %v511
      %v565 = vadd.f32 %v471, %v515
      %v566 = vadd.f32 %v472, %v519
      %v567 = vadd.f32 %v473, %v523
      %v568 = vadd.f32 %v474, %v527
      %v569 = vadd.f32 %v475, %v531
      %v570 = vadd.f32 %v476, %v535
      %v571 = vadd.f32 %v477, %v511
      %v572 = vadd.f32 %v478, %v515
      %v573 = vadd.f32 %v479, %v519
      %v574 = vadd.f32 %v480, %v523
      %v575 = vadd.f32 %v481, %v527
      %v576 = vadd.f32 %v482, %v531
      %v577 = vadd.f32 %v483, %v535
      %v578 = vadd.f32 %v484, %v511
      %v579 = vadd.f32 %v485, %v515
      %v580 = vadd.f32 %v486, %v519
      %v581 = vadd.f32 %v487, %v523
      %v582 = vadd.f32 %v488, %v527
      %v583 = vadd.f32 %v489, %v531
      %v584 = vadd.f32 %v490, %v535
      %v585 = vadd.f32 %v491, %v511
      %v586 = vadd.f32 %v492, %v515
      %v587 = vadd.f32 %v493, %v519
      %v588 = vadd.f32 %v494, %v523
      %v589 = vadd.f32 %v495, %v527
      %v590 = vadd.f32 %v496, %v531
      %v591 = vadd.f32 %v497, %v535
      %v592 = vadd.f32 %v498, %v511
      %v593 = vadd.f32 %v499, %v515
      %v594 = vadd.f32 %v500, %v519
      %v595 = vadd.f32 %v501, %v523
      %v596 = vadd.f32 %v502, %v527
      %v597 = vadd.f32 %v503, %v531
      %v598 = vadd.f32 %v504, %v535
      %v599 = vld [vmem:[%s2] sm:$0xff]
      %v600 = vld [vmem:[%s2 + $0x8] sm:$0xff]
      %v601 = vld [vmem:[%s2 + $0x10] sm:$0xff]
      %v602 = vld [vmem:[%s2 + $0x18] sm:$0xff]
      %v603 = vld [vmem:[%s2 + $0x20] sm:$0xff]
      %v604 = vld [vmem:[%s2 + $0x28] sm:$0xff]
      %v605 = vld [vmem:[%s2 + $0x30] sm:$0xff]
      %v606 = vld [vmem:[%s2 + $0x38] sm:$0xff]
      %v607 = vld [vmem:[%s2 + $0x40] sm:$0xff]
      %v608 = vld [vmem:[%s2 + $0x48] sm:$0xff]
      %v609 = vld [vmem:[%s2 + $0x50] sm:$0xff]
      %v610 = vld [vmem:[%s2 + $0x58] sm:$0xff]
      %v611 = vld [vmem:[%s2 + $0x60] sm:$0xff]
      %v612 = vld [vmem:[%s2 + $0x68] sm:$0xff]
      %v613 = vld [vmem:[%s2 + $0x70] sm:$0xff]
      %v614 = vld [vmem:[%s2 + $0x78] sm:$0xff]
      %v615 = vld [vmem:[%s2 + $0x80] sm:$0xff]
      %v616 = vld [vmem:[%s2 + $0x88] sm:$0xff]
      %v617 = vld [vmem:[%s2 + $0x90] sm:$0xff]
      %v618 = vld [vmem:[%s2 + $0x98] sm:$0xff]
      %v619 = vld [vmem:[%s2 + $0xa0] sm:$0xff]
      %v620 = vld [vmem:[%s2 + $0xa8] sm:$0xff]
      %v621 = vld [vmem:[%s2 + $0xb0] sm:$0xff]
      %v622 = vld [vmem:[%s2 + $0xb8] sm:$0xff]
      %v623 = vld [vmem:[%s2 + $0xc0] sm:$0xff]
      %v624 = vld [vmem:[%s2 + $0xc8] sm:$0xff]
      %v625 = vld [vmem:[%s2 + $0xd0] sm:$0xff]
      %v626 = vld [vmem:[%s2 + $0xd8] sm:$0xff]
      %v627 = vld [vmem:[%s2 + $0xe0] sm:$0xff]
      %v628 = vld [vmem:[%s2 + $0xe8] sm:$0xff]
      %v629 = vld [vmem:[%s2 + $0xf0] sm:$0xff]
      %v630 = vld [vmem:[%s2 + $0xf8] sm:$0xff]
      %v631 = vld [vmem:[%s2 + $0x100] sm:$0xff]
      %v632 = vld [vmem:[%s2 + $0x108] sm:$0xff]
      %v633 = vld [vmem:[%s2 + $0x110] sm:$0xff]
      %v634 = vld [vmem:[%s2 + $0x118] sm:$0xff]
      %v635 = vld [vmem:[%s2 + $0x120] sm:$0xff]
      %v636 = vld [vmem:[%s2 + $0x128] sm:$0xff]
      %v637 = vld [vmem:[%s2 + $0x130] sm:$0xff]
      %v638 = vld [vmem:[%s2 + $0x138] sm:$0xff]
      %v639 = vld [vmem:[%s2 + $0x140] sm:$0xff]
      %v640 = vld [vmem:[%s2 + $0x148] sm:$0xff]
      %v641 = vld [vmem:[%s2 + $0x150] sm:$0xff]
      %v642 = vld [vmem:[%s2 + $0x158] sm:$0xff]
      %v643 = vld [vmem:[%s2 + $0x160] sm:$0xff]
      %v644 = vld [vmem:[%s2 + $0x168] sm:$0xff]
      %v645 = vld [vmem:[%s2 + $0x170] sm:$0xff]
      %v646 = vld [vmem:[%s2 + $0x178] sm:$0xff]
      %v647 = vld [vmem:[%s2 + $0x180] sm:$0xff]
      %v648 = vld [vmem:[%s2 + $0x188] sm:$0xff]
      %v649 = vld [vmem:[%s2 + $0x190] sm:$0xff]
      %v650 = vld [vmem:[%s2 + $0x198] sm:$0xff]
      %v651 = vld [vmem:[%s2 + $0x1a0] sm:$0xff]
      %v652 = vld [vmem:[%s2 + $0x1a8] sm:$0xff]
      %v653 = vld [vmem:[%s2 + $0x1b0] sm:$0xff]
      %v654 = vld [vmem:[%s2 + $0x1b8] sm:$0xff]
      %v655 = vld [vmem:[%s2 + $0x1c0] sm:$0xff]
      %v656 = vld [vmem:[%s2 + $0x1c8] sm:$0xff]
      %v657 = vld [vmem:[%s2 + $0x1d0] sm:$0xff]
      %v658 = vld [vmem:[%s2 + $0x1d8] sm:$0xff]
      %v659 = vld [vmem:[%s2 + $0x1e0] sm:$0xff]
      %v660 = vld [vmem:[%s2 + $0x1e8] sm:$0xff]
      %v661 = vld [vmem:[%s2 + $0x1f0] sm:$0xff]
      %v662 = vld [vmem:[%s2 + $0x1f8] sm:$0xff]
      %v663 = vld [vmem:[%s2 + $0x200] sm:$0xff]
      %v664 = vld [vmem:[%s2 + $0x208] sm:$0xff]
      %v665 = vld [vmem:[%s2 + $0x210] sm:$0xff]
      %v666 = vld [vmem:[%s2 + $0x218] sm:$0xff]
      %v667 = vld [vmem:[%s2 + $0x220] sm:$0xff]
      %v668 = vld [vmem:[%s2 + $0x228] sm:$0xff]
      %v669 = vld [vmem:[%s2 + $0x230] sm:$0xff]
      %v670 = vld [vmem:[%s2 + $0x238] sm:$0xff]
      %v671 = vld [vmem:[%s2 + $0x240] sm:$0xff]
      %v672 = vld [vmem:[%s2 + $0x248] sm:$0xff]
      %v673 = vld [vmem:[%s2 + $0x250] sm:$0xff]
      %v674 = vld [vmem:[%s2 + $0x258] sm:$0xff]
      %v675 = vld [vmem:[%s2 + $0x260] sm:$0xff]
      %v676 = vld [vmem:[%s2 + $0x268] sm:$0xff]
      %v677 = vld [vmem:[%s2 + $0x270] sm:$0xff]
      %v678 = vld [vmem:[%s2 + $0x278] sm:$0xff]
      %v679 = vld [vmem:[%s2 + $0x280] sm:$0xff]
      %v680 = vld [vmem:[%s2 + $0x288] sm:$0xff]
      %v681 = vld [vmem:[%s2 + $0x290] sm:$0xff]
      %v682 = vld [vmem:[%s2 + $0x298] sm:$0xff]
      %v683 = vld [vmem:[%s2 + $0x2a0] sm:$0xff]
      %v684 = vld [vmem:[%s2 + $0x2a8] sm:$0xff]
      %v685 = vld [vmem:[%s2 + $0x2b0] sm:$0xff]
      %v686 = vld [vmem:[%s2 + $0x2b8] sm:$0xff]
      %v687 = vld [vmem:[%s2 + $0x2c0] sm:$0xff]
      %v688 = vld [vmem:[%s2 + $0x2c8] sm:$0xff]
      %v689 = vld [vmem:[%s2 + $0x2d0] sm:$0xff]
      %v690 = vld [vmem:[%s2 + $0x2d8] sm:$0xff]
      %v691 = vld [vmem:[%s2 + $0x2e0] sm:$0xff]
      %v692 = vld [vmem:[%s2 + $0x2e8] sm:$0xff]
      %v693 = vld [vmem:[%s2 + $0x2f0] sm:$0xff]
      %v694 = vld [vmem:[%s2 + $0x2f8] sm:$0xff]
      %v695 = vld [vmem:[%s2 + $0x300] sm:$0xff]
      %v696 = vld [vmem:[%s2 + $0x308] sm:$0xff]
      %v697 = vld [vmem:[%s2 + $0x310] sm:$0xff]
      %v698 = vld [vmem:[%s2 + $0x318] sm:$0xff]
      %v699 = vld [vmem:[%s2 + $0x320] sm:$0xff]
      %v700 = vld [vmem:[%s2 + $0x328] sm:$0xff]
      %v701 = vld [vmem:[%s2 + $0x330] sm:$0xff]
      %v702 = vld [vmem:[%s2 + $0x338] sm:$0xff]
      %v703 = vld [vmem:[%s2 + $0x340] sm:$0xff]
      %v704 = vld [vmem:[%s2 + $0x348] sm:$0xff]
      %v705 = vld [vmem:[%s2 + $0x350] sm:$0xff]
      %v706 = vld [vmem:[%s2 + $0x358] sm:$0xff]
      %v707 = vld [vmem:[%s2 + $0x360] sm:$0xff]
      %v708 = vld [vmem:[%s2 + $0x368] sm:$0xff]
      %v709 = vld [vmem:[%s2 + $0x370] sm:$0xff]
      %v710 = vld [vmem:[%s2 + $0x378] sm:$0xff]
      %v711 = vld [vmem:[%s2 + $0x380] sm:$0xff]
      %v712 = vld [vmem:[%s2 + $0x388] sm:$0xff]
      %v713 = vld [vmem:[%s2 + $0x390] sm:$0xff]
      %v714 = vld [vmem:[%s2 + $0x398] sm:$0xff]
      %v715 = vld [vmem:[%s2 + $0x3a0] sm:$0xff]
      %v716 = vld [vmem:[%s2 + $0x3a8] sm:$0xff]
      %v717 = vld [vmem:[%s2 + $0x3b0] sm:$0xff]
      %v718 = vld [vmem:[%s2 + $0x3b8] sm:$0xff]
      %v719 = vld [vmem:[%s2 + $0x3c0] sm:$0xff]
      %v720 = vld [vmem:[%s2 + $0x3c8] sm:$0xff]
      %v721 = vld [vmem:[%s2 + $0x3d0] sm:$0xff]
      %v722 = vld [vmem:[%s2 + $0x3d8] sm:$0xff]
      %v723 = vld [vmem:[%s2 + $0x3e0] sm:$0xff]
      %v724 = vld [vmem:[%s2 + $0x3e8] sm:$0xff]
      %v725 = vld [vmem:[%s2 + $0x3f0] sm:$0xff]
      %v726 = vld [vmem:[%s2 + $0x3f8] sm:$0xff]
      %v727 = vld [vmem:[%s2 + $0x400] sm:$0xff]
      %v728 = vld [vmem:[%s2 + $0x408] sm:$0xff]
      %v729 = vld [vmem:[%s2 + $0x410] sm:$0xff]
      %v730 = vld [vmem:[%s2 + $0x418] sm:$0xff]
      %v731 = vld [vmem:[%s2 + $0x420] sm:$0xff]
      %v732 = vld [vmem:[%s2 + $0x428] sm:$0xff]
      %v733 = vld [vmem:[%s2 + $0x430] sm:$0xff]
      %v734 = vld [vmem:[%s2 + $0x438] sm:$0xff]
      %v735 = vld [vmem:[%s2 + $0x440] sm:$0xff]
      %v736 = vld [vmem:[%s2 + $0x448] sm:$0xff]
      %v737 = vld [vmem:[%s2 + $0x450] sm:$0xff]
      %v738 = vld [vmem:[%s2 + $0x458] sm:$0xff]
      %v739 = vld [vmem:[%s2 + $0x460] sm:$0xff]
      %v740 = vld [vmem:[%s2 + $0x468] sm:$0xff]
      %v741 = vld [vmem:[%s2 + $0x470] sm:$0xff]
      %v742 = vld [vmem:[%s2 + $0x478] sm:$0xff]
      %v743 = vld [vmem:[%s2 + $0x480] sm:$0xff]
      %v744 = vld [vmem:[%s2 + $0x488] sm:$0xff]
      %v745 = vld [vmem:[%s2 + $0x490] sm:$0xff]
      %v746 = vld [vmem:[%s2 + $0x498] sm:$0xff]
      %v747 = vld [vmem:[%s2 + $0x4a0] sm:$0xff]
      %v748 = vld [vmem:[%s2 + $0x4a8] sm:$0xff]
      %v749 = vld [vmem:[%s2 + $0x4b0] sm:$0xff]
      %v750 = vld [vmem:[%s2 + $0x4b8] sm:$0xff]
      %v751 = vld [vmem:[%s2 + $0x4c0] sm:$0xff]
      %v752 = vld [vmem:[%s2 + $0x4c8] sm:$0xff]
      %v753 = vld [vmem:[%s2 + $0x4d0] sm:$0xff]
      %v754 = vld [vmem:[%s2 + $0x4d8] sm:$0xff]
      %v755 = vld [vmem:[%s2 + $0x4e0] sm:$0xff]
      %v756 = vld [vmem:[%s2 + $0x4e8] sm:$0xff]
      %v757 = vld [vmem:[%s2 + $0x4f0] sm:$0xff]
      %v758 = vld [vmem:[%s2 + $0x4f8] sm:$0xff]
      %v759 = vld [vmem:[%s2 + $0x500] sm:$0xff]
      %v760 = vld [vmem:[%s2 + $0x508] sm:$0xff]
      %v761 = vld [vmem:[%s2 + $0x510] sm:$0xff]
      %v762 = vld [vmem:[%s2 + $0x518] sm:$0xff]
      %v763 = vld [vmem:[%s2 + $0x520] sm:$0xff]
      %v764 = vld [vmem:[%s2 + $0x528] sm:$0xff]
      %v765 = vld [vmem:[%s2 + $0x530] sm:$0xff]
      %v766 = vld [vmem:[%s2 + $0x538] sm:$0xff]
      %v767 = vld [vmem:[%s2 + $0x540] sm:$0xff]
      %v768 = vld [vmem:[%s2 + $0x548] sm:$0xff]
      %v769 = vld [vmem:[%s2 + $0x550] sm:$0xff]
      %v770 = vld [vmem:[%s2 + $0x558] sm:$0xff]
      %v771 = vld [vmem:[%s2 + $0x560] sm:$0xff]
      %v772 = vld [vmem:[%s2 + $0x568] sm:$0xff]
      %v773 = vld [vmem:[%s2 + $0x570] sm:$0xff]
      %v774 = vld [vmem:[%s2 + $0x578] sm:$0xff]
      %v775 = vld [vmem:[%s2 + $0x580] sm:$0xff]
      %v776 = vld [vmem:[%s2 + $0x588] sm:$0xff]
      %v777 = vld [vmem:[%s2 + $0x590] sm:$0xff]
      %v778 = vld [vmem:[%s2 + $0x598] sm:$0xff]
      %v779 = vld [vmem:[%s2 + $0x5a0] sm:$0xff]
      %v780 = vld [vmem:[%s2 + $0x5a8] sm:$0xff]
      %v781 = vld [vmem:[%s2 + $0x5b0] sm:$0xff]
      %v782 = vld [vmem:[%s2 + $0x5b8] sm:$0xff]
      %v783 = vld [vmem:[%s2 + $0x5c0] sm:$0xff]
      %v784 = vld [vmem:[%s2 + $0x5c8] sm:$0xff]
      %v785 = vld [vmem:[%s2 + $0x5d0] sm:$0xff]
      %v786 = vld [vmem:[%s2 + $0x5d8] sm:$0xff]
      %v787 = vld [vmem:[%s2 + $0x5e0] sm:$0xff]
      %v788 = vld [vmem:[%s2 + $0x5e8] sm:$0xff]
      %v789 = vld [vmem:[%s2 + $0x5f0] sm:$0xff]
      %v790 = vld [vmem:[%s2 + $0x5f8] sm:$0xff]
      %v791 = vld [vmem:[%s2 + $0x600] sm:$0xff]
      %v792 = vld [vmem:[%s2 + $0x608] sm:$0xff]
      %v793 = vld [vmem:[%s2 + $0x610] sm:$0xff]
      %v794 = vld [vmem:[%s2 + $0x618] sm:$0xff]
      %v795 = vld [vmem:[%s2 + $0x620] sm:$0xff]
      %v796 = vld [vmem:[%s2 + $0x628] sm:$0xff]
      %v797 = vld [vmem:[%s2 + $0x630] sm:$0xff]
      %v798 = vld [vmem:[%s2 + $0x638] sm:$0xff]
      %v799 = vld [vmem:[%s2 + $0x640] sm:$0xff]
      %v800 = vld [vmem:[%s2 + $0x648] sm:$0xff]
      %v801 = vld [vmem:[%s2 + $0x650] sm:$0xff]
      %v802 = vld [vmem:[%s2 + $0x658] sm:$0xff]
      %v803 = vld [vmem:[%s2 + $0x660] sm:$0xff]
      %v804 = vld [vmem:[%s2 + $0x668] sm:$0xff]
      %v805 = vld [vmem:[%s2 + $0x670] sm:$0xff]
      %v806 = vld [vmem:[%s2 + $0x678] sm:$0xff]
      %v807 = vld [vmem:[%s2 + $0x680] sm:$0xff]
      %v808 = vld [vmem:[%s2 + $0x688] sm:$0xff]
      %v809 = vld [vmem:[%s2 + $0x690] sm:$0xff]
      %v810 = vld [vmem:[%s2 + $0x698] sm:$0xff]
      %v811 = vld [vmem:[%s2 + $0x6a0] sm:$0xff]
      %v812 = vld [vmem:[%s2 + $0x6a8] sm:$0xff]
      %v813 = vld [vmem:[%s2 + $0x6b0] sm:$0xff]
      %v814 = vld [vmem:[%s2 + $0x6b8] sm:$0xff]
      %v815 = vld [vmem:[%s2 + $0x6c0] sm:$0xff]
      %v816 = vld [vmem:[%s2 + $0x6c8] sm:$0xff]
      %v817 = vld [vmem:[%s2 + $0x6d0] sm:$0xff]
      %v818 = vld [vmem:[%s2 + $0x6d8] sm:$0xff]
      %v819 = vld [vmem:[%s2 + $0x6e0] sm:$0xff]
      %v820 = vld [vmem:[%s2 + $0x6e8] sm:$0xff]
      %v821 = vld [vmem:[%s2 + $0x6f0] sm:$0xff]
      %v822 = vld [vmem:[%s2 + $0x6f8] sm:$0xff]
      %v823 = vld [vmem:[%s2 + $0x700] sm:$0xff]
      %v824 = vld [vmem:[%s2 + $0x708] sm:$0xff]
      %v825 = vld [vmem:[%s2 + $0x710] sm:$0xff]
      %v826 = vld [vmem:[%s2 + $0x718] sm:$0xff]
      %v827 = vld [vmem:[%s2 + $0x720] sm:$0xff]
      %v828 = vld [vmem:[%s2 + $0x728] sm:$0xff]
      %v829 = vld [vmem:[%s2 + $0x730] sm:$0xff]
      %v830 = vld [vmem:[%s2 + $0x738] sm:$0xff]
      %v831 = vld [vmem:[%s2 + $0x740] sm:$0xff]
      %v832 = vld [vmem:[%s2 + $0x748] sm:$0xff]
      %v833 = vld [vmem:[%s2 + $0x750] sm:$0xff]
      %v834 = vld [vmem:[%s2 + $0x758] sm:$0xff]
      %v835 = vld [vmem:[%s2 + $0x760] sm:$0xff]
      %v836 = vld [vmem:[%s2 + $0x768] sm:$0xff]
      %v837 = vld [vmem:[%s2 + $0x770] sm:$0xff]
      %v838 = vld [vmem:[%s2 + $0x778] sm:$0xff]
      %v839 = vld [vmem:[%s2 + $0x780] sm:$0xff]
      %v840 = vld [vmem:[%s2 + $0x788] sm:$0xff]
      %v841 = vld [vmem:[%s2 + $0x790] sm:$0xff]
      %v842 = vld [vmem:[%s2 + $0x798] sm:$0xff]
      %v843 = vld [vmem:[%s2 + $0x7a0] sm:$0xff]
      %v844 = vld [vmem:[%s2 + $0x7a8] sm:$0xff]
      %v845 = vld [vmem:[%s2 + $0x7b0] sm:$0xff]
      %v846 = vld [vmem:[%s2 + $0x7b8] sm:$0xff]
      %v847 = vld [vmem:[%s2 + $0x7c0] sm:$0xff]
      %v848 = vld [vmem:[%s2 + $0x7c8] sm:$0xff]
      %v849 = vld [vmem:[%s2 + $0x7d0] sm:$0xff]
      %v850 = vld [vmem:[%s2 + $0x7d8] sm:$0xff]
      %v851 = vld [vmem:[%s2 + $0x7e0] sm:$0xff]
      %v852 = vld [vmem:[%s2 + $0x7e8] sm:$0xff]
      %v853 = vld [vmem:[%s2 + $0x7f0] sm:$0xff]
      %v854 = vld [vmem:[%s2 + $0x7f8] sm:$0xff]
      %v855 = vld [vmem:[%s2 + $0x800] sm:$0xff]
      %v856 = vld [vmem:[%s2 + $0x808] sm:$0xff]
      %v857 = vld [vmem:[%s2 + $0x810] sm:$0xff]
      %v858 = vld [vmem:[%s2 + $0x818] sm:$0xff]
      %v859 = vld [vmem:[%s2 + $0x820] sm:$0xff]
      %v860 = vld [vmem:[%s2 + $0x828] sm:$0xff]
      %v861 = vld [vmem:[%s2 + $0x830] sm:$0xff]
      %v862 = vld [vmem:[%s2 + $0x838] sm:$0xff]
      %v863 = vld [vmem:[%s2 + $0x840] sm:$0xff]
      %v864 = vld [vmem:[%s2 + $0x848] sm:$0xff]
      %v865 = vld [vmem:[%s2 + $0x850] sm:$0xff]
      %v866 = vld [vmem:[%s2 + $0x858] sm:$0xff]
      %v867 = vld [vmem:[%s2 + $0x860] sm:$0xff]
      %v868 = vld [vmem:[%s2 + $0x868] sm:$0xff]
      %v869 = vld [vmem:[%s2 + $0x870] sm:$0xff]
      %v870 = vld [vmem:[%s2 + $0x878] sm:$0xff]
      %v871 = vld [vmem:[%s2 + $0x880] sm:$0xff]
      %v872 = vld [vmem:[%s2 + $0x888] sm:$0xff]
      %v873 = vld [vmem:[%s2 + $0x890] sm:$0xff]
      %v874 = vld [vmem:[%s2 + $0x898] sm:$0xff]
      %v875 = vld [vmem:[%s2 + $0x8a0] sm:$0xff]
      %v876 = vld [vmem:[%s2 + $0x8a8] sm:$0xff]
      %v877 = vld [vmem:[%s2 + $0x8b0] sm:$0xff]
      %v878 = vld [vmem:[%s2 + $0x8b8] sm:$0xff]
      %v879 = vld [vmem:[%s2 + $0x8c0] sm:$0xff]
      %v880 = vld [vmem:[%s2 + $0x8c8] sm:$0xff]
      %v881 = vld [vmem:[%s2 + $0x8d0] sm:$0xff]
      %v882 = vld [vmem:[%s2 + $0x8d8] sm:$0xff]
      %v883 = vld [vmem:[%s2 + $0x8e0] sm:$0xff]
      %v884 = vld [vmem:[%s2 + $0x8e8] sm:$0xff]
      %v885 = vld [vmem:[%s2 + $0x8f0] sm:$0xff]
      %v886 = vld [vmem:[%s2 + $0x8f8] sm:$0xff]
      %v887 = vld [vmem:[%s2 + $0x900] sm:$0xff]
      %v888 = vld [vmem:[%s2 + $0x908] sm:$0xff]
      %v889 = vld [vmem:[%s2 + $0x910] sm:$0xff]
      %v890 = vld [vmem:[%s2 + $0x918] sm:$0xff]
      %v891 = vld [vmem:[%s2 + $0x920] sm:$0xff]
      %v892 = vld [vmem:[%s2 + $0x928] sm:$0xff]
      %v893 = vld [vmem:[%s2 + $0x930] sm:$0xff]
      %v894 = vld [vmem:[%s2 + $0x938] sm:$0xff]
      %v895 = vld [vmem:[%s2 + $0x940] sm:$0xff]
      %v896 = vld [vmem:[%s2 + $0x948] sm:$0xff]
      %v897 = vld [vmem:[%s2 + $0x950] sm:$0xff]
      %v898 = vld [vmem:[%s2 + $0x958] sm:$0xff]
      %v899 = vld [vmem:[%s2 + $0x960] sm:$0xff]
      %v900 = vld [vmem:[%s2 + $0x968] sm:$0xff]
      %v901 = vld [vmem:[%s2 + $0x970] sm:$0xff]
      %v902 = vld [vmem:[%s2 + $0x978] sm:$0xff]
      %v903 = vld [vmem:[%s2 + $0x980] sm:$0xff]
      %v904 = vld [vmem:[%s2 + $0x988] sm:$0xff]
      %v905 = vld [vmem:[%s2 + $0x990] sm:$0xff]
      %v906 = vld [vmem:[%s2 + $0x998] sm:$0xff]
      %v907 = vld [vmem:[%s2 + $0x9a0] sm:$0xff]
      %v908 = vld [vmem:[%s2 + $0x9a8] sm:$0xff]
      %v909 = vld [vmem:[%s2 + $0x9b0] sm:$0xff]
      %v910 = vld [vmem:[%s2 + $0x9b8] sm:$0xff]
      %v911 = vld [vmem:[%s2 + $0x9c0] sm:$0xff]
      %v912 = vld [vmem:[%s2 + $0x9c8] sm:$0xff]
      %v913 = vld [vmem:[%s2 + $0x9d0] sm:$0xff]
      %v914 = vld [vmem:[%s2 + $0x9d8] sm:$0xff]
      %v915 = vld [vmem:[%s2 + $0x9e0] sm:$0xff]
      %v916 = vld [vmem:[%s2 + $0x9e8] sm:$0xff]
      %v917 = vld [vmem:[%s2 + $0x9f0] sm:$0xff]
      %v918 = vld [vmem:[%s2 + $0x9f8] sm:$0xff]
      %v919 = vld [vmem:[%s2 + $0xa00] sm:$0xff]
      %v920 = vld [vmem:[%s2 + $0xa08] sm:$0xff]
      %v921 = vld [vmem:[%s2 + $0xa10] sm:$0xff]
      %v922 = vld [vmem:[%s2 + $0xa18] sm:$0xff]
      %v923 = vld [vmem:[%s2 + $0xa20] sm:$0xff]
      %v924 = vld [vmem:[%s2 + $0xa28] sm:$0xff]
      %v925 = vld [vmem:[%s2 + $0xa30] sm:$0xff]
      %v926 = vld [vmem:[%s2 + $0xa38] sm:$0xff]
      %v927 = vld [vmem:[%s2 + $0xa40] sm:$0xff]
      %v928 = vld [vmem:[%s2 + $0xa48] sm:$0xff]
      %v929 = vld [vmem:[%s2 + $0xa50] sm:$0xff]
      %v930 = vld [vmem:[%s2 + $0xa58] sm:$0xff]
      %v931 = vld [vmem:[%s2 + $0xa60] sm:$0xff]
      %v932 = vld [vmem:[%s2 + $0xa68] sm:$0xff]
      %v933 = vld [vmem:[%s2 + $0xa70] sm:$0xff]
      %v934 = vld [vmem:[%s2 + $0xa78] sm:$0xff]
      %v935 = vld [vmem:[%s2 + $0xa80] sm:$0xff]
      %v936 = vld [vmem:[%s2 + $0xa88] sm:$0xff]
      %v937 = vld [vmem:[%s2 + $0xa90] sm:$0xff]
      %v938 = vld [vmem:[%s2 + $0xa98] sm:$0xff]
      %v939 = vld [vmem:[%s2 + $0xaa0] sm:$0xff]
      %v940 = vld [vmem:[%s2 + $0xaa8] sm:$0xff]
      %v941 = vld [vmem:[%s2 + $0xab0] sm:$0xff]
      %v942 = vld [vmem:[%s2 + $0xab8] sm:$0xff]
      %v943 = vld [vmem:[%s2 + $0xac0] sm:$0xff]
      %v944 = vld [vmem:[%s2 + $0xac8] sm:$0xff]
      %v945 = vld [vmem:[%s2 + $0xad0] sm:$0xff]
      %v946 = vld [vmem:[%s2 + $0xad8] sm:$0xff]
      %v947 = vld [vmem:[%s2 + $0xae0] sm:$0xff]
      %v948 = vld [vmem:[%s2 + $0xae8] sm:$0xff]
      %v949 = vld [vmem:[%s2 + $0xaf0] sm:$0xff]
      %v950 = vld [vmem:[%s2 + $0xaf8] sm:$0xff]
      %v951 = vld [vmem:[%s2 + $0xb00] sm:$0xff]
      %v952 = vld [vmem:[%s2 + $0xb08] sm:$0xff]
      %v953 = vld [vmem:[%s2 + $0xb10] sm:$0xff]
      %v954 = vld [vmem:[%s2 + $0xb18] sm:$0xff]
      %v955 = vld [vmem:[%s2 + $0xb20] sm:$0xff]
      %v956 = vld [vmem:[%s2 + $0xb28] sm:$0xff]
      %v957 = vld [vmem:[%s2 + $0xb30] sm:$0xff]
      %v958 = vld [vmem:[%s2 + $0xb38] sm:$0xff]
      %v959 = vld [vmem:[%s2 + $0xb40] sm:$0xff]
      %v960 = vld [vmem:[%s2 + $0xb48] sm:$0xff]
      %v961 = vld [vmem:[%s2 + $0xb50] sm:$0xff]
      %v962 = vld [vmem:[%s2 + $0xb58] sm:$0xff]
      %v963 = vld [vmem:[%s2 + $0xb60] sm:$0xff]
      %v964 = vld [vmem:[%s2 + $0xb68] sm:$0xff]
      %v965 = vld [vmem:[%s2 + $0xb70] sm:$0xff]
      %v966 = vld [vmem:[%s2 + $0xb78] sm:$0xff]
      %v967 = vld [vmem:[%s2 + $0xb80] sm:$0xff]
      %v968 = vld [vmem:[%s2 + $0xb88] sm:$0xff]
      %v969 = vld [vmem:[%s2 + $0xb90] sm:$0xff]
      %v970 = vld [vmem:[%s2 + $0xb98] sm:$0xff]
      %v971 = vld [vmem:[%s2 + $0xba0] sm:$0xff]
      %v972 = vld [vmem:[%s2 + $0xba8] sm:$0xff]
      %v973 = vld [vmem:[%s2 + $0xbb0] sm:$0xff]
      %v974 = vld [vmem:[%s2 + $0xbb8] sm:$0xff]
      %v975 = vld [vmem:[%s2 + $0xbc0] sm:$0xff]
      %v976 = vld [vmem:[%s2 + $0xbc8] sm:$0xff]
      %v977 = vld [vmem:[%s2 + $0xbd0] sm:$0xff]
      %v978 = vld [vmem:[%s2 + $0xbd8] sm:$0xff]
      %v979 = vld [vmem:[%s2 + $0xbe0] sm:$0xff]
      %v980 = vld [vmem:[%s2 + $0xbe8] sm:$0xff]
      %v981 = vld [vmem:[%s2 + $0xbf0] sm:$0xff]
      %v982 = vld [vmem:[%s2 + $0xbf8] sm:$0xff]
      %v983 = vld [vmem:[%s2 + $0xc00] sm:$0xff]
      %v984 = vld [vmem:[%s2 + $0xc08] sm:$0xff]
      %v985 = vld [vmem:[%s2 + $0xc10] sm:$0xff]
      %v986 = vld [vmem:[%s2 + $0xc18] sm:$0xff]
      %v987 = vld [vmem:[%s2 + $0xc20] sm:$0xff]
      %v988 = vld [vmem:[%s2 + $0xc28] sm:$0xff]
      %v989 = vld [vmem:[%s2 + $0xc30] sm:$0xff]
      %v990 = vld [vmem:[%s2 + $0xc38] sm:$0xff]
      %v991 = vld [vmem:[%s2 + $0xc40] sm:$0xff]
      %v992 = vld [vmem:[%s2 + $0xc48] sm:$0xff]
      %v993 = vld [vmem:[%s2 + $0xc50] sm:$0xff]
      %v994 = vld [vmem:[%s2 + $0xc58] sm:$0xff]
      %v995 = vld [vmem:[%s2 + $0xc60] sm:$0xff]
      %v996 = vld [vmem:[%s2 + $0xc68] sm:$0xff]
      %v997 = vld [vmem:[%s2 + $0xc70] sm:$0xff]
      %v998 = vld [vmem:[%s2 + $0xc78] sm:$0xff]
      %v999 = vld [vmem:[%s2 + $0xc80] sm:$0xff]
      %v1000 = vld [vmem:[%s2 + $0xc88] sm:$0xff]
      %v1001 = vld [vmem:[%s2 + $0xc90] sm:$0xff]
      %v1002 = vld [vmem:[%s2 + $0xc98] sm:$0xff]
      %v1003 = vld [vmem:[%s2 + $0xca0] sm:$0xff]
      %v1004 = vld [vmem:[%s2 + $0xca8] sm:$0xff]
      %v1005 = vld [vmem:[%s2 + $0xcb0] sm:$0xff]
      %v1006 = vld [vmem:[%s2 + $0xcb8] sm:$0xff]
      %v1007 = vld [vmem:[%s2 + $0xcc0] sm:$0xff]
      %v1008 = vld [vmem:[%s2 + $0xcc8] sm:$0xff]
      %v1009 = vld [vmem:[%s2 + $0xcd0] sm:$0xff]
      %v1010 = vld [vmem:[%s2 + $0xcd8] sm:$0xff]
      %v1011 = vld [vmem:[%s2 + $0xce0] sm:$0xff]
      %v1012 = vld [vmem:[%s2 + $0xce8] sm:$0xff]
      %v1013 = vld [vmem:[%s2 + $0xcf0] sm:$0xff]
      %v1014 = vld [vmem:[%s2 + $0xcf8] sm:$0xff]
      %v1015 = vld [vmem:[%s2 + $0xd00] sm:$0xff]
      %v1016 = vld [vmem:[%s2 + $0xd08] sm:$0xff]
      %v1017 = vld [vmem:[%s2 + $0xd10] sm:$0xff]
      %v1018 = vld [vmem:[%s2 + $0xd18] sm:$0xff]
      %v1019 = vld [vmem:[%s2 + $0xd20] sm:$0xff]
      %v1020 = vld [vmem:[%s2 + $0xd28] sm:$0xff]
      %v1021 = vld [vmem:[%s2 + $0xd30] sm:$0xff]
      %v1022 = vld [vmem:[%s2 + $0xd38] sm:$0xff]
      %v1023 = vld [vmem:[%s2 + $0xd40] sm:$0xff]
      %v1024 = vld [vmem:[%s2 + $0xd48] sm:$0xff]
      %v1025 = vld [vmem:[%s2 + $0xd50] sm:$0xff]
      %v1026 = vld [vmem:[%s2 + $0xd58] sm:$0xff]
      %v1027 = vld [vmem:[%s2 + $0xd60] sm:$0xff]
      %v1028 = vld [vmem:[%s2 + $0xd68] sm:$0xff]
      %v1029 = vld [vmem:[%s2 + $0xd70] sm:$0xff]
      %v1030 = vld [vmem:[%s2 + $0xd78] sm:$0xff]
      %v1031 = vld [vmem:[%s2 + $0xd80] sm:$0xff]
      %v1032 = vld [vmem:[%s2 + $0xd88] sm:$0xff]
      %v1033 = vld [vmem:[%s2 + $0xd90] sm:$0xff]
      %v1034 = vld [vmem:[%s2 + $0xd98] sm:$0xff]
      %v1035 = vld [vmem:[%s2 + $0xda0] sm:$0xff]
      %v1036 = vld [vmem:[%s2 + $0xda8] sm:$0xff]
      %v1037 = vld [vmem:[%s2 + $0xdb0] sm:$0xff]
      %v1038 = vld [vmem:[%s2 + $0xdb8] sm:$0xff]
      %v1039 = vld [vmem:[%s2 + $0xdc0] sm:$0xff]
      %v1040 = vld [vmem:[%s2 + $0xdc8] sm:$0xff]
      %v1041 = vld [vmem:[%s2 + $0xdd0] sm:$0xff]
      %v1042 = vld [vmem:[%s2 + $0xdd8] sm:$0xff]
      %v1043 = vld [vmem:[%s2 + $0xde0] sm:$0xff]
      %v1044 = vld [vmem:[%s2 + $0xde8] sm:$0xff]
      %v1045 = vld [vmem:[%s2 + $0xdf0] sm:$0xff]
      %v1046 = vld [vmem:[%s2 + $0xdf8] sm:$0xff]
      %v1047 = vld [vmem:[%s2 + $0xe00] sm:$0xff]
      %v1048 = vld [vmem:[%s2 + $0xe08] sm:$0xff]
      %v1049 = vld [vmem:[%s2 + $0xe10] sm:$0xff]
      %v1050 = vld [vmem:[%s2 + $0xe18] sm:$0xff]
      %v1051 = vld [vmem:[%s2 + $0xe20] sm:$0xff]
      %v1052 = vld [vmem:[%s2 + $0xe28] sm:$0xff]
      %v1053 = vld [vmem:[%s2 + $0xe30] sm:$0xff]
      %v1054 = vld [vmem:[%s2 + $0xe38] sm:$0xff]
      %v1055 = vld [vmem:[%s2 + $0xe40] sm:$0xff]
      %v1056 = vld [vmem:[%s2 + $0xe48] sm:$0xff]
      %v1057 = vld [vmem:[%s2 + $0xe50] sm:$0xff]
      %v1058 = vld [vmem:[%s2 + $0xe58] sm:$0xff]
      %v1059 = vld [vmem:[%s2 + $0xe60] sm:$0xff]
      %v1060 = vld [vmem:[%s2 + $0xe68] sm:$0xff]
      %v1061 = vld [vmem:[%s2 + $0xe70] sm:$0xff]
      %v1062 = vld [vmem:[%s2 + $0xe78] sm:$0xff]
      %v1063 = vld [vmem:[%s2 + $0xe80] sm:$0xff]
      %v1064 = vld [vmem:[%s2 + $0xe88] sm:$0xff]
      %v1065 = vld [vmem:[%s2 + $0xe90] sm:$0xff]
      %v1066 = vld [vmem:[%s2 + $0xe98] sm:$0xff]
      %v1067 = vld [vmem:[%s2 + $0xea0] sm:$0xff]
      %v1068 = vld [vmem:[%s2 + $0xea8] sm:$0xff]
      %v1069 = vld [vmem:[%s2 + $0xeb0] sm:$0xff]
      %v1070 = vld [vmem:[%s2 + $0xeb8] sm:$0xff]
      %v1071 = vld [vmem:[%s2 + $0xec0] sm:$0xff]
      %v1072 = vld [vmem:[%s2 + $0xec8] sm:$0xff]
      %v1073 = vld [vmem:[%s2 + $0xed0] sm:$0xff]
      %v1074 = vld [vmem:[%s2 + $0xed8] sm:$0xff]
      %v1075 = vld [vmem:[%s2 + $0xee0] sm:$0xff]
      %v1076 = vld [vmem:[%s2 + $0xee8] sm:$0xff]
      %v1077 = vld [vmem:[%s2 + $0xef0] sm:$0xff]
      %v1078 = vld [vmem:[%s2 + $0xef8] sm:$0xff]
      %v1079 = vld [vmem:[%s2 + $0xf00] sm:$0xff]
      %v1080 = vld [vmem:[%s2 + $0xf08] sm:$0xff]
      %v1081 = vld [vmem:[%s2 + $0xf10] sm:$0xff]
      %v1082 = vld [vmem:[%s2 + $0xf18] sm:$0xff]
      %v1083 = vld [vmem:[%s2 + $0xf20] sm:$0xff]
      %v1084 = vld [vmem:[%s2 + $0xf28] sm:$0xff]
      %v1085 = vld [vmem:[%s2 + $0xf30] sm:$0xff]
      %v1086 = vld [vmem:[%s2 + $0xf38] sm:$0xff]
      %v1087 = vld [vmem:[%s2 + $0xf40] sm:$0xff]
      %v1088 = vld [vmem:[%s2 + $0xf48] sm:$0xff]
      %v1089 = vld [vmem:[%s2 + $0xf50] sm:$0xff]
      %v1090 = vld [vmem:[%s2 + $0xf58] sm:$0xff]
      %v1091 = vld [vmem:[%s2 + $0xf60] sm:$0xff]
      %v1092 = vld [vmem:[%s2 + $0xf68] sm:$0xff]
      %v1093 = vld [vmem:[%s2 + $0xf70] sm:$0xff]
      %v1094 = vld [vmem:[%s2 + $0xf78] sm:$0xff]
      %v1095 = vld [vmem:[%s2 + $0xf80] sm:$0xff]
      %v1096 = vld [vmem:[%s2 + $0xf88] sm:$0xff]
      %v1097 = vld [vmem:[%s2 + $0xf90] sm:$0xff]
      %v1098 = vld [vmem:[%s2 + $0xf98] sm:$0xff]
      %v1099 = vld [vmem:[%s2 + $0xfa0] sm:$0xff]
      %v1100 = vld [vmem:[%s2 + $0xfa8] sm:$0xff]
      %v1101 = vld [vmem:[%s2 + $0xfb0] sm:$0xff]
      %v1102 = vld [vmem:[%s2 + $0xfb8] sm:$0xff]
      %v1103 = vld [vmem:[%s2 + $0xfc0] sm:$0xff]
      %v1104 = vld [vmem:[%s2 + $0xfc8] sm:$0xff]
      %v1105 = vld [vmem:[%s2 + $0xfd0] sm:$0xff]
      %v1106 = vld [vmem:[%s2 + $0xfd8] sm:$0xff]
      %v1107 = vld [vmem:[%s2 + $0xfe0] sm:$0xff]
      %v1108 = vld [vmem:[%s2 + $0xfe8] sm:$0xff]
      %v1109 = vld [vmem:[%s2 + $0xff0] sm:$0xff]
      %v1110 = vld [vmem:[%s2 + $0xff8] sm:$0xff]
      %v1111 = vld [vmem:[%s2 + $0x1000] sm:$0xff]
      %v1112 = vld [vmem:[%s2 + $0x1008] sm:$0xff]
      %v1113 = vld [vmem:[%s2 + $0x1010] sm:$0xff]
      %v1114 = vld [vmem:[%s2 + $0x1018] sm:$0xff]
      %v1115 = vld [vmem:[%s2 + $0x1020] sm:$0xff]
      %v1116 = vld [vmem:[%s2 + $0x1028] sm:$0xff]
      %v1117 = vld [vmem:[%s2 + $0x1030] sm:$0xff]
      %v1118 = vld [vmem:[%s2 + $0x1038] sm:$0xff]
      %v1119 = vld [vmem:[%s2 + $0x1040] sm:$0xff]
      %v1120 = vld [vmem:[%s2 + $0x1048] sm:$0xff]
      %v1121 = vld [vmem:[%s2 + $0x1050] sm:$0xff]
      %v1122 = vld [vmem:[%s2 + $0x1058] sm:$0xff]
      %v1123 = vld [vmem:[%s2 + $0x1060] sm:$0xff]
      %v1124 = vld [vmem:[%s2 + $0x1068] sm:$0xff]
      %v1125 = vld [vmem:[%s2 + $0x1070] sm:$0xff]
      %v1126 = vld [vmem:[%s2 + $0x1078] sm:$0xff]
      %v1127 = vld [vmem:[%s2 + $0x1080] sm:$0xff]
      %v1128 = vld [vmem:[%s2 + $0x1088] sm:$0xff]
      %v1129 = vld [vmem:[%s2 + $0x1090] sm:$0xff]
      %v1130 = vld [vmem:[%s2 + $0x1098] sm:$0xff]
      %v1131 = vld [vmem:[%s2 + $0x10a0] sm:$0xff]
      %v1132 = vld [vmem:[%s2 + $0x10a8] sm:$0xff]
      %v1133 = vld [vmem:[%s2 + $0x10b0] sm:$0xff]
      %v1134 = vld [vmem:[%s2 + $0x10b8] sm:$0xff]
      %v1135 = vld [vmem:[%s2 + $0x10c0] sm:$0xff]
      %v1136 = vld [vmem:[%s2 + $0x10c8] sm:$0xff]
      %v1137 = vld [vmem:[%s2 + $0x10d0] sm:$0xff]
      %v1138 = vld [vmem:[%s2 + $0x10d8] sm:$0xff]
      %v1139 = vld [vmem:[%s2 + $0x10e0] sm:$0xff]
      %v1140 = vld [vmem:[%s2 + $0x10e8] sm:$0xff]
      %v1141 = vld [vmem:[%s2 + $0x10f0] sm:$0xff]
      %v1142 = vld [vmem:[%s2 + $0x10f8] sm:$0xff]
      %v1143 = vld [vmem:[%s2 + $0x1100] sm:$0xff]
      %v1144 = vld [vmem:[%s2 + $0x1108] sm:$0xff]
      %v1145 = vld [vmem:[%s2 + $0x1110] sm:$0xff]
      %v1146 = vld [vmem:[%s2 + $0x1118] sm:$0xff]
      %v1147 = vld [vmem:[%s2 + $0x1120] sm:$0xff]
      %v1148 = vld [vmem:[%s2 + $0x1128] sm:$0xff]
      %v1149 = vld [vmem:[%s2 + $0x1130] sm:$0xff]
      %v1150 = vld [vmem:[%s2 + $0x1138] sm:$0xff]
      %v1151 = vld [vmem:[%s2 + $0x1140] sm:$0xff]
      %v1152 = vld [vmem:[%s2 + $0x1148] sm:$0xff]
      %v1153 = vld [vmem:[%s2 + $0x1150] sm:$0xff]
      %v1154 = vld [vmem:[%s2 + $0x1158] sm:$0xff]
      %v1155 = vld [vmem:[%s2 + $0x1160] sm:$0xff]
      %v1156 = vld [vmem:[%s2 + $0x1168] sm:$0xff]
      %v1157 = vld [vmem:[%s2 + $0x1170] sm:$0xff]
      %v1158 = vld [vmem:[%s2 + $0x1178] sm:$0xff]
      %v1159 = vld [vmem:[%s2 + $0x1180] sm:$0xff]
      %v1160 = vld [vmem:[%s2 + $0x1188] sm:$0xff]
      %v1161 = vld [vmem:[%s2 + $0x1190] sm:$0xff]
      %v1162 = vld [vmem:[%s2 + $0x1198] sm:$0xff]
      %v1163 = vld [vmem:[%s2 + $0x11a0] sm:$0xff]
      %v1164 = vld [vmem:[%s2 + $0x11a8] sm:$0xff]
      %v1165 = vld [vmem:[%s2 + $0x11b0] sm:$0xff]
      %v1166 = vld [vmem:[%s2 + $0x11b8] sm:$0xff]
      %v1167 = vld [vmem:[%s2 + $0x11c0] sm:$0xff]
      %v1168 = vld [vmem:[%s2 + $0x11c8] sm:$0xff]
      %v1169 = vld [vmem:[%s2 + $0x11d0] sm:$0xff]
      %v1170 = vld [vmem:[%s2 + $0x11d8] sm:$0xff]
      %v1171 = vld [vmem:[%s2 + $0x11e0] sm:$0xff]
      %v1172 = vld [vmem:[%s2 + $0x11e8] sm:$0xff]
      %v1173 = vld [vmem:[%s2 + $0x11f0] sm:$0xff]
      %v1174 = vld [vmem:[%s2 + $0x11f8] sm:$0xff]
      %v1175 = vld [vmem:[%s2 + $0x1200] sm:$0xff]
      %v1176 = vld [vmem:[%s2 + $0x1208] sm:$0xff]
      %v1177 = vld [vmem:[%s2 + $0x1210] sm:$0xff]
      %v1178 = vld [vmem:[%s2 + $0x1218] sm:$0xff]
      %v1179 = vld [vmem:[%s2 + $0x1220] sm:$0xff]
      %v1180 = vld [vmem:[%s2 + $0x1228] sm:$0xff]
      %v1181 = vld [vmem:[%s2 + $0x1230] sm:$0xff]
      %v1182 = vld [vmem:[%s2 + $0x1238] sm:$0xff]
      %v1183 = vld [vmem:[%s2 + $0x1240] sm:$0xff]
      %v1184 = vld [vmem:[%s2 + $0x1248] sm:$0xff]
      %v1185 = vld [vmem:[%s2 + $0x1250] sm:$0xff]
      %v1186 = vld [vmem:[%s2 + $0x1258] sm:$0xff]
      %v1187 = vld [vmem:[%s2 + $0x1260] sm:$0xff]
      %v1188 = vld [vmem:[%s2 + $0x1268] sm:$0xff]
      %v1189 = vld [vmem:[%s2 + $0x1270] sm:$0xff]
      %v1190 = vld [vmem:[%s2 + $0x1278] sm:$0xff]
      %v1191 = vld [vmem:[%s2 + $0x1280] sm:$0xff]
      %v1192 = vld [vmem:[%s2 + $0x1288] sm:$0xff]
      %v1193 = vld [vmem:[%s2 + $0x1290] sm:$0xff]
      %v1194 = vld [vmem:[%s2 + $0x1298] sm:$0xff]
      %v1195 = vld [vmem:[%s2 + $0x12a0] sm:$0xff]
      %v1196 = vld [vmem:[%s2 + $0x12a8] sm:$0xff]
      %v1197 = vld [vmem:[%s2 + $0x12b0] sm:$0xff]
      %v1198 = vld [vmem:[%s2 + $0x12b8] sm:$0xff]
      %v1199 = vld [vmem:[%s2 + $0x12c0] sm:$0xff]
      %v1200 = vld [vmem:[%s2 + $0x12c8] sm:$0xff]
      %v1201 = vld [vmem:[%s2 + $0x12d0] sm:$0xff]
      %v1202 = vld [vmem:[%s2 + $0x12d8] sm:$0xff]
      %v1203 = vld [vmem:[%s2 + $0x12e0] sm:$0xff]
      %v1204 = vld [vmem:[%s2 + $0x12e8] sm:$0xff]
      %v1205 = vld [vmem:[%s2 + $0x12f0] sm:$0xff]
      %v1206 = vld [vmem:[%s2 + $0x12f8] sm:$0xff]
      %v1207 = vld [vmem:[%s2 + $0x1300] sm:$0xff]
      %v1208 = vld [vmem:[%s2 + $0x1308] sm:$0xff]
      %v1209 = vld [vmem:[%s2 + $0x1310] sm:$0xff]
      %v1210 = vld [vmem:[%s2 + $0x1318] sm:$0xff]
      %v1211 = vld [vmem:[%s2 + $0x1320] sm:$0xff]
      %v1212 = vld [vmem:[%s2 + $0x1328] sm:$0xff]
      %v1213 = vld [vmem:[%s2 + $0x1330] sm:$0xff]
      %v1214 = vld [vmem:[%s2 + $0x1338] sm:$0xff]
      %v1215 = vld [vmem:[%s2 + $0x1340] sm:$0xff]
      %v1216 = vld [vmem:[%s2 + $0x1348] sm:$0xff]
      %v1217 = vld [vmem:[%s2 + $0x1350] sm:$0xff]
      %v1218 = vld [vmem:[%s2 + $0x1358] sm:$0xff]
      %v1219 = vld [vmem:[%s2 + $0x1360] sm:$0xff]
      %v1220 = vld [vmem:[%s2 + $0x1368] sm:$0xff]
      %v1221 = vld [vmem:[%s2 + $0x1370] sm:$0xff]
      %v1222 = vld [vmem:[%s2 + $0x1378] sm:$0xff]
      %v1223 = vld [vmem:[%s2 + $0x1380] sm:$0xff]
      %v1224 = vld [vmem:[%s2 + $0x1388] sm:$0xff]
      %v1225 = vld [vmem:[%s2 + $0x1390] sm:$0xff]
      %v1226 = vld [vmem:[%s2 + $0x1398] sm:$0xff]
      %v1227 = vld [vmem:[%s2 + $0x13a0] sm:$0xff]
      %v1228 = vld [vmem:[%s2 + $0x13a8] sm:$0xff]
      %v1229 = vld [vmem:[%s2 + $0x13b0] sm:$0xff]
      %v1230 = vld [vmem:[%s2 + $0x13b8] sm:$0xff]
      %v1231 = vld [vmem:[%s2 + $0x13c0] sm:$0xff]
      %v1232 = vld [vmem:[%s2 + $0x13c8] sm:$0xff]
      %v1233 = vld [vmem:[%s2 + $0x13d0] sm:$0xff]
      %v1234 = vld [vmem:[%s2 + $0x13d8] sm:$0xff]
      %v1235 = vld [vmem:[%s2 + $0x13e0] sm:$0xff]
      %v1236 = vld [vmem:[%s2 + $0x13e8] sm:$0xff]
      %v1237 = vld [vmem:[%s2 + $0x13f0] sm:$0xff]
      %v1238 = vld [vmem:[%s2 + $0x13f8] sm:$0xff]
      %v1239 = vld [vmem:[%s2 + $0x1400] sm:$0xff]
      %v1240 = vld [vmem:[%s2 + $0x1408] sm:$0xff]
      %v1241 = vld [vmem:[%s2 + $0x1410] sm:$0xff]
      %v1242 = vld [vmem:[%s2 + $0x1418] sm:$0xff]
      %v1243 = vld [vmem:[%s2 + $0x1420] sm:$0xff]
      %v1244 = vld [vmem:[%s2 + $0x1428] sm:$0xff]
      %v1245 = vld [vmem:[%s2 + $0x1430] sm:$0xff]
      %v1246 = vld [vmem:[%s2 + $0x1438] sm:$0xff]
      %vm1247 = vcmask 785408
      %v1249 = vsel %vm1247, %v549, 0
      %v1252 = vsel %vm1247, %v556, 0
      %v1255 = vsel %vm1247, %v563, 0
      %v1258 = vsel %vm1247, %v570, 0
      %v1261 = vsel %vm1247, %v577, 0
      %v1264 = vsel %vm1247, %v584, 0
      %v1267 = vsel %vm1247, %v591, 0
      %v1270 = vsel %vm1247, %v598, 0
      %1272 = vmatprep.subr.mxu0 %v600
      %1273 = vmatpush1.msra.mxu0 %v599
      %1274 = vmatprep.subr.mxu0 %v606
      %1275 = vmatpush1.msra.mxu0 %v605
      %1276 = vmatprep.subr.mxu0 %v612
      %1277 = vmatpush1.msra.mxu0 %v611
      %1278 = vmatprep.subr.mxu0 %v618
      %1279 = vmatpush1.msra.mxu0 %v617
      %1280 = vmatprep.subr.mxu0 %v624
      %1281 = vmatpush1.msra.mxu0 %v623
      %1282 = vmatprep.subr.mxu0 %v630
      %1283 = vmatpush1.msra.mxu0 %v629
      %1284 = vmatprep.subr.mxu0 %v636
      %1285 = vmatpush1.msra.mxu0 %v635
      %1286 = vmatprep.subr.mxu0 %v642
      %1287 = vmatpush1.msra.mxu0 %v641
      %1288 = vmatprep.subr.mxu0 %v648
      %1289 = vmatpush1.msra.mxu0 %v647
      %1290 = vmatprep.subr.mxu0 %v654
      %1291 = vmatpush1.msra.mxu0 %v653
      %1292 = vmatprep.subr.mxu0 %v660
      %1293 = vmatpush1.msra.mxu0 %v659
      %1294 = vmatprep.subr.mxu0 %v666
      %1295 = vmatpush1.msra.mxu0 %v665
      %1296 = vmatprep.subr.mxu0 %v672
      %1297 = vmatpush1.msra.mxu0 %v671
      %1298 = vmatprep.subr.mxu0 %v678
      %1299 = vmatpush1.msra.mxu0 %v677
      %1300 = vmatprep.subr.mxu0 %v684
      %1301 = vmatpush1.msra.mxu0 %v683
      %1302 = vmatprep.subr.mxu0 %v690
      %1303 = vmatpush1.msra.mxu0 %v689
      %1304 = vmatprep.subr.mxu0 %v696
      %1305 = vmatpush1.msra.mxu0 %v695
      %1306 = vmatprep.subr.mxu0 %v702
      %1307 = vmatpush1.msra.mxu0 %v701
      %1308 = vmatprep.subr.mxu0 %v708
      %1309 = vmatpush1.msra.mxu0 %v707
      %1310 = vmatprep.subr.mxu0 %v714
      %1311 = vmatpush1.msra.mxu0 %v713
      %1312 = vmatprep.subr.mxu0 %v720
      %1313 = vmatpush1.msra.mxu0 %v719
      %1314 = vmatprep.subr.mxu0 %v726
      %1315 = vmatpush1.msra.mxu0 %v725
      %1316 = vmatprep.subr.mxu0 %v732
      %1317 = vmatpush1.msra.mxu0 %v731
      %1318 = vmatprep.subr.mxu0 %v738
      %1319 = vmatpush1.msra.mxu0 %v737
      %1320 = vmatprep.subr.mxu0 %v744
      %1321 = vmatpush1.msra.mxu0 %v743
      %1322 = vmatprep.subr.mxu0 %v750
      %1323 = vmatpush1.msra.mxu0 %v749
      %1324 = vmatprep.subr.mxu0 %v756
      %1325 = vmatpush1.msra.mxu0 %v755
      %1326 = vmatprep.subr.mxu0 %v762
      %1327 = vmatpush1.msra.mxu0 %v761
      %1328 = vmatprep.subr.mxu0 %v768
      %1329 = vmatpush1.msra.mxu0 %v767
      %1330 = vmatprep.subr.mxu0 %v774
      %1331 = vmatpush1.msra.mxu0 %v773
      %1332 = vmatprep.subr.mxu0 %v780
      %1333 = vmatpush1.msra.mxu0 %v779
      %1334 = vmatprep.subr.mxu0 %v786
      %1335 = vmatpush1.msra.mxu0 %v785
      %1336 = vmatprep.mubr.f32.mxu0 %v544
      %1337 = vmatmul.mubr.f32.gmra.mrb[0].mxu0 %v543
      %v1338 = vpop.f32.mrb[0].mxu0
      %v1339 = vadd.f32 0.0, %v1338
      %v1340 = vpop.f32.mrb[0].mxu0
      %v1341 = vadd.f32 0.0, %v1340
      %1342 = vmatprep.mubr.f32.mxu0 %v551
      %1343 = vmatmul.mubr.f32.gmra.mrb[0].mxu0 %v550
      %v1344 = vpop.f32.mrb[0].mxu0
      %v1345 = vadd.f32 0.0, %v1344
      %v1346 = vpop.f32.mrb[0].mxu0
      %v1347 = vadd.f32 0.0, %v1346
      %1348 = vmatprep.mubr.f32.mxu0 %v558
      %1349 = vmatmul.mubr.f32.gmra.mrb[0].mxu0 %v557
      %v1350 = vpop.f32.mrb[0].mxu0
      %v1351 = vadd.f32 0.0, %v1350
      %v1352 = vpop.f32.mrb[0].mxu0
      %v1353 = vadd.f32 0.0, %v1352
      %1354 = vmatprep.mubr.f32.mxu0 %v565
      %1355 = vmatmul.mubr.f32.gmra.mrb[0].mxu0 %v564
      %v1356 = vpop.f32.mrb[0].mxu0
      %v1357 = vadd.f32 0.0, %v1356
      %v1358 = vpop.f32.mrb[0].mxu0
      %v1359 = vadd.f32 0.0, %v1358
      %1360 = vmatprep.mubr.f32.mxu0 %v572
      %1361 = vmatmul.mubr.f32.gmra.mrb[0].mxu0 %v571
      %v1362 = vpop.f32.mrb[0].mxu0
      %v1363 = vadd.f32 0.0, %v1362
      %v1364 = vpop.f32.mrb[0].mxu0
      %v1365 = vadd.f32 0.0, %v1364
      %1366 = vmatprep.mubr.f32.mxu0 %v579
      %1367 = vmatmul.mubr.f32.gmra.mrb[0].mxu0 %v578
      %v1368 = vpop.f32.mrb[0].mxu0
      %v1369 = vadd.f32 0.0, %v1368
      %v1370 = vpop.f32.mrb[0].mxu0
      %v1371 = vadd.f32 0.0, %v1370
      %1372 = vmatprep.mubr.f32.mxu0 %v586
      %1373 = vmatmul.mubr.f32.gmra.mrb[0].mxu0 %v585
      %v1374 = vpop.f32.mrb[0].mxu0
      %v1375 = vadd.f32 0.0, %v1374
      %v1376 = vpop.f32.mrb[0].mxu0
      %v1377 = vadd.f32 0.0, %v1376
      %1378 = vmatprep.mubr.f32.mxu0 %v593
      %1379 = vmatmul.mubr.f32.gmra.mrb[0].mxu0 %v592
      %v1380 = vpop.f32.mrb[0].mxu0
      %v1381 = vadd.f32 0.0, %v1380
      %v1382 = vpop.f32.mrb[0].mxu0
      %v1383 = vadd.f32 0.0, %v1382
      %1384 = vdwg.mxu0
      %1385 = vmatprep.subr.mxu0 %v792
      %1386 = vmatpush1.msra.mxu0 %v791
      %1387 = vmatprep.subr.mxu0 %v798
      %1388 = vmatpush1.msra.mxu0 %v797
      %1389 = vmatprep.subr.mxu0 %v804
      %1390 = vmatpush1.msra.mxu0 %v803
      %1391 = vmatprep.subr.mxu0 %v810
      %1392 = vmatpush1.msra.mxu0 %v809
      %1393 = vmatprep.subr.mxu0 %v816
      %1394 = vmatpush1.msra.mxu0 %v815
      %1395 = vmatprep.subr.mxu0 %v822
      %1396 = vmatpush1.msra.mxu0 %v821
      %1397 = vmatprep.subr.mxu0 %v828
      %1398 = vmatpush1.msra.mxu0 %v827
      %1399 = vmatprep.subr.mxu0 %v834
      %1400 = vmatpush1.msra.mxu0 %v833
      %1401 = vmatprep.subr.mxu0 %v840
      %1402 = vmatpush1.msra.mxu0 %v839
      %1403 = vmatprep.subr.mxu0 %v846
      %1404 = vmatpush1.msra.mxu0 %v845
      %1405 = vmatprep.subr.mxu0 %v852
      %1406 = vmatpush1.msra.mxu0 %v851
      %1407 = vmatprep.subr.mxu0 %v858
      %1408 = vmatpush1.msra.mxu0 %v857
      %1409 = vmatprep.subr.mxu0 %v864
      %1410 = vmatpush1.msra.mxu0 %v863
      %1411 = vmatprep.subr.mxu0 %v870
      %1412 = vmatpush1.msra.mxu0 %v869
      %1413 = vmatprep.subr.mxu0 %v876
      %1414 = vmatpush1.msra.mxu0 %v875
      %1415 = vmatprep.subr.mxu0 %v882
      %1416 = vmatpush1.msra.mxu0 %v881
      %1417 = vmatprep.subr.mxu0 %v888
      %1418 = vmatpush1.msra.mxu0 %v887
      %1419 = vmatprep.subr.mxu0 %v894
      %1420 = vmatpush1.msra.mxu0 %v893
      %1421 = vmatprep.subr.mxu0 %v900
      %1422 = vmatpush1.msra.mxu0 %v899
      %1423 = vmatprep.subr.mxu0 %v906
      %1424 = vmatpush1.msra.mxu0 %v905
      %1425 = vmatprep.subr.mxu0 %v912
      %1426 = vmatpush1.msra.mxu0 %v911
      %1427 = vmatprep.subr.mxu0 %v918
      %1428 = vmatpush1.msra.mxu0 %v917
      %1429 = vmatprep.subr.mxu0 %v924
      %1430 = vmatpush1.msra.mxu0 %v923
      %1431 = vmatprep.subr.mxu0 %v930
      %1432 = vmatpush1.msra.mxu0 %v929
      %1433 = vmatprep.subr.mxu0 %v936
      %1434 = vmatpush1.msra.mxu0 %v935
      %1435 = vmatprep.subr.mxu0 %v942
      %1436 = vmatpush1.msra.mxu0 %v941
      %1437 = vmatprep.subr.mxu0 %v948
      %1438 = vmatpush1.msra.mxu0 %v947
      %1439 = vmatprep.subr.mxu0 %v954
      %1440 = vmatpush1.msra.mxu0 %v953
      %1441 = vmatprep.subr.mxu0 %v960
      %1442 = vmatpush1.msra.mxu0 %v959
      %1443 = vmatprep.subr.mxu0 %v966
      %1444 = vmatpush1.msra.mxu0 %v965
      %1445 = vmatprep.subr.mxu0 %v972
      %1446 = vmatpush1.msra.mxu0 %v971
      %1447 = vmatprep.subr.mxu0 %v978
      %1448 = vmatpush1.msra.mxu0 %v977
      %1449 = vmatprep.mubr.f32.mxu0 %v546
      %1450 = vmatmul.mubr.f32.gmra.mrb[0].mxu0 %v545
      %v1451 = vpop.f32.mrb[0].mxu0
      %v1452 = vadd.f32 %v1339, %v1451
      %v1453 = vpop.f32.mrb[0].mxu0
      %v1454 = vadd.f32 %v1341, %v1453
      %1455 = vmatprep.mubr.f32.mxu0 %v553
      %1456 = vmatmul.mubr.f32.gmra.mrb[0].mxu0 %v552
      %v1457 = vpop.f32.mrb[0].mxu0
      %v1458 = vadd.f32 %v1345, %v1457
      %v1459 = vpop.f32.mrb[0].mxu0
      %v1460 = vadd.f32 %v1347, %v1459
      %1461 = vmatprep.mubr.f32.mxu0 %v560
      %1462 = vmatmul.mubr.f32.gmra.mrb[0].mxu0 %v559
      %v1463 = vpop.f32.mrb[0].mxu0
      %v1464 = vadd.f32 %v1351, %v1463
      %v1465 = vpop.f32.mrb[0].mxu0
      %v1466 = vadd.f32 %v1353, %v1465
      %1467 = vmatprep.mubr.f32.mxu0 %v567
      %1468 = vmatmul.mubr.f32.gmra.mrb[0].mxu0 %v566
      %v1469 = vpop.f32.mrb[0].mxu0
      %v1470 = vadd.f32 %v1357, %v1469
      %v1471 = vpop.f32.mrb[0].mxu0
      %v1472 = vadd.f32 %v1359, %v1471
      %1473 = vmatprep.mubr.f32.mxu0 %v574
      %1474 = vmatmul.mubr.f32.gmra.mrb[0].mxu0 %v573
      %v1475 = vpop.f32.mrb[0].mxu0
      %v1476 = vadd.f32 %v1363, %v1475
      %v1477 = vpop.f32.mrb[0].mxu0
      %v1478 = vadd.f32 %v1365, %v1477
      %1479 = vmatprep.mubr.f32.mxu0 %v581
      %1480 = vmatmul.mubr.f32.gmra.mrb[0].mxu0 %v580
      %v1481 = vpop.f32.mrb[0].mxu0
      %v1482 = vadd.f32 %v1369, %v1481
      %v1483 = vpop.f32.mrb[0].mxu0
      %v1484 = vadd.f32 %v1371, %v1483
      %1485 = vmatprep.mubr.f32.mxu0 %v588
      %1486 = vmatmul.mubr.f32.gmra.mrb[0].mxu0 %v587
      %v1487 = vpop.f32.mrb[0].mxu0
      %v1488 = vadd.f32 %v1375, %v1487
      %v1489 = vpop.f32.mrb[0].mxu0
      %v1490 = vadd.f32 %v1377, %v1489
      %1491 = vmatprep.mubr.f32.mxu0 %v595
      %1492 = vmatmul.mubr.f32.gmra.mrb[0].mxu0 %v594
      %v1493 = vpop.f32.mrb[0].mxu0
      %v1494 = vadd.f32 %v1381, %v1493
      %v1495 = vpop.f32.mrb[0].mxu0
      %v1496 = vadd.f32 %v1383, %v1495
      %1497 = vdwg.mxu0
      %1498 = vmatprep.subr.mxu0 %v984
      %1499 = vmatpush1.msra.mxu0 %v983
      %1500 = vmatprep.subr.mxu0 %v990
      %1501 = vmatpush1.msra.mxu0 %v989
      %1502 = vmatprep.subr.mxu0 %v996
      %1503 = vmatpush1.msra.mxu0 %v995
      %1504 = vmatprep.subr.mxu0 %v1002
      %1505 = vmatpush1.msra.mxu0 %v1001
      %1506 = vmatprep.subr.mxu0 %v1008
      %1507 = vmatpush1.msra.mxu0 %v1007
      %1508 = vmatprep.subr.mxu0 %v1014
      %1509 = vmatpush1.msra.mxu0 %v1013
      %1510 = vmatprep.subr.mxu0 %v1020
      %1511 = vmatpush1.msra.mxu0 %v1019
      %1512 = vmatprep.subr.mxu0 %v1026
      %1513 = vmatpush1.msra.mxu0 %v1025
      %1514 = vmatprep.subr.mxu0 %v1032
      %1515 = vmatpush1.msra.mxu0 %v1031
      %1516 = vmatprep.subr.mxu0 %v1038
      %1517 = vmatpush1.msra.mxu0 %v1037
      %1518 = vmatprep.subr.mxu0 %v1044
      %1519 = vmatpush1.msra.mxu0 %v1043
      %1520 = vmatprep.subr.mxu0 %v1050
      %1521 = vmatpush1.msra.mxu0 %v1049
      %1522 = vmatprep.subr.mxu0 %v1056
      %1523 = vmatpush1.msra.mxu0 %v1055
      %1524 = vmatprep.subr.mxu0 %v1062
      %1525 = vmatpush1.msra.mxu0 %v1061
      %1526 = vmatprep.subr.mxu0 %v1068
      %1527 = vmatpush1.msra.mxu0 %v1067
      %1528 = vmatprep.subr.mxu0 %v1074
      %1529 = vmatpush1.msra.mxu0 %v1073
      %1530 = vmatprep.subr.mxu0 %v1080
      %1531 = vmatpush1.msra.mxu0 %v1079
      %1532 = vmatprep.subr.mxu0 %v1086
      %1533 = vmatpush1.msra.mxu0 %v1085
      %1534 = vmatprep.subr.mxu0 %v1092
      %1535 = vmatpush1.msra.mxu0 %v1091
      %1536 = vmatprep.subr.mxu0 %v1098
      %1537 = vmatpush1.msra.mxu0 %v1097
      %1538 = vmatprep.subr.mxu0 %v1104
      %1539 = vmatpush1.msra.mxu0 %v1103
      %1540 = vmatprep.subr.mxu0 %v1110
      %1541 = vmatpush1.msra.mxu0 %v1109
      %1542 = vmatprep.subr.mxu0 %v1116
      %1543 = vmatpush1.msra.mxu0 %v1115
      %1544 = vmatprep.subr.mxu0 %v1122
      %1545 = vmatpush1.msra.mxu0 %v1121
      %1546 = vmatprep.subr.mxu0 %v1128
      %1547 = vmatpush1.msra.mxu0 %v1127
      %1548 = vmatprep.subr.mxu0 %v1134
      %1549 = vmatpush1.msra.mxu0 %v1133
      %1550 = vmatprep.subr.mxu0 %v1140
      %1551 = vmatpush1.msra.mxu0 %v1139
      %1552 = vmatprep.subr.mxu0 %v1146
      %1553 = vmatpush1.msra.mxu0 %v1145
      %1554 = vmatprep.subr.mxu0 %v1152
      %1555 = vmatpush1.msra.mxu0 %v1151
      %1556 = vmatprep.subr.mxu0 %v1158
      %1557 = vmatpush1.msra.mxu0 %v1157
      %1558 = vmatprep.subr.mxu0 %v1164
      %1559 = vmatpush1.msra.mxu0 %v1163
      %1560 = vmatprep.subr.mxu0 %v1170
      %1561 = vmatpush1.msra.mxu0 %v1169
      %1562 = vmatprep.mubr.f32.mxu0 %v548
      %1563 = vmatmul.mubr.f32.gmra.mrb[0].mxu0 %v547
      %v1564 = vpop.f32.mrb[0].mxu0
      %v1565 = vadd.f32 %v1452, %v1564
      %v1566 = vpop.f32.mrb[0].mxu0
      %v1567 = vadd.f32 %v1454, %v1566
      %1568 = vmatprep.mubr.f32.mxu0 %v555
      %1569 = vmatmul.mubr.f32.gmra.mrb[0].mxu0 %v554
      %v1570 = vpop.f32.mrb[0].mxu0
      %v1571 = vadd.f32 %v1458, %v1570
      %v1572 = vpop.f32.mrb[0].mxu0
      %v1573 = vadd.f32 %v1460, %v1572
      %1574 = vmatprep.mubr.f32.mxu0 %v562
      %1575 = vmatmul.mubr.f32.gmra.mrb[0].mxu0 %v561
      %v1576 = vpop.f32.mrb[0].mxu0
      %v1577 = vadd.f32 %v1464, %v1576
      %v1578 = vpop.f32.mrb[0].mxu0
      %v1579 = vadd.f32 %v1466, %v1578
      %1580 = vmatprep.mubr.f32.mxu0 %v569
      %1581 = vmatmul.mubr.f32.gmra.mrb[0].mxu0 %v568
      %v1582 = vpop.f32.mrb[0].mxu0
      %v1583 = vadd.f32 %v1470, %v1582
      %v1584 = vpop.f32.mrb[0].mxu0
      %v1585 = vadd.f32 %v1472, %v1584
      %1586 = vmatprep.mubr.f32.mxu0 %v576
      %1587 = vmatmul.mubr.f32.gmra.mrb[0].mxu0 %v575
      %v1588 = vpop.f32.mrb[0].mxu0
      %v1589 = vadd.f32 %v1476, %v1588
      %v1590 = vpop.f32.mrb[0].mxu0
      %v1591 = vadd.f32 %v1478, %v1590
      %1592 = vmatprep.mubr.f32.mxu0 %v583
      %1593 = vmatmul.mubr.f32.gmra.mrb[0].mxu0 %v582
      %v1594 = vpop.f32.mrb[0].mxu0
      %v1595 = vadd.f32 %v1482, %v1594
      %v1596 = vpop.f32.mrb[0].mxu0
      %v1597 = vadd.f32 %v1484, %v1596
      %1598 = vmatprep.mubr.f32.mxu0 %v590
      %1599 = vmatmul.mubr.f32.gmra.mrb[0].mxu0 %v589
      %v1600 = vpop.f32.mrb[0].mxu0
      %v1601 = vadd.f32 %v1488, %v1600
      %v1602 = vpop.f32.mrb[0].mxu0
      %v1603 = vadd.f32 %v1490, %v1602
      %1604 = vmatprep.mubr.f32.mxu0 %v597
      %1605 = vmatmul.mubr.f32.gmra.mrb[0].mxu0 %v596
      %v1606 = vpop.f32.mrb[0].mxu0
      %v1607 = vadd.f32 %v1494, %v1606
      %v1608 = vpop.f32.mrb[0].mxu0
      %v1609 = vadd.f32 %v1496, %v1608
      %1610 = vdwg.mxu0
      %1611 = vmatprep.subr.mxu0 %v1176
      %1612 = vmatpush1.msra.mxu0 %v1175
      %1613 = vmatprep.subr.mxu0 %v1182
      %1614 = vmatpush1.msra.mxu0 %v1181
      %1615 = vmatprep.subr.mxu0 %v1188
      %1616 = vmatpush1.msra.mxu0 %v1187
      %1617 = vmatprep.subr.mxu0 %v1194
      %1618 = vmatpush1.msra.mxu0 %v1193
      %1619 = vmatprep.subr.mxu0 %v1200
      %1620 = vmatpush1.msra.mxu0 %v1199
      %1621 = vmatprep.subr.mxu0 %v1206
      %1622 = vmatpush1.msra.mxu0 %v1205
      %1623 = vmatprep.subr.mxu0 %v1212
      %1624 = vmatpush1.msra.mxu0 %v1211
      %1625 = vmatprep.subr.mxu0 %v1218
      %1626 = vmatpush1.msra.mxu0 %v1217
      %1627 = vmatprep.subr.mxu0 %v1224
      %1628 = vmatpush1.msra.mxu0 %v1223
      %1629 = vmatprep.subr.mxu0 %v1230
      %1630 = vmatpush1.msra.mxu0 %v1229
      %1631 = vmatprep.subr.mxu0 %v1236
      %1632 = vmatpush1.msra.mxu0 %v1235
      %1633 = vmatprep.subr.mxu0 %v1242
      %1634 = vmatpush1.msra.mxu0 %v1241
      %1635 = vmatprep.subr.mxu0 0.0
      %1636 = vmatpush1.msra.mxu0 0.0
      %1637 = vmatprep.subr.mxu0 0.0
      %1638 = vmatpush1.msra.mxu0 0.0
      %1639 = vmatprep.subr.mxu0 0.0
      %1640 = vmatpush1.msra.mxu0 0.0
      %1641 = vmatprep.subr.mxu0 0.0
      %1642 = vmatpush1.msra.mxu0 0.0
      %1643 = vmatprep.subr.mxu0 0.0
      %1644 = vmatpush1.msra.mxu0 0.0
      %1645 = vmatprep.subr.mxu0 0.0
      %1646 = vmatpush1.msra.mxu0 0.0
      %1647 = vmatprep.subr.mxu0 0.0
      %1648 = vmatpush1.msra.mxu0 0.0
      %1649 = vmatprep.subr.mxu0 0.0
      %1650 = vmatpush1.msra.mxu0 0.0
      %1651 = vmatprep.subr.mxu0 0.0
      %1652 = vmatpush1.msra.mxu0 0.0
      %1653 = vmatprep.subr.mxu0 0.0
      %1654 = vmatpush1.msra.mxu0 0.0
      %1655 = vmatprep.subr.mxu0 0.0
      %1656 = vmatpush1.msra.mxu0 0.0
      %1657 = vmatprep.subr.mxu0 0.0
      %1658 = vmatpush1.msra.mxu0 0.0
      %1659 = vmatprep.subr.mxu0 0.0
      %1660 = vmatpush1.msra.mxu0 0.0
      %1661 = vmatprep.subr.mxu0 0.0
      %1662 = vmatpush1.msra.mxu0 0.0
      %1663 = vmatprep.subr.mxu0 0.0
      %1664 = vmatpush1.msra.mxu0 0.0
      %1665 = vmatprep.subr.mxu0 0.0
      %1666 = vmatpush1.msra.mxu0 0.0
      %1667 = vmatprep.subr.mxu0 0.0
      %1668 = vmatpush1.msra.mxu0 0.0
      %1669 = vmatprep.subr.mxu0 0.0
      %1670 = vmatpush1.msra.mxu0 0.0
      %1671 = vmatprep.subr.mxu0 0.0
      %1672 = vmatpush1.msra.mxu0 0.0
      %1673 = vmatprep.subr.mxu0 0.0
      %1674 = vmatpush1.msra.mxu0 0.0
      %1675 = vmatprep.mubr.f32.mxu0 0.0
      %1676 = vmatmul.mubr.f32.gmra.mrb[0].mxu0 %v1249
      %v1677 = vpop.f32.mrb[0].mxu0
      %v1678 = vadd.f32 %v1565, %v1677
      %v1679 = vpop.f32.mrb[0].mxu0
      %v1680 = vadd.f32 %v1567, %v1679
      %1681 = vmatprep.mubr.f32.mxu0 0.0
      %1682 = vmatmul.mubr.f32.gmra.mrb[0].mxu0 %v1252
      %v1683 = vpop.f32.mrb[0].mxu0
      %v1684 = vadd.f32 %v1571, %v1683
      %v1685 = vpop.f32.mrb[0].mxu0
      %v1686 = vadd.f32 %v1573, %v1685
      %1687 = vmatprep.mubr.f32.mxu0 0.0
      %1688 = vmatmul.mubr.f32.gmra.mrb[0].mxu0 %v1255
      %v1689 = vpop.f32.mrb[0].mxu0
      %v1690 = vadd.f32 %v1577, %v1689
      %v1691 = vpop.f32.mrb[0].mxu0
      %v1692 = vadd.f32 %v1579, %v1691
      %1693 = vmatprep.mubr.f32.mxu0 0.0
      %1694 = vmatmul.mubr.f32.gmra.mrb[0].mxu0 %v1258
      %v1695 = vpop.f32.mrb[0].mxu0
      %v1696 = vadd.f32 %v1583, %v1695
      %v1697 = vpop.f32.mrb[0].mxu0
      %v1698 = vadd.f32 %v1585, %v1697
      %1699 = vmatprep.mubr.f32.mxu0 0.0
      %1700 = vmatmul.mubr.f32.gmra.mrb[0].mxu0 %v1261
      %v1701 = vpop.f32.mrb[0].mxu0
      %v1702 = vadd.f32 %v1589, %v1701
      %v1703 = vpop.f32.mrb[0].mxu0
      %v1704 = vadd.f32 %v1591, %v1703
      %1705 = vmatprep.mubr.f32.mxu0 0.0
      %1706 = vmatmul.mubr.f32.gmra.mrb[0].mxu0 %v1264
      %v1707 = vpop.f32.mrb[0].mxu0
      %v1708 = vadd.f32 %v1595, %v1707
      %v1709 = vpop.f32.mrb[0].mxu0
      %v1710 = vadd.f32 %v1597, %v1709
      %1711 = vmatprep.mubr.f32.mxu0 0.0
      %1712 = vmatmul.mubr.f32.gmra.mrb[0].mxu0 %v1267
      %v1713 = vpop.f32.mrb[0].mxu0
      %v1714 = vadd.f32 %v1601, %v1713
      %v1715 = vpop.f32.mrb[0].mxu0
      %v1716 = vadd.f32 %v1603, %v1715
      %1717 = vmatprep.mubr.f32.mxu0 0.0
      %1718 = vmatmul.mubr.f32.gmra.mrb[0].mxu0 %v1270
      %v1719 = vpop.f32.mrb[0].mxu0
      %v1720 = vadd.f32 %v1607, %v1719
      %v1721 = vpop.f32.mrb[0].mxu0
      %v1722 = vadd.f32 %v1609, %v1721
      %1723 = vdwg.mxu0
      %1724 = vmatprep.subr.mxu0 %v602
      %1725 = vmatpush1.msra.mxu0 %v601
      %1726 = vmatprep.subr.mxu0 %v608
      %1727 = vmatpush1.msra.mxu0 %v607
      %1728 = vmatprep.subr.mxu0 %v614
      %1729 = vmatpush1.msra.mxu0 %v613
      %1730 = vmatprep.subr.mxu0 %v620
      %1731 = vmatpush1.msra.mxu0 %v619
      %1732 = vmatprep.subr.mxu0 %v626
      %1733 = vmatpush1.msra.mxu0 %v625
      %1734 = vmatprep.subr.mxu0 %v632
      %1735 = vmatpush1.msra.mxu0 %v631
      %1736 = vmatprep.subr.mxu0 %v638
      %1737 = vmatpush1.msra.mxu0 %v637
      %1738 = vmatprep.subr.mxu0 %v644
      %1739 = vmatpush1.msra.mxu0 %v643
      %1740 = vmatprep.subr.mxu0 %v650
      %1741 = vmatpush1.msra.mxu0 %v649
      %1742 = vmatprep.subr.mxu0 %v656
      %1743 = vmatpush1.msra.mxu0 %v655
      %1744 = vmatprep.subr.mxu0 %v662
      %1745 = vmatpush1.msra.mxu0 %v661
      %1746 = vmatprep.subr.mxu0 %v668
      %1747 = vmatpush1.msra.mxu0 %v667
      %1748 = vmatprep.subr.mxu0 %v674
      %1749 = vmatpush1.msra.mxu0 %v673
      %1750 = vmatprep.subr.mxu0 %v680
      %1751 = vmatpush1.msra.mxu0 %v679
      %1752 = vmatprep.subr.mxu0 %v686
      %1753 = vmatpush1.msra.mxu0 %v685
      %1754 = vmatprep.subr.mxu0 %v692
      %1755 = vmatpush1.msra.mxu0 %v691
      %1756 = vmatprep.subr.mxu0 %v698
      %1757 = vmatpush1.msra.mxu0 %v697
      %1758 = vmatprep.subr.mxu0 %v704
      %1759 = vmatpush1.msra.mxu0 %v703
      %1760 = vmatprep.subr.mxu0 %v710
      %1761 = vmatpush1.msra.mxu0 %v709
      %1762 = vmatprep.subr.mxu0 %v716
      %1763 = vmatpush1.msra.mxu0 %v715
      %1764 = vmatprep.subr.mxu0 %v722
      %1765 = vmatpush1.msra.mxu0 %v721
      %1766 = vmatprep.subr.mxu0 %v728
      %1767 = vmatpush1.msra.mxu0 %v727
      %1768 = vmatprep.subr.mxu0 %v734
      %1769 = vmatpush1.msra.mxu0 %v733
      %1770 = vmatprep.subr.mxu0 %v740
      %1771 = vmatpush1.msra.mxu0 %v739
      %1772 = vmatprep.subr.mxu0 %v746
      %1773 = vmatpush1.msra.mxu0 %v745
      %1774 = vmatprep.subr.mxu0 %v752
      %1775 = vmatpush1.msra.mxu0 %v751
      %1776 = vmatprep.subr.mxu0 %v758
      %1777 = vmatpush1.msra.mxu0 %v757
      %1778 = vmatprep.subr.mxu0 %v764
      %1779 = vmatpush1.msra.mxu0 %v763
      %1780 = vmatprep.subr.mxu0 %v770
      %1781 = vmatpush1.msra.mxu0 %v769
      %1782 = vmatprep.subr.mxu0 %v776
      %1783 = vmatpush1.msra.mxu0 %v775
      %1784 = vmatprep.subr.mxu0 %v782
      %1785 = vmatpush1.msra.mxu0 %v781
      %1786 = vmatprep.subr.mxu0 %v788
      %1787 = vmatpush1.msra.mxu0 %v787
      %1788 = vmatprep.mubr.f32.mxu0 %v544
      %1789 = vmatmul.mubr.f32.gmra.mrb[0].mxu0 %v543
      %v1790 = vpop.f32.mrb[0].mxu0
      %v1791 = vadd.f32 0.0, %v1790
      %v1792 = vpop.f32.mrb[0].mxu0
      %v1793 = vadd.f32 0.0, %v1792
      %1794 = vmatprep.mubr.f32.mxu0 %v551
      %1795 = vmatmul.mubr.f32.gmra.mrb[0].mxu0 %v550
      %v1796 = vpop.f32.mrb[0].mxu0
      %v1797 = vadd.f32 0.0, %v1796
      %v1798 = vpop.f32.mrb[0].mxu0
      %v1799 = vadd.f32 0.0, %v1798
      %1800 = vmatprep.mubr.f32.mxu0 %v558
      %1801 = vmatmul.mubr.f32.gmra.mrb[0].mxu0 %v557
      %v1802 = vpop.f32.mrb[0].mxu0
      %v1803 = vadd.f32 0.0, %v1802
      %v1804 = vpop.f32.mrb[0].mxu0
      %v1805 = vadd.f32 0.0, %v1804
      %1806 = vmatprep.mubr.f32.mxu0 %v565
      %1807 = vmatmul.mubr.f32.gmra.mrb[0].mxu0 %v564
      %v1808 = vpop.f32.mrb[0].mxu0
      %v1809 = vadd.f32 0.0, %v1808
      %v1810 = vpop.f32.mrb[0].mxu0
      %v1811 = vadd.f32 0.0, %v1810
      %1812 = vmatprep.mubr.f32.mxu0 %v572
      %1813 = vmatmul.mubr.f32.gmra.mrb[0].mxu0 %v571
      %v1814 = vpop.f32.mrb[0].mxu0
      %v1815 = vadd.f32 0.0, %v1814
      %v1816 = vpop.f32.mrb[0].mxu0
      %v1817 = vadd.f32 0.0, %v1816
      %1818 = vmatprep.mubr.f32.mxu0 %v579
      %1819 = vmatmul.mubr.f32.gmra.mrb[0].mxu0 %v578
      %v1820 = vpop.f32.mrb[0].mxu0
      %v1821 = vadd.f32 0.0, %v1820
      %v1822 = vpop.f32.mrb[0].mxu0
      %v1823 = vadd.f32 0.0, %v1822
      %1824 = vmatprep.mubr.f32.mxu0 %v586
      %1825 = vmatmul.mubr.f32.gmra.mrb[0].mxu0 %v585
      %v1826 = vpop.f32.mrb[0].mxu0
      %v1827 = vadd.f32 0.0, %v1826
      %v1828 = vpop.f32.mrb[0].mxu0
      %v1829 = vadd.f32 0.0, %v1828
      %1830 = vmatprep.mubr.f32.mxu0 %v593
      %1831 = vmatmul.mubr.f32.gmra.mrb[0].mxu0 %v592
      %v1832 = vpop.f32.mrb[0].mxu0
      %v1833 = vadd.f32 0.0, %v1832
      %v1834 = vpop.f32.mrb[0].mxu0
      %v1835 = vadd.f32 0.0, %v1834
      %1836 = vdwg.mxu0
      %1837 = vmatprep.subr.mxu0 %v794
      %1838 = vmatpush1.msra.mxu0 %v793
      %1839 = vmatprep.subr.mxu0 %v800
      %1840 = vmatpush1.msra.mxu0 %v799
      %1841 = vmatprep.subr.mxu0 %v806
      %1842 = vmatpush1.msra.mxu0 %v805
      %1843 = vmatprep.subr.mxu0 %v812
      %1844 = vmatpush1.msra.mxu0 %v811
      %1845 = vmatprep.subr.mxu0 %v818
      %1846 = vmatpush1.msra.mxu0 %v817
      %1847 = vmatprep.subr.mxu0 %v824
      %1848 = vmatpush1.msra.mxu0 %v823
      %1849 = vmatprep.subr.mxu0 %v830
      %1850 = vmatpush1.msra.mxu0 %v829
      %1851 = vmatprep.subr.mxu0 %v836
      %1852 = vmatpush1.msra.mxu0 %v835
      %1853 = vmatprep.subr.mxu0 %v842
      %1854 = vmatpush1.msra.mxu0 %v841
      %1855 = vmatprep.subr.mxu0 %v848
      %1856 = vmatpush1.msra.mxu0 %v847
      %1857 = vmatprep.subr.mxu0 %v854
      %1858 = vmatpush1.msra.mxu0 %v853
      %1859 = vmatprep.subr.mxu0 %v860
      %1860 = vmatpush1.msra.mxu0 %v859
      %1861 = vmatprep.subr.mxu0 %v866
      %1862 = vmatpush1.msra.mxu0 %v865
      %1863 = vmatprep.subr.mxu0 %v872
      %1864 = vmatpush1.msra.mxu0 %v871
      %1865 = vmatprep.subr.mxu0 %v878
      %1866 = vmatpush1.msra.mxu0 %v877
      %1867 = vmatprep.subr.mxu0 %v884
      %1868 = vmatpush1.msra.mxu0 %v883
      %1869 = vmatprep.subr.mxu0 %v890
      %1870 = vmatpush1.msra.mxu0 %v889
      %1871 = vmatprep.subr.mxu0 %v896
      %1872 = vmatpush1.msra.mxu0 %v895
      %1873 = vmatprep.subr.mxu0 %v902
      %1874 = vmatpush1.msra.mxu0 %v901
      %1875 = vmatprep.subr.mxu0 %v908
      %1876 = vmatpush1.msra.mxu0 %v907
      %1877 = vmatprep.subr.mxu0 %v914
      %1878 = vmatpush1.msra.mxu0 %v913
      %1879 = vmatprep.subr.mxu0 %v920
      %1880 = vmatpush1.msra.mxu0 %v919
      %1881 = vmatprep.subr.mxu0 %v926
      %1882 = vmatpush1.msra.mxu0 %v925
      %1883 = vmatprep.subr.mxu0 %v932
      %1884 = vmatpush1.msra.mxu0 %v931
      %1885 = vmatprep.subr.mxu0 %v938
      %1886 = vmatpush1.msra.mxu0 %v937
      %1887 = vmatprep.subr.mxu0 %v944
      %1888 = vmatpush1.msra.mxu0 %v943
      %1889 = vmatprep.subr.mxu0 %v950
      %1890 = vmatpush1.msra.mxu0 %v949
      %1891 = vmatprep.subr.mxu0 %v956
      %1892 = vmatpush1.msra.mxu0 %v955
      %1893 = vmatprep.subr.mxu0 %v962
      %1894 = vmatpush1.msra.mxu0 %v961
      %1895 = vmatprep.subr.mxu0 %v968
      %1896 = vmatpush1.msra.mxu0 %v967
      %1897 = vmatprep.subr.mxu0 %v974
      %1898 = vmatpush1.msra.mxu0 %v973
      %1899 = vmatprep.subr.mxu0 %v980
      %1900 = vmatpush1.msra.mxu0 %v979
      %1901 = vmatprep.mubr.f32.mxu0 %v546
      %1902 = vmatmul.mubr.f32.gmra.mrb[0].mxu0 %v545
      %v1903 = vpop.f32.mrb[0].mxu0
      %v1904 = vadd.f32 %v1791, %v1903
      %v1905 = vpop.f32.mrb[0].mxu0
      %v1906 = vadd.f32 %v1793, %v1905
      %1907 = vmatprep.mubr.f32.mxu0 %v553
      %1908 = vmatmul.mubr.f32.gmra.mrb[0].mxu0 %v552
      %v1909 = vpop.f32.mrb[0].mxu0
      %v1910 = vadd.f32 %v1797, %v1909
      %v1911 = vpop.f32.mrb[0].mxu0
      %v1912 = vadd.f32 %v1799, %v1911
      %1913 = vmatprep.mubr.f32.mxu0 %v560
      %1914 = vmatmul.mubr.f32.gmra.mrb[0].mxu0 %v559
      %v1915 = vpop.f32.mrb[0].mxu0
      %v1916 = vadd.f32 %v1803, %v1915
      %v1917 = vpop.f32.mrb[0].mxu0
      %v1918 = vadd.f32 %v1805, %v1917
      %1919 = vmatprep.mubr.f32.mxu0 %v567
      %1920 = vmatmul.mubr.f32.gmra.mrb[0].mxu0 %v566
      %v1921 = vpop.f32.mrb[0].mxu0
      %v1922 = vadd.f32 %v1809, %v1921
      %v1923 = vpop.f32.mrb[0].mxu0
      %v1924 = vadd.f32 %v1811, %v1923
      %1925 = vmatprep.mubr.f32.mxu0 %v574
      %1926 = vmatmul.mubr.f32.gmra.mrb[0].mxu0 %v573
      %v1927 = vpop.f32.mrb[0].mxu0
      %v1928 = vadd.f32 %v1815, %v1927
      %v1929 = vpop.f32.mrb[0].mxu0
      %v1930 = vadd.f32 %v1817, %v1929
      %1931 = vmatprep.mubr.f32.mxu0 %v581
      %1932 = vmatmul.mubr.f32.gmra.mrb[0].mxu0 %v580
      %v1933 = vpop.f32.mrb[0].mxu0
      %v1934 = vadd.f32 %v1821, %v1933
      %v1935 = vpop.f32.mrb[0].mxu0
      %v1936 = vadd.f32 %v1823, %v1935
      %1937 = vmatprep.mubr.f32.mxu0 %v588
      %1938 = vmatmul.mubr.f32.gmra.mrb[0].mxu0 %v587
      %v1939 = vpop.f32.mrb[0].mxu0
      %v1940 = vadd.f32 %v1827, %v1939
      %v1941 = vpop.f32.mrb[0].mxu0
      %v1942 = vadd.f32 %v1829, %v1941
      %1943 = vmatprep.mubr.f32.mxu0 %v595
      %1944 = vmatmul.mubr.f32.gmra.mrb[0].mxu0 %v594
      %v1945 = vpop.f32.mrb[0].mxu0
      %v1946 = vadd.f32 %v1833, %v1945
      %v1947 = vpop.f32.mrb[0].mxu0
      %v1948 = vadd.f32 %v1835, %v1947
      %1949 = vdwg.mxu0
      %1950 = vmatprep.subr.mxu0 %v986
      %1951 = vmatpush1.msra.mxu0 %v985
      %1952 = vmatprep.subr.mxu0 %v992
      %1953 = vmatpush1.msra.mxu0 %v991
      %1954 = vmatprep.subr.mxu0 %v998
      %1955 = vmatpush1.msra.mxu0 %v997
      %1956 = vmatprep.subr.mxu0 %v1004
      %1957 = vmatpush1.msra.mxu0 %v1003
      %1958 = vmatprep.subr.mxu0 %v1010
      %1959 = vmatpush1.msra.mxu0 %v1009
      %1960 = vmatprep.subr.mxu0 %v1016
      %1961 = vmatpush1.msra.mxu0 %v1015
      %1962 = vmatprep.subr.mxu0 %v1022
      %1963 = vmatpush1.msra.mxu0 %v1021
      %1964 = vmatprep.subr.mxu0 %v1028
      %1965 = vmatpush1.msra.mxu0 %v1027
      %1966 = vmatprep.subr.mxu0 %v1034
      %1967 = vmatpush1.msra.mxu0 %v1033
      %1968 = vmatprep.subr.mxu0 %v1040
      %1969 = vmatpush1.msra.mxu0 %v1039
      %1970 = vmatprep.subr.mxu0 %v1046
      %1971 = vmatpush1.msra.mxu0 %v1045
      %1972 = vmatprep.subr.mxu0 %v1052
      %1973 = vmatpush1.msra.mxu0 %v1051
      %1974 = vmatprep.subr.mxu0 %v1058
      %1975 = vmatpush1.msra.mxu0 %v1057
      %1976 = vmatprep.subr.mxu0 %v1064
      %1977 = vmatpush1.msra.mxu0 %v1063
      %1978 = vmatprep.subr.mxu0 %v1070
      %1979 = vmatpush1.msra.mxu0 %v1069
      %1980 = vmatprep.subr.mxu0 %v1076
      %1981 = vmatpush1.msra.mxu0 %v1075
      %1982 = vmatprep.subr.mxu0 %v1082
      %1983 = vmatpush1.msra.mxu0 %v1081
      %1984 = vmatprep.subr.mxu0 %v1088
      %1985 = vmatpush1.msra.mxu0 %v1087
      %1986 = vmatprep.subr.mxu0 %v1094
      %1987 = vmatpush1.msra.mxu0 %v1093
      %1988 = vmatprep.subr.mxu0 %v1100
      %1989 = vmatpush1.msra.mxu0 %v1099
      %1990 = vmatprep.subr.mxu0 %v1106
      %1991 = vmatpush1.msra.mxu0 %v1105
      %1992 = vmatprep.subr.mxu0 %v1112
      %1993 = vmatpush1.msra.mxu0 %v1111
      %1994 = vmatprep.subr.mxu0 %v1118
      %1995 = vmatpush1.msra.mxu0 %v1117
      %1996 = vmatprep.subr.mxu0 %v1124
      %1997 = vmatpush1.msra.mxu0 %v1123
      %1998 = vmatprep.subr.mxu0 %v1130
      %1999 = vmatpush1.msra.mxu0 %v1129
      %2000 = vmatprep.subr.mxu0 %v1136
      %2001 = vmatpush1.msra.mxu0 %v1135
      %2002 = vmatprep.subr.mxu0 %v1142
      %2003 = vmatpush1.msra.mxu0 %v1141
      %2004 = vmatprep.subr.mxu0 %v1148
      %2005 = vmatpush1.msra.mxu0 %v1147
      %2006 = vmatprep.subr.mxu0 %v1154
      %2007 = vmatpush1.msra.mxu0 %v1153
      %2008 = vmatprep.subr.mxu0 %v1160
      %2009 = vmatpush1.msra.mxu0 %v1159
      %2010 = vmatprep.subr.mxu0 %v1166
      %2011 = vmatpush1.msra.mxu0 %v1165
      %2012 = vmatprep.subr.mxu0 %v1172
      %2013 = vmatpush1.msra.mxu0 %v1171
      %2014 = vmatprep.mubr.f32.mxu0 %v548
      %2015 = vmatmul.mubr.f32.gmra.mrb[0].mxu0 %v547
      %v2016 = vpop.f32.mrb[0].mxu0
      %v2017 = vadd.f32 %v1904, %v2016
      %v2018 = vpop.f32.mrb[0].mxu0
      %v2019 = vadd.f32 %v1906, %v2018
      %2020 = vmatprep.mubr.f32.mxu0 %v555
      %2021 = vmatmul.mubr.f32.gmra.mrb[0].mxu0 %v554
      %v2022 = vpop.f32.mrb[0].mxu0
      %v2023 = vadd.f32 %v1910, %v2022
      %v2024 = vpop.f32.mrb[0].mxu0
      %v2025 = vadd.f32 %v1912, %v2024
      %2026 = vmatprep.mubr.f32.mxu0 %v562
      %2027 = vmatmul.mubr.f32.gmra.mrb[0].mxu0 %v561
      %v2028 = vpop.f32.mrb[0].mxu0
      %v2029 = vadd.f32 %v1916, %v2028
      %v2030 = vpop.f32.mrb[0].mxu0
      %v2031 = vadd.f32 %v1918, %v2030
      %2032 = vmatprep.mubr.f32.mxu0 %v569
      %2033 = vmatmul.mubr.f32.gmra.mrb[0].mxu0 %v568
      %v2034 = vpop.f32.mrb[0].mxu0
      %v2035 = vadd.f32 %v1922, %v2034
      %v2036 = vpop.f32.mrb[0].mxu0
      %v2037 = vadd.f32 %v1924, %v2036
      %2038 = vmatprep.mubr.f32.mxu0 %v576
      %2039 = vmatmul.mubr.f32.gmra.mrb[0].mxu0 %v575
      %v2040 = vpop.f32.mrb[0].mxu0
      %v2041 = vadd.f32 %v1928, %v2040
      %v2042 = vpop.f32.mrb[0].mxu0
      %v2043 = vadd.f32 %v1930, %v2042
      %2044 = vmatprep.mubr.f32.mxu0 %v583
      %2045 = vmatmul.mubr.f32.gmra.mrb[0].mxu0 %v582
      %v2046 = vpop.f32.mrb[0].mxu0
      %v2047 = vadd.f32 %v1934, %v2046
      %v2048 = vpop.f32.mrb[0].mxu0
      %v2049 = vadd.f32 %v1936, %v2048
      %2050 = vmatprep.mubr.f32.mxu0 %v590
      %2051 = vmatmul.mubr.f32.gmra.mrb[0].mxu0 %v589
      %v2052 = vpop.f32.mrb[0].mxu0
      %v2053 = vadd.f32 %v1940, %v2052
      %v2054 = vpop.f32.mrb[0].mxu0
      %v2055 = vadd.f32 %v1942, %v2054
      %2056 = vmatprep.mubr.f32.mxu0 %v597
      %2057 = vmatmul.mubr.f32.gmra.mrb[0].mxu0 %v596
      %v2058 = vpop.f32.mrb[0].mxu0
      %v2059 = vadd.f32 %v1946, %v2058
      %v2060 = vpop.f32.mrb[0].mxu0
      %v2061 = vadd.f32 %v1948, %v2060
      %2062 = vdwg.mxu0
      %2063 = vmatprep.subr.mxu0 %v1178
      %2064 = vmatpush1.msra.mxu0 %v1177
      %2065 = vmatprep.subr.mxu0 %v1184
      %2066 = vmatpush1.msra.mxu0 %v1183
      %2067 = vmatprep.subr.mxu0 %v1190
      %2068 = vmatpush1.msra.mxu0 %v1189
      %2069 = vmatprep.subr.mxu0 %v1196
      %2070 = vmatpush1.msra.mxu0 %v1195
      %2071 = vmatprep.subr.mxu0 %v1202
      %2072 = vmatpush1.msra.mxu0 %v1201
      %2073 = vmatprep.subr.mxu0 %v1208
      %2074 = vmatpush1.msra.mxu0 %v1207
      %2075 = vmatprep.subr.mxu0 %v1214
      %2076 = vmatpush1.msra.mxu0 %v1213
      %2077 = vmatprep.subr.mxu0 %v1220
      %2078 = vmatpush1.msra.mxu0 %v1219
      %2079 = vmatprep.subr.mxu0 %v1226
      %2080 = vmatpush1.msra.mxu0 %v1225
      %2081 = vmatprep.subr.mxu0 %v1232
      %2082 = vmatpush1.msra.mxu0 %v1231
      %2083 = vmatprep.subr.mxu0 %v1238
      %2084 = vmatpush1.msra.mxu0 %v1237
      %2085 = vmatprep.subr.mxu0 %v1244
      %2086 = vmatpush1.msra.mxu0 %v1243
      %2087 = vmatprep.subr.mxu0 0.0
      %2088 = vmatpush1.msra.mxu0 0.0
      %2089 = vmatprep.subr.mxu0 0.0
      %2090 = vmatpush1.msra.mxu0 0.0
      %2091 = vmatprep.subr.mxu0 0.0
      %2092 = vmatpush1.msra.mxu0 0.0
      %2093 = vmatprep.subr.mxu0 0.0
      %2094 = vmatpush1.msra.mxu0 0.0
      %2095 = vmatprep.subr.mxu0 0.0
      %2096 = vmatpush1.msra.mxu0 0.0
      %2097 = vmatprep.subr.mxu0 0.0
      %2098 = vmatpush1.msra.mxu0 0.0
      %2099 = vmatprep.subr.mxu0 0.0
      %2100 = vmatpush1.msra.mxu0 0.0
      %2101 = vmatprep.subr.mxu0 0.0
      %2102 = vmatpush1.msra.mxu0 0.0
      %2103 = vmatprep.subr.mxu0 0.0
      %2104 = vmatpush1.msra.mxu0 0.0
      %2105 = vmatprep.subr.mxu0 0.0
      %2106 = vmatpush1.msra.mxu0 0.0
      %2107 = vmatprep.subr.mxu0 0.0
      %2108 = vmatpush1.msra.mxu0 0.0
      %2109 = vmatprep.subr.mxu0 0.0
      %2110 = vmatpush1.msra.mxu0 0.0
      %2111 = vmatprep.subr.mxu0 0.0
      %2112 = vmatpush1.msra.mxu0 0.0
      %2113 = vmatprep.subr.mxu0 0.0
      %2114 = vmatpush1.msra.mxu0 0.0
      %2115 = vmatprep.subr.mxu0 0.0
      %2116 = vmatpush1.msra.mxu0 0.0
      %2117 = vmatprep.subr.mxu0 0.0
      %2118 = vmatpush1.msra.mxu0 0.0
      %2119 = vmatprep.subr.mxu0 0.0
      %2120 = vmatpush1.msra.mxu0 0.0
      %2121 = vmatprep.subr.mxu0 0.0
      %2122 = vmatpush1.msra.mxu0 0.0
      %2123 = vmatprep.subr.mxu0 0.0
      %2124 = vmatpush1.msra.mxu0 0.0
      %2125 = vmatprep.subr.mxu0 0.0
      %2126 = vmatpush1.msra.mxu0 0.0
      %2127 = vmatprep.mubr.f32.mxu0 0.0
      %2128 = vmatmul.mubr.f32.gmra.mrb[0].mxu0 %v1249
      %v2129 = vpop.f32.mrb[0].mxu0
      %v2130 = vadd.f32 %v2017, %v2129
      %v2131 = vpop.f32.mrb[0].mxu0
      %v2132 = vadd.f32 %v2019, %v2131
      %2133 = vmatprep.mubr.f32.mxu0 0.0
      %2134 = vmatmul.mubr.f32.gmra.mrb[0].mxu0 %v1252
      %v2135 = vpop.f32.mrb[0].mxu0
      %v2136 = vadd.f32 %v2023, %v2135
      %v2137 = vpop.f32.mrb[0].mxu0
      %v2138 = vadd.f32 %v2025, %v2137
      %2139 = vmatprep.mubr.f32.mxu0 0.0
      %2140 = vmatmul.mubr.f32.gmra.mrb[0].mxu0 %v1255
      %v2141 = vpop.f32.mrb[0].mxu0
      %v2142 = vadd.f32 %v2029, %v2141
      %v2143 = vpop.f32.mrb[0].mxu0
      %v2144 = vadd.f32 %v2031, %v2143
      %2145 = vmatprep.mubr.f32.mxu0 0.0
      %2146 = vmatmul.mubr.f32.gmra.mrb[0].mxu0 %v1258
      %v2147 = vpop.f32.mrb[0].mxu0
      %v2148 = vadd.f32 %v2035, %v2147
      %v2149 = vpop.f32.mrb[0].mxu0
      %v2150 = vadd.f32 %v2037, %v2149
      %2151 = vmatprep.mubr.f32.mxu0 0.0
      %2152 = vmatmul.mubr.f32.gmra.mrb[0].mxu0 %v1261
      %v2153 = vpop.f32.mrb[0].mxu0
      %v2154 = vadd.f32 %v2041, %v2153
      %v2155 = vpop.f32.mrb[0].mxu0
      %v2156 = vadd.f32 %v2043, %v2155
      %2157 = vmatprep.mubr.f32.mxu0 0.0
      %2158 = vmatmul.mubr.f32.gmra.mrb[0].mxu0 %v1264
      %v2159 = vpop.f32.mrb[0].mxu0
      %v2160 = vadd.f32 %v2047, %v2159
      %v2161 = vpop.f32.mrb[0].mxu0
      %v2162 = vadd.f32 %v2049, %v2161
      %2163 = vmatprep.mubr.f32.mxu0 0.0
      %2164 = vmatmul.mubr.f32.gmra.mrb[0].mxu0 %v1267
      %v2165 = vpop.f32.mrb[0].mxu0
      %v2166 = vadd.f32 %v2053, %v2165
      %v2167 = vpop.f32.mrb[0].mxu0
      %v2168 = vadd.f32 %v2055, %v2167
      %2169 = vmatprep.mubr.f32.mxu0 0.0
      %2170 = vmatmul.mubr.f32.gmra.mrb[0].mxu0 %v1270
      %v2171 = vpop.f32.mrb[0].mxu0
      %v2172 = vadd.f32 %v2059, %v2171
      %v2173 = vpop.f32.mrb[0].mxu0
      %v2174 = vadd.f32 %v2061, %v2173
      %2175 = vdwg.mxu0
      %2176 = vmatprep.subr.mxu0 %v604
      %2177 = vmatpush1.msra.mxu0 %v603
      %2178 = vmatprep.subr.mxu0 %v610
      %2179 = vmatpush1.msra.mxu0 %v609
      %2180 = vmatprep.subr.mxu0 %v616
      %2181 = vmatpush1.msra.mxu0 %v615
      %2182 = vmatprep.subr.mxu0 %v622
      %2183 = vmatpush1.msra.mxu0 %v621
      %2184 = vmatprep.subr.mxu0 %v628
      %2185 = vmatpush1.msra.mxu0 %v627
      %2186 = vmatprep.subr.mxu0 %v634
      %2187 = vmatpush1.msra.mxu0 %v633
      %2188 = vmatprep.subr.mxu0 %v640
      %2189 = vmatpush1.msra.mxu0 %v639
      %2190 = vmatprep.subr.mxu0 %v646
      %2191 = vmatpush1.msra.mxu0 %v645
      %2192 = vmatprep.subr.mxu0 %v652
      %2193 = vmatpush1.msra.mxu0 %v651
      %2194 = vmatprep.subr.mxu0 %v658
      %2195 = vmatpush1.msra.mxu0 %v657
      %2196 = vmatprep.subr.mxu0 %v664
      %2197 = vmatpush1.msra.mxu0 %v663
      %2198 = vmatprep.subr.mxu0 %v670
      %2199 = vmatpush1.msra.mxu0 %v669
      %2200 = vmatprep.subr.mxu0 %v676
      %2201 = vmatpush1.msra.mxu0 %v675
      %2202 = vmatprep.subr.mxu0 %v682
      %2203 = vmatpush1.msra.mxu0 %v681
      %2204 = vmatprep.subr.mxu0 %v688
      %2205 = vmatpush1.msra.mxu0 %v687
      %2206 = vmatprep.subr.mxu0 %v694
      %2207 = vmatpush1.msra.mxu0 %v693
      %2208 = vmatprep.subr.mxu0 %v700
      %2209 = vmatpush1.msra.mxu0 %v699
      %2210 = vmatprep.subr.mxu0 %v706
      %2211 = vmatpush1.msra.mxu0 %v705
      %2212 = vmatprep.subr.mxu0 %v712
      %2213 = vmatpush1.msra.mxu0 %v711
      %2214 = vmatprep.subr.mxu0 %v718
      %2215 = vmatpush1.msra.mxu0 %v717
      %2216 = vmatprep.subr.mxu0 %v724
      %2217 = vmatpush1.msra.mxu0 %v723
      %2218 = vmatprep.subr.mxu0 %v730
      %2219 = vmatpush1.msra.mxu0 %v729
      %2220 = vmatprep.subr.mxu0 %v736
      %2221 = vmatpush1.msra.mxu0 %v735
      %2222 = vmatprep.subr.mxu0 %v742
      %2223 = vmatpush1.msra.mxu0 %v741
      %2224 = vmatprep.subr.mxu0 %v748
      %2225 = vmatpush1.msra.mxu0 %v747
      %2226 = vmatprep.subr.mxu0 %v754
      %2227 = vmatpush1.msra.mxu0 %v753
      %2228 = vmatprep.subr.mxu0 %v760
      %2229 = vmatpush1.msra.mxu0 %v759
      %2230 = vmatprep.subr.mxu0 %v766
      %2231 = vmatpush1.msra.mxu0 %v765
      %2232 = vmatprep.subr.mxu0 %v772
      %2233 = vmatpush1.msra.mxu0 %v771
      %2234 = vmatprep.subr.mxu0 %v778
      %2235 = vmatpush1.msra.mxu0 %v777
      %2236 = vmatprep.subr.mxu0 %v784
      %2237 = vmatpush1.msra.mxu0 %v783
      %2238 = vmatprep.subr.mxu0 %v790
      %2239 = vmatpush1.msra.mxu0 %v789
      %2240 = vmatprep.mubr.f32.mxu0 %v544
      %2241 = vmatmul.mubr.f32.gmra.mrb[0].mxu0 %v543
      %v2242 = vpop.f32.mrb[0].mxu0
      %v2243 = vadd.f32 0.0, %v2242
      %v2244 = vpop.f32.mrb[0].mxu0
      %v2245 = vadd.f32 0.0, %v2244
      %2246 = vmatprep.mubr.f32.mxu0 %v551
      %2247 = vmatmul.mubr.f32.gmra.mrb[0].mxu0 %v550
      %v2248 = vpop.f32.mrb[0].mxu0
      %v2249 = vadd.f32 0.0, %v2248
      %v2250 = vpop.f32.mrb[0].mxu0
      %v2251 = vadd.f32 0.0, %v2250
      %2252 = vmatprep.mubr.f32.mxu0 %v558
      %2253 = vmatmul.mubr.f32.gmra.mrb[0].mxu0 %v557
      %v2254 = vpop.f32.mrb[0].mxu0
      %v2255 = vadd.f32 0.0, %v2254
      %v2256 = vpop.f32.mrb[0].mxu0
      %v2257 = vadd.f32 0.0, %v2256
      %2258 = vmatprep.mubr.f32.mxu0 %v565
      %2259 = vmatmul.mubr.f32.gmra.mrb[0].mxu0 %v564
      %v2260 = vpop.f32.mrb[0].mxu0
      %v2261 = vadd.f32 0.0, %v2260
      %v2262 = vpop.f32.mrb[0].mxu0
      %v2263 = vadd.f32 0.0, %v2262
      %2264 = vmatprep.mubr.f32.mxu0 %v572
      %2265 = vmatmul.mubr.f32.gmra.mrb[0].mxu0 %v571
      %v2266 = vpop.f32.mrb[0].mxu0
      %v2267 = vadd.f32 0.0, %v2266
      %v2268 = vpop.f32.mrb[0].mxu0
      %v2269 = vadd.f32 0.0, %v2268
      %2270 = vmatprep.mubr.f32.mxu0 %v579
      %2271 = vmatmul.mubr.f32.gmra.mrb[0].mxu0 %v578
      %v2272 = vpop.f32.mrb[0].mxu0
      %v2273 = vadd.f32 0.0, %v2272
      %v2274 = vpop.f32.mrb[0].mxu0
      %v2275 = vadd.f32 0.0, %v2274
      %2276 = vmatprep.mubr.f32.mxu0 %v586
      %2277 = vmatmul.mubr.f32.gmra.mrb[0].mxu0 %v585
      %v2278 = vpop.f32.mrb[0].mxu0
      %v2279 = vadd.f32 0.0, %v2278
      %v2280 = vpop.f32.mrb[0].mxu0
      %v2281 = vadd.f32 0.0, %v2280
      %2282 = vmatprep.mubr.f32.mxu0 %v593
      %2283 = vmatmul.mubr.f32.gmra.mrb[0].mxu0 %v592
      %v2284 = vpop.f32.mrb[0].mxu0
      %v2285 = vadd.f32 0.0, %v2284
      %v2286 = vpop.f32.mrb[0].mxu0
      %v2287 = vadd.f32 0.0, %v2286
      %2288 = vdwg.mxu0
      %2289 = vmatprep.subr.mxu0 %v796
      %2290 = vmatpush1.msra.mxu0 %v795
      %2291 = vmatprep.subr.mxu0 %v802
      %2292 = vmatpush1.msra.mxu0 %v801
      %2293 = vmatprep.subr.mxu0 %v808
      %2294 = vmatpush1.msra.mxu0 %v807
      %2295 = vmatprep.subr.mxu0 %v814
      %2296 = vmatpush1.msra.mxu0 %v813
      %2297 = vmatprep.subr.mxu0 %v820
      %2298 = vmatpush1.msra.mxu0 %v819
      %2299 = vmatprep.subr.mxu0 %v826
      %2300 = vmatpush1.msra.mxu0 %v825
      %2301 = vmatprep.subr.mxu0 %v832
      %2302 = vmatpush1.msra.mxu0 %v831
      %2303 = vmatprep.subr.mxu0 %v838
      %2304 = vmatpush1.msra.mxu0 %v837
      %2305 = vmatprep.subr.mxu0 %v844
      %2306 = vmatpush1.msra.mxu0 %v843
      %2307 = vmatprep.subr.mxu0 %v850
      %2308 = vmatpush1.msra.mxu0 %v849
      %2309 = vmatprep.subr.mxu0 %v856
      %2310 = vmatpush1.msra.mxu0 %v855
      %2311 = vmatprep.subr.mxu0 %v862
      %2312 = vmatpush1.msra.mxu0 %v861
      %2313 = vmatprep.subr.mxu0 %v868
      %2314 = vmatpush1.msra.mxu0 %v867
      %2315 = vmatprep.subr.mxu0 %v874
      %2316 = vmatpush1.msra.mxu0 %v873
      %2317 = vmatprep.subr.mxu0 %v880
      %2318 = vmatpush1.msra.mxu0 %v879
      %2319 = vmatprep.subr.mxu0 %v886
      %2320 = vmatpush1.msra.mxu0 %v885
      %2321 = vmatprep.subr.mxu0 %v892
      %2322 = vmatpush1.msra.mxu0 %v891
      %2323 = vmatprep.subr.mxu0 %v898
      %2324 = vmatpush1.msra.mxu0 %v897
      %2325 = vmatprep.subr.mxu0 %v904
      %2326 = vmatpush1.msra.mxu0 %v903
      %2327 = vmatprep.subr.mxu0 %v910
      %2328 = vmatpush1.msra.mxu0 %v909
      %2329 = vmatprep.subr.mxu0 %v916
      %2330 = vmatpush1.msra.mxu0 %v915
      %2331 = vmatprep.subr.mxu0 %v922
      %2332 = vmatpush1.msra.mxu0 %v921
      %2333 = vmatprep.subr.mxu0 %v928
      %2334 = vmatpush1.msra.mxu0 %v927
      %2335 = vmatprep.subr.mxu0 %v934
      %2336 = vmatpush1.msra.mxu0 %v933
      %2337 = vmatprep.subr.mxu0 %v940
      %2338 = vmatpush1.msra.mxu0 %v939
      %2339 = vmatprep.subr.mxu0 %v946
      %2340 = vmatpush1.msra.mxu0 %v945
      %2341 = vmatprep.subr.mxu0 %v952
      %2342 = vmatpush1.msra.mxu0 %v951
      %2343 = vmatprep.subr.mxu0 %v958
      %2344 = vmatpush1.msra.mxu0 %v957
      %2345 = vmatprep.subr.mxu0 %v964
      %2346 = vmatpush1.msra.mxu0 %v963
      %2347 = vmatprep.subr.mxu0 %v970
      %2348 = vmatpush1.msra.mxu0 %v969
      %2349 = vmatprep.subr.mxu0 %v976
      %2350 = vmatpush1.msra.mxu0 %v975
      %2351 = vmatprep.subr.mxu0 %v982
      %2352 = vmatpush1.msra.mxu0 %v981
      %2353 = vmatprep.mubr.f32.mxu0 %v546
      %2354 = vmatmul.mubr.f32.gmra.mrb[0].mxu0 %v545
      %v2355 = vpop.f32.mrb[0].mxu0
      %v2356 = vadd.f32 %v2243, %v2355
      %v2357 = vpop.f32.mrb[0].mxu0
      %v2358 = vadd.f32 %v2245, %v2357
      %2359 = vmatprep.mubr.f32.mxu0 %v553
      %2360 = vmatmul.mubr.f32.gmra.mrb[0].mxu0 %v552
      %v2361 = vpop.f32.mrb[0].mxu0
      %v2362 = vadd.f32 %v2249, %v2361
      %v2363 = vpop.f32.mrb[0].mxu0
      %v2364 = vadd.f32 %v2251, %v2363
      %2365 = vmatprep.mubr.f32.mxu0 %v560
      %2366 = vmatmul.mubr.f32.gmra.mrb[0].mxu0 %v559
      %v2367 = vpop.f32.mrb[0].mxu0
      %v2368 = vadd.f32 %v2255, %v2367
      %v2369 = vpop.f32.mrb[0].mxu0
      %v2370 = vadd.f32 %v2257, %v2369
      %2371 = vmatprep.mubr.f32.mxu0 %v567
      %2372 = vmatmul.mubr.f32.gmra.mrb[0].mxu0 %v566
      %v2373 = vpop.f32.mrb[0].mxu0
      %v2374 = vadd.f32 %v2261, %v2373
      %v2375 = vpop.f32.mrb[0].mxu0
      %v2376 = vadd.f32 %v2263, %v2375
      %2377 = vmatprep.mubr.f32.mxu0 %v574
      %2378 = vmatmul.mubr.f32.gmra.mrb[0].mxu0 %v573
      %v2379 = vpop.f32.mrb[0].mxu0
      %v2380 = vadd.f32 %v2267, %v2379
      %v2381 = vpop.f32.mrb[0].mxu0
      %v2382 = vadd.f32 %v2269, %v2381
      %2383 = vmatprep.mubr.f32.mxu0 %v581
      %2384 = vmatmul.mubr.f32.gmra.mrb[0].mxu0 %v580
      %v2385 = vpop.f32.mrb[0].mxu0
      %v2386 = vadd.f32 %v2273, %v2385
      %v2387 = vpop.f32.mrb[0].mxu0
      %v2388 = vadd.f32 %v2275, %v2387
      %2389 = vmatprep.mubr.f32.mxu0 %v588
      %2390 = vmatmul.mubr.f32.gmra.mrb[0].mxu0 %v587
      %v2391 = vpop.f32.mrb[0].mxu0
      %v2392 = vadd.f32 %v2279, %v2391
      %v2393 = vpop.f32.mrb[0].mxu0
      %v2394 = vadd.f32 %v2281, %v2393
      %2395 = vmatprep.mubr.f32.mxu0 %v595
      %2396 = vmatmul.mubr.f32.gmra.mrb[0].mxu0 %v594
      %v2397 = vpop.f32.mrb[0].mxu0
      %v2398 = vadd.f32 %v2285, %v2397
      %v2399 = vpop.f32.mrb[0].mxu0
      %v2400 = vadd.f32 %v2287, %v2399
      %2401 = vdwg.mxu0
      %2402 = vmatprep.subr.mxu0 %v988
      %2403 = vmatpush1.msra.mxu0 %v987
      %2404 = vmatprep.subr.mxu0 %v994
      %2405 = vmatpush1.msra.mxu0 %v993
      %2406 = vmatprep.subr.mxu0 %v1000
      %2407 = vmatpush1.msra.mxu0 %v999
      %2408 = vmatprep.subr.mxu0 %v1006
      %2409 = vmatpush1.msra.mxu0 %v1005
      %2410 = vmatprep.subr.mxu0 %v1012
      %2411 = vmatpush1.msra.mxu0 %v1011
      %2412 = vmatprep.subr.mxu0 %v1018
      %2413 = vmatpush1.msra.mxu0 %v1017
      %2414 = vmatprep.subr.mxu0 %v1024
      %2415 = vmatpush1.msra.mxu0 %v1023
      %2416 = vmatprep.subr.mxu0 %v1030
      %2417 = vmatpush1.msra.mxu0 %v1029
      %2418 = vmatprep.subr.mxu0 %v1036
      %2419 = vmatpush1.msra.mxu0 %v1035
      %2420 = vmatprep.subr.mxu0 %v1042
      %2421 = vmatpush1.msra.mxu0 %v1041
      %2422 = vmatprep.subr.mxu0 %v1048
      %2423 = vmatpush1.msra.mxu0 %v1047
      %2424 = vmatprep.subr.mxu0 %v1054
      %2425 = vmatpush1.msra.mxu0 %v1053
      %2426 = vmatprep.subr.mxu0 %v1060
      %2427 = vmatpush1.msra.mxu0 %v1059
      %2428 = vmatprep.subr.mxu0 %v1066
      %2429 = vmatpush1.msra.mxu0 %v1065
      %2430 = vmatprep.subr.mxu0 %v1072
      %2431 = vmatpush1.msra.mxu0 %v1071
      %2432 = vmatprep.subr.mxu0 %v1078
      %2433 = vmatpush1.msra.mxu0 %v1077
      %2434 = vmatprep.subr.mxu0 %v1084
      %2435 = vmatpush1.msra.mxu0 %v1083
      %2436 = vmatprep.subr.mxu0 %v1090
      %2437 = vmatpush1.msra.mxu0 %v1089
      %2438 = vmatprep.subr.mxu0 %v1096
      %2439 = vmatpush1.msra.mxu0 %v1095
      %2440 = vmatprep.subr.mxu0 %v1102
      %2441 = vmatpush1.msra.mxu0 %v1101
      %2442 = vmatprep.subr.mxu0 %v1108
      %2443 = vmatpush1.msra.mxu0 %v1107
      %2444 = vmatprep.subr.mxu0 %v1114
      %2445 = vmatpush1.msra.mxu0 %v1113
      %2446 = vmatprep.subr.mxu0 %v1120
      %2447 = vmatpush1.msra.mxu0 %v1119
      %2448 = vmatprep.subr.mxu0 %v1126
      %2449 = vmatpush1.msra.mxu0 %v1125
      %2450 = vmatprep.subr.mxu0 %v1132
      %2451 = vmatpush1.msra.mxu0 %v1131
      %2452 = vmatprep.subr.mxu0 %v1138
      %2453 = vmatpush1.msra.mxu0 %v1137
      %2454 = vmatprep.subr.mxu0 %v1144
      %2455 = vmatpush1.msra.mxu0 %v1143
      %2456 = vmatprep.subr.mxu0 %v1150
      %2457 = vmatpush1.msra.mxu0 %v1149
      %2458 = vmatprep.subr.mxu0 %v1156
      %2459 = vmatpush1.msra.mxu0 %v1155
      %2460 = vmatprep.subr.mxu0 %v1162
      %2461 = vmatpush1.msra.mxu0 %v1161
      %2462 = vmatprep.subr.mxu0 %v1168
      %2463 = vmatpush1.msra.mxu0 %v1167
      %2464 = vmatprep.subr.mxu0 %v1174
      %2465 = vmatpush1.msra.mxu0 %v1173
      %2466 = vmatprep.mubr.f32.mxu0 %v548
      %2467 = vmatmul.mubr.f32.gmra.mrb[0].mxu0 %v547
      %v2468 = vpop.f32.mrb[0].mxu0
      %v2469 = vadd.f32 %v2356, %v2468
      %v2470 = vpop.f32.mrb[0].mxu0
      %v2471 = vadd.f32 %v2358, %v2470
      %2472 = vmatprep.mubr.f32.mxu0 %v555
      %2473 = vmatmul.mubr.f32.gmra.mrb[0].mxu0 %v554
      %v2474 = vpop.f32.mrb[0].mxu0
      %v2475 = vadd.f32 %v2362, %v2474
      %v2476 = vpop.f32.mrb[0].mxu0
      %v2477 = vadd.f32 %v2364, %v2476
      %2478 = vmatprep.mubr.f32.mxu0 %v562
      %2479 = vmatmul.mubr.f32.gmra.mrb[0].mxu0 %v561
      %v2480 = vpop.f32.mrb[0].mxu0
      %v2481 = vadd.f32 %v2368, %v2480
      %v2482 = vpop.f32.mrb[0].mxu0
      %v2483 = vadd.f32 %v2370, %v2482
      %2484 = vmatprep.mubr.f32.mxu0 %v569
      %2485 = vmatmul.mubr.f32.gmra.mrb[0].mxu0 %v568
      %v2486 = vpop.f32.mrb[0].mxu0
      %v2487 = vadd.f32 %v2374, %v2486
      %v2488 = vpop.f32.mrb[0].mxu0
      %v2489 = vadd.f32 %v2376, %v2488
      %2490 = vmatprep.mubr.f32.mxu0 %v576
      %2491 = vmatmul.mubr.f32.gmra.mrb[0].mxu0 %v575
      %v2492 = vpop.f32.mrb[0].mxu0
      %v2493 = vadd.f32 %v2380, %v2492
      %v2494 = vpop.f32.mrb[0].mxu0
      %v2495 = vadd.f32 %v2382, %v2494
      %2496 = vmatprep.mubr.f32.mxu0 %v583
      %2497 = vmatmul.mubr.f32.gmra.mrb[0].mxu0 %v582
      %v2498 = vpop.f32.mrb[0].mxu0
      %v2499 = vadd.f32 %v2386, %v2498
      %v2500 = vpop.f32.mrb[0].mxu0
      %v2501 = vadd.f32 %v2388, %v2500
      %2502 = vmatprep.mubr.f32.mxu0 %v590
      %2503 = vmatmul.mubr.f32.gmra.mrb[0].mxu0 %v589
      %v2504 = vpop.f32.mrb[0].mxu0
      %v2505 = vadd.f32 %v2392, %v2504
      %v2506 = vpop.f32.mrb[0].mxu0
      %v2507 = vadd.f32 %v2394, %v2506
      %2508 = vmatprep.mubr.f32.mxu0 %v597
      %2509 = vmatmul.mubr.f32.gmra.mrb[0].mxu0 %v596
      %v2510 = vpop.f32.mrb[0].mxu0
      %v2511 = vadd.f32 %v2398, %v2510
      %v2512 = vpop.f32.mrb[0].mxu0
      %v2513 = vadd.f32 %v2400, %v2512
      %2514 = vdwg.mxu0
      %2515 = vmatprep.subr.mxu0 %v1180
      %2516 = vmatpush1.msra.mxu0 %v1179
      %2517 = vmatprep.subr.mxu0 %v1186
      %2518 = vmatpush1.msra.mxu0 %v1185
      %2519 = vmatprep.subr.mxu0 %v1192
      %2520 = vmatpush1.msra.mxu0 %v1191
      %2521 = vmatprep.subr.mxu0 %v1198
      %2522 = vmatpush1.msra.mxu0 %v1197
      %2523 = vmatprep.subr.mxu0 %v1204
      %2524 = vmatpush1.msra.mxu0 %v1203
      %2525 = vmatprep.subr.mxu0 %v1210
      %2526 = vmatpush1.msra.mxu0 %v1209
      %2527 = vmatprep.subr.mxu0 %v1216
      %2528 = vmatpush1.msra.mxu0 %v1215
      %2529 = vmatprep.subr.mxu0 %v1222
      %2530 = vmatpush1.msra.mxu0 %v1221
      %2531 = vmatprep.subr.mxu0 %v1228
      %2532 = vmatpush1.msra.mxu0 %v1227
      %2533 = vmatprep.subr.mxu0 %v1234
      %2534 = vmatpush1.msra.mxu0 %v1233
      %2535 = vmatprep.subr.mxu0 %v1240
      %2536 = vmatpush1.msra.mxu0 %v1239
      %2537 = vmatprep.subr.mxu0 %v1246
      %2538 = vmatpush1.msra.mxu0 %v1245
      %2539 = vmatprep.subr.mxu0 0.0
      %2540 = vmatpush1.msra.mxu0 0.0
      %2541 = vmatprep.subr.mxu0 0.0
      %2542 = vmatpush1.msra.mxu0 0.0
      %2543 = vmatprep.subr.mxu0 0.0
      %2544 = vmatpush1.msra.mxu0 0.0
      %2545 = vmatprep.subr.mxu0 0.0
      %2546 = vmatpush1.msra.mxu0 0.0
      %2547 = vmatprep.subr.mxu0 0.0
      %2548 = vmatpush1.msra.mxu0 0.0
      %2549 = vmatprep.subr.mxu0 0.0
      %2550 = vmatpush1.msra.mxu0 0.0
      %2551 = vmatprep.subr.mxu0 0.0
      %2552 = vmatpush1.msra.mxu0 0.0
      %2553 = vmatprep.subr.mxu0 0.0
      %2554 = vmatpush1.msra.mxu0 0.0
      %2555 = vmatprep.subr.mxu0 0.0
      %2556 = vmatpush1.msra.mxu0 0.0
      %2557 = vmatprep.subr.mxu0 0.0
      %2558 = vmatpush1.msra.mxu0 0.0
      %2559 = vmatprep.subr.mxu0 0.0
      %2560 = vmatpush1.msra.mxu0 0.0
      %2561 = vmatprep.subr.mxu0 0.0
      %2562 = vmatpush1.msra.mxu0 0.0
      %2563 = vmatprep.subr.mxu0 0.0
      %2564 = vmatpush1.msra.mxu0 0.0
      %2565 = vmatprep.subr.mxu0 0.0
      %2566 = vmatpush1.msra.mxu0 0.0
      %2567 = vmatprep.subr.mxu0 0.0
      %2568 = vmatpush1.msra.mxu0 0.0
      %2569 = vmatprep.subr.mxu0 0.0
      %2570 = vmatpush1.msra.mxu0 0.0
      %2571 = vmatprep.subr.mxu0 0.0
      %2572 = vmatpush1.msra.mxu0 0.0
      %2573 = vmatprep.subr.mxu0 0.0
      %2574 = vmatpush1.msra.mxu0 0.0
      %2575 = vmatprep.subr.mxu0 0.0
      %2576 = vmatpush1.msra.mxu0 0.0
      %2577 = vmatprep.subr.mxu0 0.0
      %2578 = vmatpush1.msra.mxu0 0.0
      %2579 = vmatprep.mubr.f32.mxu0 0.0
      %2580 = vmatmul.mubr.f32.gmra.mrb[0].mxu0 %v1249
      %v2581 = vpop.f32.mrb[0].mxu0
      %v2582 = vadd.f32 %v2469, %v2581
      %v2583 = vpop.f32.mrb[0].mxu0
      %v2584 = vadd.f32 %v2471, %v2583
      %2585 = vmatprep.mubr.f32.mxu0 0.0
      %2586 = vmatmul.mubr.f32.gmra.mrb[0].mxu0 %v1252
      %v2587 = vpop.f32.mrb[0].mxu0
      %v2588 = vadd.f32 %v2475, %v2587
      %v2589 = vpop.f32.mrb[0].mxu0
      %v2590 = vadd.f32 %v2477, %v2589
      %2591 = vmatprep.mubr.f32.mxu0 0.0
      %2592 = vmatmul.mubr.f32.gmra.mrb[0].mxu0 %v1255
      %v2593 = vpop.f32.mrb[0].mxu0
      %v2594 = vadd.f32 %v2481, %v2593
      %v2595 = vpop.f32.mrb[0].mxu0
      %v2596 = vadd.f32 %v2483, %v2595
      %2597 = vmatprep.mubr.f32.mxu0 0.0
      %2598 = vmatmul.mubr.f32.gmra.mrb[0].mxu0 %v1258
      %v2599 = vpop.f32.mrb[0].mxu0
      %v2600 = vadd.f32 %v2487, %v2599
      %v2601 = vpop.f32.mrb[0].mxu0
      %v2602 = vadd.f32 %v2489, %v2601
      %2603 = vmatprep.mubr.f32.mxu0 0.0
      %2604 = vmatmul.mubr.f32.gmra.mrb[0].mxu0 %v1261
      %v2605 = vpop.f32.mrb[0].mxu0
      %v2606 = vadd.f32 %v2493, %v2605
      %v2607 = vpop.f32.mrb[0].mxu0
      %v2608 = vadd.f32 %v2495, %v2607
      %2609 = vmatprep.mubr.f32.mxu0 0.0
      %2610 = vmatmul.mubr.f32.gmra.mrb[0].mxu0 %v1264
      %v2611 = vpop.f32.mrb[0].mxu0
      %v2612 = vadd.f32 %v2499, %v2611
      %v2613 = vpop.f32.mrb[0].mxu0
      %v2614 = vadd.f32 %v2501, %v2613
      %2615 = vmatprep.mubr.f32.mxu0 0.0
      %2616 = vmatmul.mubr.f32.gmra.mrb[0].mxu0 %v1267
      %v2617 = vpop.f32.mrb[0].mxu0
      %v2618 = vadd.f32 %v2505, %v2617
      %v2619 = vpop.f32.mrb[0].mxu0
      %v2620 = vadd.f32 %v2507, %v2619
      %2621 = vmatprep.mubr.f32.mxu0 0.0
      %2622 = vmatmul.mubr.f32.gmra.mrb[0].mxu0 %v1270
      %v2623 = vpop.f32.mrb[0].mxu0
      %v2624 = vadd.f32 %v2511, %v2623
      %v2625 = vpop.f32.mrb[0].mxu0
      %v2626 = vadd.f32 %v2513, %v2625
      %2627 = vdwg.mxu0
      %v2628 = vmax.f32 %v1678, %v2132
      %v2629 = vmax.f32 %v1680, %v2582
      %v2630 = vmax.f32 %v2130, %v2584
      %v2631 = vmax.f32 %v1684, %v2138
      %v2632 = vmax.f32 %v1686, %v2588
      %v2633 = vmax.f32 %v2136, %v2590
      %v2634 = vmax.f32 %v1690, %v2144
      %v2635 = vmax.f32 %v1692, %v2594
      %v2636 = vmax.f32 %v2142, %v2596
      %v2637 = vmax.f32 %v1696, %v2150
      %v2638 = vmax.f32 %v1698, %v2600
      %v2639 = vmax.f32 %v2148, %v2602
      %v2640 = vmax.f32 %v1702, %v2156
      %v2641 = vmax.f32 %v1704, %v2606
      %v2642 = vmax.f32 %v2154, %v2608
      %v2643 = vmax.f32 %v1708, %v2162
      %v2644 = vmax.f32 %v1710, %v2612
      %v2645 = vmax.f32 %v2160, %v2614
      %v2646 = vmax.f32 %v1714, %v2168
      %v2647 = vmax.f32 %v1716, %v2618
      %v2648 = vmax.f32 %v2166, %v2620
      %v2649 = vmax.f32 %v1720, %v2174
      %v2650 = vmax.f32 %v1722, %v2624
      %v2651 = vmax.f32 %v2172, %v2626
      %v2652 = vld [vmem:[%s3] sm:$0x7]
      %v2654 = vlaneseq
      %v2655 = vshrl.u32 %v2654, 7
      %v2656 = vsub.s32 0, %v2655
      %v2657 = vrot.slane %v2652, %v2656
      %v2658 = vlaneseq
      %v2659 = vshrl.u32 %v2658, 7
      %v2660 = vsub.s32 1, %v2659
      %v2661 = vrot.slane %v2652, %v2660
      %v2662 = vlaneseq
      %v2663 = vshrl.u32 %v2662, 7
      %v2664 = vsub.s32 2, %v2663
      %v2665 = vrot.slane %v2652, %v2664
      %v2669 = vadd.f32 %v2628, %v2657
      %v2670 = vadd.f32 %v2629, %v2661
      %v2671 = vadd.f32 %v2630, %v2665
      %v2672 = vadd.f32 %v2631, %v2657
      %v2673 = vadd.f32 %v2632, %v2661
      %v2674 = vadd.f32 %v2633, %v2665
      %v2675 = vadd.f32 %v2634, %v2657
      %v2676 = vadd.f32 %v2635, %v2661
      %v2677 = vadd.f32 %v2636, %v2665
      %v2678 = vadd.f32 %v2637, %v2657
      %v2679 = vadd.f32 %v2638, %v2661
      %v2680 = vadd.f32 %v2639, %v2665
      %v2681 = vadd.f32 %v2640, %v2657
      %v2682 = vadd.f32 %v2641, %v2661
      %v2683 = vadd.f32 %v2642, %v2665
      %v2684 = vadd.f32 %v2643, %v2657
      %v2685 = vadd.f32 %v2644, %v2661
      %v2686 = vadd.f32 %v2645, %v2665
      %v2687 = vadd.f32 %v2646, %v2657
      %v2688 = vadd.f32 %v2647, %v2661
      %v2689 = vadd.f32 %v2648, %v2665
      %v2690 = vadd.f32 %v2649, %v2657
      %v2691 = vadd.f32 %v2650, %v2661
      %v2692 = vadd.f32 %v2651, %v2665
      %v2693 = vmax.f32 %v2669, 0.0
      %v2694 = vmax.f32 %v2670, 0.0
      %v2695 = vmax.f32 %v2671, 0.0
      %v2696 = vmax.f32 %v2672, 0.0
      %v2697 = vmax.f32 %v2673, 0.0
      %v2698 = vmax.f32 %v2674, 0.0
      %v2699 = vmax.f32 %v2675, 0.0
      %v2700 = vmax.f32 %v2676, 0.0
      %v2701 = vmax.f32 %v2677, 0.0
      %v2702 = vmax.f32 %v2678, 0.0
      %v2703 = vmax.f32 %v2679, 0.0
      %v2704 = vmax.f32 %v2680, 0.0
      %v2705 = vmax.f32 %v2681, 0.0
      %v2706 = vmax.f32 %v2682, 0.0
      %v2707 = vmax.f32 %v2683, 0.0
      %v2708 = vmax.f32 %v2684, 0.0
      %v2709 = vmax.f32 %v2685, 0.0
      %v2710 = vmax.f32 %v2686, 0.0
      %v2711 = vmax.f32 %v2687, 0.0
      %v2712 = vmax.f32 %v2688, 0.0
      %v2713 = vmax.f32 %v2689, 0.0
      %v2714 = vmax.f32 %v2690, 0.0
      %v2715 = vmax.f32 %v2691, 0.0
      %v2716 = vmax.f32 %v2692, 0.0
      %v2717 = vld [vmem:[%s4] sm:$0xff]
      %v2718 = vld [vmem:[%s4 + $0x8] sm:$0xff]
      %v2719 = vld [vmem:[%s4 + $0x10] sm:$0xff]
      %v2720 = vld [vmem:[%s4 + $0x18] sm:$0xff]
      %v2721 = vld [vmem:[%s4 + $0x20] sm:$0xff]
      %v2722 = vld [vmem:[%s4 + $0x28] sm:$0xff]
      %v2723 = vld [vmem:[%s4 + $0x30] sm:$0xff]
      %v2724 = vld [vmem:[%s4 + $0x38] sm:$0xff]
      %v2725 = vld [vmem:[%s4 + $0x40] sm:$0xff]
      %v2726 = vld [vmem:[%s4 + $0x48] sm:$0xff]
      %v2727 = vld [vmem:[%s4 + $0x50] sm:$0xff]
      %v2728 = vld [vmem:[%s4 + $0x58] sm:$0xff]
      %v2729 = vld [vmem:[%s4 + $0x60] sm:$0xff]
      %v2730 = vld [vmem:[%s4 + $0x68] sm:$0xff]
      %v2731 = vld [vmem:[%s4 + $0x70] sm:$0xff]
      %v2732 = vld [vmem:[%s4 + $0x78] sm:$0xff]
      %v2733 = vld [vmem:[%s4 + $0x80] sm:$0xff]
      %v2734 = vld [vmem:[%s4 + $0x88] sm:$0xff]
      %v2735 = vld [vmem:[%s4 + $0x90] sm:$0xff]
      %v2736 = vld [vmem:[%s4 + $0x98] sm:$0xff]
      %v2737 = vld [vmem:[%s4 + $0xa0] sm:$0xff]
      %v2738 = vld [vmem:[%s4 + $0xa8] sm:$0xff]
      %v2739 = vld [vmem:[%s4 + $0xb0] sm:$0xff]
      %v2740 = vld [vmem:[%s4 + $0xb8] sm:$0xff]
      %v2741 = vld [vmem:[%s4 + $0xc0] sm:$0xff]
      %v2742 = vld [vmem:[%s4 + $0xc8] sm:$0xff]
      %v2743 = vld [vmem:[%s4 + $0xd0] sm:$0xff]
      %v2744 = vld [vmem:[%s4 + $0xd8] sm:$0xff]
      %v2745 = vld [vmem:[%s4 + $0xe0] sm:$0xff]
      %v2746 = vld [vmem:[%s4 + $0xe8] sm:$0xff]
      %v2747 = vld [vmem:[%s4 + $0xf0] sm:$0xff]
      %v2748 = vld [vmem:[%s4 + $0xf8] sm:$0xff]
      %v2749 = vld [vmem:[%s4 + $0x100] sm:$0xff]
      %v2750 = vld [vmem:[%s4 + $0x108] sm:$0xff]
      %v2751 = vld [vmem:[%s4 + $0x110] sm:$0xff]
      %v2752 = vld [vmem:[%s4 + $0x118] sm:$0xff]
      %v2753 = vld [vmem:[%s4 + $0x120] sm:$0xff]
      %v2754 = vld [vmem:[%s4 + $0x128] sm:$0xff]
      %v2755 = vld [vmem:[%s4 + $0x130] sm:$0xff]
      %v2756 = vld [vmem:[%s4 + $0x138] sm:$0xff]
      %v2757 = vld [vmem:[%s4 + $0x140] sm:$0xff]
      %v2758 = vld [vmem:[%s4 + $0x148] sm:$0xff]
      %v2759 = vld [vmem:[%s4 + $0x150] sm:$0xff]
      %v2760 = vld [vmem:[%s4 + $0x158] sm:$0xff]
      %v2761 = vld [vmem:[%s4 + $0x160] sm:$0xff]
      %v2762 = vld [vmem:[%s4 + $0x168] sm:$0xff]
      %v2763 = vld [vmem:[%s4 + $0x170] sm:$0xff]
      %v2764 = vld [vmem:[%s4 + $0x178] sm:$0xff]
      %v2765 = vld [vmem:[%s4 + $0x180] sm:$0xff]
      %v2766 = vld [vmem:[%s4 + $0x188] sm:$0xff]
      %v2767 = vld [vmem:[%s4 + $0x190] sm:$0xff]
      %v2768 = vld [vmem:[%s4 + $0x198] sm:$0xff]
      %v2769 = vld [vmem:[%s4 + $0x1a0] sm:$0xff]
      %v2770 = vld [vmem:[%s4 + $0x1a8] sm:$0xff]
      %v2771 = vld [vmem:[%s4 + $0x1b0] sm:$0xff]
      %v2772 = vld [vmem:[%s4 + $0x1b8] sm:$0xff]
      %v2773 = vld [vmem:[%s4 + $0x1c0] sm:$0xff]
      %v2774 = vld [vmem:[%s4 + $0x1c8] sm:$0xff]
      %v2775 = vld [vmem:[%s4 + $0x1d0] sm:$0xff]
      %v2776 = vld [vmem:[%s4 + $0x1d8] sm:$0xff]
      %v2777 = vld [vmem:[%s4 + $0x1e0] sm:$0xff]
      %v2778 = vld [vmem:[%s4 + $0x1e8] sm:$0xff]
      %v2779 = vld [vmem:[%s4 + $0x1f0] sm:$0xff]
      %v2780 = vld [vmem:[%s4 + $0x1f8] sm:$0xff]
      %v2781 = vld [vmem:[%s4 + $0x200] sm:$0xff]
      %v2782 = vld [vmem:[%s4 + $0x208] sm:$0xff]
      %v2783 = vld [vmem:[%s4 + $0x210] sm:$0xff]
      %v2784 = vld [vmem:[%s4 + $0x218] sm:$0xff]
      %v2785 = vld [vmem:[%s4 + $0x220] sm:$0xff]
      %v2786 = vld [vmem:[%s4 + $0x228] sm:$0xff]
      %v2787 = vld [vmem:[%s4 + $0x230] sm:$0xff]
      %v2788 = vld [vmem:[%s4 + $0x238] sm:$0xff]
      %v2789 = vld [vmem:[%s4 + $0x240] sm:$0xff]
      %v2790 = vld [vmem:[%s4 + $0x248] sm:$0xff]
      %v2791 = vld [vmem:[%s4 + $0x250] sm:$0xff]
      %v2792 = vld [vmem:[%s4 + $0x258] sm:$0xff]
      %v2793 = vld [vmem:[%s4 + $0x260] sm:$0xff]
      %v2794 = vld [vmem:[%s4 + $0x268] sm:$0xff]
      %v2795 = vld [vmem:[%s4 + $0x270] sm:$0xff]
      %v2796 = vld [vmem:[%s4 + $0x278] sm:$0xff]
      %v2797 = vld [vmem:[%s4 + $0x280] sm:$0xff]
      %v2798 = vld [vmem:[%s4 + $0x288] sm:$0xff]
      %v2799 = vld [vmem:[%s4 + $0x290] sm:$0xff]
      %v2800 = vld [vmem:[%s4 + $0x298] sm:$0xff]
      %v2801 = vld [vmem:[%s4 + $0x2a0] sm:$0xff]
      %v2802 = vld [vmem:[%s4 + $0x2a8] sm:$0xff]
      %v2803 = vld [vmem:[%s4 + $0x2b0] sm:$0xff]
      %v2804 = vld [vmem:[%s4 + $0x2b8] sm:$0xff]
      %v2805 = vld [vmem:[%s4 + $0x2c0] sm:$0xff]
      %v2806 = vld [vmem:[%s4 + $0x2c8] sm:$0xff]
      %v2807 = vld [vmem:[%s4 + $0x2d0] sm:$0xff]
      %v2808 = vld [vmem:[%s4 + $0x2d8] sm:$0xff]
      %v2809 = vld [vmem:[%s4 + $0x2e0] sm:$0xff]
      %v2810 = vld [vmem:[%s4 + $0x2e8] sm:$0xff]
      %v2811 = vld [vmem:[%s4 + $0x2f0] sm:$0xff]
      %v2812 = vld [vmem:[%s4 + $0x2f8] sm:$0xff]
      %v2813 = vld [vmem:[%s4 + $0x300] sm:$0xff]
      %v2814 = vld [vmem:[%s4 + $0x308] sm:$0xff]
      %v2815 = vld [vmem:[%s4 + $0x310] sm:$0xff]
      %v2816 = vld [vmem:[%s4 + $0x318] sm:$0xff]
      %v2817 = vld [vmem:[%s4 + $0x320] sm:$0xff]
      %v2818 = vld [vmem:[%s4 + $0x328] sm:$0xff]
      %v2819 = vld [vmem:[%s4 + $0x330] sm:$0xff]
      %v2820 = vld [vmem:[%s4 + $0x338] sm:$0xff]
      %v2821 = vld [vmem:[%s4 + $0x340] sm:$0xff]
      %v2822 = vld [vmem:[%s4 + $0x348] sm:$0xff]
      %v2823 = vld [vmem:[%s4 + $0x350] sm:$0xff]
      %v2824 = vld [vmem:[%s4 + $0x358] sm:$0xff]
      %v2825 = vld [vmem:[%s4 + $0x360] sm:$0xff]
      %v2826 = vld [vmem:[%s4 + $0x368] sm:$0xff]
      %v2827 = vld [vmem:[%s4 + $0x370] sm:$0xff]
      %v2828 = vld [vmem:[%s4 + $0x378] sm:$0xff]
      %v2829 = vld [vmem:[%s4 + $0x380] sm:$0xff]
      %v2830 = vld [vmem:[%s4 + $0x388] sm:$0xff]
      %v2831 = vld [vmem:[%s4 + $0x390] sm:$0xff]
      %v2832 = vld [vmem:[%s4 + $0x398] sm:$0xff]
      %v2833 = vld [vmem:[%s4 + $0x3a0] sm:$0xff]
      %v2834 = vld [vmem:[%s4 + $0x3a8] sm:$0xff]
      %v2835 = vld [vmem:[%s4 + $0x3b0] sm:$0xff]
      %v2836 = vld [vmem:[%s4 + $0x3b8] sm:$0xff]
      %v2837 = vld [vmem:[%s4 + $0x3c0] sm:$0xff]
      %v2838 = vld [vmem:[%s4 + $0x3c8] sm:$0xff]
      %v2839 = vld [vmem:[%s4 + $0x3d0] sm:$0xff]
      %v2840 = vld [vmem:[%s4 + $0x3d8] sm:$0xff]
      %v2841 = vld [vmem:[%s4 + $0x3e0] sm:$0xff]
      %v2842 = vld [vmem:[%s4 + $0x3e8] sm:$0xff]
      %v2843 = vld [vmem:[%s4 + $0x3f0] sm:$0xff]
      %v2844 = vld [vmem:[%s4 + $0x3f8] sm:$0xff]
      %v2845 = vld [vmem:[%s4 + $0x400] sm:$0xff]
      %v2846 = vld [vmem:[%s4 + $0x408] sm:$0xff]
      %v2847 = vld [vmem:[%s4 + $0x410] sm:$0xff]
      %v2848 = vld [vmem:[%s4 + $0x418] sm:$0xff]
      %v2849 = vld [vmem:[%s4 + $0x420] sm:$0xff]
      %v2850 = vld [vmem:[%s4 + $0x428] sm:$0xff]
      %v2851 = vld [vmem:[%s4 + $0x430] sm:$0xff]
      %v2852 = vld [vmem:[%s4 + $0x438] sm:$0xff]
      %v2853 = vld [vmem:[%s4 + $0x440] sm:$0xff]
      %v2854 = vld [vmem:[%s4 + $0x448] sm:$0xff]
      %v2855 = vld [vmem:[%s4 + $0x450] sm:$0xff]
      %v2856 = vld [vmem:[%s4 + $0x458] sm:$0xff]
      %v2857 = vld [vmem:[%s4 + $0x460] sm:$0xff]
      %v2858 = vld [vmem:[%s4 + $0x468] sm:$0xff]
      %v2859 = vld [vmem:[%s4 + $0x470] sm:$0xff]
      %v2860 = vld [vmem:[%s4 + $0x478] sm:$0xff]
      %v2861 = vld [vmem:[%s4 + $0x480] sm:$0xff]
      %v2862 = vld [vmem:[%s4 + $0x488] sm:$0xff]
      %v2863 = vld [vmem:[%s4 + $0x490] sm:$0xff]
      %v2864 = vld [vmem:[%s4 + $0x498] sm:$0xff]
      %v2865 = vld [vmem:[%s4 + $0x4a0] sm:$0xff]
      %v2866 = vld [vmem:[%s4 + $0x4a8] sm:$0xff]
      %v2867 = vld [vmem:[%s4 + $0x4b0] sm:$0xff]
      %v2868 = vld [vmem:[%s4 + $0x4b8] sm:$0xff]
      %v2869 = vld [vmem:[%s4 + $0x4c0] sm:$0xff]
      %v2870 = vld [vmem:[%s4 + $0x4c8] sm:$0xff]
      %v2871 = vld [vmem:[%s4 + $0x4d0] sm:$0xff]
      %v2872 = vld [vmem:[%s4 + $0x4d8] sm:$0xff]
      %v2873 = vld [vmem:[%s4 + $0x4e0] sm:$0xff]
      %v2874 = vld [vmem:[%s4 + $0x4e8] sm:$0xff]
      %v2875 = vld [vmem:[%s4 + $0x4f0] sm:$0xff]
      %v2876 = vld [vmem:[%s4 + $0x4f8] sm:$0xff]
      %v2877 = vld [vmem:[%s4 + $0x500] sm:$0xff]
      %v2878 = vld [vmem:[%s4 + $0x508] sm:$0xff]
      %v2879 = vld [vmem:[%s4 + $0x510] sm:$0xff]
      %v2880 = vld [vmem:[%s4 + $0x518] sm:$0xff]
      %v2881 = vld [vmem:[%s4 + $0x520] sm:$0xff]
      %v2882 = vld [vmem:[%s4 + $0x528] sm:$0xff]
      %v2883 = vld [vmem:[%s4 + $0x530] sm:$0xff]
      %v2884 = vld [vmem:[%s4 + $0x538] sm:$0xff]
      %v2885 = vld [vmem:[%s4 + $0x540] sm:$0xff]
      %v2886 = vld [vmem:[%s4 + $0x548] sm:$0xff]
      %v2887 = vld [vmem:[%s4 + $0x550] sm:$0xff]
      %v2888 = vld [vmem:[%s4 + $0x558] sm:$0xff]
      %v2889 = vld [vmem:[%s4 + $0x560] sm:$0xff]
      %v2890 = vld [vmem:[%s4 + $0x568] sm:$0xff]
      %v2891 = vld [vmem:[%s4 + $0x570] sm:$0xff]
      %v2892 = vld [vmem:[%s4 + $0x578] sm:$0xff]
      %v2893 = vld [vmem:[%s4 + $0x580] sm:$0xff]
      %v2894 = vld [vmem:[%s4 + $0x588] sm:$0xff]
      %v2895 = vld [vmem:[%s4 + $0x590] sm:$0xff]
      %v2896 = vld [vmem:[%s4 + $0x598] sm:$0xff]
      %v2897 = vld [vmem:[%s4 + $0x5a0] sm:$0xff]
      %v2898 = vld [vmem:[%s4 + $0x5a8] sm:$0xff]
      %v2899 = vld [vmem:[%s4 + $0x5b0] sm:$0xff]
      %v2900 = vld [vmem:[%s4 + $0x5b8] sm:$0xff]
      %v2901 = vld [vmem:[%s4 + $0x5c0] sm:$0xff]
      %v2902 = vld [vmem:[%s4 + $0x5c8] sm:$0xff]
      %v2903 = vld [vmem:[%s4 + $0x5d0] sm:$0xff]
      %v2904 = vld [vmem:[%s4 + $0x5d8] sm:$0xff]
      %v2905 = vld [vmem:[%s4 + $0x5e0] sm:$0xff]
      %v2906 = vld [vmem:[%s4 + $0x5e8] sm:$0xff]
      %v2907 = vld [vmem:[%s4 + $0x5f0] sm:$0xff]
      %v2908 = vld [vmem:[%s4 + $0x5f8] sm:$0xff]
      %2909 = vmatprep.subr.mxu0 %v2718
      %2910 = vmatpush1.msra.mxu0 %v2717
      %2911 = vmatprep.subr.mxu0 %v2720
      %2912 = vmatpush1.msra.mxu0 %v2719
      %2913 = vmatprep.subr.mxu0 %v2722
      %2914 = vmatpush1.msra.mxu0 %v2721
      %2915 = vmatprep.subr.mxu0 %v2724
      %2916 = vmatpush1.msra.mxu0 %v2723
      %2917 = vmatprep.subr.mxu0 %v2726
      %2918 = vmatpush1.msra.mxu0 %v2725
      %2919 = vmatprep.subr.mxu0 %v2728
      %2920 = vmatpush1.msra.mxu0 %v2727
      %2921 = vmatprep.subr.mxu0 %v2730
      %2922 = vmatpush1.msra.mxu0 %v2729
      %2923 = vmatprep.subr.mxu0 %v2732
      %2924 = vmatpush1.msra.mxu0 %v2731
      %2925 = vmatprep.subr.mxu0 %v2734
      %2926 = vmatpush1.msra.mxu0 %v2733
      %2927 = vmatprep.subr.mxu0 %v2736
      %2928 = vmatpush1.msra.mxu0 %v2735
      %2929 = vmatprep.subr.mxu0 %v2738
      %2930 = vmatpush1.msra.mxu0 %v2737
      %2931 = vmatprep.subr.mxu0 %v2740
      %2932 = vmatpush1.msra.mxu0 %v2739
      %2933 = vmatprep.subr.mxu0 %v2742
      %2934 = vmatpush1.msra.mxu0 %v2741
      %2935 = vmatprep.subr.mxu0 %v2744
      %2936 = vmatpush1.msra.mxu0 %v2743
      %2937 = vmatprep.subr.mxu0 %v2746
      %2938 = vmatpush1.msra.mxu0 %v2745
      %2939 = vmatprep.subr.mxu0 %v2748
      %2940 = vmatpush1.msra.mxu0 %v2747
      %2941 = vmatprep.subr.mxu0 %v2750
      %2942 = vmatpush1.msra.mxu0 %v2749
      %2943 = vmatprep.subr.mxu0 %v2752
      %2944 = vmatpush1.msra.mxu0 %v2751
      %2945 = vmatprep.subr.mxu0 %v2754
      %2946 = vmatpush1.msra.mxu0 %v2753
      %2947 = vmatprep.subr.mxu0 %v2756
      %2948 = vmatpush1.msra.mxu0 %v2755
      %2949 = vmatprep.subr.mxu0 %v2758
      %2950 = vmatpush1.msra.mxu0 %v2757
      %2951 = vmatprep.subr.mxu0 %v2760
      %2952 = vmatpush1.msra.mxu0 %v2759
      %2953 = vmatprep.subr.mxu0 %v2762
      %2954 = vmatpush1.msra.mxu0 %v2761
      %2955 = vmatprep.subr.mxu0 %v2764
      %2956 = vmatpush1.msra.mxu0 %v2763
      %2957 = vmatprep.subr.mxu0 %v2766
      %2958 = vmatpush1.msra.mxu0 %v2765
      %2959 = vmatprep.subr.mxu0 %v2768
      %2960 = vmatpush1.msra.mxu0 %v2767
      %2961 = vmatprep.subr.mxu0 %v2770
      %2962 = vmatpush1.msra.mxu0 %v2769
      %2963 = vmatprep.subr.mxu0 %v2772
      %2964 = vmatpush1.msra.mxu0 %v2771
      %2965 = vmatprep.subr.mxu0 %v2774
      %2966 = vmatpush1.msra.mxu0 %v2773
      %2967 = vmatprep.subr.mxu0 %v2776
      %2968 = vmatpush1.msra.mxu0 %v2775
      %2969 = vmatprep.subr.mxu0 %v2778
      %2970 = vmatpush1.msra.mxu0 %v2777
      %2971 = vmatprep.subr.mxu0 %v2780
      %2972 = vmatpush1.msra.mxu0 %v2779
      %2973 = vmatprep.mubr.f32.mxu0 %v2694
      %2974 = vmatmul.mubr.f32.gmra.mrb[0].mxu0 %v2693
      %v2975 = vpop.f32.mrb[0].mxu0
      %v2976 = vadd.f32 0.0, %v2975
      %v2977 = vpop.f32.mrb[0].mxu0
      %v2978 = vadd.f32 0.0, %v2977
      %2979 = vmatprep.mubr.f32.mxu0 %v2697
      %2980 = vmatmul.mubr.f32.gmra.mrb[0].mxu0 %v2696
      %v2981 = vpop.f32.mrb[0].mxu0
      %v2982 = vadd.f32 0.0, %v2981
      %v2983 = vpop.f32.mrb[0].mxu0
      %v2984 = vadd.f32 0.0, %v2983
      %2985 = vmatprep.mubr.f32.mxu0 %v2700
      %2986 = vmatmul.mubr.f32.gmra.mrb[0].mxu0 %v2699
      %v2987 = vpop.f32.mrb[0].mxu0
      %v2988 = vadd.f32 0.0, %v2987
      %v2989 = vpop.f32.mrb[0].mxu0
      %v2990 = vadd.f32 0.0, %v2989
      %2991 = vmatprep.mubr.f32.mxu0 %v2703
      %2992 = vmatmul.mubr.f32.gmra.mrb[0].mxu0 %v2702
      %v2993 = vpop.f32.mrb[0].mxu0
      %v2994 = vadd.f32 0.0, %v2993
      %v2995 = vpop.f32.mrb[0].mxu0
      %v2996 = vadd.f32 0.0, %v2995
      %2997 = vmatprep.mubr.f32.mxu0 %v2706
      %2998 = vmatmul.mubr.f32.gmra.mrb[0].mxu0 %v2705
      %v2999 = vpop.f32.mrb[0].mxu0
      %v3000 = vadd.f32 0.0, %v2999
      %v3001 = vpop.f32.mrb[0].mxu0
      %v3002 = vadd.f32 0.0, %v3001
      %3003 = vmatprep.mubr.f32.mxu0 %v2709
      %3004 = vmatmul.mubr.f32.gmra.mrb[0].mxu0 %v2708
      %v3005 = vpop.f32.mrb[0].mxu0
      %v3006 = vadd.f32 0.0, %v3005
      %v3007 = vpop.f32.mrb[0].mxu0
      %v3008 = vadd.f32 0.0, %v3007
      %3009 = vmatprep.mubr.f32.mxu0 %v2712
      %3010 = vmatmul.mubr.f32.gmra.mrb[0].mxu0 %v2711
      %v3011 = vpop.f32.mrb[0].mxu0
      %v3012 = vadd.f32 0.0, %v3011
      %v3013 = vpop.f32.mrb[0].mxu0
      %v3014 = vadd.f32 0.0, %v3013
      %3015 = vmatprep.mubr.f32.mxu0 %v2715
      %3016 = vmatmul.mubr.f32.gmra.mrb[0].mxu0 %v2714
      %v3017 = vpop.f32.mrb[0].mxu0
      %v3018 = vadd.f32 0.0, %v3017
      %v3019 = vpop.f32.mrb[0].mxu0
      %v3020 = vadd.f32 0.0, %v3019
      %3021 = vdwg.mxu0
      %3022 = vmatprep.subr.mxu0 %v2782
      %3023 = vmatpush1.msra.mxu0 %v2781
      %3024 = vmatprep.subr.mxu0 %v2784
      %3025 = vmatpush1.msra.mxu0 %v2783
      %3026 = vmatprep.subr.mxu0 %v2786
      %3027 = vmatpush1.msra.mxu0 %v2785
      %3028 = vmatprep.subr.mxu0 %v2788
      %3029 = vmatpush1.msra.mxu0 %v2787
      %3030 = vmatprep.subr.mxu0 %v2790
      %3031 = vmatpush1.msra.mxu0 %v2789
      %3032 = vmatprep.subr.mxu0 %v2792
      %3033 = vmatpush1.msra.mxu0 %v2791
      %3034 = vmatprep.subr.mxu0 %v2794
      %3035 = vmatpush1.msra.mxu0 %v2793
      %3036 = vmatprep.subr.mxu0 %v2796
      %3037 = vmatpush1.msra.mxu0 %v2795
      %3038 = vmatprep.subr.mxu0 %v2798
      %3039 = vmatpush1.msra.mxu0 %v2797
      %3040 = vmatprep.subr.mxu0 %v2800
      %3041 = vmatpush1.msra.mxu0 %v2799
      %3042 = vmatprep.subr.mxu0 %v2802
      %3043 = vmatpush1.msra.mxu0 %v2801
      %3044 = vmatprep.subr.mxu0 %v2804
      %3045 = vmatpush1.msra.mxu0 %v2803
      %3046 = vmatprep.subr.mxu0 %v2806
      %3047 = vmatpush1.msra.mxu0 %v2805
      %3048 = vmatprep.subr.mxu0 %v2808
      %3049 = vmatpush1.msra.mxu0 %v2807
      %3050 = vmatprep.subr.mxu0 %v2810
      %3051 = vmatpush1.msra.mxu0 %v2809
      %3052 = vmatprep.subr.mxu0 %v2812
      %3053 = vmatpush1.msra.mxu0 %v2811
      %3054 = vmatprep.subr.mxu0 0.0
      %3055 = vmatpush1.msra.mxu0 0.0
      %3056 = vmatprep.subr.mxu0 0.0
      %3057 = vmatpush1.msra.mxu0 0.0
      %3058 = vmatprep.subr.mxu0 0.0
      %3059 = vmatpush1.msra.mxu0 0.0
      %3060 = vmatprep.subr.mxu0 0.0
      %3061 = vmatpush1.msra.mxu0 0.0
      %3062 = vmatprep.subr.mxu0 0.0
      %3063 = vmatpush1.msra.mxu0 0.0
      %3064 = vmatprep.subr.mxu0 0.0
      %3065 = vmatpush1.msra.mxu0 0.0
      %3066 = vmatprep.subr.mxu0 0.0
      %3067 = vmatpush1.msra.mxu0 0.0
      %3068 = vmatprep.subr.mxu0 0.0
      %3069 = vmatpush1.msra.mxu0 0.0
      %3070 = vmatprep.subr.mxu0 0.0
      %3071 = vmatpush1.msra.mxu0 0.0
      %3072 = vmatprep.subr.mxu0 0.0
      %3073 = vmatpush1.msra.mxu0 0.0
      %3074 = vmatprep.subr.mxu0 0.0
      %3075 = vmatpush1.msra.mxu0 0.0
      %3076 = vmatprep.subr.mxu0 0.0
      %3077 = vmatpush1.msra.mxu0 0.0
      %3078 = vmatprep.subr.mxu0 0.0
      %3079 = vmatpush1.msra.mxu0 0.0
      %3080 = vmatprep.subr.mxu0 0.0
      %3081 = vmatpush1.msra.mxu0 0.0
      %3082 = vmatprep.subr.mxu0 0.0
      %3083 = vmatpush1.msra.mxu0 0.0
      %3084 = vmatprep.subr.mxu0 0.0
      %3085 = vmatpush1.msra.mxu0 0.0
      %3086 = vmatprep.mubr.f32.mxu0 0.0
      %3087 = vmatmul.mubr.f32.gmra.mrb[0].mxu0 %v2695
      %v3088 = vpop.f32.mrb[0].mxu0
      %v3089 = vadd.f32 %v2976, %v3088
      %v3090 = vpop.f32.mrb[0].mxu0
      %v3091 = vadd.f32 %v2978, %v3090
      %3092 = vmatprep.mubr.f32.mxu0 0.0
      %3093 = vmatmul.mubr.f32.gmra.mrb[0].mxu0 %v2698
      %v3094 = vpop.f32.mrb[0].mxu0
      %v3095 = vadd.f32 %v2982, %v3094
      %v3096 = vpop.f32.mrb[0].mxu0
      %v3097 = vadd.f32 %v2984, %v3096
      %3098 = vmatprep.mubr.f32.mxu0 0.0
      %3099 = vmatmul.mubr.f32.gmra.mrb[0].mxu0 %v2701
      %v3100 = vpop.f32.mrb[0].mxu0
      %v3101 = vadd.f32 %v2988, %v3100
      %v3102 = vpop.f32.mrb[0].mxu0
      %v3103 = vadd.f32 %v2990, %v3102
      %3104 = vmatprep.mubr.f32.mxu0 0.0
      %3105 = vmatmul.mubr.f32.gmra.mrb[0].mxu0 %v2704
      %v3106 = vpop.f32.mrb[0].mxu0
      %v3107 = vadd.f32 %v2994, %v3106
      %v3108 = vpop.f32.mrb[0].mxu0
      %v3109 = vadd.f32 %v2996, %v3108
      %3110 = vmatprep.mubr.f32.mxu0 0.0
      %3111 = vmatmul.mubr.f32.gmra.mrb[0].mxu0 %v2707
      %v3112 = vpop.f32.mrb[0].mxu0
      %v3113 = vadd.f32 %v3000, %v3112
      %v3114 = vpop.f32.mrb[0].mxu0
      %v3115 = vadd.f32 %v3002, %v3114
      %3116 = vmatprep.mubr.f32.mxu0 0.0
      %3117 = vmatmul.mubr.f32.gmra.mrb[0].mxu0 %v2710
      %v3118 = vpop.f32.mrb[0].mxu0
      %v3119 = vadd.f32 %v3006, %v3118
      %v3120 = vpop.f32.mrb[0].mxu0
      %v3121 = vadd.f32 %v3008, %v3120
      %3122 = vmatprep.mubr.f32.mxu0 0.0
      %3123 = vmatmul.mubr.f32.gmra.mrb[0].mxu0 %v2713
      %v3124 = vpop.f32.mrb[0].mxu0
      %v3125 = vadd.f32 %v3012, %v3124
      %v3126 = vpop.f32.mrb[0].mxu0
      %v3127 = vadd.f32 %v3014, %v3126
      %3128 = vmatprep.mubr.f32.mxu0 0.0
      %3129 = vmatmul.mubr.f32.gmra.mrb[0].mxu0 %v2716
      %v3130 = vpop.f32.mrb[0].mxu0
      %v3131 = vadd.f32 %v3018, %v3130
      %v3132 = vpop.f32.mrb[0].mxu0
      %v3133 = vadd.f32 %v3020, %v3132
      %3134 = vdwg.mxu0
      %3135 = vmatprep.subr.mxu0 %v2814
      %3136 = vmatpush1.msra.mxu0 %v2813
      %3137 = vmatprep.subr.mxu0 %v2816
      %3138 = vmatpush1.msra.mxu0 %v2815
      %3139 = vmatprep.subr.mxu0 %v2818
      %3140 = vmatpush1.msra.mxu0 %v2817
      %3141 = vmatprep.subr.mxu0 %v2820
      %3142 = vmatpush1.msra.mxu0 %v2819
      %3143 = vmatprep.subr.mxu0 %v2822
      %3144 = vmatpush1.msra.mxu0 %v2821
      %3145 = vmatprep.subr.mxu0 %v2824
      %3146 = vmatpush1.msra.mxu0 %v2823
      %3147 = vmatprep.subr.mxu0 %v2826
      %3148 = vmatpush1.msra.mxu0 %v2825
      %3149 = vmatprep.subr.mxu0 %v2828
      %3150 = vmatpush1.msra.mxu0 %v2827
      %3151 = vmatprep.subr.mxu0 %v2830
      %3152 = vmatpush1.msra.mxu0 %v2829
      %3153 = vmatprep.subr.mxu0 %v2832
      %3154 = vmatpush1.msra.mxu0 %v2831
      %3155 = vmatprep.subr.mxu0 %v2834
      %3156 = vmatpush1.msra.mxu0 %v2833
      %3157 = vmatprep.subr.mxu0 %v2836
      %3158 = vmatpush1.msra.mxu0 %v2835
      %3159 = vmatprep.subr.mxu0 %v2838
      %3160 = vmatpush1.msra.mxu0 %v2837
      %3161 = vmatprep.subr.mxu0 %v2840
      %3162 = vmatpush1.msra.mxu0 %v2839
      %3163 = vmatprep.subr.mxu0 %v2842
      %3164 = vmatpush1.msra.mxu0 %v2841
      %3165 = vmatprep.subr.mxu0 %v2844
      %3166 = vmatpush1.msra.mxu0 %v2843
      %3167 = vmatprep.subr.mxu0 %v2846
      %3168 = vmatpush1.msra.mxu0 %v2845
      %3169 = vmatprep.subr.mxu0 %v2848
      %3170 = vmatpush1.msra.mxu0 %v2847
      %3171 = vmatprep.subr.mxu0 %v2850
      %3172 = vmatpush1.msra.mxu0 %v2849
      %3173 = vmatprep.subr.mxu0 %v2852
      %3174 = vmatpush1.msra.mxu0 %v2851
      %3175 = vmatprep.subr.mxu0 %v2854
      %3176 = vmatpush1.msra.mxu0 %v2853
      %3177 = vmatprep.subr.mxu0 %v2856
      %3178 = vmatpush1.msra.mxu0 %v2855
      %3179 = vmatprep.subr.mxu0 %v2858
      %3180 = vmatpush1.msra.mxu0 %v2857
      %3181 = vmatprep.subr.mxu0 %v2860
      %3182 = vmatpush1.msra.mxu0 %v2859
      %3183 = vmatprep.subr.mxu0 %v2862
      %3184 = vmatpush1.msra.mxu0 %v2861
      %3185 = vmatprep.subr.mxu0 %v2864
      %3186 = vmatpush1.msra.mxu0 %v2863
      %3187 = vmatprep.subr.mxu0 %v2866
      %3188 = vmatpush1.msra.mxu0 %v2865
      %3189 = vmatprep.subr.mxu0 %v2868
      %3190 = vmatpush1.msra.mxu0 %v2867
      %3191 = vmatprep.subr.mxu0 %v2870
      %3192 = vmatpush1.msra.mxu0 %v2869
      %3193 = vmatprep.subr.mxu0 %v2872
      %3194 = vmatpush1.msra.mxu0 %v2871
      %3195 = vmatprep.subr.mxu0 %v2874
      %3196 = vmatpush1.msra.mxu0 %v2873
      %3197 = vmatprep.subr.mxu0 %v2876
      %3198 = vmatpush1.msra.mxu0 %v2875
      %3199 = vmatprep.mubr.f32.mxu0 %v2694
      %3200 = vmatmul.mubr.f32.gmra.mrb[0].mxu0 %v2693
      %v3201 = vpop.f32.mrb[0].mxu0
      %v3202 = vadd.f32 0.0, %v3201
      %v3203 = vpop.f32.mrb[0].mxu0
      %v3204 = vadd.f32 0.0, %v3203
      %3205 = vmatprep.mubr.f32.mxu0 %v2697
      %3206 = vmatmul.mubr.f32.gmra.mrb[0].mxu0 %v2696
      %v3207 = vpop.f32.mrb[0].mxu0
      %v3208 = vadd.f32 0.0, %v3207
      %v3209 = vpop.f32.mrb[0].mxu0
      %v3210 = vadd.f32 0.0, %v3209
      %3211 = vmatprep.mubr.f32.mxu0 %v2700
      %3212 = vmatmul.mubr.f32.gmra.mrb[0].mxu0 %v2699
      %v3213 = vpop.f32.mrb[0].mxu0
      %v3214 = vadd.f32 0.0, %v3213
      %v3215 = vpop.f32.mrb[0].mxu0
      %v3216 = vadd.f32 0.0, %v3215
      %3217 = vmatprep.mubr.f32.mxu0 %v2703
      %3218 = vmatmul.mubr.f32.gmra.mrb[0].mxu0 %v2702
      %v3219 = vpop.f32.mrb[0].mxu0
      %v3220 = vadd.f32 0.0, %v3219
      %v3221 = vpop.f32.mrb[0].mxu0
      %v3222 = vadd.f32 0.0, %v3221
      %3223 = vmatprep.mubr.f32.mxu0 %v2706
      %3224 = vmatmul.mubr.f32.gmra.mrb[0].mxu0 %v2705
      %v3225 = vpop.f32.mrb[0].mxu0
      %v3226 = vadd.f32 0.0, %v3225
      %v3227 = vpop.f32.mrb[0].mxu0
      %v3228 = vadd.f32 0.0, %v3227
      %3229 = vmatprep.mubr.f32.mxu0 %v2709
      %3230 = vmatmul.mubr.f32.gmra.mrb[0].mxu0 %v2708
      %v3231 = vpop.f32.mrb[0].mxu0
      %v3232 = vadd.f32 0.0, %v3231
      %v3233 = vpop.f32.mrb[0].mxu0
      %v3234 = vadd.f32 0.0, %v3233
      %3235 = vmatprep.mubr.f32.mxu0 %v2712
      %3236 = vmatmul.mubr.f32.gmra.mrb[0].mxu0 %v2711
      %v3237 = vpop.f32.mrb[0].mxu0
      %v3238 = vadd.f32 0.0, %v3237
      %v3239 = vpop.f32.mrb[0].mxu0
      %v3240 = vadd.f32 0.0, %v3239
      %3241 = vmatprep.mubr.f32.mxu0 %v2715
      %3242 = vmatmul.mubr.f32.gmra.mrb[0].mxu0 %v2714
      %v3243 = vpop.f32.mrb[0].mxu0
      %v3244 = vadd.f32 0.0, %v3243
      %v3245 = vpop.f32.mrb[0].mxu0
      %v3246 = vadd.f32 0.0, %v3245
      %3247 = vdwg.mxu0
      %3248 = vmatprep.subr.mxu0 %v2878
      %3249 = vmatpush1.msra.mxu0 %v2877
      %3250 = vmatprep.subr.mxu0 %v2880
      %3251 = vmatpush1.msra.mxu0 %v2879
      %3252 = vmatprep.subr.mxu0 %v2882
      %3253 = vmatpush1.msra.mxu0 %v2881
      %3254 = vmatprep.subr.mxu0 %v2884
      %3255 = vmatpush1.msra.mxu0 %v2883
      %3256 = vmatprep.subr.mxu0 %v2886
      %3257 = vmatpush1.msra.mxu0 %v2885
      %3258 = vmatprep.subr.mxu0 %v2888
      %3259 = vmatpush1.msra.mxu0 %v2887
      %3260 = vmatprep.subr.mxu0 %v2890
      %3261 = vmatpush1.msra.mxu0 %v2889
      %3262 = vmatprep.subr.mxu0 %v2892
      %3263 = vmatpush1.msra.mxu0 %v2891
      %3264 = vmatprep.subr.mxu0 %v2894
      %3265 = vmatpush1.msra.mxu0 %v2893
      %3266 = vmatprep.subr.mxu0 %v2896
      %3267 = vmatpush1.msra.mxu0 %v2895
      %3268 = vmatprep.subr.mxu0 %v2898
      %3269 = vmatpush1.msra.mxu0 %v2897
      %3270 = vmatprep.subr.mxu0 %v2900
      %3271 = vmatpush1.msra.mxu0 %v2899
      %3272 = vmatprep.subr.mxu0 %v2902
      %3273 = vmatpush1.msra.mxu0 %v2901
      %3274 = vmatprep.subr.mxu0 %v2904
      %3275 = vmatpush1.msra.mxu0 %v2903
      %3276 = vmatprep.subr.mxu0 %v2906
      %3277 = vmatpush1.msra.mxu0 %v2905
      %3278 = vmatprep.subr.mxu0 %v2908
      %3279 = vmatpush1.msra.mxu0 %v2907
      %3280 = vmatprep.subr.mxu0 0.0
      %3281 = vmatpush1.msra.mxu0 0.0
      %3282 = vmatprep.subr.mxu0 0.0
      %3283 = vmatpush1.msra.mxu0 0.0
      %3284 = vmatprep.subr.mxu0 0.0
      %3285 = vmatpush1.msra.mxu0 0.0
      %3286 = vmatprep.subr.mxu0 0.0
      %3287 = vmatpush1.msra.mxu0 0.0
      %3288 = vmatprep.subr.mxu0 0.0
      %3289 = vmatpush1.msra.mxu0 0.0
      %3290 = vmatprep.subr.mxu0 0.0
      %3291 = vmatpush1.msra.mxu0 0.0
      %3292 = vmatprep.subr.mxu0 0.0
      %3293 = vmatpush1.msra.mxu0 0.0
      %3294 = vmatprep.subr.mxu0 0.0
      %3295 = vmatpush1.msra.mxu0 0.0
      %3296 = vmatprep.subr.mxu0 0.0
      %3297 = vmatpush1.msra.mxu0 0.0
      %3298 = vmatprep.subr.mxu0 0.0
      %3299 = vmatpush1.msra.mxu0 0.0
      %3300 = vmatprep.subr.mxu0 0.0
      %3301 = vmatpush1.msra.mxu0 0.0
      %3302 = vmatprep.subr.mxu0 0.0
      %3303 = vmatpush1.msra.mxu0 0.0
      %3304 = vmatprep.subr.mxu0 0.0
      %3305 = vmatpush1.msra.mxu0 0.0
      %3306 = vmatprep.subr.mxu0 0.0
      %3307 = vmatpush1.msra.mxu0 0.0
      %3308 = vmatprep.subr.mxu0 0.0
      %3309 = vmatpush1.msra.mxu0 0.0
      %3310 = vmatprep.subr.mxu0 0.0
      %3311 = vmatpush1.msra.mxu0 0.0
      %3312 = vmatprep.mubr.f32.mxu0 0.0
      %3313 = vmatmul.mubr.f32.gmra.mrb[0].mxu0 %v2695
      %v3314 = vpop.f32.mrb[0].mxu0
      %v3315 = vadd.f32 %v3202, %v3314
      %v3316 = vpop.f32.mrb[0].mxu0
      %v3317 = vadd.f32 %v3204, %v3316
      %3318 = vmatprep.mubr.f32.mxu0 0.0
      %3319 = vmatmul.mubr.f32.gmra.mrb[0].mxu0 %v2698
      %v3320 = vpop.f32.mrb[0].mxu0
      %v3321 = vadd.f32 %v3208, %v3320
      %v3322 = vpop.f32.mrb[0].mxu0
      %v3323 = vadd.f32 %v3210, %v3322
      %3324 = vmatprep.mubr.f32.mxu0 0.0
      %3325 = vmatmul.mubr.f32.gmra.mrb[0].mxu0 %v2701
      %v3326 = vpop.f32.mrb[0].mxu0
      %v3327 = vadd.f32 %v3214, %v3326
      %v3328 = vpop.f32.mrb[0].mxu0
      %v3329 = vadd.f32 %v3216, %v3328
      %3330 = vmatprep.mubr.f32.mxu0 0.0
      %3331 = vmatmul.mubr.f32.gmra.mrb[0].mxu0 %v2704
      %v3332 = vpop.f32.mrb[0].mxu0
      %v3333 = vadd.f32 %v3220, %v3332
      %v3334 = vpop.f32.mrb[0].mxu0
      %v3335 = vadd.f32 %v3222, %v3334
      %3336 = vmatprep.mubr.f32.mxu0 0.0
      %3337 = vmatmul.mubr.f32.gmra.mrb[0].mxu0 %v2707
      %v3338 = vpop.f32.mrb[0].mxu0
      %v3339 = vadd.f32 %v3226, %v3338
      %v3340 = vpop.f32.mrb[0].mxu0
      %v3341 = vadd.f32 %v3228, %v3340
      %3342 = vmatprep.mubr.f32.mxu0 0.0
      %3343 = vmatmul.mubr.f32.gmra.mrb[0].mxu0 %v2710
      %v3344 = vpop.f32.mrb[0].mxu0
      %v3345 = vadd.f32 %v3232, %v3344
      %v3346 = vpop.f32.mrb[0].mxu0
      %v3347 = vadd.f32 %v3234, %v3346
      %3348 = vmatprep.mubr.f32.mxu0 0.0
      %3349 = vmatmul.mubr.f32.gmra.mrb[0].mxu0 %v2713
      %v3350 = vpop.f32.mrb[0].mxu0
      %v3351 = vadd.f32 %v3238, %v3350
      %v3352 = vpop.f32.mrb[0].mxu0
      %v3353 = vadd.f32 %v3240, %v3352
      %3354 = vmatprep.mubr.f32.mxu0 0.0
      %3355 = vmatmul.mubr.f32.gmra.mrb[0].mxu0 %v2716
      %v3356 = vpop.f32.mrb[0].mxu0
      %v3357 = vadd.f32 %v3244, %v3356
      %v3358 = vpop.f32.mrb[0].mxu0
      %v3359 = vadd.f32 %v3246, %v3358
      %3360 = vdwg.mxu0
      %v3361 = vmax.f32 %v3089, %v3315
      %v3362 = vmax.f32 %v3091, %v3317
      %v3363 = vmax.f32 %v3095, %v3321
      %v3364 = vmax.f32 %v3097, %v3323
      %v3365 = vmax.f32 %v3101, %v3327
      %v3366 = vmax.f32 %v3103, %v3329
      %v3367 = vmax.f32 %v3107, %v3333
      %v3368 = vmax.f32 %v3109, %v3335
      %v3369 = vmax.f32 %v3113, %v3339
      %v3370 = vmax.f32 %v3115, %v3341
      %v3371 = vmax.f32 %v3119, %v3345
      %v3372 = vmax.f32 %v3121, %v3347
      %v3373 = vmax.f32 %v3125, %v3351
      %v3374 = vmax.f32 %v3127, %v3353
      %v3375 = vmax.f32 %v3131, %v3357
      %v3376 = vmax.f32 %v3133, %v3359
      %v3377 = vld [vmem:[%s5] sm:$0xff]
      %v3378 = vld [vmem:[%s5 + $0x8] sm:$0xff]
      %v3379 = vld [vmem:[%s5 + $0x10] sm:$0xff]
      %v3380 = vld [vmem:[%s5 + $0x18] sm:$0xff]
      %v3381 = vld [vmem:[%s5 + $0x20] sm:$0xff]
      %v3382 = vld [vmem:[%s5 + $0x28] sm:$0xff]
      %v3383 = vld [vmem:[%s5 + $0x30] sm:$0xff]
      %v3384 = vld [vmem:[%s5 + $0x38] sm:$0xff]
      %v3385 = vld [vmem:[%s5 + $0x40] sm:$0xff]
      %v3386 = vld [vmem:[%s5 + $0x48] sm:$0xff]
      %v3387 = vld [vmem:[%s5 + $0x50] sm:$0xff]
      %v3388 = vld [vmem:[%s5 + $0x58] sm:$0xff]
      %v3389 = vld [vmem:[%s5 + $0x60] sm:$0xff]
      %v3390 = vld [vmem:[%s5 + $0x68] sm:$0xff]
      %v3391 = vld [vmem:[%s5 + $0x70] sm:$0xff]
      %v3392 = vld [vmem:[%s5 + $0x78] sm:$0xff]
      %v3393 = vld [vmem:[%s5 + $0x80] sm:$0xff]
      %v3394 = vld [vmem:[%s5 + $0x88] sm:$0xff]
      %v3395 = vld [vmem:[%s5 + $0x90] sm:$0xff]
      %v3396 = vld [vmem:[%s5 + $0x98] sm:$0xff]
      %v3397 = vld [vmem:[%s5 + $0xa0] sm:$0xff]
      %v3398 = vld [vmem:[%s5 + $0xa8] sm:$0xff]
      %v3399 = vld [vmem:[%s5 + $0xb0] sm:$0xff]
      %v3400 = vld [vmem:[%s5 + $0xb8] sm:$0xff]
      %v3401 = vld [vmem:[%s6] sm:$0x1]
      %v3403 = vlaneseq
      %v3404 = vshrl.u32 %v3403, 7
      %v3405 = vsub.s32 0, %v3404
      %v3406 = vrot.slane %v3401, %v3405
      %vm3408 = vcmask 523264
      %v3410 = vsel %vm3408, %v3362, 0
      %v3413 = vsel %vm3408, %v3364, 0
      %v3416 = vsel %vm3408, %v3366, 0
      %v3419 = vsel %vm3408, %v3368, 0
      %v3422 = vsel %vm3408, %v3370, 0
      %v3425 = vsel %vm3408, %v3372, 0
      %v3428 = vsel %vm3408, %v3374, 0
      %v3431 = vsel %vm3408, %v3376, 0
      %3433 = vmatprep.subr.mxu0 0.0
      %3434 = vmatpush1.msra.mxu0 %v3377
      %3435 = vmatprep.subr.mxu0 0.0
      %3436 = vmatpush1.msra.mxu0 %v3378
      %3437 = vmatprep.subr.mxu0 0.0
      %3438 = vmatpush1.msra.mxu0 %v3379
      %3439 = vmatprep.subr.mxu0 0.0
      %3440 = vmatpush1.msra.mxu0 %v3380
      %3441 = vmatprep.subr.mxu0 0.0
      %3442 = vmatpush1.msra.mxu0 %v3381
      %3443 = vmatprep.subr.mxu0 0.0
      %3444 = vmatpush1.msra.mxu0 %v3382
      %3445 = vmatprep.subr.mxu0 0.0
      %3446 = vmatpush1.msra.mxu0 %v3383
      %3447 = vmatprep.subr.mxu0 0.0
      %3448 = vmatpush1.msra.mxu0 %v3384
      %3449 = vmatprep.subr.mxu0 0.0
      %3450 = vmatpush1.msra.mxu0 %v3385
      %3451 = vmatprep.subr.mxu0 0.0
      %3452 = vmatpush1.msra.mxu0 %v3386
      %3453 = vmatprep.subr.mxu0 0.0
      %3454 = vmatpush1.msra.mxu0 %v3387
      %3455 = vmatprep.subr.mxu0 0.0
      %3456 = vmatpush1.msra.mxu0 %v3388
      %3457 = vmatprep.subr.mxu0 0.0
      %3458 = vmatpush1.msra.mxu0 %v3389
      %3459 = vmatprep.subr.mxu0 0.0
      %3460 = vmatpush1.msra.mxu0 %v3390
      %3461 = vmatprep.subr.mxu0 0.0
      %3462 = vmatpush1.msra.mxu0 %v3391
      %3463 = vmatprep.subr.mxu0 0.0
      %3464 = vmatpush1.msra.mxu0 %v3392
      %3465 = vmatprep.subr.mxu0 0.0
      %3466 = vmatpush1.msra.mxu0 %v3393
      %3467 = vmatprep.subr.mxu0 0.0
      %3468 = vmatpush1.msra.mxu0 %v3394
      %3469 = vmatprep.subr.mxu0 0.0
      %3470 = vmatpush1.msra.mxu0 %v3395
      %3471 = vmatprep.subr.mxu0 0.0
      %3472 = vmatpush1.msra.mxu0 %v3396
      %3473 = vmatprep.subr.mxu0 0.0
      %3474 = vmatpush1.msra.mxu0 %v3397
      %3475 = vmatprep.subr.mxu0 0.0
      %3476 = vmatpush1.msra.mxu0 %v3398
      %3477 = vmatprep.subr.mxu0 0.0
      %3478 = vmatpush1.msra.mxu0 %v3399
      %3479 = vmatprep.subr.mxu0 0.0
      %3480 = vmatpush1.msra.mxu0 %v3400
      %3481 = vmatprep.subr.mxu0 0.0
      %3482 = vmatpush1.msra.mxu0 0.0
      %3483 = vmatprep.subr.mxu0 0.0
      %3484 = vmatpush1.msra.mxu0 0.0
      %3485 = vmatprep.subr.mxu0 0.0
      %3486 = vmatpush1.msra.mxu0 0.0
      %3487 = vmatprep.subr.mxu0 0.0
      %3488 = vmatpush1.msra.mxu0 0.0
      %3489 = vmatprep.subr.mxu0 0.0
      %3490 = vmatpush1.msra.mxu0 0.0
      %3491 = vmatprep.subr.mxu0 0.0
      %3492 = vmatpush1.msra.mxu0 0.0
      %3493 = vmatprep.subr.mxu0 0.0
      %3494 = vmatpush1.msra.mxu0 0.0
      %3495 = vmatprep.subr.mxu0 0.0
      %3496 = vmatpush1.msra.mxu0 0.0
      %3497 = vmatprep.mubr.f32.mxu0 %v3410
      %3498 = vmatmul.mubr.f32.gmra.mrb[0].mxu0 %v3361
      %v3499 = vpop.f32.mrb[0].mxu0
      %v3500 = vadd.f32 %v3406, %v3499
      %v3501 = vpop.f32.mrb[0].mxu0
      %3502 = vmatprep.mubr.f32.mxu0 %v3413
      %3503 = vmatmul.mubr.f32.gmra.mrb[0].mxu0 %v3363
      %v3504 = vpop.f32.mrb[0].mxu0
      %v3505 = vadd.f32 %v3406, %v3504
      %v3506 = vpop.f32.mrb[0].mxu0
      %3507 = vmatprep.mubr.f32.mxu0 %v3416
      %3508 = vmatmul.mubr.f32.gmra.mrb[0].mxu0 %v3365
      %v3509 = vpop.f32.mrb[0].mxu0
      %v3510 = vadd.f32 %v3406, %v3509
      %v3511 = vpop.f32.mrb[0].mxu0
      %3512 = vmatprep.mubr.f32.mxu0 %v3419
      %3513 = vmatmul.mubr.f32.gmra.mrb[0].mxu0 %v3367
      %v3514 = vpop.f32.mrb[0].mxu0
      %v3515 = vadd.f32 %v3406, %v3514
      %v3516 = vpop.f32.mrb[0].mxu0
      %3517 = vmatprep.mubr.f32.mxu0 %v3422
      %3518 = vmatmul.mubr.f32.gmra.mrb[0].mxu0 %v3369
      %v3519 = vpop.f32.mrb[0].mxu0
      %v3520 = vadd.f32 %v3406, %v3519
      %v3521 = vpop.f32.mrb[0].mxu0
      %3522 = vmatprep.mubr.f32.mxu0 %v3425
      %3523 = vmatmul.mubr.f32.gmra.mrb[0].mxu0 %v3371
      %v3524 = vpop.f32.mrb[0].mxu0
      %v3525 = vadd.f32 %v3406, %v3524
      %v3526 = vpop.f32.mrb[0].mxu0
      %3527 = vmatprep.mubr.f32.mxu0 %v3428
      %3528 = vmatmul.mubr.f32.gmra.mrb[0].mxu0 %v3373
      %v3529 = vpop.f32.mrb[0].mxu0
      %v3530 = vadd.f32 %v3406, %v3529
      %v3531 = vpop.f32.mrb[0].mxu0
      %3532 = vmatprep.mubr.f32.mxu0 %v3431
      %3533 = vmatmul.mubr.f32.gmra.mrb[0].mxu0 %v3375
      %v3534 = vpop.f32.mrb[0].mxu0
      %v3535 = vadd.f32 %v3406, %v3534
      %v3536 = vpop.f32.mrb[0].mxu0
      %3537 = vdwg.mxu0
      %v3538 = vmax.f32 %v3500, 0.0
      %v3539 = vmax.f32 %v3505, 0.0
      %v3540 = vmax.f32 %v3510, 0.0
      %v3541 = vmax.f32 %v3515, 0.0
      %v3542 = vmax.f32 %v3520, 0.0
      %v3543 = vmax.f32 %v3525, 0.0
      %v3544 = vmax.f32 %v3530, 0.0
      %v3545 = vmax.f32 %v3535, 0.0
      %vm3546 = vcmask 982016
      %3547 = vst.msk [vmem:[%s348] sm:$0xff] %vm3546, %v3538
      %3548 = vst.msk [vmem:[%s348 + $0x8] sm:$0xff] %vm3546, %v3539
      %3549 = vst.msk [vmem:[%s348 + $0x10] sm:$0xff] %vm3546, %v3540
      %3550 = vst.msk [vmem:[%s348 + $0x18] sm:$0xff] %vm3546, %v3541
      %3551 = vst.msk [vmem:[%s348 + $0x20] sm:$0xff] %vm3546, %v3542
      %3552 = vst.msk [vmem:[%s348 + $0x28] sm:$0xff] %vm3546, %v3543
      %3553 = vst.msk [vmem:[%s348 + $0x30] sm:$0xff] %vm3546, %v3544
      %3554 = vst.msk [vmem:[%s348 + $0x38] sm:$0xff] %vm3546, %v3545
      %v3555 = vsel %vm3546, %v3538, 0.0
      %v3556 = vsel %vm3546, %v3539, 0.0
      %v3557 = vadd.f32 %v3555, %v3556
      %v3558 = vsel %vm3546, %v3540, 0.0
      %v3559 = vadd.f32 %v3557, %v3558
      %v3560 = vsel %vm3546, %v3541, 0.0
      %v3561 = vadd.f32 %v3559, %v3560
      %v3562 = vsel %vm3546, %v3542, 0.0
      %v3563 = vadd.f32 %v3561, %v3562
      %v3564 = vsel %vm3546, %v3543, 0.0
      %v3565 = vadd.f32 %v3563, %v3564
      %v3566 = vsel %vm3546, %v3544, 0.0
      %v3567 = vadd.f32 %v3565, %v3566
      %v3568 = vsel %vm3546, %v3545, 0.0
      %v3569 = vadd.f32 %v3567, %v3568
      %v3570 = vrot.slane %v3569, 4
      %v3571 = vadd.f32 %v3569, %v3570
      %v3572 = vrot.slane %v3571, 2
      %v3573 = vadd.f32 %v3571, %v3572
      %v3574 = vrot.slane %v3573, 1
      %v3575 = vadd.f32 %v3573, %v3574
      %vm3576 = vcmask 974848
      %3577 = vst.msk [vmem:[%s352] sm:$0x1] %vm3576, %v3575
      %v3578 = vmul.f32 %v3538, %v3538
      %v3579 = vmul.f32 %v3539, %v3539
      %v3580 = vmul.f32 %v3540, %v3540
      %v3581 = vmul.f32 %v3541, %v3541
      %v3582 = vmul.f32 %v3542, %v3542
      %v3583 = vmul.f32 %v3543, %v3543
      %v3584 = vmul.f32 %v3544, %v3544
      %v3585 = vmul.f32 %v3545, %v3545
      %v3586 = vsel %vm3546, %v3578, 0.0
      %v3587 = vsel %vm3546, %v3579, 0.0
      %v3588 = vadd.f32 %v3586, %v3587
      %v3589 = vsel %vm3546, %v3580, 0.0
      %v3590 = vadd.f32 %v3588, %v3589
      %v3591 = vsel %vm3546, %v3581, 0.0
      %v3592 = vadd.f32 %v3590, %v3591
      %v3593 = vsel %vm3546, %v3582, 0.0
      %v3594 = vadd.f32 %v3592, %v3593
      %v3595 = vsel %vm3546, %v3583, 0.0
      %v3596 = vadd.f32 %v3594, %v3595
      %v3597 = vsel %vm3546, %v3584, 0.0
      %v3598 = vadd.f32 %v3596, %v3597
      %v3599 = vsel %vm3546, %v3585, 0.0
      %v3600 = vadd.f32 %v3598, %v3599
      %v3601 = vrot.slane %v3600, 4
      %v3602 = vadd.f32 %v3600, %v3601
      %v3603 = vrot.slane %v3602, 2
      %v3604 = vadd.f32 %v3602, %v3603
      %v3605 = vrot.slane %v3604, 1
      %v3606 = vadd.f32 %v3604, %v3605
      %3607 = vst.msk [vmem:[%s355] sm:$0x1] %vm3576, %v3606
      %s3608 = smul.u32 8, %s21
      %p3609 = scmp.lt.s32.totalorder %s3608, 15
      %s3610 = scalar_select %p3609, %s3608, 15
      %s3611 = smul.addr %s3610, 8
      %s3612 = scalar_lea.vmem %s7, %s3611
      %p3613 = scmp.lt.s32.totalorder %s21, 1
      %s3614 = scalar_select %p3613, %s21, 1
      %s3615 = scalar_lea.vmem %s8, %s3614
      %p3616 = scmp.lt.s32.totalorder %s21, 1
      %s3617 = scalar_select %p3616, %s21, 1
      %s3618 = scalar_lea.vmem %s9, %s3617
      // Predicated region
      $region49: #{network_forward.4} parent=47 // pred_check
        %p3619 = pneg %p191
      $region50: #{network_forward.4} parent=47 // pred_check_branch
        %3621 = sbr.rel (%p3619) target = $region52
      $region51: #{network_forward.4} parent=47 // pred_region
        %s3622 = smul.u32 8, %s21
      $region52: #{network_forward.4} parent=47 // pred_fallthru
        _
      // Predicated region
      $region53: #{network_forward.4} parent=47 // pred_check
        %p3623 = pneg %p217
      $region54: #{network_forward.4} parent=47 // pred_check_branch
        %3625 = sbr.rel (%p3623) target = $region56
      $region55: #{network_forward.4} parent=47 // pred_region
        _
      $region56: #{network_forward.4} parent=47 // pred_fallthru
        _
      // Predicated region
      $region57: #{network_forward.4} parent=47 // pred_check
        %p3626 = pneg %p243
      $region58: #{network_forward.4} parent=47 // pred_check_branch
        %3628 = sbr.rel (%p3626) target = $region60
      $region59: #{network_forward.4} parent=47 // pred_region
        _
      $region60: #{network_forward.4} parent=47 // pred_fallthru
        _
    $region48: #{network_forward.4} parent=5 // pred_fallthru
      _
    %p3629 = scmp.le.s32.totalorder 2, %s16
    // Predicated region
    $region61: #{network_forward.4} parent=5 // pred_check
      %p3630 = pneg %p3629
    $region62: #{network_forward.4} parent=5 // pred_check_branch
      %3632 = sbr.rel (%p3630) target = $region64
    $region63: #{network_forward.4} parent=5 // pred_region
      %s3633 = ssub.s32 %s16, 2
      // Predicated region
      $region65: #{network_forward.4} parent=63 // pred_check
        %p3634 = pneg %p197
      $region66: #{network_forward.4} parent=63 // pred_check_branch
        %3636 = sbr.rel (%p3634) target = $region68
      $region67: #{network_forward.4} parent=63 // pred_region
        %s3637 = smul.u32 8, %s22
        %p3638 = scmp.lt.s32.totalorder %s3637, 15
        %s3639 = scalar_select %p3638, %s3637, 15
        %s3640 = smul.addr %s3639, 8
        %s3641 = scalar_lea.vmem %s7, %s3640
      $region68: #{network_forward.4} parent=63 // pred_fallthru
        _
      // Predicated region
      $region69: #{network_forward.4} parent=63 // pred_check
        %p3642 = pneg %p223
      $region70: #{network_forward.4} parent=63 // pred_check_branch
        %3644 = sbr.rel (%p3642) target = $region72
      $region71: #{network_forward.4} parent=63 // pred_region
        %p3645 = scmp.lt.s32.totalorder %s22, 1
        %s3646 = scalar_select %p3645, %s22, 1
        %s3647 = scalar_lea.vmem %s8, %s3646
      $region72: #{network_forward.4} parent=63 // pred_fallthru
        _
      // Predicated region
      $region73: #{network_forward.4} parent=63 // pred_check
        %p3648 = pneg %p249
      $region74: #{network_forward.4} parent=63 // pred_check_branch
        %3650 = sbr.rel (%p3648) target = $region76
      $region75: #{network_forward.4} parent=63 // pred_region
        %p3651 = scmp.lt.s32.totalorder %s22, 1
        %s3652 = scalar_select %p3651, %s22, 1
        %s3653 = scalar_lea.vmem %s9, %s3652
      $region76: #{network_forward.4} parent=63 // pred_fallthru
        _
    $region64: #{network_forward.4} parent=5 // pred_fallthru
      _
  $region6: #{network_forward.4} parent=0 // loop_footer
    %s20 = sadd.s32 1, %s16
  $region7: #{network_forward.4} parent=0 // loop_footer_branch
    %15 = sbr.rel target = $region3
  $region8: #{network_forward.4} parent=0 // loop_exit
    _

</llo_original>
